<compile_context>
chip_gen: v7x
topology: tpu7x:2x2x1
jax: 0.10.0
libtpu: 0.0.40
codegen_flags: <defaults>
</compile_context>

<pallas_src>
import functools

import jax
import jax.numpy as jnp
from jax.experimental import pallas as pl
from jax.experimental.pallas import tpu as pltpu


def _round_up(x, m):
    return (x + m - 1) // m * m


def _default_vmem_limit():
    # Items 9/10: derive the scoped-VMEM budget from the chip (v7x: 64 MiB/TC,
    # v5e/v6e: 128 MiB) instead of hard-coding 32 MiB.
    try:
        cap = int(pltpu.get_tpu_info().vmem_capacity_bytes)
    except Exception:
        cap = 128 * 1024 * 1024
    return int(min(3 * cap // 4, 96 * 1024 * 1024))


VMEM_LIMIT = _default_vmem_limit()

# Item 8: leading 'parallel' K-split of the head matmul so both v7x
# TensorCores stream disjoint halves of the big head weight.
HEAD_K_SPLITS = 2


# ---------------------------------------------------------------------------
# Conv geometry (same arithmetic as the PyTorch __init__ probe)
# ---------------------------------------------------------------------------

def _pick_tw(wo, cin, cout):
    """Output-width chunk: full width while the block-diag weights stay small."""
    if 9 * (wo * cin) * (wo * cout) * 2 <= (4 << 20):
        return wo
    return max(8, min(wo, 512 // cin))


def _conv_geom(h, w, cin, cout):
    ho, wo = h - 2, w - 2
    tw = _pick_tw(wo, cin, cout)
    wo_pad = _round_up(wo, tw)
    return dict(h=h, w=w, cin=cin, cout=cout, ho=ho, wo=wo, tw=tw,
                wo_pad=wo_pad, wi_pad=wo_pad + 2, tr=min(ho, 32))


def make_config(img_hw):
    g1 = _conv_geom(img_hw, img_hw, 3, 16)
    hp1, wp1 = g1["ho"] // 2, g1["wo"] // 2
    g2 = _conv_geom(hp1, wp1, 16, 32)
    hp2, wp2 = g2["ho"] // 2, g2["wo"] // 2
    return dict(g1=g1, g2=g2, conv_out_dim=g2["cout"] * hp2 * wp2)


# ---------------------------------------------------------------------------
# Fused Conv2d(3x3, valid) + ReLU  (no HBM im2col; lane-dense in/out slabs)
# ---------------------------------------------------------------------------
# Per grid step (one image) the 9 taps (di, dj) are accumulated as
#   acc += x[di:di+rows, (w0+dj)*Cin : (w0+dj+TW)*Cin] @ Wbig[3*di+dj]
# where Wbig[t] = kron(I_TW, w[di, dj]) is a pre-built block-diagonal weight,
# so the matmul output lands directly in the lane-dense (rows, TW*Cout) layout.

def _conv3x3_relu_kernel(x_ref, w_ref, b_ref, o_ref, *, cin, cout, tw, ho,
                         wo_pad, tr):
    bias = b_ref[...]                                    # (1, tw*cout) f32
    for r0 in range(0, ho, tr):                          # static row chunks
        rr = min(tr, ho - r0)
        for wc in range(wo_pad // tw):                   # static width chunks
            c0 = wc * tw
            acc = jnp.zeros((rr, tw * cout), jnp.float32)
            for di in range(3):
                for dj in range(3):
                    lhs = x_ref[0, r0 + di:r0 + di + rr,
                                (c0 + dj) * cin:(c0 + dj + tw) * cin]
                    acc = acc + jnp.dot(lhs, w_ref[3 * di + dj],
                                        preferred_element_type=jnp.float32)
            y = jnp.maximum(acc + bias, 0.0)             # f32 epilogue
            o_ref[0, r0:r0 + rr, c0 * cout:(c0 + tw) * cout] = y.astype(o_ref.dtype)


def conv2d_relu_pallas(x_nhwc, wbig, bias_t, g):
    """x: (N,H,W,Cin) bf16; wbig: (9, TW*Cin, TW*Cout) bf16; bias_t: (1, TW*Cout) f32."""
    n, h, w, cin = x_nhwc.shape
    assert (h, w, cin) == (g["h"], g["w"], g["cin"])
    wpad = g["wi_pad"] - w
    x = jnp.pad(x_nhwc, ((0, 0), (0, 0), (0, wpad), (0, 0))) if wpad else x_nhwc
    x = x.reshape(n, g["h"], g["wi_pad"] * cin)          # lane-dense slab
    out_cols = g["wo_pad"] * g["cout"]
    kern = functools.partial(_conv3x3_relu_kernel, cin=cin, cout=g["cout"],
                             tw=g["tw"], ho=g["ho"], wo_pad=g["wo_pad"],
                             tr=g["tr"])
    cost = pl.CostEstimate(
        flops=int(2 * n * g["ho"] * g["wo_pad"] * 9 * g["tw"] * cin * g["cout"]),
        transcendentals=0,
        bytes_accessed=int(x.size * 2 + wbig.size * 2 + n * g["ho"] * out_cols * 2),
    )
    out = pl.pallas_call(
        kern,
        out_shape=jax.ShapeDtypeStruct((n, g["ho"], out_cols), jnp.bfloat16),
        grid=(n,),
        in_specs=[
            pl.BlockSpec((1, g["h"], g["wi_pad"] * cin), lambda i: (i, 0, 0)),
            pl.BlockSpec((9, g["tw"] * cin, g["tw"] * g["cout"]),
                         lambda i: (0, 0, 0)),
            pl.BlockSpec((1, g["tw"] * g["cout"]), lambda i: (0, 0)),
        ],
        out_specs=pl.BlockSpec((1, g["ho"], out_cols), lambda i: (i, 0, 0)),
        compiler_params=pltpu.CompilerParams(
            dimension_semantics=("parallel",),
            vmem_limit_bytes=VMEM_LIMIT),
        cost_estimate=cost,
    )(x, wbig, bias_t)
    out = out.reshape(n, g["ho"], g["wo_pad"], g["cout"])[:, :, : g["wo"], :]
    return out


# ---------------------------------------------------------------------------
# MaxPool2d(2, 2)  (row-tiled elementwise max over the 4 window slices)
# ---------------------------------------------------------------------------

def _max4_kernel(a_ref, b_ref, c_ref, d_ref, o_ref):
    o_ref[...] = jnp.maximum(
        jnp.maximum(a_ref[...], b_ref[...]),
        jnp.maximum(c_ref[...], d_ref[...]),
    )


def max4_pallas(a, b, c, d):
    R, C = a.shape
    row_bytes = C * a.dtype.itemsize
    # Item 11: cap per-step bytes (~10 buffers resident) so v5e's smaller
    # scoped-VMEM default can never overflow.
    max_tr = max(16, ((6 << 20) // (10 * row_bytes)) // 16 * 16)
    TR = min(_round_up(R, 16), max_tr)
    Rp = _round_up(R, TR)
    pad = ((0, Rp - R), (0, 0))
    args = [jnp.pad(t, pad) for t in (a, b, c, d)]
    out = pl.pallas_call(
        _max4_kernel,
        out_shape=jax.ShapeDtypeStruct((Rp, C), a.dtype),
        grid=(Rp // TR,),
        in_specs=[pl.BlockSpec((TR, C), lambda i: (i, 0))] * 4,
        out_specs=pl.BlockSpec((TR, C), lambda i: (i, 0)),
        compiler_params=pltpu.CompilerParams(
            dimension_semantics=("parallel",),
            vmem_limit_bytes=VMEM_LIMIT),
    )(*args)
    return out[:R]


def maxpool2x2(x_nhwc):
    """MaxPool2d(kernel=2, stride=2), floor mode (crops trailing odd row/col)."""
    n, h, w, c = x_nhwc.shape
    ho, wo = h // 2, w // 2
    x = x_nhwc[:, : 2 * ho, : 2 * wo, :]
    # TODO(synk): fuse the 2x2 pool into the conv kernel's epilogue so the
    # pre-pool activation never round-trips through HBM (review item 4).
    a = x[:, 0::2, 0::2, :].reshape(n * ho, wo * c)       # lane-dense (rows, Wo*C)
    b = x[:, 0::2, 1::2, :].reshape(n * ho, wo * c)
    cc = x[:, 1::2, 0::2, :].reshape(n * ho, wo * c)
    d = x[:, 1::2, 1::2, :].reshape(n * ho, wo * c)
    y = max4_pallas(a, b, cc, d)
    return y.reshape(n, ho, wo, c)


# ---------------------------------------------------------------------------
# Tiled matmul + bias + (ReLU) kernel  (fc head / fc[2])
# ---------------------------------------------------------------------------

def _mm_kernel(x_ref, w_ref, b_ref, o_ref, acc_ref, *, apply_relu):
    k = pl.program_id(3)

    @pl.when(k == 0)
    def _init():
        acc_ref[...] = jnp.zeros_like(acc_ref)

    acc_ref[...] += jnp.dot(x_ref[...], w_ref[...],
                            preferred_element_type=jnp.float32)

    @pl.when(k == pl.num_programs(3) - 1)
    def _finalize():
        y = acc_ref[...] + b_ref[...]                     # f32 epilogue
        if apply_relu:
            y = jnp.maximum(y, 0.0)
        o_ref[...] = y.astype(o_ref.dtype).reshape(o_ref.shape)


def _pad_linear_weight(w, k_splits=1):
    """Pre-cast to bf16 and pre-pad ONCE (item 5); K aligned for the K-split."""
    K, N = w.shape
    Np = _round_up(N, 128)
    if K <= 8192 * k_splits:
        Kp = _round_up(K, 128 * k_splits)
    else:
        Kp = _round_up(K, 4096 * k_splits)
    return jnp.pad(w.astype(jnp.bfloat16), ((0, Kp - K), (0, Np - N)))


def linear_pallas(x, w_pad, b, n_out, *, relu, per_row_bias, k_splits=1,
                  out_dtype=jnp.float32):
    """act(x @ w + b) with a pre-padded bf16 weight (Kp, Np).

    b is either a pre-padded (1, Np) f32 broadcast bias or a (M, n_out) f32
    per-row bias.  With k_splits > 1, K is additionally split on a leading
    'parallel' grid axis (both v7x cores); partial sums + bias + ReLU then
    happen in a tiny wrapper epilogue.
    """
    M, K = x.shape
    Kp, Np = w_pad.shape
    assert K <= Kp and n_out <= Np and Kp % k_splits == 0
    Mp = _round_up(max(M, 16), 16)                        # bf16 sublane packing
    TM = min(Mp, 1024)
    Mp = _round_up(Mp, TM)
    # Item 2: stream the weight in wide K chunks (>=0.5-1 MB tiles at real K)
    TKs = Kp // k_splits
    TK = TKs if TKs <= 8192 else 4096
    KB = Kp // (TK * k_splits)
    if Np % 512 == 0:
        TN = 512
    elif Np % 256 == 0:
        TN = 256
    else:
        TN = 128
    xb = jnp.pad(x.astype(jnp.bfloat16), ((0, Mp - M), (0, Kp - K)))

    fuse_epilogue = (k_splits == 1)
    if per_row_bias and fuse_epilogue:
        bf = jnp.pad(b.astype(jnp.float32), ((0, Mp - M), (0, Np - b.shape[1])))
        b_spec = pl.BlockSpec((TM, TN), lambda s, i, j, k: (i, j))
    elif fuse_epilogue:
        bf = b                                            # pre-padded (1, Np) f32
        b_spec = pl.BlockSpec((1, TN), lambda s, i, j, k: (0, j))
    else:
        bf = jnp.zeros((1, Np), jnp.float32)              # bias added after sum
        b_spec = pl.BlockSpec((1, TN), lambda s, i, j, k: (0, j))

    grid = (k_splits, Mp // TM, Np // TN, KB)
    cost = pl.CostEstimate(
        flops=int(2 * Mp * Np * Kp),
        transcendentals=0,
        bytes_accessed=int(xb.size * 2 * (Np // TN) + w_pad.size * 2 * (Mp // TM)
                           + bf.size * 4 + k_splits * Mp * Np * 4),
    )
    out = pl.pallas_call(
        functools.partial(_mm_kernel, apply_relu=relu and fuse_epilogue),
        out_shape=jax.ShapeDtypeStruct((k_splits, Mp, Np), jnp.float32),
        grid=grid,
        in_specs=[
            pl.BlockSpec((TM, TK), lambda s, i, j, k: (i, s * KB + k)),
            pl.BlockSpec((TK, TN), lambda s, i, j, k: (s * KB + k, j)),
            b_spec,
        ],
        out_specs=pl.BlockSpec((1, TM, TN), lambda s, i, j, k: (s, i, j)),
        scratch_shapes=[pltpu.VMEM((TM, TN), jnp.float32)],
        compiler_params=pltpu.CompilerParams(
            dimension_semantics=("parallel", "parallel", "parallel", "arbitrary"),
            vmem_limit_bytes=VMEM_LIMIT),
        cost_estimate=cost,
    )(xb, w_pad, bf)

    if fuse_epilogue:
        return out[0][:M, :n_out].astype(out_dtype)
    y = jnp.sum(out, axis=0)[:M, :n_out]                  # tiny (B, n_out) epilogue
    y = y + (b if per_row_bias else b[:, :n_out])
    if relu:
        y = jnp.maximum(y, 0.0)
    return y.astype(out_dtype)


# ---------------------------------------------------------------------------
# Fused feature_net + feature-half of fc[0] (one small Pallas kernel)
# ---------------------------------------------------------------------------

def _feature_head_kernel(t_ref, w1_ref, b1_ref, w2_ref, b2_ref,
                         wf_ref, bf_ref, o_ref):
    h = jnp.dot(t_ref[...], w1_ref[...], preferred_element_type=jnp.float32)
    h = jnp.maximum(h + b1_ref[...], 0.0)
    h = jnp.dot(h.astype(jnp.bfloat16), w2_ref[...],
                preferred_element_type=jnp.float32)
    h = jnp.maximum(h + b2_ref[...], 0.0)
    z = jnp.dot(h.astype(jnp.bfloat16), wf_ref[...],
                preferred_element_type=jnp.float32)
    o_ref[...] = z + bf_ref[...]


def feature_head_partial(tab, dp):
    """relu(relu(tab@fw1+fb1)@fw2+fb2) @ cw1_feat + cb1  ->  (B, 128) f32.

    Consumed by the image matmul as a per-row bias, so torch.cat([x_img,
    x_feat]) is never materialized and three kernel launches disappear.
    """
    B, F = tab.shape
    fw1, fw2, wf = dp["fw1_p"], dp["fw2_p"], dp["cw1_feat_p"]
    Fp, H1 = fw1.shape
    H2 = fw2.shape[1]
    NH = wf.shape[1]
    Bp = _round_up(max(B, 16), 16)
    t = jnp.pad(tab.astype(jnp.bfloat16), ((0, Bp - B), (0, Fp - F)))
    out = pl.pallas_call(
        _feature_head_kernel,
        out_shape=jax.ShapeDtypeStruct((Bp, NH), jnp.float32),
        grid=(1,),
        in_specs=[
            pl.BlockSpec((Bp, Fp), lambda i: (0, 0)),
            pl.BlockSpec((Fp, H1), lambda i: (0, 0)),
            pl.BlockSpec((1, H1), lambda i: (0, 0)),
            pl.BlockSpec((H1, H2), lambda i: (0, 0)),
            pl.BlockSpec((1, H2), lambda i: (0, 0)),
            pl.BlockSpec((H2, NH), lambda i: (0, 0)),
            pl.BlockSpec((1, NH), lambda i: (0, 0)),
        ],
        out_specs=pl.BlockSpec((Bp, NH), lambda i: (0, 0)),
        compiler_params=pltpu.CompilerParams(vmem_limit_bytes=VMEM_LIMIT),
    )(t, fw1, dp["fb1_p"], fw2, dp["fb2_p"], wf, dp["cb1_p"])
    return out[:B]


# ---------------------------------------------------------------------------
# Model: raw params, one-time device-layout preparation, forward, reference
# ---------------------------------------------------------------------------

def init_params(key, feature_dimension, conv_out_dimension):
    ks = jax.random.split(key, 13)

    def w(k, shape, scale=0.05):
        return (scale * jax.random.normal(k, shape)).astype(jnp.float32)

    return dict(
        # conv1: Conv2d(3,16,3)  — weight as (kh*kw*Cin, Cout), (kh,kw,Cin) order
        w1=w(ks[0], (3 * 3 * 3, 16)), b1=w(ks[1], (16,)),
        # conv2: Conv2d(16,32,3)
        w2=w(ks[2], (3 * 3 * 16, 32)), b2=w(ks[3], (32,)),
        # feature_net: Linear(feature_dim,64), Linear(64,32)  (stored (in,out))
        fw1=w(ks[4], (feature_dimension, 64)), fb1=w(ks[5], (64,)),
        fw2=w(ks[6], (64, 32)), fb2=w(ks[7], (32,)),
        # fc[0]: Linear(conv_out+32,128) split into image / feature row blocks;
        # cw1_img rows are in NHWC-flatten order (permute once from a torch ckpt).
        cw1_img=w(ks[8], (conv_out_dimension, 128)),
        cw1_feat=w(ks[9], (32, 128)),
        cb1=w(ks[10], (128,)),
        # fc[2]: Linear(128,1)
        cw2=w(ks[11], (128, 1)), cb2=w(ks[12], (1,)),
    )


def prepare_params(params, cfg):
    """One-time bf16 cast / padding / block-diag expansion (review item 5)."""
    dp = {}
    for tag, g in (("1", cfg["g1"]), ("2", cfg["g2"])):
        w9 = params["w" + tag].reshape(3, 3, g["cin"], g["cout"])
        eye = jnp.eye(g["tw"], dtype=jnp.float32)
        wbig = jnp.stack([jnp.kron(eye, w9[di, dj])
                          for di in range(3) for dj in range(3)])
        dp["wbig" + tag] = wbig.astype(jnp.bfloat16)      # (9, TW*Cin, TW*Cout)
        dp["bt" + tag] = jnp.tile(params["b" + tag], g["tw"]).reshape(
            1, g["tw"] * g["cout"]).astype(jnp.float32)
    # feature_net (+ feature rows of fc[0])
    F = params["fw1"].shape[0]
    Fp = _round_up(F, 8)
    dp["fw1_p"] = jnp.pad(params["fw1"].astype(jnp.bfloat16), ((0, Fp - F), (0, 0)))
    dp["fb1_p"] = params["fb1"].astype(jnp.float32).reshape(1, -1)
    dp["fw2_p"] = params["fw2"].astype(jnp.bfloat16)
    dp["fb2_p"] = params["fb2"].astype(jnp.float32).reshape(1, -1)
    dp["cw1_feat_p"] = params["cw1_feat"].astype(jnp.bfloat16)
    dp["cb1_p"] = params["cb1"].astype(jnp.float32).reshape(1, -1)
    # head (image rows of fc[0]) and fc[2]
    dp["cw1_img_p"] = _pad_linear_weight(params["cw1_img"], HEAD_K_SPLITS)
    dp["cw2_p"] = _pad_linear_weight(params["cw2"], 1)
    n2 = params["cw2"].shape[1]
    dp["cb2_p"] = jnp.pad(params["cb2"].astype(jnp.float32).reshape(1, n2),
                          ((0, 0), (0, 128 - n2)))
    return dp


def convnet_forward(dparams, img, tab, *, cfg):
    g1, g2 = cfg["g1"], cfg["g2"]
    # conv stack: bf16 activations, f32 accumulation inside the kernels
    x = jnp.transpose(img, (0, 2, 3, 1)).astype(jnp.bfloat16)       # NCHW->NHWC
    x = conv2d_relu_pallas(x, dparams["wbig1"], dparams["bt1"], g1)  # (N,.,.,16)
    x = maxpool2x2(x)
    x = conv2d_relu_pallas(x, dparams["wbig2"], dparams["bt2"], g2)  # (N,.,.,32)
    x = maxpool2x2(x)
    n = x.shape[0]
    x_img = x.reshape(n, -1)            # NHWC flatten — no relayout transpose

    # feature net + feature-half of fc[0], fused into one kernel
    head_bias = feature_head_partial(tab, dparams)                   # (n,128) f32

    # head: relu(x_img @ cw1_img + head_bias) @ cw2 + cb2
    z = linear_pallas(x_img, dparams["cw1_img_p"], head_bias, 128,
                      relu=True, per_row_bias=True, k_splits=HEAD_K_SPLITS)
    z = linear_pallas(z, dparams["cw2_p"], dparams["cb2_p"], 1,
                      relu=False, per_row_bias=False)                # (n, 1)
    return jnp.squeeze(z)                                            # .squeeze()


def convnet_reference(params, img, tab):
    """Pure-JAX f32 reference (same weight-layout conventions)."""
    w1 = params["w1"].reshape(3, 3, 3, 16)     # HWIO
    w2 = params["w2"].reshape(3, 3, 16, 32)

    def conv(x, w, b):
        y = jax.lax.conv_general_dilated(
            x, w, (1, 1), "VALID", dimension_numbers=("NHWC", "HWIO", "NHWC"))
        return jax.nn.relu(y + b)

    def pool(x):
        n, h, w, c = x.shape
        x = x[:, : h // 2 * 2, : w // 2 * 2, :]
        return x.reshape(n, h // 2, 2, w // 2, 2, c).max(axis=(2, 4))

    x = jnp.transpose(img, (0, 2, 3, 1))
    x = pool(conv(x, w1, params["b1"]))
    x = pool(conv(x, w2, params["b2"]))
    x_img = x.reshape(x.shape[0], -1)
    h = jax.nn.relu(tab @ params["fw1"] + params["fb1"])
    h = jax.nn.relu(h @ params["fw2"] + params["fb2"])
    z = jax.nn.relu(x_img @ params["cw1_img"] + h @ params["cw1_feat"]
                    + params["cb1"])
    return jnp.squeeze(z @ params["cw2"] + params["cb2"])


if __name__ == "__main__":
    key = jax.random.PRNGKey(0)
    k_img, k_tab, k_par = jax.random.split(key, 3)

    batch = 2
    img_hw = 32                       # small stand-in for the 256x256 probe size
    feature_dimension = 8
    cfg = make_config(img_hw)         # conv_out_dim = 32*6*6 = 1152

    img = jax.random.normal(k_img, (batch, 3, img_hw, img_hw), dtype=jnp.float32)
    tab = jax.random.normal(k_tab, (batch, feature_dimension), dtype=jnp.float32)
    params = init_params(k_par, feature_dimension, cfg["conv_out_dim"])
    dparams = prepare_params(params, cfg)      # one-time layout prep (item 5)

    fwd = jax.jit(functools.partial(convnet_forward, cfg=cfg))
    out = fwd(dparams, img, tab)
    jax.block_until_ready(out)
    assert out.shape == (batch,), out.shape

    # Tolerance-asserted pure-JAX f32 reference (bf16 MXU operands, f32 accum).
    ref = convnet_reference(params, img, tab)
    max_err = float(jnp.max(jnp.abs(out - ref)))
    tol = 5e-2 * max(1.0, float(jnp.max(jnp.abs(ref))))
    assert max_err < tol, f"mismatch vs f32 reference: {max_err} >= {tol}"

    print("KERNEL_OK")
</pallas_src>

<mosaic_0001>
module attributes {stable_mosaic.version = 11 : i64} {
  func.func @_conv3x3_relu_kernel(%arg0: i32, %arg1: memref<1x32x96xbf16, #tpu.memory_space<vmem>>, %arg2: memref<9x90x480xbf16, #tpu.memory_space<vmem>>, %arg3: memref<1x480xf32, #tpu.memory_space<vmem>>, %arg4: memref<1x30x480xbf16, #tpu.memory_space<vmem>>) attributes {dimension_semantics = [#tpu.dimension_semantics<parallel>], iteration_bounds = array<i64: 2>, scalar_prefetch = 0 : i64, scratch_operands = 0 : i64, tpu.core_type = #tpu.core_type<tc>, window_params = [{transform_indices = @transform_0, window_bounds = array<i64: 1, 32, 96>}, {pipeline_mode = #tpu.pipeline_mode<synchronous>, transform_indices = @transform_1, window_bounds = array<i64: 9, 90, 480>}, {pipeline_mode = #tpu.pipeline_mode<synchronous>, transform_indices = @transform_2, window_bounds = array<i64: 1, 480>}, {transform_indices = @transform_3, window_bounds = array<i64: 1, 30, 480>}]} {
    %c0 = arith.constant 0 : index
    %c0_0 = arith.constant 0 : index
    %0 = vector.load %arg3[%c0, %c0_0] : memref<1x480xf32, #tpu.memory_space<vmem>>, vector<1x480xf32>
    %cst = arith.constant 0.000000e+00 : f32
    %1 = vector.broadcast %cst : f32 to vector<30x480xf32>
    %c0_1 = arith.constant 0 : index
    %c0_2 = arith.constant 0 : index
    %c0_3 = arith.constant 0 : index
    %2 = vector.load %arg1[%c0_1, %c0_2, %c0_3] : memref<1x32x96xbf16, #tpu.memory_space<vmem>>, vector<1x30x90xbf16>
    %3 = vector.shape_cast %2 : vector<1x30x90xbf16> to vector<30x90xbf16>
    %c0_4 = arith.constant 0 : index
    %c0_5 = arith.constant 0 : index
    %c0_6 = arith.constant 0 : index
    %4 = vector.load %arg2[%c0_4, %c0_5, %c0_6] : memref<9x90x480xbf16, #tpu.memory_space<vmem>>, vector<1x90x480xbf16>
    %5 = vector.shape_cast %4 : vector<1x90x480xbf16> to vector<90x480xbf16>
    %cst_7 = arith.constant dense<0.000000e+00> : vector<30x480xf32>
    %6 = tpu.matmul %3, %5, %cst_7 {dimension_numbers = #tpu.dot_dimension_numbers<[1], [0], [0], [1], [0, 0, 1, 1], [], []>} : vector<30x90xbf16>, vector<90x480xbf16>, vector<30x480xf32> -> vector<30x480xf32>
    %7 = arith.addf %1, %6 : vector<30x480xf32>
    %c0_8 = arith.constant 0 : index
    %c0_9 = arith.constant 0 : index
    %c3 = arith.constant 3 : index
    %8 = vector.load %arg1[%c0_8, %c0_9, %c3] : memref<1x32x96xbf16, #tpu.memory_space<vmem>>, vector<1x30x90xbf16>
    %9 = vector.shape_cast %8 : vector<1x30x90xbf16> to vector<30x90xbf16>
    %c1 = arith.constant 1 : index
    %c0_10 = arith.constant 0 : index
    %c0_11 = arith.constant 0 : index
    %10 = vector.load %arg2[%c1, %c0_10, %c0_11] : memref<9x90x480xbf16, #tpu.memory_space<vmem>>, vector<1x90x480xbf16>
    %11 = vector.shape_cast %10 : vector<1x90x480xbf16> to vector<90x480xbf16>
    %cst_12 = arith.constant dense<0.000000e+00> : vector<30x480xf32>
    %12 = tpu.matmul %9, %11, %cst_12 {dimension_numbers = #tpu.dot_dimension_numbers<[1], [0], [0], [1], [0, 0, 1, 1], [], []>} : vector<30x90xbf16>, vector<90x480xbf16>, vector<30x480xf32> -> vector<30x480xf32>
    %13 = arith.addf %7, %12 : vector<30x480xf32>
    %c0_13 = arith.constant 0 : index
    %c0_14 = arith.constant 0 : index
    %c6 = arith.constant 6 : index
    %14 = vector.load %arg1[%c0_13, %c0_14, %c6] : memref<1x32x96xbf16, #tpu.memory_space<vmem>>, vector<1x30x90xbf16>
    %15 = vector.shape_cast %14 : vector<1x30x90xbf16> to vector<30x90xbf16>
    %c2 = arith.constant 2 : index
    %c0_15 = arith.constant 0 : index
    %c0_16 = arith.constant 0 : index
    %16 = vector.load %arg2[%c2, %c0_15, %c0_16] : memref<9x90x480xbf16, #tpu.memory_space<vmem>>, vector<1x90x480xbf16>
    %17 = vector.shape_cast %16 : vector<1x90x480xbf16> to vector<90x480xbf16>
    %cst_17 = arith.constant dense<0.000000e+00> : vector<30x480xf32>
    %18 = tpu.matmul %15, %17, %cst_17 {dimension_numbers = #tpu.dot_dimension_numbers<[1], [0], [0], [1], [0, 0, 1, 1], [], []>} : vector<30x90xbf16>, vector<90x480xbf16>, vector<30x480xf32> -> vector<30x480xf32>
    %19 = arith.addf %13, %18 : vector<30x480xf32>
    %c0_18 = arith.constant 0 : index
    %c1_19 = arith.constant 1 : index
    %c0_20 = arith.constant 0 : index
    %20 = vector.load %arg1[%c0_18, %c1_19, %c0_20] : memref<1x32x96xbf16, #tpu.memory_space<vmem>>, vector<1x30x90xbf16>
    %21 = vector.shape_cast %20 : vector<1x30x90xbf16> to vector<30x90xbf16>
    %c3_21 = arith.constant 3 : index
    %c0_22 = arith.constant 0 : index
    %c0_23 = arith.constant 0 : index
    %22 = vector.load %arg2[%c3_21, %c0_22, %c0_23] : memref<9x90x480xbf16, #tpu.memory_space<vmem>>, vector<1x90x480xbf16>
    %23 = vector.shape_cast %22 : vector<1x90x480xbf16> to vector<90x480xbf16>
    %cst_24 = arith.constant dense<0.000000e+00> : vector<30x480xf32>
    %24 = tpu.matmul %21, %23, %cst_24 {dimension_numbers = #tpu.dot_dimension_numbers<[1], [0], [0], [1], [0, 0, 1, 1], [], []>} : vector<30x90xbf16>, vector<90x480xbf16>, vector<30x480xf32> -> vector<30x480xf32>
    %25 = arith.addf %19, %24 : vector<30x480xf32>
    %c0_25 = arith.constant 0 : index
    %c1_26 = arith.constant 1 : index
    %c3_27 = arith.constant 3 : index
    %26 = vector.load %arg1[%c0_25, %c1_26, %c3_27] : memref<1x32x96xbf16, #tpu.memory_space<vmem>>, vector<1x30x90xbf16>
    %27 = vector.shape_cast %26 : vector<1x30x90xbf16> to vector<30x90xbf16>
    %c4 = arith.constant 4 : index
    %c0_28 = arith.constant 0 : index
    %c0_29 = arith.constant 0 : index
    %28 = vector.load %arg2[%c4, %c0_28, %c0_29] : memref<9x90x480xbf16, #tpu.memory_space<vmem>>, vector<1x90x480xbf16>
    %29 = vector.shape_cast %28 : vector<1x90x480xbf16> to vector<90x480xbf16>
    %cst_30 = arith.constant dense<0.000000e+00> : vector<30x480xf32>
    %30 = tpu.matmul %27, %29, %cst_30 {dimension_numbers = #tpu.dot_dimension_numbers<[1], [0], [0], [1], [0, 0, 1, 1], [], []>} : vector<30x90xbf16>, vector<90x480xbf16>, vector<30x480xf32> -> vector<30x480xf32>
    %31 = arith.addf %25, %30 : vector<30x480xf32>
    %c0_31 = arith.constant 0 : index
    %c1_32 = arith.constant 1 : index
    %c6_33 = arith.constant 6 : index
    %32 = vector.load %arg1[%c0_31, %c1_32, %c6_33] : memref<1x32x96xbf16, #tpu.memory_space<vmem>>, vector<1x30x90xbf16>
    %33 = vector.shape_cast %32 : vector<1x30x90xbf16> to vector<30x90xbf16>
    %c5 = arith.constant 5 : index
    %c0_34 = arith.constant 0 : index
    %c0_35 = arith.constant 0 : index
    %34 = vector.load %arg2[%c5, %c0_34, %c0_35] : memref<9x90x480xbf16, #tpu.memory_space<vmem>>, vector<1x90x480xbf16>
    %35 = vector.shape_cast %34 : vector<1x90x480xbf16> to vector<90x480xbf16>
    %cst_36 = arith.constant dense<0.000000e+00> : vector<30x480xf32>
    %36 = tpu.matmul %33, %35, %cst_36 {dimension_numbers = #tpu.dot_dimension_numbers<[1], [0], [0], [1], [0, 0, 1, 1], [], []>} : vector<30x90xbf16>, vector<90x480xbf16>, vector<30x480xf32> -> vector<30x480xf32>
    %37 = arith.addf %31, %36 : vector<30x480xf32>
    %c0_37 = arith.constant 0 : index
    %c2_38 = arith.constant 2 : index
    %c0_39 = arith.constant 0 : index
    %38 = vector.load %arg1[%c0_37, %c2_38, %c0_39] : memref<1x32x96xbf16, #tpu.memory_space<vmem>>, vector<1x30x90xbf16>
    %39 = vector.shape_cast %38 : vector<1x30x90xbf16> to vector<30x90xbf16>
    %c6_40 = arith.constant 6 : index
    %c0_41 = arith.constant 0 : index
    %c0_42 = arith.constant 0 : index
    %40 = vector.load %arg2[%c6_40, %c0_41, %c0_42] : memref<9x90x480xbf16, #tpu.memory_space<vmem>>, vector<1x90x480xbf16>
    %41 = vector.shape_cast %40 : vector<1x90x480xbf16> to vector<90x480xbf16>
    %cst_43 = arith.constant dense<0.000000e+00> : vector<30x480xf32>
    %42 = tpu.matmul %39, %41, %cst_43 {dimension_numbers = #tpu.dot_dimension_numbers<[1], [0], [0], [1], [0, 0, 1, 1], [], []>} : vector<30x90xbf16>, vector<90x480xbf16>, vector<30x480xf32> -> vector<30x480xf32>
    %43 = arith.addf %37, %42 : vector<30x480xf32>
    %c0_44 = arith.constant 0 : index
    %c2_45 = arith.constant 2 : index
    %c3_46 = arith.constant 3 : index
    %44 = vector.load %arg1[%c0_44, %c2_45, %c3_46] : memref<1x32x96xbf16, #tpu.memory_space<vmem>>, vector<1x30x90xbf16>
    %45 = vector.shape_cast %44 : vector<1x30x90xbf16> to vector<30x90xbf16>
    %c7 = arith.constant 7 : index
    %c0_47 = arith.constant 0 : index
    %c0_48 = arith.constant 0 : index
    %46 = vector.load %arg2[%c7, %c0_47, %c0_48] : memref<9x90x480xbf16, #tpu.memory_space<vmem>>, vector<1x90x480xbf16>
    %47 = vector.shape_cast %46 : vector<1x90x480xbf16> to vector<90x480xbf16>
    %cst_49 = arith.constant dense<0.000000e+00> : vector<30x480xf32>
    %48 = tpu.matmul %45, %47, %cst_49 {dimension_numbers = #tpu.dot_dimension_numbers<[1], [0], [0], [1], [0, 0, 1, 1], [], []>} : vector<30x90xbf16>, vector<90x480xbf16>, vector<30x480xf32> -> vector<30x480xf32>
    %49 = arith.addf %43, %48 : vector<30x480xf32>
    %c0_50 = arith.constant 0 : index
    %c2_51 = arith.constant 2 : index
    %c6_52 = arith.constant 6 : index
    %50 = vector.load %arg1[%c0_50, %c2_51, %c6_52] : memref<1x32x96xbf16, #tpu.memory_space<vmem>>, vector<1x30x90xbf16>
    %51 = vector.shape_cast %50 : vector<1x30x90xbf16> to vector<30x90xbf16>
    %c8 = arith.constant 8 : index
    %c0_53 = arith.constant 0 : index
    %c0_54 = arith.constant 0 : index
    %52 = vector.load %arg2[%c8, %c0_53, %c0_54] : memref<9x90x480xbf16, #tpu.memory_space<vmem>>, vector<1x90x480xbf16>
    %53 = vector.shape_cast %52 : vector<1x90x480xbf16> to vector<90x480xbf16>
    %cst_55 = arith.constant dense<0.000000e+00> : vector<30x480xf32>
    %54 = tpu.matmul %51, %53, %cst_55 {dimension_numbers = #tpu.dot_dimension_numbers<[1], [0], [0], [1], [0, 0, 1, 1], [], []>} : vector<30x90xbf16>, vector<90x480xbf16>, vector<30x480xf32> -> vector<30x480xf32>
    %55 = arith.addf %49, %54 : vector<30x480xf32>
    %56 = vector.broadcast %0 : vector<1x480xf32> to vector<30x480xf32>
    %57 = arith.addf %55, %56 : vector<30x480xf32>
    %cst_56 = arith.constant 0.000000e+00 : f32
    %58 = vector.broadcast %cst_56 : f32 to vector<30x480xf32>
    %59 = arith.maximumf %57, %58 : vector<30x480xf32>
    %60 = arith.truncf %59 : vector<30x480xf32> to vector<30x480xbf16>
    %c0_57 = arith.constant 0 : index
    %c0_58 = arith.constant 0 : index
    %c0_59 = arith.constant 0 : index
    %61 = vector.load %arg4[%c0_57, %c0_58, %c0_59] : memref<1x30x480xbf16, #tpu.memory_space<vmem>>, vector<1x30x480xbf16>
    %62 = vector.shape_cast %61 : vector<1x30x480xbf16> to vector<30x480xbf16>
    %63 = vector.shape_cast %60 : vector<30x480xbf16> to vector<1x30x480xbf16>
    tpu.vector_store %arg4[%c0_57, %c0_58, %c0_59], %63 {strides = array<i32>} : memref<1x30x480xbf16, #tpu.memory_space<vmem>>, vector<1x30x480xbf16>,
    return
  }
  func.func @transform_0(%arg0: i32) -> (i32, i32, i32) {
    %c0_i32 = arith.constant 0 : i32
    %c0_i32_0 = arith.constant 0 : i32
    %c0_i32_1 = arith.constant 0 : i32
    return %arg0, %c0_i32, %c0_i32_0 : i32, i32, i32
  }
  func.func @transform_1(%arg0: i32) -> (i32, i32, i32) {
    %c0_i32 = arith.constant 0 : i32
    %c0_i32_0 = arith.constant 0 : i32
    %c0_i32_1 = arith.constant 0 : i32
    %c0_i32_2 = arith.constant 0 : i32
    return %c0_i32, %c0_i32_0, %c0_i32_1 : i32, i32, i32
  }
  func.func @transform_2(%arg0: i32) -> (i32, i32) {
    %c0_i32 = arith.constant 0 : i32
    %c0_i32_0 = arith.constant 0 : i32
    %c0_i32_1 = arith.constant 0 : i32
    return %c0_i32, %c0_i32_0 : i32, i32
  }
  func.func @transform_3(%arg0: i32) -> (i32, i32, i32) {
    %c0_i32 = arith.constant 0 : i32
    %c0_i32_0 = arith.constant 0 : i32
    %c0_i32_1 = arith.constant 0 : i32
    return %arg0, %c0_i32, %c0_i32_0 : i32, i32, i32
  }
}

module attributes {stable_mosaic.version = 11 : i64} {
  func.func @_max4_kernel(%arg0: i32, %arg1: memref<32x240xbf16, #tpu.memory_space<vmem>>, %arg2: memref<32x240xbf16, #tpu.memory_space<vmem>>, %arg3: memref<32x240xbf16, #tpu.memory_space<vmem>>, %arg4: memref<32x240xbf16, #tpu.memory_space<vmem>>, %arg5: memref<32x240xbf16, #tpu.memory_space<vmem>>) attributes {dimension_semantics = [#tpu.dimension_semantics<parallel>], iteration_bounds = array<i64: 1>, scalar_prefetch = 0 : i64, scratch_operands = 0 : i64, tpu.core_type = #tpu.core_type<tc>, window_params = [{transform_indices = @transform_0, window_bounds = array<i64: 32, 240>}, {transform_indices = @transform_1, window_bounds = array<i64: 32, 240>}, {transform_indices = @transform_2, window_bounds = array<i64: 32, 240>}, {transform_indices = @transform_3, window_bounds = array<i64: 32, 240>}, {transform_indices = @transform_4, window_bounds = array<i64: 32, 240>}]} {
    %c0 = arith.constant 0 : index
    %c0_0 = arith.constant 0 : index
    %0 = vector.load %arg1[%c0, %c0_0] : memref<32x240xbf16, #tpu.memory_space<vmem>>, vector<32x240xbf16>
    %c0_1 = arith.constant 0 : index
    %c0_2 = arith.constant 0 : index
    %1 = vector.load %arg2[%c0_1, %c0_2] : memref<32x240xbf16, #tpu.memory_space<vmem>>, vector<32x240xbf16>
    %2 = arith.maximumf %0, %1 : vector<32x240xbf16>
    %c0_3 = arith.constant 0 : index
    %c0_4 = arith.constant 0 : index
    %3 = vector.load %arg3[%c0_3, %c0_4] : memref<32x240xbf16, #tpu.memory_space<vmem>>, vector<32x240xbf16>
    %c0_5 = arith.constant 0 : index
    %c0_6 = arith.constant 0 : index
    %4 = vector.load %arg4[%c0_5, %c0_6] : memref<32x240xbf16, #tpu.memory_space<vmem>>, vector<32x240xbf16>
    %5 = arith.maximumf %3, %4 : vector<32x240xbf16>
    %6 = arith.maximumf %2, %5 : vector<32x240xbf16>
    %c0_7 = arith.constant 0 : index
    %c0_8 = arith.constant 0 : index
    %7 = vector.load %arg5[%c0_7, %c0_8] : memref<32x240xbf16, #tpu.memory_space<vmem>>, vector<32x240xbf16>
    tpu.vector_store %arg5[%c0_7, %c0_8], %6 {strides = array<i32>} : memref<32x240xbf16, #tpu.memory_space<vmem>>, vector<32x240xbf16>,
    return
  }
  func.func @transform_0(%arg0: i32) -> (i32, i32) {
    %c0_i32 = arith.constant 0 : i32
    %c0_i32_0 = arith.constant 0 : i32
    return %arg0, %c0_i32 : i32, i32
  }
  func.func @transform_1(%arg0: i32) -> (i32, i32) {
    %c0_i32 = arith.constant 0 : i32
    %c0_i32_0 = arith.constant 0 : i32
    return %arg0, %c0_i32 : i32, i32
  }
  func.func @transform_2(%arg0: i32) -> (i32, i32) {
    %c0_i32 = arith.constant 0 : i32
    %c0_i32_0 = arith.constant 0 : i32
    return %arg0, %c0_i32 : i32, i32
  }
  func.func @transform_3(%arg0: i32) -> (i32, i32) {
    %c0_i32 = arith.constant 0 : i32
    %c0_i32_0 = arith.constant 0 : i32
    return %arg0, %c0_i32 : i32, i32
  }
  func.func @transform_4(%arg0: i32) -> (i32, i32) {
    %c0_i32 = arith.constant 0 : i32
    %c0_i32_0 = arith.constant 0 : i32
    return %arg0, %c0_i32 : i32, i32
  }
}

module attributes {stable_mosaic.version = 11 : i64} {
  func.func @_conv3x3_relu_kernel(%arg0: i32, %arg1: memref<1x15x240xbf16, #tpu.memory_space<vmem>>, %arg2: memref<9x208x416xbf16, #tpu.memory_space<vmem>>, %arg3: memref<1x416xf32, #tpu.memory_space<vmem>>, %arg4: memref<1x13x416xbf16, #tpu.memory_space<vmem>>) attributes {dimension_semantics = [#tpu.dimension_semantics<parallel>], iteration_bounds = array<i64: 2>, scalar_prefetch = 0 : i64, scratch_operands = 0 : i64, tpu.core_type = #tpu.core_type<tc>, window_params = [{transform_indices = @transform_0, window_bounds = array<i64: 1, 15, 240>}, {pipeline_mode = #tpu.pipeline_mode<synchronous>, transform_indices = @transform_1, window_bounds = array<i64: 9, 208, 416>}, {pipeline_mode = #tpu.pipeline_mode<synchronous>, transform_indices = @transform_2, window_bounds = array<i64: 1, 416>}, {transform_indices = @transform_3, window_bounds = array<i64: 1, 13, 416>}]} {
    %c0 = arith.constant 0 : index
    %c0_0 = arith.constant 0 : index
    %0 = vector.load %arg3[%c0, %c0_0] : memref<1x416xf32, #tpu.memory_space<vmem>>, vector<1x416xf32>
    %cst = arith.constant 0.000000e+00 : f32
    %1 = vector.broadcast %cst : f32 to vector<13x416xf32>
    %c0_1 = arith.constant 0 : index
    %c0_2 = arith.constant 0 : index
    %c0_3 = arith.constant 0 : index
    %2 = vector.load %arg1[%c0_1, %c0_2, %c0_3] : memref<1x15x240xbf16, #tpu.memory_space<vmem>>, vector<1x13x208xbf16>
    %3 = vector.shape_cast %2 : vector<1x13x208xbf16> to vector<13x208xbf16>
    %c0_4 = arith.constant 0 : index
    %c0_5 = arith.constant 0 : index
    %c0_6 = arith.constant 0 : index
    %4 = vector.load %arg2[%c0_4, %c0_5, %c0_6] : memref<9x208x416xbf16, #tpu.memory_space<vmem>>, vector<1x208x416xbf16>
    %5 = vector.shape_cast %4 : vector<1x208x416xbf16> to vector<208x416xbf16>
    %cst_7 = arith.constant dense<0.000000e+00> : vector<13x416xf32>
    %6 = tpu.matmul %3, %5, %cst_7 {dimension_numbers = #tpu.dot_dimension_numbers<[1], [0], [0], [1], [0, 0, 1, 1], [], []>} : vector<13x208xbf16>, vector<208x416xbf16>, vector<13x416xf32> -> vector<13x416xf32>
    %7 = arith.addf %1, %6 : vector<13x416xf32>
    %c0_8 = arith.constant 0 : index
    %c0_9 = arith.constant 0 : index
    %c16 = arith.constant 16 : index
    %8 = vector.load %arg1[%c0_8, %c0_9, %c16] : memref<1x15x240xbf16, #tpu.memory_space<vmem>>, vector<1x13x208xbf16>
    %9 = vector.shape_cast %8 : vector<1x13x208xbf16> to vector<13x208xbf16>
    %c1 = arith.constant 1 : index
    %c0_10 = arith.constant 0 : index
    %c0_11 = arith.constant 0 : index
    %10 = vector.load %arg2[%c1, %c0_10, %c0_11] : memref<9x208x416xbf16, #tpu.memory_space<vmem>>, vector<1x208x416xbf16>
    %11 = vector.shape_cast %10 : vector<1x208x416xbf16> to vector<208x416xbf16>
    %cst_12 = arith.constant dense<0.000000e+00> : vector<13x416xf32>
    %12 = tpu.matmul %9, %11, %cst_12 {dimension_numbers = #tpu.dot_dimension_numbers<[1], [0], [0], [1], [0, 0, 1, 1], [], []>} : vector<13x208xbf16>, vector<208x416xbf16>, vector<13x416xf32> -> vector<13x416xf32>
    %13 = arith.addf %7, %12 : vector<13x416xf32>
    %c0_13 = arith.constant 0 : index
    %c0_14 = arith.constant 0 : index
    %c32 = arith.constant 32 : index
    %14 = vector.load %arg1[%c0_13, %c0_14, %c32] : memref<1x15x240xbf16, #tpu.memory_space<vmem>>, vector<1x13x208xbf16>
    %15 = vector.shape_cast %14 : vector<1x13x208xbf16> to vector<13x208xbf16>
    %c2 = arith.constant 2 : index
    %c0_15 = arith.constant 0 : index
    %c0_16 = arith.constant 0 : index
    %16 = vector.load %arg2[%c2, %c0_15, %c0_16] : memref<9x208x416xbf16, #tpu.memory_space<vmem>>, vector<1x208x416xbf16>
    %17 = vector.shape_cast %16 : vector<1x208x416xbf16> to vector<208x416xbf16>
    %cst_17 = arith.constant dense<0.000000e+00> : vector<13x416xf32>
    %18 = tpu.matmul %15, %17, %cst_17 {dimension_numbers = #tpu.dot_dimension_numbers<[1], [0], [0], [1], [0, 0, 1, 1], [], []>} : vector<13x208xbf16>, vector<208x416xbf16>, vector<13x416xf32> -> vector<13x416xf32>
    %19 = arith.addf %13, %18 : vector<13x416xf32>
    %c0_18 = arith.constant 0 : index
    %c1_19 = arith.constant 1 : index
    %c0_20 = arith.constant 0 : index
    %20 = vector.load %arg1[%c0_18, %c1_19, %c0_20] : memref<1x15x240xbf16, #tpu.memory_space<vmem>>, vector<1x13x208xbf16>
    %21 = vector.shape_cast %20 : vector<1x13x208xbf16> to vector<13x208xbf16>
    %c3 = arith.constant 3 : index
    %c0_21 = arith.constant 0 : index
    %c0_22 = arith.constant 0 : index
    %22 = vector.load %arg2[%c3, %c0_21, %c0_22] : memref<9x208x416xbf16, #tpu.memory_space<vmem>>, vector<1x208x416xbf16>
    %23 = vector.shape_cast %22 : vector<1x208x416xbf16> to vector<208x416xbf16>
    %cst_23 = arith.constant dense<0.000000e+00> : vector<13x416xf32>
    %24 = tpu.matmul %21, %23, %cst_23 {dimension_numbers = #tpu.dot_dimension_numbers<[1], [0], [0], [1], [0, 0, 1, 1], [], []>} : vector<13x208xbf16>, vector<208x416xbf16>, vector<13x416xf32> -> vector<13x416xf32>
    %25 = arith.addf %19, %24 : vector<13x416xf32>
    %c0_24 = arith.constant 0 : index
    %c1_25 = arith.constant 1 : index
    %c16_26 = arith.constant 16 : index
    %26 = vector.load %arg1[%c0_24, %c1_25, %c16_26] : memref<1x15x240xbf16, #tpu.memory_space<vmem>>, vector<1x13x208xbf16>
    %27 = vector.shape_cast %26 : vector<1x13x208xbf16> to vector<13x208xbf16>
    %c4 = arith.constant 4 : index
    %c0_27 = arith.constant 0 : index
    %c0_28 = arith.constant 0 : index
    %28 = vector.load %arg2[%c4, %c0_27, %c0_28] : memref<9x208x416xbf16, #tpu.memory_space<vmem>>, vector<1x208x416xbf16>
    %29 = vector.shape_cast %28 : vector<1x208x416xbf16> to vector<208x416xbf16>
    %cst_29 = arith.constant dense<0.000000e+00> : vector<13x416xf32>
    %30 = tpu.matmul %27, %29, %cst_29 {dimension_numbers = #tpu.dot_dimension_numbers<[1], [0], [0], [1], [0, 0, 1, 1], [], []>} : vector<13x208xbf16>, vector<208x416xbf16>, vector<13x416xf32> -> vector<13x416xf32>
    %31 = arith.addf %25, %30 : vector<13x416xf32>
    %c0_30 = arith.constant 0 : index
    %c1_31 = arith.constant 1 : index
    %c32_32 = arith.constant 32 : index
    %32 = vector.load %arg1[%c0_30, %c1_31, %c32_32] : memref<1x15x240xbf16, #tpu.memory_space<vmem>>, vector<1x13x208xbf16>
    %33 = vector.shape_cast %32 : vector<1x13x208xbf16> to vector<13x208xbf16>
    %c5 = arith.constant 5 : index
    %c0_33 = arith.constant 0 : index
    %c0_34 = arith.constant 0 : index
    %34 = vector.load %arg2[%c5, %c0_33, %c0_34] : memref<9x208x416xbf16, #tpu.memory_space<vmem>>, vector<1x208x416xbf16>
    %35 = vector.shape_cast %34 : vector<1x208x416xbf16> to vector<208x416xbf16>
    %cst_35 = arith.constant dense<0.000000e+00> : vector<13x416xf32>
    %36 = tpu.matmul %33, %35, %cst_35 {dimension_numbers = #tpu.dot_dimension_numbers<[1], [0], [0], [1], [0, 0, 1, 1], [], []>} : vector<13x208xbf16>, vector<208x416xbf16>, vector<13x416xf32> -> vector<13x416xf32>
    %37 = arith.addf %31, %36 : vector<13x416xf32>
    %c0_36 = arith.constant 0 : index
    %c2_37 = arith.constant 2 : index
    %c0_38 = arith.constant 0 : index
    %38 = vector.load %arg1[%c0_36, %c2_37, %c0_38] : memref<1x15x240xbf16, #tpu.memory_space<vmem>>, vector<1x13x208xbf16>
    %39 = vector.shape_cast %38 : vector<1x13x208xbf16> to vector<13x208xbf16>
    %c6 = arith.constant 6 : index
    %c0_39 = arith.constant 0 : index
    %c0_40 = arith.constant 0 : index
    %40 = vector.load %arg2[%c6, %c0_39, %c0_40] : memref<9x208x416xbf16, #tpu.memory_space<vmem>>, vector<1x208x416xbf16>
    %41 = vector.shape_cast %40 : vector<1x208x416xbf16> to vector<208x416xbf16>
    %cst_41 = arith.constant dense<0.000000e+00> : vector<13x416xf32>
    %42 = tpu.matmul %39, %41, %cst_41 {dimension_numbers = #tpu.dot_dimension_numbers<[1], [0], [0], [1], [0, 0, 1, 1], [], []>} : vector<13x208xbf16>, vector<208x416xbf16>, vector<13x416xf32> -> vector<13x416xf32>
    %43 = arith.addf %37, %42 : vector<13x416xf32>
    %c0_42 = arith.constant 0 : index
    %c2_43 = arith.constant 2 : index
    %c16_44 = arith.constant 16 : index
    %44 = vector.load %arg1[%c0_42, %c2_43, %c16_44] : memref<1x15x240xbf16, #tpu.memory_space<vmem>>, vector<1x13x208xbf16>
    %45 = vector.shape_cast %44 : vector<1x13x208xbf16> to vector<13x208xbf16>
    %c7 = arith.constant 7 : index
    %c0_45 = arith.constant 0 : index
    %c0_46 = arith.constant 0 : index
    %46 = vector.load %arg2[%c7, %c0_45, %c0_46] : memref<9x208x416xbf16, #tpu.memory_space<vmem>>, vector<1x208x416xbf16>
    %47 = vector.shape_cast %46 : vector<1x208x416xbf16> to vector<208x416xbf16>
    %cst_47 = arith.constant dense<0.000000e+00> : vector<13x416xf32>
    %48 = tpu.matmul %45, %47, %cst_47 {dimension_numbers = #tpu.dot_dimension_numbers<[1], [0], [0], [1], [0, 0, 1, 1], [], []>} : vector<13x208xbf16>, vector<208x416xbf16>, vector<13x416xf32> -> vector<13x416xf32>
    %49 = arith.addf %43, %48 : vector<13x416xf32>
    %c0_48 = arith.constant 0 : index
    %c2_49 = arith.constant 2 : index
    %c32_50 = arith.constant 32 : index
    %50 = vector.load %arg1[%c0_48, %c2_49, %c32_50] : memref<1x15x240xbf16, #tpu.memory_space<vmem>>, vector<1x13x208xbf16>
    %51 = vector.shape_cast %50 : vector<1x13x208xbf16> to vector<13x208xbf16>
    %c8 = arith.constant 8 : index
    %c0_51 = arith.constant 0 : index
    %c0_52 = arith.constant 0 : index
    %52 = vector.load %arg2[%c8, %c0_51, %c0_52] : memref<9x208x416xbf16, #tpu.memory_space<vmem>>, vector<1x208x416xbf16>
    %53 = vector.shape_cast %52 : vector<1x208x416xbf16> to vector<208x416xbf16>
    %cst_53 = arith.constant dense<0.000000e+00> : vector<13x416xf32>
    %54 = tpu.matmul %51, %53, %cst_53 {dimension_numbers = #tpu.dot_dimension_numbers<[1], [0], [0], [1], [0, 0, 1, 1], [], []>} : vector<13x208xbf16>, vector<208x416xbf16>, vector<13x416xf32> -> vector<13x416xf32>
    %55 = arith.addf %49, %54 : vector<13x416xf32>
    %56 = vector.broadcast %0 : vector<1x416xf32> to vector<13x416xf32>
    %57 = arith.addf %55, %56 : vector<13x416xf32>
    %cst_54 = arith.constant 0.000000e+00 : f32
    %58 = vector.broadcast %cst_54 : f32 to vector<13x416xf32>
    %59 = arith.maximumf %57, %58 : vector<13x416xf32>
    %60 = arith.truncf %59 : vector<13x416xf32> to vector<13x416xbf16>
    %c0_55 = arith.constant 0 : index
    %c0_56 = arith.constant 0 : index
    %c0_57 = arith.constant 0 : index
    %61 = vector.load %arg4[%c0_55, %c0_56, %c0_57] : memref<1x13x416xbf16, #tpu.memory_space<vmem>>, vector<1x13x416xbf16>
    %62 = vector.shape_cast %61 : vector<1x13x416xbf16> to vector<13x416xbf16>
    %63 = vector.shape_cast %60 : vector<13x416xbf16> to vector<1x13x416xbf16>
    tpu.vector_store %arg4[%c0_55, %c0_56, %c0_57], %63 {strides = array<i32>} : memref<1x13x416xbf16, #tpu.memory_space<vmem>>, vector<1x13x416xbf16>,
    return
  }
  func.func @transform_0(%arg0: i32) -> (i32, i32, i32) {
    %c0_i32 = arith.constant 0 : i32
    %c0_i32_0 = arith.constant 0 : i32
    %c0_i32_1 = arith.constant 0 : i32
    return %arg0, %c0_i32, %c0_i32_0 : i32, i32, i32
  }
  func.func @transform_1(%arg0: i32) -> (i32, i32, i32) {
    %c0_i32 = arith.constant 0 : i32
    %c0_i32_0 = arith.constant 0 : i32
    %c0_i32_1 = arith.constant 0 : i32
    %c0_i32_2 = arith.constant 0 : i32
    return %c0_i32, %c0_i32_0, %c0_i32_1 : i32, i32, i32
  }
  func.func @transform_2(%arg0: i32) -> (i32, i32) {
    %c0_i32 = arith.constant 0 : i32
    %c0_i32_0 = arith.constant 0 : i32
    %c0_i32_1 = arith.constant 0 : i32
    return %c0_i32, %c0_i32_0 : i32, i32
  }
  func.func @transform_3(%arg0: i32) -> (i32, i32, i32) {
    %c0_i32 = arith.constant 0 : i32
    %c0_i32_0 = arith.constant 0 : i32
    %c0_i32_1 = arith.constant 0 : i32
    return %arg0, %c0_i32, %c0_i32_0 : i32, i32, i32
  }
}

module attributes {stable_mosaic.version = 11 : i64} {
  func.func @_max4_kernel(%arg0: i32, %arg1: memref<16x192xbf16, #tpu.memory_space<vmem>>, %arg2: memref<16x192xbf16, #tpu.memory_space<vmem>>, %arg3: memref<16x192xbf16, #tpu.memory_space<vmem>>, %arg4: memref<16x192xbf16, #tpu.memory_space<vmem>>, %arg5: memref<16x192xbf16, #tpu.memory_space<vmem>>) attributes {dimension_semantics = [#tpu.dimension_semantics<parallel>], iteration_bounds = array<i64: 1>, scalar_prefetch = 0 : i64, scratch_operands = 0 : i64, tpu.core_type = #tpu.core_type<tc>, window_params = [{transform_indices = @transform_0, window_bounds = array<i64: 16, 192>}, {transform_indices = @transform_1, window_bounds = array<i64: 16, 192>}, {transform_indices = @transform_2, window_bounds = array<i64: 16, 192>}, {transform_indices = @transform_3, window_bounds = array<i64: 16, 192>}, {transform_indices = @transform_4, window_bounds = array<i64: 16, 192>}]} {
    %c0 = arith.constant 0 : index
    %c0_0 = arith.constant 0 : index
    %0 = vector.load %arg1[%c0, %c0_0] : memref<16x192xbf16, #tpu.memory_space<vmem>>, vector<16x192xbf16>
    %c0_1 = arith.constant 0 : index
    %c0_2 = arith.constant 0 : index
    %1 = vector.load %arg2[%c0_1, %c0_2] : memref<16x192xbf16, #tpu.memory_space<vmem>>, vector<16x192xbf16>
    %2 = arith.maximumf %0, %1 : vector<16x192xbf16>
    %c0_3 = arith.constant 0 : index
    %c0_4 = arith.constant 0 : index
    %3 = vector.load %arg3[%c0_3, %c0_4] : memref<16x192xbf16, #tpu.memory_space<vmem>>, vector<16x192xbf16>
    %c0_5 = arith.constant 0 : index
    %c0_6 = arith.constant 0 : index
    %4 = vector.load %arg4[%c0_5, %c0_6] : memref<16x192xbf16, #tpu.memory_space<vmem>>, vector<16x192xbf16>
    %5 = arith.maximumf %3, %4 : vector<16x192xbf16>
    %6 = arith.maximumf %2, %5 : vector<16x192xbf16>
    %c0_7 = arith.constant 0 : index
    %c0_8 = arith.constant 0 : index
    %7 = vector.load %arg5[%c0_7, %c0_8] : memref<16x192xbf16, #tpu.memory_space<vmem>>, vector<16x192xbf16>
    tpu.vector_store %arg5[%c0_7, %c0_8], %6 {strides = array<i32>} : memref<16x192xbf16, #tpu.memory_space<vmem>>, vector<16x192xbf16>,
    return
  }
  func.func @transform_0(%arg0: i32) -> (i32, i32) {
    %c0_i32 = arith.constant 0 : i32
    %c0_i32_0 = arith.constant 0 : i32
    return %arg0, %c0_i32 : i32, i32
  }
  func.func @transform_1(%arg0: i32) -> (i32, i32) {
    %c0_i32 = arith.constant 0 : i32
    %c0_i32_0 = arith.constant 0 : i32
    return %arg0, %c0_i32 : i32, i32
  }
  func.func @transform_2(%arg0: i32) -> (i32, i32) {
    %c0_i32 = arith.constant 0 : i32
    %c0_i32_0 = arith.constant 0 : i32
    return %arg0, %c0_i32 : i32, i32
  }
  func.func @transform_3(%arg0: i32) -> (i32, i32) {
    %c0_i32 = arith.constant 0 : i32
    %c0_i32_0 = arith.constant 0 : i32
    return %arg0, %c0_i32 : i32, i32
  }
  func.func @transform_4(%arg0: i32) -> (i32, i32) {
    %c0_i32 = arith.constant 0 : i32
    %c0_i32_0 = arith.constant 0 : i32
    return %arg0, %c0_i32 : i32, i32
  }
}

module attributes {stable_mosaic.version = 11 : i64} {
  func.func @_mm_kernel(%arg0: i32, %arg1: i32, %arg2: i32, %arg3: i32, %arg4: memref<16x640xbf16, #tpu.memory_space<vmem>>, %arg5: memref<640x128xbf16, #tpu.memory_space<vmem>>, %arg6: memref<1x128xf32, #tpu.memory_space<vmem>>, %arg7: memref<1x16x128xf32, #tpu.memory_space<vmem>>, %arg8: memref<16x128xf32, #tpu.memory_space<vmem>>) attributes {dimension_semantics = [#tpu.dimension_semantics<parallel>, #tpu.dimension_semantics<parallel>, #tpu.dimension_semantics<parallel>, #tpu.dimension_semantics<arbitrary>], iteration_bounds = array<i64: 2, 1, 1, 1>, scalar_prefetch = 0 : i64, scratch_operands = 1 : i64, tpu.core_type = #tpu.core_type<tc>, window_params = [{transform_indices = @transform_0, window_bounds = array<i64: 16, 640>}, {transform_indices = @transform_1, window_bounds = array<i64: 640, 128>}, {transform_indices = @transform_2, window_bounds = array<i64: 1, 128>}, {transform_indices = @transform_3, window_bounds = array<i64: 1, 16, 128>}]} {
    %c0_i32 = arith.constant 0 : i32
    %0 = arith.cmpi eq, %arg3, %c0_i32 : i32
    %1 = arith.extui %0 : i1 to i32
    %c0_i32_0 = arith.constant 0 : i32
    %2 = arith.cmpi ne, %1, %c0_i32_0 : i32
    scf.if %2 {
      %cst_10 = arith.constant 0.000000e+00 : f32
      %12 = vector.broadcast %cst_10 : f32 to vector<16x128xf32>
      %c0_11 = arith.constant 0 : index
      %c0_12 = arith.constant 0 : index
      %13 = vector.load %arg8[%c0_11, %c0_12] : memref<16x128xf32, #tpu.memory_space<vmem>>, vector<16x128xf32>
      tpu.vector_store %arg8[%c0_11, %c0_12], %12 {strides = array<i32>} : memref<16x128xf32, #tpu.memory_space<vmem>>, vector<16x128xf32>,
    } else {
    }
    %c0 = arith.constant 0 : index
    %c0_1 = arith.constant 0 : index
    %3 = vector.load %arg8[%c0, %c0_1] : memref<16x128xf32, #tpu.memory_space<vmem>>, vector<16x128xf32>
    %c0_2 = arith.constant 0 : index
    %c0_3 = arith.constant 0 : index
    %4 = vector.load %arg4[%c0_2, %c0_3] : memref<16x640xbf16, #tpu.memory_space<vmem>>, vector<16x640xbf16>
    %c0_4 = arith.constant 0 : index
    %c0_5 = arith.constant 0 : index
    %5 = vector.load %arg5[%c0_4, %c0_5] : memref<640x128xbf16, #tpu.memory_space<vmem>>, vector<640x128xbf16>
    %cst = arith.constant dense<0.000000e+00> : vector<16x128xf32>
    %6 = tpu.matmul %4, %5, %cst {dimension_numbers = #tpu.dot_dimension_numbers<[1], [0], [0], [1], [0, 0, 1, 1], [], []>} : vector<16x640xbf16>, vector<640x128xbf16>, vector<16x128xf32> -> vector<16x128xf32>
    %7 = arith.addf %3, %6 : vector<16x128xf32>
    %c0_6 = arith.constant 0 : index
    %c0_7 = arith.constant 0 : index
    %8 = vector.load %arg8[%c0_6, %c0_7] : memref<16x128xf32, #tpu.memory_space<vmem>>, vector<16x128xf32>
    tpu.vector_store %arg8[%c0_6, %c0_7], %7 {strides = array<i32>} : memref<16x128xf32, #tpu.memory_space<vmem>>, vector<16x128xf32>,
    %c0_i32_8 = arith.constant 0 : i32
    %9 = arith.cmpi eq, %arg3, %c0_i32_8 : i32
    %10 = arith.extui %9 : i1 to i32
    %c0_i32_9 = arith.constant 0 : i32
    %11 = arith.cmpi ne, %10, %c0_i32_9 : i32
    scf.if %11 {
      %c0_10 = arith.constant 0 : index
      %c0_11 = arith.constant 0 : index
      %12 = vector.load %arg8[%c0_10, %c0_11] : memref<16x128xf32, #tpu.memory_space<vmem>>, vector<16x128xf32>
      %c0_12 = arith.constant 0 : index
      %c0_13 = arith.constant 0 : index
      %13 = vector.load %arg6[%c0_12, %c0_13] : memref<1x128xf32, #tpu.memory_space<vmem>>, vector<1x128xf32>
      %14 = vector.broadcast %13 : vector<1x128xf32> to vector<16x128xf32>
      %15 = arith.addf %12, %14 : vector<16x128xf32>
      %16 = vector.shape_cast %15 : vector<16x128xf32> to vector<1x16x128xf32>
      %c0_14 = arith.constant 0 : index
      %c0_15 = arith.constant 0 : index
      %c0_16 = arith.constant 0 : index
      %17 = vector.load %arg7[%c0_14, %c0_15, %c0_16] : memref<1x16x128xf32, #tpu.memory_space<vmem>>, vector<1x16x128xf32>
      tpu.vector_store %arg7[%c0_14, %c0_15, %c0_16], %16 {strides = array<i32>} : memref<1x16x128xf32, #tpu.memory_space<vmem>>, vector<1x16x128xf32>,
    } else {
    }
    return
  }
  func.func @transform_0(%arg0: i32, %arg1: i32, %arg2: i32, %arg3: i32) -> (i32, i32) {
    %c1_i32 = arith.constant 1 : i32
    %0 = arith.muli %arg0, %c1_i32 : i32
    %1 = arith.addi %0, %arg3 : i32
    %c0_i32 = arith.constant 0 : i32
    return %arg1, %1 : i32, i32
  }
  func.func @transform_1(%arg0: i32, %arg1: i32, %arg2: i32, %arg3: i32) -> (i32, i32) {
    %c1_i32 = arith.constant 1 : i32
    %0 = arith.muli %arg0, %c1_i32 : i32
    %1 = arith.addi %0, %arg3 : i32
    %c0_i32 = arith.constant 0 : i32
    return %1, %arg2 : i32, i32
  }
  func.func @transform_2(%arg0: i32, %arg1: i32, %arg2: i32, %arg3: i32) -> (i32, i32) {
    %c0_i32 = arith.constant 0 : i32
    %c0_i32_0 = arith.constant 0 : i32
    return %c0_i32, %arg2 : i32, i32
  }
  func.func @transform_3(%arg0: i32, %arg1: i32, %arg2: i32, %arg3: i32) -> (i32, i32, i32) {
    %c0_i32 = arith.constant 0 : i32
    return %arg0, %arg1, %arg2 : i32, i32, i32
  }
}

module attributes {stable_mosaic.version = 11 : i64} {
  func.func @_feature_head_kernel(%arg0: i32, %arg1: memref<16x8xbf16, #tpu.memory_space<vmem>>, %arg2: memref<8x64xbf16, #tpu.memory_space<vmem>>, %arg3: memref<1x64xf32, #tpu.memory_space<vmem>>, %arg4: memref<64x32xbf16, #tpu.memory_space<vmem>>, %arg5: memref<1x32xf32, #tpu.memory_space<vmem>>, %arg6: memref<32x128xbf16, #tpu.memory_space<vmem>>, %arg7: memref<1x128xf32, #tpu.memory_space<vmem>>, %arg8: memref<16x128xf32, #tpu.memory_space<vmem>>) attributes {dimension_semantics = [#tpu.dimension_semantics<arbitrary>], iteration_bounds = array<i64: 1>, scalar_prefetch = 0 : i64, scratch_operands = 0 : i64, tpu.core_type = #tpu.core_type<tc>, window_params = [{pipeline_mode = #tpu.pipeline_mode<synchronous>, transform_indices = @transform_0, window_bounds = array<i64: 16, 8>}, {pipeline_mode = #tpu.pipeline_mode<synchronous>, transform_indices = @transform_1, window_bounds = array<i64: 8, 64>}, {pipeline_mode = #tpu.pipeline_mode<synchronous>, transform_indices = @transform_2, window_bounds = array<i64: 1, 64>}, {pipeline_mode = #tpu.pipeline_mode<synchronous>, transform_indices = @transform_3, window_bounds = array<i64: 64, 32>}, {pipeline_mode = #tpu.pipeline_mode<synchronous>, transform_indices = @transform_4, window_bounds = array<i64: 1, 32>}, {pipeline_mode = #tpu.pipeline_mode<synchronous>, transform_indices = @transform_5, window_bounds = array<i64: 32, 128>}, {pipeline_mode = #tpu.pipeline_mode<synchronous>, transform_indices = @transform_6, window_bounds = array<i64: 1, 128>}, {pipeline_mode = #tpu.pipeline_mode<synchronous>, transform_indices = @transform_7, window_bounds = array<i64: 16, 128>}]} {
    %c0 = arith.constant 0 : index
    %c0_0 = arith.constant 0 : index
    %0 = vector.load %arg1[%c0, %c0_0] : memref<16x8xbf16, #tpu.memory_space<vmem>>, vector<16x8xbf16>
    %c0_1 = arith.constant 0 : index
    %c0_2 = arith.constant 0 : index
    %1 = vector.load %arg2[%c0_1, %c0_2] : memref<8x64xbf16, #tpu.memory_space<vmem>>, vector<8x64xbf16>
    %cst = arith.constant dense<0.000000e+00> : vector<16x64xf32>
    %2 = tpu.matmul %0, %1, %cst {dimension_numbers = #tpu.dot_dimension_numbers<[1], [0], [0], [1], [0, 0, 1, 1], [], []>} : vector<16x8xbf16>, vector<8x64xbf16>, vector<16x64xf32> -> vector<16x64xf32>
    %c0_3 = arith.constant 0 : index
    %c0_4 = arith.constant 0 : index
    %3 = vector.load %arg3[%c0_3, %c0_4] : memref<1x64xf32, #tpu.memory_space<vmem>>, vector<1x64xf32>
    %4 = vector.broadcast %3 : vector<1x64xf32> to vector<16x64xf32>
    %5 = arith.addf %2, %4 : vector<16x64xf32>
    %cst_5 = arith.constant 0.000000e+00 : f32
    %6 = vector.broadcast %cst_5 : f32 to vector<16x64xf32>
    %7 = arith.maximumf %5, %6 : vector<16x64xf32>
    %8 = arith.truncf %7 : vector<16x64xf32> to vector<16x64xbf16>
    %c0_6 = arith.constant 0 : index
    %c0_7 = arith.constant 0 : index
    %9 = vector.load %arg4[%c0_6, %c0_7] : memref<64x32xbf16, #tpu.memory_space<vmem>>, vector<64x32xbf16>
    %cst_8 = arith.constant dense<0.000000e+00> : vector<16x32xf32>
    %10 = tpu.matmul %8, %9, %cst_8 {dimension_numbers = #tpu.dot_dimension_numbers<[1], [0], [0], [1], [0, 0, 1, 1], [], []>} : vector<16x64xbf16>, vector<64x32xbf16>, vector<16x32xf32> -> vector<16x32xf32>
    %c0_9 = arith.constant 0 : index
    %c0_10 = arith.constant 0 : index
    %11 = vector.load %arg5[%c0_9, %c0_10] : memref<1x32xf32, #tpu.memory_space<vmem>>, vector<1x32xf32>
    %12 = vector.broadcast %11 : vector<1x32xf32> to vector<16x32xf32>
    %13 = arith.addf %10, %12 : vector<16x32xf32>
    %cst_11 = arith.constant 0.000000e+00 : f32
    %14 = vector.broadcast %cst_11 : f32 to vector<16x32xf32>
    %15 = arith.maximumf %13, %14 : vector<16x32xf32>
    %16 = arith.truncf %15 : vector<16x32xf32> to vector<16x32xbf16>
    %c0_12 = arith.constant 0 : index
    %c0_13 = arith.constant 0 : index
    %17 = vector.load %arg6[%c0_12, %c0_13] : memref<32x128xbf16, #tpu.memory_space<vmem>>, vector<32x128xbf16>
    %cst_14 = arith.constant dense<0.000000e+00> : vector<16x128xf32>
    %18 = tpu.matmul %16, %17, %cst_14 {dimension_numbers = #tpu.dot_dimension_numbers<[1], [0], [0], [1], [0, 0, 1, 1], [], []>} : vector<16x32xbf16>, vector<32x128xbf16>, vector<16x128xf32> -> vector<16x128xf32>
    %c0_15 = arith.constant 0 : index
    %c0_16 = arith.constant 0 : index
    %19 = vector.load %arg7[%c0_15, %c0_16] : memref<1x128xf32, #tpu.memory_space<vmem>>, vector<1x128xf32>
    %20 = vector.broadcast %19 : vector<1x128xf32> to vector<16x128xf32>
    %21 = arith.addf %18, %20 : vector<16x128xf32>
    %c0_17 = arith.constant 0 : index
    %c0_18 = arith.constant 0 : index
    %22 = vector.load %arg8[%c0_17, %c0_18] : memref<16x128xf32, #tpu.memory_space<vmem>>, vector<16x128xf32>
    tpu.vector_store %arg8[%c0_17, %c0_18], %21 {strides = array<i32>} : memref<16x128xf32, #tpu.memory_space<vmem>>, vector<16x128xf32>,
    return
  }
  func.func @transform_0(%arg0: i32) -> (i32, i32) {
    %c0_i32 = arith.constant 0 : i32
    %c0_i32_0 = arith.constant 0 : i32
    %c0_i32_1 = arith.constant 0 : i32
    return %c0_i32, %c0_i32_0 : i32, i32
  }
  func.func @transform_1(%arg0: i32) -> (i32, i32) {
    %c0_i32 = arith.constant 0 : i32
    %c0_i32_0 = arith.constant 0 : i32
    %c0_i32_1 = arith.constant 0 : i32
    return %c0_i32, %c0_i32_0 : i32, i32
  }
  func.func @transform_2(%arg0: i32) -> (i32, i32) {
    %c0_i32 = arith.constant 0 : i32
    %c0_i32_0 = arith.constant 0 : i32
    %c0_i32_1 = arith.constant 0 : i32
    return %c0_i32, %c0_i32_0 : i32, i32
  }
  func.func @transform_3(%arg0: i32) -> (i32, i32) {
    %c0_i32 = arith.constant 0 : i32
    %c0_i32_0 = arith.constant 0 : i32
    %c0_i32_1 = arith.constant 0 : i32
    return %c0_i32, %c0_i32_0 : i32, i32
  }
  func.func @transform_4(%arg0: i32) -> (i32, i32) {
    %c0_i32 = arith.constant 0 : i32
    %c0_i32_0 = arith.constant 0 : i32
    %c0_i32_1 = arith.constant 0 : i32
    return %c0_i32, %c0_i32_0 : i32, i32
  }
  func.func @transform_5(%arg0: i32) -> (i32, i32) {
    %c0_i32 = arith.constant 0 : i32
    %c0_i32_0 = arith.constant 0 : i32
    %c0_i32_1 = arith.constant 0 : i32
    return %c0_i32, %c0_i32_0 : i32, i32
  }
  func.func @transform_6(%arg0: i32) -> (i32, i32) {
    %c0_i32 = arith.constant 0 : i32
    %c0_i32_0 = arith.constant 0 : i32
    %c0_i32_1 = arith.constant 0 : i32
    return %c0_i32, %c0_i32_0 : i32, i32
  }
  func.func @transform_7(%arg0: i32) -> (i32, i32) {
    %c0_i32 = arith.constant 0 : i32
    %c0_i32_0 = arith.constant 0 : i32
    %c0_i32_1 = arith.constant 0 : i32
    return %c0_i32, %c0_i32_0 : i32, i32
  }
}

module attributes {stable_mosaic.version = 11 : i64} {
  func.func @_mm_kernel(%arg0: i32, %arg1: i32, %arg2: i32, %arg3: i32, %arg4: memref<16x128xbf16, #tpu.memory_space<vmem>>, %arg5: memref<128x128xbf16, #tpu.memory_space<vmem>>, %arg6: memref<1x128xf32, #tpu.memory_space<vmem>>, %arg7: memref<1x16x128xf32, #tpu.memory_space<vmem>>, %arg8: memref<16x128xf32, #tpu.memory_space<vmem>>) attributes {dimension_semantics = [#tpu.dimension_semantics<parallel>, #tpu.dimension_semantics<parallel>, #tpu.dimension_semantics<parallel>, #tpu.dimension_semantics<arbitrary>], iteration_bounds = array<i64: 1, 1, 1, 1>, scalar_prefetch = 0 : i64, scratch_operands = 1 : i64, tpu.core_type = #tpu.core_type<tc>, window_params = [{transform_indices = @transform_0, window_bounds = array<i64: 16, 128>}, {transform_indices = @transform_1, window_bounds = array<i64: 128, 128>}, {transform_indices = @transform_2, window_bounds = array<i64: 1, 128>}, {transform_indices = @transform_3, window_bounds = array<i64: 1, 16, 128>}]} {
    %c0_i32 = arith.constant 0 : i32
    %0 = arith.cmpi eq, %arg3, %c0_i32 : i32
    %1 = arith.extui %0 : i1 to i32
    %c0_i32_0 = arith.constant 0 : i32
    %2 = arith.cmpi ne, %1, %c0_i32_0 : i32
    scf.if %2 {
      %cst_10 = arith.constant 0.000000e+00 : f32
      %12 = vector.broadcast %cst_10 : f32 to vector<16x128xf32>
      %c0_11 = arith.constant 0 : index
      %c0_12 = arith.constant 0 : index
      %13 = vector.load %arg8[%c0_11, %c0_12] : memref<16x128xf32, #tpu.memory_space<vmem>>, vector<16x128xf32>
      tpu.vector_store %arg8[%c0_11, %c0_12], %12 {strides = array<i32>} : memref<16x128xf32, #tpu.memory_space<vmem>>, vector<16x128xf32>,
    } else {
    }
    %c0 = arith.constant 0 : index
    %c0_1 = arith.constant 0 : index
    %3 = vector.load %arg8[%c0, %c0_1] : memref<16x128xf32, #tpu.memory_space<vmem>>, vector<16x128xf32>
    %c0_2 = arith.constant 0 : index
    %c0_3 = arith.constant 0 : index
    %4 = vector.load %arg4[%c0_2, %c0_3] : memref<16x128xbf16, #tpu.memory_space<vmem>>, vector<16x128xbf16>
    %c0_4 = arith.constant 0 : index
    %c0_5 = arith.constant 0 : index
    %5 = vector.load %arg5[%c0_4, %c0_5] : memref<128x128xbf16, #tpu.memory_space<vmem>>, vector<128x128xbf16>
    %cst = arith.constant dense<0.000000e+00> : vector<16x128xf32>
    %6 = tpu.matmul %4, %5, %cst {dimension_numbers = #tpu.dot_dimension_numbers<[1], [0], [0], [1], [0, 0, 1, 1], [], []>} : vector<16x128xbf16>, vector<128x128xbf16>, vector<16x128xf32> -> vector<16x128xf32>
    %7 = arith.addf %3, %6 : vector<16x128xf32>
    %c0_6 = arith.constant 0 : index
    %c0_7 = arith.constant 0 : index
    %8 = vector.load %arg8[%c0_6, %c0_7] : memref<16x128xf32, #tpu.memory_space<vmem>>, vector<16x128xf32>
    tpu.vector_store %arg8[%c0_6, %c0_7], %7 {strides = array<i32>} : memref<16x128xf32, #tpu.memory_space<vmem>>, vector<16x128xf32>,
    %c0_i32_8 = arith.constant 0 : i32
    %9 = arith.cmpi eq, %arg3, %c0_i32_8 : i32
    %10 = arith.extui %9 : i1 to i32
    %c0_i32_9 = arith.constant 0 : i32
    %11 = arith.cmpi ne, %10, %c0_i32_9 : i32
    scf.if %11 {
      %c0_10 = arith.constant 0 : index
      %c0_11 = arith.constant 0 : index
      %12 = vector.load %arg8[%c0_10, %c0_11] : memref<16x128xf32, #tpu.memory_space<vmem>>, vector<16x128xf32>
      %c0_12 = arith.constant 0 : index
      %c0_13 = arith.constant 0 : index
      %13 = vector.load %arg6[%c0_12, %c0_13] : memref<1x128xf32, #tpu.memory_space<vmem>>, vector<1x128xf32>
      %14 = vector.broadcast %13 : vector<1x128xf32> to vector<16x128xf32>
      %15 = arith.addf %12, %14 : vector<16x128xf32>
      %16 = vector.shape_cast %15 : vector<16x128xf32> to vector<1x16x128xf32>
      %c0_14 = arith.constant 0 : index
      %c0_15 = arith.constant 0 : index
      %c0_16 = arith.constant 0 : index
      %17 = vector.load %arg7[%c0_14, %c0_15, %c0_16] : memref<1x16x128xf32, #tpu.memory_space<vmem>>, vector<1x16x128xf32>
      tpu.vector_store %arg7[%c0_14, %c0_15, %c0_16], %16 {strides = array<i32>} : memref<1x16x128xf32, #tpu.memory_space<vmem>>, vector<1x16x128xf32>,
    } else {
    }
    return
  }
  func.func @transform_0(%arg0: i32, %arg1: i32, %arg2: i32, %arg3: i32) -> (i32, i32) {
    %c1_i32 = arith.constant 1 : i32
    %0 = arith.muli %arg0, %c1_i32 : i32
    %1 = arith.addi %0, %arg3 : i32
    %c0_i32 = arith.constant 0 : i32
    return %arg1, %1 : i32, i32
  }
  func.func @transform_1(%arg0: i32, %arg1: i32, %arg2: i32, %arg3: i32) -> (i32, i32) {
    %c1_i32 = arith.constant 1 : i32
    %0 = arith.muli %arg0, %c1_i32 : i32
    %1 = arith.addi %0, %arg3 : i32
    %c0_i32 = arith.constant 0 : i32
    return %1, %arg2 : i32, i32
  }
  func.func @transform_2(%arg0: i32, %arg1: i32, %arg2: i32, %arg3: i32) -> (i32, i32) {
    %c0_i32 = arith.constant 0 : i32
    %c0_i32_0 = arith.constant 0 : i32
    return %c0_i32, %arg2 : i32, i32
  }
  func.func @transform_3(%arg0: i32, %arg1: i32, %arg2: i32, %arg3: i32) -> (i32, i32, i32) {
    %c0_i32 = arith.constant 0 : i32
    return %arg0, %arg1, %arg2 : i32, i32, i32
  }
}

</mosaic_0001>

<llo_original>
// kernel: convnet_forward.8
$region0: #{convnet_forward.8}
  #allocation0 [shape = 'u32[]', space=smem, size = 0x4, offset = 0x4, fixed_abs, tag = 'smem constant byte address 0x4 - core index']
  #allocation1 [shape = 'u32[144,128]{1,0:T(1,128)}', space=vmem, size = 0x12000, scoped, tag = 'internal scratch']
  %s0 = inlined_call_operand.hbm [shape: bf16[32,240], index: 0, kind: input, shape index: {}]
  %s1 = inlined_call_operand.hbm [shape: bf16[32,240], index: 1, kind: input, shape index: {}]
  %s2 = inlined_call_operand.hbm [shape: bf16[32,240], index: 2, kind: input, shape index: {}]
  %s3 = inlined_call_operand.hbm [shape: bf16[32,240], index: 3, kind: input, shape index: {}]
  %s4 = inlined_call_operand.hbm [shape: bf16[32,240], index: 4, kind: output, shape index: {}]
  %s5 = sld [smem:[#allocation0]]
  $region42: #{convnet_forward.8} parent=0
    _
  %s7 = ssub.s32 1, %s5
  %s8 = scalar_select 0, %s7, %s5
  $region1: #{convnet_forward.8} parent=0
    #allocation2 [shape = 'u8[16384]{0}', space=vmem, size = 0x4000, scoped, tag = 'input window, operand 0, single buffered']
    #allocation3 [shape = 's32[1]{0}', space=sflag, size = 0x4, scoped, tag = 'scoped memory for convnet_forward.8']
    #allocation4 [shape = 's32[1]{0}', space=sflag, size = 0x4, scoped, tag = 'scoped memory for convnet_forward.8']
    #allocation5 [shape = 'u8[16384]{0}', space=vmem, size = 0x4000, scoped, tag = 'input window, operand 1, single buffered']
    #allocation6 [shape = 's32[1]{0}', space=sflag, size = 0x4, scoped, tag = 'scoped memory for convnet_forward.8']
    #allocation7 [shape = 'u8[16384]{0}', space=vmem, size = 0x4000, scoped, tag = 'input window, operand 2, single buffered']
    #allocation8 [shape = 'u8[16384]{0}', space=vmem, size = 0x4000, scoped, tag = 'input window, operand 3, single buffered']
    #allocation9 [shape = 's32[1]{0}', space=sflag, size = 0x4, scoped, tag = 'scoped memory for convnet_forward.8']
    #allocation10 [shape = 'u8[16384]{0}', space=vmem, size = 0x4000, scoped, tag = 'output window, operand 0, single buffered']
    %9 = vsyncpa [#allocation3], 0
    %10 = vsyncpa [#allocation6], 0
    %11 = vsyncpa [#allocation9], 0
    %12 = vsyncpa [#allocation4], 0
    // Predicated region
    $region2: #{convnet_forward.8} parent=1 // pred_check
      _
    $region3: #{convnet_forward.8} parent=1 // pred_check_branch
      %14 = sbr.rel (0) target = $region5
    $region4: #{convnet_forward.8} parent=1 // pred_region
      %s16 = ssub.s32 512, 512
      %17 = vsyncadd [#allocation3], %s16
      %s18 = sshll.u32 [#allocation2], 4
      %s19 = int_to_ptr.vmem [resolvable:$true] %s18
      %24 = dma.hbm_to_vmem [thread:$0]  %s0, 512, %s19, [#allocation3], 128, 128, 8
    $region5: #{convnet_forward.8} parent=1 // pred_fallthru
      _
    // Predicated region
    $region6: #{convnet_forward.8} parent=1 // pred_check
      _
    $region7: #{convnet_forward.8} parent=1 // pred_check_branch
      %26 = sbr.rel (0) target = $region9
    $region8: #{convnet_forward.8} parent=1 // pred_region
      %s28 = ssub.s32 512, 512
      %29 = vsyncadd [#allocation6], %s28
      %s30 = sshll.u32 [#allocation5], 4
      %s31 = int_to_ptr.vmem [resolvable:$true] %s30
      %36 = dma.hbm_to_vmem [thread:$0]  %s1, 512, %s31, [#allocation6], 128, 128, 8
    $region9: #{convnet_forward.8} parent=1 // pred_fallthru
      _
    // Predicated region
    $region10: #{convnet_forward.8} parent=1 // pred_check
      _
    $region11: #{convnet_forward.8} parent=1 // pred_check_branch
      %38 = sbr.rel (0) target = $region13
    $region12: #{convnet_forward.8} parent=1 // pred_region
      %s40 = ssub.s32 512, 512
      %41 = vsyncadd [#allocation6], %s40
      %s42 = sshll.u32 [#allocation7], 4
      %s43 = int_to_ptr.vmem [resolvable:$true] %s42
      %48 = dma.hbm_to_vmem [thread:$0]  %s2, 512, %s43, [#allocation6], 128, 128, 8
    $region13: #{convnet_forward.8} parent=1 // pred_fallthru
      _
    // Predicated region
    $region14: #{convnet_forward.8} parent=1 // pred_check
      _
    $region15: #{convnet_forward.8} parent=1 // pred_check_branch
      %50 = sbr.rel (0) target = $region17
    $region16: #{convnet_forward.8} parent=1 // pred_region
      %s52 = ssub.s32 512, 512
      %53 = vsyncadd [#allocation9], %s52
      %s54 = sshll.u32 [#allocation8], 4
      %s55 = int_to_ptr.vmem [resolvable:$true] %s54
      %60 = dma.hbm_to_vmem [thread:$0]  %s3, 512, %s55, [#allocation9], 128, 128, 8
    $region17: #{convnet_forward.8} parent=1 // pred_fallthru
      _
    // Predicated region
    $region18: #{convnet_forward.8} parent=1 // pred_check
      _
    $region19: #{convnet_forward.8} parent=1 // pred_check_branch
      %62 = sbr.rel (0) target = $region21
    $region20: #{convnet_forward.8} parent=1 // pred_region
      %63 = dma.done [#allocation3], 512
    $region21: #{convnet_forward.8} parent=1 // pred_fallthru
      _
    // Predicated region
    $region22: #{convnet_forward.8} parent=1 // pred_check
      _
    $region23: #{convnet_forward.8} parent=1 // pred_check_branch
      %65 = sbr.rel (0) target = $region25
    $region24: #{convnet_forward.8} parent=1 // pred_region
      %66 = dma.done [#allocation6], 512
    $region25: #{convnet_forward.8} parent=1 // pred_fallthru
      _
    // Predicated region
    $region26: #{convnet_forward.8} parent=1 // pred_check
      _
    $region27: #{convnet_forward.8} parent=1 // pred_check_branch
      %68 = sbr.rel (0) target = $region29
    $region28: #{convnet_forward.8} parent=1 // pred_region
      %69 = dma.done [#allocation6], 512
    $region29: #{convnet_forward.8} parent=1 // pred_fallthru
      _
    // Predicated region
    $region30: #{convnet_forward.8} parent=1 // pred_check
      _
    $region31: #{convnet_forward.8} parent=1 // pred_check_branch
      %71 = sbr.rel (0) target = $region33
    $region32: #{convnet_forward.8} parent=1 // pred_region
      %72 = dma.done [#allocation9], 512
    $region33: #{convnet_forward.8} parent=1 // pred_fallthru
      _
    %v73 = vld [vmem:[#allocation2] sm:$0xff]
    %v74 = vld [vmem:[#allocation2 + $0x8] sm:$0xff]
    %v75 = vld [vmem:[#allocation2 + $0x10] sm:$0xff]
    %v76 = vld [vmem:[#allocation2 + $0x18] sm:$0xff]
    %v77 = vld [vmem:[#allocation5] sm:$0xff]
    %v78 = vld [vmem:[#allocation5 + $0x8] sm:$0xff]
    %v79 = vld [vmem:[#allocation5 + $0x10] sm:$0xff]
    %v80 = vld [vmem:[#allocation5 + $0x18] sm:$0xff]
    %v81 = vmax.bf16 %v73, %v77
    %v82 = vmax.bf16 %v74, %v78
    %v83 = vmax.bf16 %v75, %v79
    %v84 = vmax.bf16 %v76, %v80
    %v85 = vld [vmem:[#allocation7] sm:$0xff]
    %v86 = vld [vmem:[#allocation7 + $0x8] sm:$0xff]
    %v87 = vld [vmem:[#allocation7 + $0x10] sm:$0xff]
    %v88 = vld [vmem:[#allocation7 + $0x18] sm:$0xff]
    %v89 = vld [vmem:[#allocation8] sm:$0xff]
    %v90 = vld [vmem:[#allocation8 + $0x8] sm:$0xff]
    %v91 = vld [vmem:[#allocation8 + $0x10] sm:$0xff]
    %v92 = vld [vmem:[#allocation8 + $0x18] sm:$0xff]
    %v93 = vmax.bf16 %v85, %v89
    %v94 = vmax.bf16 %v86, %v90
    %v95 = vmax.bf16 %v87, %v91
    %v96 = vmax.bf16 %v88, %v92
    %v97 = vmax.bf16 %v81, %v93
    %v98 = vmax.bf16 %v82, %v94
    %v99 = vmax.bf16 %v83, %v95
    %v100 = vmax.bf16 %v84, %v96
    %vm101 = vcmask 1043456
    %vm102 = vcmask 916484
    %vm103 = vmor %vm102, %vm101
    %104 = vst.msk [vmem:[#allocation10] sm:$0xff] %vm103, %v97
    %105 = vst.msk [vmem:[#allocation10 + $0x8] sm:$0xff] %vm103, %v98
    %106 = vst.msk [vmem:[#allocation10 + $0x10] sm:$0xff] %vm103, %v99
    %107 = vst.msk [vmem:[#allocation10 + $0x18] sm:$0xff] %vm103, %v100
    // Predicated region
    $region34: #{convnet_forward.8} parent=1 // pred_check
      _
    $region35: #{convnet_forward.8} parent=1 // pred_check_branch
      %109 = sbr.rel (0) target = $region37
    $region36: #{convnet_forward.8} parent=1 // pred_region
      %s111 = ssub.s32 512, 512
      %112 = vsyncadd [#allocation4], %s111
      %s113 = sshll.u32 [#allocation10], 4
      %s114 = int_to_ptr.vmem [resolvable:$true] %s113
      %119 = dma.vmem_to_hbm [thread:$0]  %s114, 512, %s4, [#allocation4], 128, 128, 8
    $region37: #{convnet_forward.8} parent=1 // pred_fallthru
      _
    // Predicated region
    $region38: #{convnet_forward.8} parent=1 // pred_check
      _
    $region39: #{convnet_forward.8} parent=1 // pred_check_branch
      %121 = sbr.rel (0) target = $region41
    $region40: #{convnet_forward.8} parent=1 // pred_region
      %122 = dma.done [#allocation4], 512
    $region41: #{convnet_forward.8} parent=1 // pred_fallthru
      _
    %123 = vsyncpa [#allocation3], 1
    %124 = vsyncpa [#allocation6], 1
    %125 = vsyncpa [#allocation9], 1
    %126 = vsyncpa [#allocation4], 1

// kernel: convnet_forward.7
$region0: #{convnet_forward.7}
  #allocation0 [shape = 'u32[]', space=smem, size = 0x4, offset = 0x4, fixed_abs, tag = 'smem constant byte address 0x4 - core index']
  #allocation1 [shape = 'u32[144,128]{1,0:T(1,128)}', space=vmem, size = 0x12000, scoped, tag = 'internal scratch']
  %s0 = inlined_call_operand.hbm [shape: bf16[2,32,96], index: 0, kind: input, shape index: {}]
  %s1 = inlined_call_operand.hbm [shape: bf16[9,90,480], index: 1, kind: input, shape index: {}]
  %s2 = inlined_call_operand.hbm [shape: f32[1,480], index: 2, kind: input, shape index: {}]
  %s3 = inlined_call_operand.hbm [shape: bf16[2,30,480], index: 3, kind: output, shape index: {}]
  %s4 = sld [smem:[#allocation0]]
  $region57: #{convnet_forward.7} parent=0
    _
  %s6 = ssub.s32 1, %s4
  %s7 = scalar_select 0, %s6, %s4
  $region1: #{convnet_forward.7} parent=0
    #allocation2 [shape = 'u8[16384]{0}', space=vmem, size = 0x4000, scoped, tag = 'input window, operand 0']
    #allocation3 [shape = 's32[2]{0}', space=sflag, size = 0x8, scoped, tag = 'scoped memory for convnet_forward.7']
    #allocation4 [shape = 's32[2]{0}', space=sflag, size = 0x8, scoped, tag = 'scoped memory for convnet_forward.7']
    #allocation5 [shape = 'u8[884736]{0}', space=vmem, size = 0xd8000, scoped, tag = 'input window, operand 1, single buffered']
    #allocation6 [shape = 's32[1]{0}', space=sflag, size = 0x4, scoped, tag = 'scoped memory for convnet_forward.7']
    #allocation7 [shape = 'u8[2048]{0}', space=vmem, size = 0x800, scoped, tag = 'input window, operand 2, single buffered']
    #allocation8 [shape = 'u8[65536]{0}', space=vmem, size = 0x10000, scoped, tag = 'output window, operand 0']
    %8 = vsyncpa [#allocation3], 0
    %s9 = scalar_lea.sflag [#allocation3], 1
    %10 = vsyncpa %s9, 0
    %11 = vsyncpa [#allocation6], 0
    %12 = vsyncpa [#allocation4], 0
    %s13 = scalar_lea.sflag [#allocation4], 1
    %14 = vsyncpa %s13, 0
    loop: start=0, step=1, limit=4
    $region2: #{convnet_forward.7} parent=1 // loop_pre_header
      _
    $region3: #{convnet_forward.7} parent=1 // loop_header
      %s16 = sphi 0, %s20
      %p17 = scmp.ge.s32.totalorder %s16, 4
      %s26 = sphi 0, %s28
      %s29 = sphi 0, %s26
      %s30 = sphi 0, %s29
      %s46 = sphi 0, %s30
      %s50 = sphi 0, %s50
      %s52 = sphi 0, %s50
      %s53 = sphi 0, %s52
      %s67 = sphi 0, %s53
      %s71 = sphi 0, %s71
      %s73 = sphi 0, %s71
      %s74 = sphi 0, %s73
      %s88 = sphi 0, %s74
      %s94 = sphi 0, %s96
      %s97 = sphi 0, %s94
      %s98 = sphi 0, %s97
      %s114 = sphi 0, %s98
    $region4: #{convnet_forward.7} parent=1 // loop_header_branch
      %19 = sbr.rel (%p17) target = $region8
    $region5: #{convnet_forward.7} parent=1 // loop_body
      %s21 = ssub.s32 %s16, 1
      %s22 = ssub.s32 %s16, 2
      %s23 = sadd.s32 %s16, 1
      %s24 = ssub.s32 %s16, %s23
      %p25 = scmp.eq.s32.totalorder %s24, 0
      %s27 = sadd.s32 %s26, 1
      %s28 = scalar_select %p25, %s26, %s27
      %p31 = pneg %p25
      %p32 = scmp.eq.s32.totalorder %s16, 1
      %p33 = por %p31, %p32
      %p34 = scmp.ne.s32.totalorder %s26, %s29
      %p35 = scmp.eq.s32.totalorder %s16, 0
      %p36 = por %p34, %p35
      %p37 = scmp.ne.s32.totalorder %s26, %s29
      %p38 = scmp.eq.s32.totalorder %s21, 1
      %p39 = por %p37, %p38
      %p40 = scmp.ne.s32.totalorder %s29, %s30
      %p41 = scmp.eq.s32.totalorder %s21, 0
      %p42 = por %p40, %p41
      %p43 = scmp.ne.s32.totalorder %s29, %s30
      %p44 = scmp.eq.s32.totalorder %s22, 1
      %p45 = por %p43, %p44
      %p47 = scmp.ne.s32.totalorder %s30, %s46
      %p48 = scmp.eq.s32.totalorder %s22, 0
      %p49 = por %p47, %p48
      %s51 = sadd.s32 %s50, 1
      %p54 = scmp.eq.s32.totalorder %s16, 1
      %p55 = scmp.ne.s32.totalorder %s50, %s52
      %p56 = scmp.eq.s32.totalorder %s16, 0
      %p57 = por %p55, %p56
      %p58 = scmp.ne.s32.totalorder %s50, %s52
      %p59 = scmp.eq.s32.totalorder %s21, 1
      %p60 = por %p58, %p59
      %p61 = scmp.ne.s32.totalorder %s52, %s53
      %p62 = scmp.eq.s32.totalorder %s21, 0
      %p63 = por %p61, %p62
      %p64 = scmp.ne.s32.totalorder %s52, %s53
      %p65 = scmp.eq.s32.totalorder %s22, 1
      %p66 = por %p64, %p65
      %p68 = scmp.ne.s32.totalorder %s53, %s67
      %p69 = scmp.eq.s32.totalorder %s22, 0
      %p70 = por %p68, %p69
      %s72 = sadd.s32 %s71, 1
      %p75 = scmp.eq.s32.totalorder %s16, 1
      %p76 = scmp.ne.s32.totalorder %s71, %s73
      %p77 = scmp.eq.s32.totalorder %s16, 0
      %p78 = por %p76, %p77
      %p79 = scmp.ne.s32.totalorder %s71, %s73
      %p80 = scmp.eq.s32.totalorder %s21, 1
      %p81 = por %p79, %p80
      %p82 = scmp.ne.s32.totalorder %s73, %s74
      %p83 = scmp.eq.s32.totalorder %s21, 0
      %p84 = por %p82, %p83
      %p85 = scmp.ne.s32.totalorder %s73, %s74
      %p86 = scmp.eq.s32.totalorder %s22, 1
      %p87 = por %p85, %p86
      %p89 = scmp.ne.s32.totalorder %s74, %s88
      %p90 = scmp.eq.s32.totalorder %s22, 0
      %p91 = por %p89, %p90
      %s92 = ssub.s32 %s16, %s23
      %p93 = scmp.eq.s32.totalorder %s92, 0
      %s95 = sadd.s32 %s94, 1
      %s96 = scalar_select %p93, %s94, %s95
      %p99 = pneg %p93
      %p100 = scmp.eq.s32.totalorder %s16, 1
      %p101 = por %p99, %p100
      %p102 = scmp.ne.s32.totalorder %s94, %s97
      %p103 = scmp.eq.s32.totalorder %s16, 0
      %p104 = por %p102, %p103
      %p105 = scmp.ne.s32.totalorder %s94, %s97
      %p106 = scmp.eq.s32.totalorder %s21, 1
      %p107 = por %p105, %p106
      %p108 = scmp.ne.s32.totalorder %s97, %s98
      %p109 = scmp.eq.s32.totalorder %s21, 0
      %p110 = por %p108, %p109
      %p111 = scmp.ne.s32.totalorder %s97, %s98
      %p112 = scmp.eq.s32.totalorder %s22, 1
      %p113 = por %p111, %p112
      %p115 = scmp.ne.s32.totalorder %s98, %s114
      %p116 = scmp.eq.s32.totalorder %s22, 0
      %p117 = por %p115, %p116
      %p118 = scmp.le.s32.totalorder 1, %s16
      %p119 = scmp.lt.s32.totalorder %s16, 3
      %p120 = pnand %p118, %p119
      %p121 = pneg %p120
      // Predicated region
      $region9: #{convnet_forward.7} parent=5 // pred_check
        _
      $region10: #{convnet_forward.7} parent=5 // pred_check_branch
        %123 = sbr.rel (%p120) target = $region12
      $region11: #{convnet_forward.7} parent=5 // pred_region
        %s124 = ssub.s32 %s16, 1
        // Predicated region
        $region13: #{convnet_forward.7} parent=11 // pred_check
          %p125 = pneg %p63
        $region14: #{convnet_forward.7} parent=11 // pred_check_branch
          %127 = sbr.rel (%p125) target = $region16
        $region15: #{convnet_forward.7} parent=11 // pred_region
          %s129 = ssub.s32 27648, 27648
          %130 = vsyncadd [#allocation6], %s129
          %s131 = sshll.u32 [#allocation5], 4
          %s132 = int_to_ptr.vmem [resolvable:$true] %s131
          %137 = dma.hbm_to_vmem [thread:$0]  %s1, 27648, %s132, [#allocation6], 256, 256, 16
        $region16: #{convnet_forward.7} parent=11 // pred_fallthru
          _
        // Predicated region
        $region17: #{convnet_forward.7} parent=11 // pred_check
          %p138 = pneg %p84
        $region18: #{convnet_forward.7} parent=11 // pred_check_branch
          %140 = sbr.rel (%p138) target = $region20
        $region19: #{convnet_forward.7} parent=11 // pred_region
          %s142 = ssub.s32 64, 64
          %143 = vsyncadd [#allocation6], %s142
          %s145 = sshll.u32 [#allocation7], 4
          %s146 = int_to_ptr.vmem [resolvable:$true] %s145
          %148 = dma.hbm_to_vmem [thread:$0]  %s2, 64, %s146, [#allocation6]
        $region20: #{convnet_forward.7} parent=11 // pred_fallthru
          _
      $region12: #{convnet_forward.7} parent=5 // pred_fallthru
        _
      %p149 = scmp.lt.s32.totalorder %s16, 2
      // Predicated region
      $region21: #{convnet_forward.7} parent=5 // pred_check
        %p150 = pneg %p149
      $region22: #{convnet_forward.7} parent=5 // pred_check_branch
        %152 = sbr.rel (%p150) target = $region24
      $region23: #{convnet_forward.7} parent=5 // pred_region
        // Predicated region
        $region25: #{convnet_forward.7} parent=23 // pred_check
          %p153 = pneg %p36
        $region26: #{convnet_forward.7} parent=23 // pred_check_branch
          %155 = sbr.rel (%p153) target = $region28
        $region27: #{convnet_forward.7} parent=23 // pred_region
          %s156 = sand.u32 %s26, 1
          %s157 = scalar_lea.sflag [#allocation3], %s156
          %s158 = sand.u32 %s26, 1
          %s159 = smul.addr %s158, 16
          %s160 = scalar_lea.vmem [#allocation2], %s159
          %s162 = ssub.s32 256, 256
          %163 = vsyncadd %s157, %s162
          %s164 = smul.addr %s16, 4
          %s165 = smul.addr %s164, 64
          %s166 = scalar_lea.hbm %s0, %s165
          %s167 = sshll.u32 %s160, 4
          %s168 = int_to_ptr.vmem [resolvable:$true] %s167
          %173 = dma.hbm_to_vmem [thread:$0]  %s166, 256, %s168, %s157, 64, 64, 4
        $region28: #{convnet_forward.7} parent=23 // pred_fallthru
          _
      $region24: #{convnet_forward.7} parent=5 // pred_fallthru
        _
      %p174 = scmp.le.s32.totalorder 1, %s16
      %p175 = scmp.lt.s32.totalorder %s16, 3
      %p176 = pnand %p174, %p175
      %p177 = pneg %p176
      // Predicated region
      $region29: #{convnet_forward.7} parent=5 // pred_check
        _
      $region30: #{convnet_forward.7} parent=5 // pred_check_branch
        %179 = sbr.rel (%p176) target = $region32
      $region31: #{convnet_forward.7} parent=5 // pred_region
        %s180 = ssub.s32 %s16, 1
        %s181 = sand.u32 %s29, 1
        %s182 = scalar_lea.sflag [#allocation3], %s181
        %s183 = sand.u32 %s29, 1
        %s184 = smul.addr %s183, 16
        %s185 = scalar_lea.vmem [#allocation2], %s184
        // Predicated region
        $region33: #{convnet_forward.7} parent=31 // pred_check
          %p186 = pneg %p42
        $region34: #{convnet_forward.7} parent=31 // pred_check_branch
          %188 = sbr.rel (%p186) target = $region36
        $region35: #{convnet_forward.7} parent=31 // pred_region
          %189 = dma.done %s182, 256
        $region36: #{convnet_forward.7} parent=31 // pred_fallthru
          _
        // Predicated region
        $region37: #{convnet_forward.7} parent=31 // pred_check
          %p190 = pneg %p63
        $region38: #{convnet_forward.7} parent=31 // pred_check_branch
          %192 = sbr.rel (%p190) target = $region40
        $region39: #{convnet_forward.7} parent=31 // pred_region
          %193 = dma.done [#allocation6], 27648
        $region40: #{convnet_forward.7} parent=31 // pred_fallthru
          _
        // Predicated region
        $region41: #{convnet_forward.7} parent=31 // pred_check
          %p194 = pneg %p84
        $region42: #{convnet_forward.7} parent=31 // pred_check_branch
          %196 = sbr.rel (%p194) target = $region44
        $region43: #{convnet_forward.7} parent=31 // pred_region
          %197 = dma.done [#allocation6], 64
        $region44: #{convnet_forward.7} parent=31 // pred_fallthru
          _
        %s198 = sand.u32 %s29, 1
        %s199 = scalar_lea.sflag [#allocation3], %s198
        %s200 = sand.u32 %s29, 1
        %s201 = smul.addr %s200, 16
        %s202 = scalar_lea.vmem [#allocation2], %s201
        %p203 = pneg %p42
        %p204 = pneg %p39
        %p205 = pneg %p63
        %p206 = pneg %p60
        %p207 = pneg %p84
        %p208 = pneg %p81
        %p209 = pneg %p110
        %p210 = pneg %p107
        %s211 = sand.u32 %s97, 1
        %s212 = scalar_lea.sflag [#allocation4], %s211
        %s213 = sand.u32 %s97, 1
        %s214 = smul.addr %s213, 64
        %s215 = scalar_lea.vmem [#allocation8], %s214
        %v217 = vld [vmem:[#allocation7] sm:$0xf]
        %v218 = vld [vmem:[%s185] sm:$0xf]
        %v219 = vld [vmem:[%s185 + $0x4] sm:$0xf]
        %v220 = vld [vmem:[%s185 + $0x8] sm:$0xf]
        %v221 = vld [vmem:[%s185 + $0xc] sm:$0x7]
        %v222 = vld [vmem:[#allocation5] sm:$0xff]
        %v223 = vld [vmem:[#allocation5 + $0x8] sm:$0xff]
        %v224 = vld [vmem:[#allocation5 + $0x10] sm:$0xff]
        %v225 = vld [vmem:[#allocation5 + $0x18] sm:$0xff]
        %v226 = vld [vmem:[#allocation5 + $0x20] sm:$0xff]
        %v227 = vld [vmem:[#allocation5 + $0x28] sm:$0xff]
        %v228 = vld [vmem:[#allocation5 + $0x30] sm:$0xff]
        %v229 = vld [vmem:[#allocation5 + $0x38] sm:$0xff]
        %v230 = vld [vmem:[#allocation5 + $0x40] sm:$0xff]
        %v231 = vld [vmem:[#allocation5 + $0x48] sm:$0xff]
        %v232 = vld [vmem:[#allocation5 + $0x50] sm:$0xff]
        %v233 = vld [vmem:[#allocation5 + $0x58] sm:$0xff]
        %v234 = vld [vmem:[#allocation5 + $0x60] sm:$0xff]
        %v235 = vld [vmem:[#allocation5 + $0x68] sm:$0xff]
        %v236 = vld [vmem:[#allocation5 + $0x70] sm:$0xff]
        %v237 = vld [vmem:[#allocation5 + $0x78] sm:$0xff]
        %v238 = vld [vmem:[#allocation5 + $0x80] sm:$0xff]
        %v239 = vld [vmem:[#allocation5 + $0x88] sm:$0xff]
        %v240 = vld [vmem:[#allocation5 + $0x90] sm:$0xff]
        %v241 = vld [vmem:[#allocation5 + $0x98] sm:$0xff]
        %v242 = vld [vmem:[#allocation5 + $0xa0] sm:$0xff]
        %v243 = vld [vmem:[#allocation5 + $0xa8] sm:$0xff]
        %v244 = vld [vmem:[#allocation5 + $0xb0] sm:$0x11]
        %v245 = vld [vmem:[#allocation5 + $0xb8] sm:$0x11]
        %s246 = scalar_lea.vmem [#allocation5], 192
        %v247 = vld [vmem:[%s246] sm:$0xff]
        %v248 = vld [vmem:[%s246 + $0x8] sm:$0xff]
        %v249 = vld [vmem:[%s246 + $0x10] sm:$0xff]
        %v250 = vld [vmem:[%s246 + $0x18] sm:$0xff]
        %v251 = vld [vmem:[%s246 + $0x20] sm:$0xff]
        %v252 = vld [vmem:[%s246 + $0x28] sm:$0xff]
        %v253 = vld [vmem:[%s246 + $0x30] sm:$0xff]
        %v254 = vld [vmem:[%s246 + $0x38] sm:$0xff]
        %v255 = vld [vmem:[%s246 + $0x40] sm:$0xff]
        %v256 = vld [vmem:[%s246 + $0x48] sm:$0xff]
        %v257 = vld [vmem:[%s246 + $0x50] sm:$0xff]
        %v258 = vld [vmem:[%s246 + $0x58] sm:$0xff]
        %v259 = vld [vmem:[%s246 + $0x60] sm:$0xff]
        %v260 = vld [vmem:[%s246 + $0x68] sm:$0xff]
        %v261 = vld [vmem:[%s246 + $0x70] sm:$0xff]
        %v262 = vld [vmem:[%s246 + $0x78] sm:$0xff]
        %v263 = vld [vmem:[%s246 + $0x80] sm:$0xff]
        %v264 = vld [vmem:[%s246 + $0x88] sm:$0xff]
        %v265 = vld [vmem:[%s246 + $0x90] sm:$0xff]
        %v266 = vld [vmem:[%s246 + $0x98] sm:$0xff]
        %v267 = vld [vmem:[%s246 + $0xa0] sm:$0xff]
        %v268 = vld [vmem:[%s246 + $0xa8] sm:$0xff]
        %v269 = vld [vmem:[%s246 + $0xb0] sm:$0x11]
        %v270 = vld [vmem:[%s246 + $0xb8] sm:$0x11]
        %v275 = vunpack.c.l.b16 %v218
        %v276 = vunpack.c.l.b16 %v219
        %v277 = vunpack.c.l.b16 %v220
        %v278 = vunpack.c.l.b16 %v221
        %v279 = vpack.c.b16 %v276, %v275
        %v280 = vpack.c.b16 %v278, %v277
        %281 = vrot.lane.b32.xlu0 %v279, 125
        %v282 = vpop.permute.xlu0 %281
        %283 = vrot.lane.b32.xlu0 %v280, 125
        %v284 = vpop.permute.xlu0 %283
        %v309 = vunpack.c.l.b16 %v247
        %v310 = vunpack.c.h.b16 %v247
        %v311 = vunpack.c.l.b16 %v248
        %v312 = vunpack.c.h.b16 %v248
        %v313 = vunpack.c.l.b16 %v249
        %v314 = vunpack.c.h.b16 %v249
        %v315 = vunpack.c.l.b16 %v250
        %v316 = vunpack.c.h.b16 %v250
        %v317 = vunpack.c.l.b16 %v251
        %v318 = vunpack.c.h.b16 %v251
        %v319 = vunpack.c.l.b16 %v252
        %v320 = vunpack.c.h.b16 %v252
        %v321 = vunpack.c.l.b16 %v253
        %v322 = vunpack.c.h.b16 %v253
        %v323 = vunpack.c.l.b16 %v254
        %v324 = vunpack.c.h.b16 %v254
        %v325 = vunpack.c.l.b16 %v255
        %v326 = vunpack.c.h.b16 %v255
        %v327 = vunpack.c.l.b16 %v256
        %v328 = vunpack.c.h.b16 %v256
        %v329 = vunpack.c.l.b16 %v257
        %v330 = vunpack.c.h.b16 %v257
        %v331 = vunpack.c.l.b16 %v258
        %v332 = vunpack.c.h.b16 %v258
        %v333 = vunpack.c.l.b16 %v259
        %v334 = vunpack.c.h.b16 %v259
        %v335 = vunpack.c.l.b16 %v260
        %v336 = vunpack.c.h.b16 %v260
        %v337 = vunpack.c.l.b16 %v261
        %v338 = vunpack.c.h.b16 %v261
        %v339 = vunpack.c.l.b16 %v262
        %v340 = vunpack.c.h.b16 %v262
        %v341 = vunpack.c.l.b16 %v263
        %v342 = vunpack.c.h.b16 %v263
        %v343 = vunpack.c.l.b16 %v264
        %v344 = vunpack.c.h.b16 %v264
        %v345 = vunpack.c.l.b16 %v265
        %v346 = vunpack.c.h.b16 %v265
        %v347 = vunpack.c.l.b16 %v266
        %v348 = vunpack.c.h.b16 %v266
        %v349 = vunpack.c.l.b16 %v267
        %v350 = vunpack.c.h.b16 %v267
        %v351 = vunpack.c.l.b16 %v268
        %v352 = vunpack.c.h.b16 %v268
        %v353 = vunpack.c.l.b16 %v269
        %v354 = vunpack.c.h.b16 %v269
        %v355 = vunpack.c.l.b16 %v270
        %v356 = vunpack.c.h.b16 %v270
        %v357 = vpack.c.b16 %v313, %v309
        %v358 = vpack.c.b16 %v314, %v310
        %v359 = vpack.c.b16 %v315, %v311
        %v360 = vpack.c.b16 %v316, %v312
        %v361 = vpack.c.b16 %v321, %v317
        %v362 = vpack.c.b16 %v322, %v318
        %v363 = vpack.c.b16 %v323, %v319
        %v364 = vpack.c.b16 %v324, %v320
        %v365 = vpack.c.b16 %v329, %v325
        %v366 = vpack.c.b16 %v330, %v326
        %v367 = vpack.c.b16 %v331, %v327
        %v368 = vpack.c.b16 %v332, %v328
        %v369 = vpack.c.b16 %v337, %v333
        %v370 = vpack.c.b16 %v338, %v334
        %v371 = vpack.c.b16 %v339, %v335
        %v372 = vpack.c.b16 %v340, %v336
        %v373 = vpack.c.b16 %v345, %v341
        %v374 = vpack.c.b16 %v346, %v342
        %v375 = vpack.c.b16 %v347, %v343
        %v376 = vpack.c.b16 %v348, %v344
        %v377 = vpack.c.b16 %v353, %v349
        %v378 = vpack.c.b16 %v354, %v350
        %v379 = vpack.c.b16 %v355, %v351
        %v380 = vpack.c.b16 %v356, %v352
        %vm401 = vcmask 736256
        %v403 = vsel %vm401, %v282, 0
        %v406 = vsel %vm401, %v284, 0
        %vm408 = vcmask 1044480
        %v410 = vsel %vm408, %v377, 0
        %v413 = vsel %vm408, %v378, 0
        %v416 = vsel %vm408, %v379, 0
        %v419 = vsel %vm408, %v380, 0
        %421 = vmatprep.subr.bf16.mxu0 %v358
        %422 = vmatpush1.bf16.msra.mxu0 %v357
        %423 = vmatprep.subr.bf16.mxu0 %v362
        %424 = vmatpush1.bf16.msra.mxu0 %v361
        %425 = vmatprep.subr.bf16.mxu0 %v366
        %426 = vmatpush1.bf16.msra.mxu0 %v365
        %427 = vmatprep.subr.bf16.mxu0 %v370
        %428 = vmatpush1.bf16.msra.mxu0 %v369
        %429 = vmatprep.subr.bf16.mxu0 %v374
        %430 = vmatpush1.bf16.msra.mxu0 %v373
        %431 = vmatprep.subr.bf16.mxu0 %v413
        %432 = vmatpush1.bf16.msra.mxu0 %v410
        %433 = vmatprep.subr.bf16.mxu0 0
        %434 = vmatpush1.bf16.msra.mxu0 0
        %435 = vmatprep.subr.bf16.mxu0 0
        %436 = vmatpush1.bf16.msra.mxu0 0
        %437 = vmatprep.subr.bf16.mxu0 0
        %438 = vmatpush1.bf16.msra.mxu0 0
        %439 = vmatprep.subr.bf16.mxu0 0
        %440 = vmatpush1.bf16.msra.mxu0 0
        %441 = vmatprep.subr.bf16.mxu0 0
        %442 = vmatpush1.bf16.msra.mxu0 0
        %443 = vmatprep.subr.bf16.mxu0 0
        %444 = vmatpush1.bf16.msra.mxu0 0
        %445 = vmatprep.subr.bf16.mxu0 0
        %446 = vmatpush1.bf16.msra.mxu0 0
        %447 = vmatprep.subr.bf16.mxu0 0
        %448 = vmatpush1.bf16.msra.mxu0 0
        %449 = vmatprep.subr.bf16.mxu0 0
        %450 = vmatpush1.bf16.msra.mxu0 0
        %451 = vmatprep.subr.bf16.mxu0 0
        %452 = vmatpush1.bf16.msra.mxu0 0
        %453 = vmatprep.mubr.bf16.mxu0 0
        %454 = vmatmul.mubr.bf16.gmra.mrb[0].mxu0 %v403
        %v455 = vpop.f32.mrb[0].mxu0
        %v456 = vadd.f32 0.0, %v455
        %v457 = vpop.f32.mrb[0].mxu0
        %v458 = vadd.f32 0.0, %v457
        %v459 = vpop.f32.mrb[0].mxu0
        %v460 = vadd.f32 0.0, %v459
        %v461 = vpop.f32.mrb[0].mxu0
        %v462 = vadd.f32 0.0, %v461
        %463 = vmatprep.mubr.bf16.mxu0 0
        %464 = vmatmul.mubr.bf16.gmra.mrb[0].mxu0 %v406
        %v465 = vpop.f32.mrb[0].mxu0
        %v466 = vadd.f32 0.0, %v465
        %v467 = vpop.f32.mrb[0].mxu0
        %v468 = vadd.f32 0.0, %v467
        %v469 = vpop.f32.mrb[0].mxu0
        %v470 = vadd.f32 0.0, %v469
        %v471 = vpop.f32.mrb[0].mxu0
        %v472 = vadd.f32 0.0, %v471
        %473 = vdwg.mxu0
        %474 = vmatprep.subr.bf16.mxu0 %v360
        %475 = vmatpush1.bf16.msra.mxu0 %v359
        %476 = vmatprep.subr.bf16.mxu0 %v364
        %477 = vmatpush1.bf16.msra.mxu0 %v363
        %478 = vmatprep.subr.bf16.mxu0 %v368
        %479 = vmatpush1.bf16.msra.mxu0 %v367
        %480 = vmatprep.subr.bf16.mxu0 %v372
        %481 = vmatpush1.bf16.msra.mxu0 %v371
        %482 = vmatprep.subr.bf16.mxu0 %v376
        %483 = vmatpush1.bf16.msra.mxu0 %v375
        %484 = vmatprep.subr.bf16.mxu0 %v419
        %485 = vmatpush1.bf16.msra.mxu0 %v416
        %486 = vmatprep.subr.bf16.mxu0 0
        %487 = vmatpush1.bf16.msra.mxu0 0
        %488 = vmatprep.subr.bf16.mxu0 0
        %489 = vmatpush1.bf16.msra.mxu0 0
        %490 = vmatprep.subr.bf16.mxu0 0
        %491 = vmatpush1.bf16.msra.mxu0 0
        %492 = vmatprep.subr.bf16.mxu0 0
        %493 = vmatpush1.bf16.msra.mxu0 0
        %494 = vmatprep.subr.bf16.mxu0 0
        %495 = vmatpush1.bf16.msra.mxu0 0
        %496 = vmatprep.subr.bf16.mxu0 0
        %497 = vmatpush1.bf16.msra.mxu0 0
        %498 = vmatprep.subr.bf16.mxu0 0
        %499 = vmatpush1.bf16.msra.mxu0 0
        %500 = vmatprep.subr.bf16.mxu0 0
        %501 = vmatpush1.bf16.msra.mxu0 0
        %502 = vmatprep.subr.bf16.mxu0 0
        %503 = vmatpush1.bf16.msra.mxu0 0
        %504 = vmatprep.subr.bf16.mxu0 0
        %505 = vmatpush1.bf16.msra.mxu0 0
        %506 = vmatprep.mubr.bf16.mxu0 0
        %507 = vmatmul.mubr.bf16.gmra.mrb[0].mxu0 %v403
        %v508 = vpop.f32.mrb[0].mxu0
        %v509 = vadd.f32 0.0, %v508
        %v510 = vpop.f32.mrb[0].mxu0
        %v511 = vadd.f32 0.0, %v510
        %v512 = vpop.f32.mrb[0].mxu0
        %v513 = vadd.f32 0.0, %v512
        %v514 = vpop.f32.mrb[0].mxu0
        %v515 = vadd.f32 0.0, %v514
        %516 = vmatprep.mubr.bf16.mxu0 0
        %517 = vmatmul.mubr.bf16.gmra.mrb[0].mxu0 %v406
        %v518 = vpop.f32.mrb[0].mxu0
        %v519 = vadd.f32 0.0, %v518
        %v520 = vpop.f32.mrb[0].mxu0
        %v521 = vadd.f32 0.0, %v520
        %v522 = vpop.f32.mrb[0].mxu0
        %v523 = vadd.f32 0.0, %v522
        %v524 = vpop.f32.mrb[0].mxu0
        %v525 = vadd.f32 0.0, %v524
        %526 = vdwg.mxu0
        %v551 = vunpack.c.l.b16 %v222
        %v552 = vunpack.c.h.b16 %v222
        %v553 = vunpack.c.l.b16 %v223
        %v554 = vunpack.c.h.b16 %v223
        %v555 = vunpack.c.l.b16 %v224
        %v556 = vunpack.c.h.b16 %v224
        %v557 = vunpack.c.l.b16 %v225
        %v558 = vunpack.c.h.b16 %v225
        %v559 = vunpack.c.l.b16 %v226
        %v560 = vunpack.c.h.b16 %v226
        %v561 = vunpack.c.l.b16 %v227
        %v562 = vunpack.c.h.b16 %v227
        %v563 = vunpack.c.l.b16 %v228
        %v564 = vunpack.c.h.b16 %v228
        %v565 = vunpack.c.l.b16 %v229
        %v566 = vunpack.c.h.b16 %v229
        %v567 = vunpack.c.l.b16 %v230
        %v568 = vunpack.c.h.b16 %v230
        %v569 = vunpack.c.l.b16 %v231
        %v570 = vunpack.c.h.b16 %v231
        %v571 = vunpack.c.l.b16 %v232
        %v572 = vunpack.c.h.b16 %v232
        %v573 = vunpack.c.l.b16 %v233
        %v574 = vunpack.c.h.b16 %v233
        %v575 = vunpack.c.l.b16 %v234
        %v576 = vunpack.c.h.b16 %v234
        %v577 = vunpack.c.l.b16 %v235
        %v578 = vunpack.c.h.b16 %v235
        %v579 = vunpack.c.l.b16 %v236
        %v580 = vunpack.c.h.b16 %v236
        %v581 = vunpack.c.l.b16 %v237
        %v582 = vunpack.c.h.b16 %v237
        %v583 = vunpack.c.l.b16 %v238
        %v584 = vunpack.c.h.b16 %v238
        %v585 = vunpack.c.l.b16 %v239
        %v586 = vunpack.c.h.b16 %v239
        %v587 = vunpack.c.l.b16 %v240
        %v588 = vunpack.c.h.b16 %v240
        %v589 = vunpack.c.l.b16 %v241
        %v590 = vunpack.c.h.b16 %v241
        %v591 = vunpack.c.l.b16 %v242
        %v592 = vunpack.c.h.b16 %v242
        %v593 = vunpack.c.l.b16 %v243
        %v594 = vunpack.c.h.b16 %v243
        %v595 = vunpack.c.l.b16 %v244
        %v596 = vunpack.c.h.b16 %v244
        %v597 = vunpack.c.l.b16 %v245
        %v598 = vunpack.c.h.b16 %v245
        %v599 = vpack.c.b16 %v555, %v551
        %v600 = vpack.c.b16 %v556, %v552
        %v601 = vpack.c.b16 %v557, %v553
        %v602 = vpack.c.b16 %v558, %v554
        %v603 = vpack.c.b16 %v563, %v559
        %v604 = vpack.c.b16 %v564, %v560
        %v605 = vpack.c.b16 %v565, %v561
        %v606 = vpack.c.b16 %v566, %v562
        %v607 = vpack.c.b16 %v571, %v567
        %v608 = vpack.c.b16 %v572, %v568
        %v609 = vpack.c.b16 %v573, %v569
        %v610 = vpack.c.b16 %v574, %v570
        %v611 = vpack.c.b16 %v579, %v575
        %v612 = vpack.c.b16 %v580, %v576
        %v613 = vpack.c.b16 %v581, %v577
        %v614 = vpack.c.b16 %v582, %v578
        %v615 = vpack.c.b16 %v587, %v583
        %v616 = vpack.c.b16 %v588, %v584
        %v617 = vpack.c.b16 %v589, %v585
        %v618 = vpack.c.b16 %v590, %v586
        %v619 = vpack.c.b16 %v595, %v591
        %v620 = vpack.c.b16 %v596, %v592
        %v621 = vpack.c.b16 %v597, %v593
        %v622 = vpack.c.b16 %v598, %v594
        %v644 = vsel %vm401, %v279, 0
        %v647 = vsel %vm401, %v280, 0
        %v650 = vsel %vm408, %v619, 0
        %v653 = vsel %vm408, %v620, 0
        %v656 = vsel %vm408, %v621, 0
        %v659 = vsel %vm408, %v622, 0
        %661 = vmatprep.subr.bf16.mxu0 %v600
        %662 = vmatpush1.bf16.msra.mxu0 %v599
        %663 = vmatprep.subr.bf16.mxu0 %v604
        %664 = vmatpush1.bf16.msra.mxu0 %v603
        %665 = vmatprep.subr.bf16.mxu0 %v608
        %666 = vmatpush1.bf16.msra.mxu0 %v607
        %667 = vmatprep.subr.bf16.mxu0 %v612
        %668 = vmatpush1.bf16.msra.mxu0 %v611
        %669 = vmatprep.subr.bf16.mxu0 %v616
        %670 = vmatpush1.bf16.msra.mxu0 %v615
        %671 = vmatprep.subr.bf16.mxu0 %v653
        %672 = vmatpush1.bf16.msra.mxu0 %v650
        %673 = vmatprep.subr.bf16.mxu0 0
        %674 = vmatpush1.bf16.msra.mxu0 0
        %675 = vmatprep.subr.bf16.mxu0 0
        %676 = vmatpush1.bf16.msra.mxu0 0
        %677 = vmatprep.subr.bf16.mxu0 0
        %678 = vmatpush1.bf16.msra.mxu0 0
        %679 = vmatprep.subr.bf16.mxu0 0
        %680 = vmatpush1.bf16.msra.mxu0 0
        %681 = vmatprep.subr.bf16.mxu0 0
        %682 = vmatpush1.bf16.msra.mxu0 0
        %683 = vmatprep.subr.bf16.mxu0 0
        %684 = vmatpush1.bf16.msra.mxu0 0
        %685 = vmatprep.subr.bf16.mxu0 0
        %686 = vmatpush1.bf16.msra.mxu0 0
        %687 = vmatprep.subr.bf16.mxu0 0
        %688 = vmatpush1.bf16.msra.mxu0 0
        %689 = vmatprep.subr.bf16.mxu0 0
        %690 = vmatpush1.bf16.msra.mxu0 0
        %691 = vmatprep.subr.bf16.mxu0 0
        %692 = vmatpush1.bf16.msra.mxu0 0
        %693 = vmatprep.mubr.bf16.mxu0 0
        %694 = vmatmul.mubr.bf16.gmra.mrb[0].mxu0 %v644
        %v695 = vpop.f32.mrb[0].mxu0
        %v696 = vadd.f32 %v456, %v695
        %v697 = vpop.f32.mrb[0].mxu0
        %v698 = vadd.f32 %v458, %v697
        %v699 = vpop.f32.mrb[0].mxu0
        %v700 = vadd.f32 %v460, %v699
        %v701 = vpop.f32.mrb[0].mxu0
        %v702 = vadd.f32 %v462, %v701
        %703 = vmatprep.mubr.bf16.mxu0 0
        %704 = vmatmul.mubr.bf16.gmra.mrb[0].mxu0 %v647
        %v705 = vpop.f32.mrb[0].mxu0
        %v706 = vadd.f32 %v466, %v705
        %v707 = vpop.f32.mrb[0].mxu0
        %v708 = vadd.f32 %v468, %v707
        %v709 = vpop.f32.mrb[0].mxu0
        %v710 = vadd.f32 %v470, %v709
        %v711 = vpop.f32.mrb[0].mxu0
        %v712 = vadd.f32 %v472, %v711
        %713 = vdwg.mxu0
        %714 = vmatprep.subr.bf16.mxu0 %v602
        %715 = vmatpush1.bf16.msra.mxu0 %v601
        %716 = vmatprep.subr.bf16.mxu0 %v606
        %717 = vmatpush1.bf16.msra.mxu0 %v605
        %718 = vmatprep.subr.bf16.mxu0 %v610
        %719 = vmatpush1.bf16.msra.mxu0 %v609
        %720 = vmatprep.subr.bf16.mxu0 %v614
        %721 = vmatpush1.bf16.msra.mxu0 %v613
        %722 = vmatprep.subr.bf16.mxu0 %v618
        %723 = vmatpush1.bf16.msra.mxu0 %v617
        %724 = vmatprep.subr.bf16.mxu0 %v659
        %725 = vmatpush1.bf16.msra.mxu0 %v656
        %726 = vmatprep.subr.bf16.mxu0 0
        %727 = vmatpush1.bf16.msra.mxu0 0
        %728 = vmatprep.subr.bf16.mxu0 0
        %729 = vmatpush1.bf16.msra.mxu0 0
        %730 = vmatprep.subr.bf16.mxu0 0
        %731 = vmatpush1.bf16.msra.mxu0 0
        %732 = vmatprep.subr.bf16.mxu0 0
        %733 = vmatpush1.bf16.msra.mxu0 0
        %734 = vmatprep.subr.bf16.mxu0 0
        %735 = vmatpush1.bf16.msra.mxu0 0
        %736 = vmatprep.subr.bf16.mxu0 0
        %737 = vmatpush1.bf16.msra.mxu0 0
        %738 = vmatprep.subr.bf16.mxu0 0
        %739 = vmatpush1.bf16.msra.mxu0 0
        %740 = vmatprep.subr.bf16.mxu0 0
        %741 = vmatpush1.bf16.msra.mxu0 0
        %742 = vmatprep.subr.bf16.mxu0 0
        %743 = vmatpush1.bf16.msra.mxu0 0
        %744 = vmatprep.subr.bf16.mxu0 0
        %745 = vmatpush1.bf16.msra.mxu0 0
        %746 = vmatprep.mubr.bf16.mxu0 0
        %747 = vmatmul.mubr.bf16.gmra.mrb[0].mxu0 %v644
        %v748 = vpop.f32.mrb[0].mxu0
        %v749 = vadd.f32 %v509, %v748
        %v750 = vpop.f32.mrb[0].mxu0
        %v751 = vadd.f32 %v511, %v750
        %v752 = vpop.f32.mrb[0].mxu0
        %v753 = vadd.f32 %v513, %v752
        %v754 = vpop.f32.mrb[0].mxu0
        %v755 = vadd.f32 %v515, %v754
        %756 = vmatprep.mubr.bf16.mxu0 0
        %757 = vmatmul.mubr.bf16.gmra.mrb[0].mxu0 %v647
        %v758 = vpop.f32.mrb[0].mxu0
        %v759 = vadd.f32 %v519, %v758
        %v760 = vpop.f32.mrb[0].mxu0
        %v761 = vadd.f32 %v521, %v760
        %v762 = vpop.f32.mrb[0].mxu0
        %v763 = vadd.f32 %v523, %v762
        %v764 = vpop.f32.mrb[0].mxu0
        %v765 = vadd.f32 %v525, %v764
        %766 = vdwg.mxu0
        %s767 = scalar_lea.vmem [#allocation5], 384
        %v768 = vld [vmem:[%s767] sm:$0xff]
        %v769 = vld [vmem:[%s767 + $0x8] sm:$0xff]
        %v770 = vld [vmem:[%s767 + $0x10] sm:$0xff]
        %v771 = vld [vmem:[%s767 + $0x18] sm:$0xff]
        %v772 = vld [vmem:[%s767 + $0x20] sm:$0xff]
        %v773 = vld [vmem:[%s767 + $0x28] sm:$0xff]
        %v774 = vld [vmem:[%s767 + $0x30] sm:$0xff]
        %v775 = vld [vmem:[%s767 + $0x38] sm:$0xff]
        %v776 = vld [vmem:[%s767 + $0x40] sm:$0xff]
        %v777 = vld [vmem:[%s767 + $0x48] sm:$0xff]
        %v778 = vld [vmem:[%s767 + $0x50] sm:$0xff]
        %v779 = vld [vmem:[%s767 + $0x58] sm:$0xff]
        %v780 = vld [vmem:[%s767 + $0x60] sm:$0xff]
        %v781 = vld [vmem:[%s767 + $0x68] sm:$0xff]
        %v782 = vld [vmem:[%s767 + $0x70] sm:$0xff]
        %v783 = vld [vmem:[%s767 + $0x78] sm:$0xff]
        %v784 = vld [vmem:[%s767 + $0x80] sm:$0xff]
        %v785 = vld [vmem:[%s767 + $0x88] sm:$0xff]
        %v786 = vld [vmem:[%s767 + $0x90] sm:$0xff]
        %v787 = vld [vmem:[%s767 + $0x98] sm:$0xff]
        %v788 = vld [vmem:[%s767 + $0xa0] sm:$0xff]
        %v789 = vld [vmem:[%s767 + $0xa8] sm:$0xff]
        %v790 = vld [vmem:[%s767 + $0xb0] sm:$0x11]
        %v791 = vld [vmem:[%s767 + $0xb8] sm:$0x11]
        %792 = vrot.lane.b32.xlu0 %v279, 122
        %v793 = vpop.permute.xlu0 %792
        %794 = vrot.lane.b32.xlu0 %v280, 122
        %v795 = vpop.permute.xlu0 %794
        %v820 = vunpack.c.l.b16 %v768
        %v821 = vunpack.c.h.b16 %v768
        %v822 = vunpack.c.l.b16 %v769
        %v823 = vunpack.c.h.b16 %v769
        %v824 = vunpack.c.l.b16 %v770
        %v825 = vunpack.c.h.b16 %v770
        %v826 = vunpack.c.l.b16 %v771
        %v827 = vunpack.c.h.b16 %v771
        %v828 = vunpack.c.l.b16 %v772
        %v829 = vunpack.c.h.b16 %v772
        %v830 = vunpack.c.l.b16 %v773
        %v831 = vunpack.c.h.b16 %v773
        %v832 = vunpack.c.l.b16 %v774
        %v833 = vunpack.c.h.b16 %v774
        %v834 = vunpack.c.l.b16 %v775
        %v835 = vunpack.c.h.b16 %v775
        %v836 = vunpack.c.l.b16 %v776
        %v837 = vunpack.c.h.b16 %v776
        %v838 = vunpack.c.l.b16 %v777
        %v839 = vunpack.c.h.b16 %v777
        %v840 = vunpack.c.l.b16 %v778
        %v841 = vunpack.c.h.b16 %v778
        %v842 = vunpack.c.l.b16 %v779
        %v843 = vunpack.c.h.b16 %v779
        %v844 = vunpack.c.l.b16 %v780
        %v845 = vunpack.c.h.b16 %v780
        %v846 = vunpack.c.l.b16 %v781
        %v847 = vunpack.c.h.b16 %v781
        %v848 = vunpack.c.l.b16 %v782
        %v849 = vunpack.c.h.b16 %v782
        %v850 = vunpack.c.l.b16 %v783
        %v851 = vunpack.c.h.b16 %v783
        %v852 = vunpack.c.l.b16 %v784
        %v853 = vunpack.c.h.b16 %v784
        %v854 = vunpack.c.l.b16 %v785
        %v855 = vunpack.c.h.b16 %v785
        %v856 = vunpack.c.l.b16 %v786
        %v857 = vunpack.c.h.b16 %v786
        %v858 = vunpack.c.l.b16 %v787
        %v859 = vunpack.c.h.b16 %v787
        %v860 = vunpack.c.l.b16 %v788
        %v861 = vunpack.c.h.b16 %v788
        %v862 = vunpack.c.l.b16 %v789
        %v863 = vunpack.c.h.b16 %v789
        %v864 = vunpack.c.l.b16 %v790
        %v865 = vunpack.c.h.b16 %v790
        %v866 = vunpack.c.l.b16 %v791
        %v867 = vunpack.c.h.b16 %v791
        %v868 = vpack.c.b16 %v824, %v820
        %v869 = vpack.c.b16 %v825, %v821
        %v870 = vpack.c.b16 %v826, %v822
        %v871 = vpack.c.b16 %v827, %v823
        %v872 = vpack.c.b16 %v832, %v828
        %v873 = vpack.c.b16 %v833, %v829
        %v874 = vpack.c.b16 %v834, %v830
        %v875 = vpack.c.b16 %v835, %v831
        %v876 = vpack.c.b16 %v840, %v836
        %v877 = vpack.c.b16 %v841, %v837
        %v878 = vpack.c.b16 %v842, %v838
        %v879 = vpack.c.b16 %v843, %v839
        %v880 = vpack.c.b16 %v848, %v844
        %v881 = vpack.c.b16 %v849, %v845
        %v882 = vpack.c.b16 %v850, %v846
        %v883 = vpack.c.b16 %v851, %v847
        %v884 = vpack.c.b16 %v856, %v852
        %v885 = vpack.c.b16 %v857, %v853
        %v886 = vpack.c.b16 %v858, %v854
        %v887 = vpack.c.b16 %v859, %v855
        %v888 = vpack.c.b16 %v864, %v860
        %v889 = vpack.c.b16 %v865, %v861
        %v890 = vpack.c.b16 %v866, %v862
        %v891 = vpack.c.b16 %v867, %v863
        %v913 = vsel %vm401, %v793, 0
        %v916 = vsel %vm401, %v795, 0
        %v919 = vsel %vm408, %v888, 0
        %v922 = vsel %vm408, %v889, 0
        %v925 = vsel %vm408, %v890, 0
        %v928 = vsel %vm408, %v891, 0
        %930 = vmatprep.subr.bf16.mxu0 %v869
        %931 = vmatpush1.bf16.msra.mxu0 %v868
        %932 = vmatprep.subr.bf16.mxu0 %v873
        %933 = vmatpush1.bf16.msra.mxu0 %v872
        %934 = vmatprep.subr.bf16.mxu0 %v877
        %935 = vmatpush1.bf16.msra.mxu0 %v876
        %936 = vmatprep.subr.bf16.mxu0 %v881
        %937 = vmatpush1.bf16.msra.mxu0 %v880
        %938 = vmatprep.subr.bf16.mxu0 %v885
        %939 = vmatpush1.bf16.msra.mxu0 %v884
        %940 = vmatprep.subr.bf16.mxu0 %v922
        %941 = vmatpush1.bf16.msra.mxu0 %v919
        %942 = vmatprep.subr.bf16.mxu0 0
        %943 = vmatpush1.bf16.msra.mxu0 0
        %944 = vmatprep.subr.bf16.mxu0 0
        %945 = vmatpush1.bf16.msra.mxu0 0
        %946 = vmatprep.subr.bf16.mxu0 0
        %947 = vmatpush1.bf16.msra.mxu0 0
        %948 = vmatprep.subr.bf16.mxu0 0
        %949 = vmatpush1.bf16.msra.mxu0 0
        %950 = vmatprep.subr.bf16.mxu0 0
        %951 = vmatpush1.bf16.msra.mxu0 0
        %952 = vmatprep.subr.bf16.mxu0 0
        %953 = vmatpush1.bf16.msra.mxu0 0
        %954 = vmatprep.subr.bf16.mxu0 0
        %955 = vmatpush1.bf16.msra.mxu0 0
        %956 = vmatprep.subr.bf16.mxu0 0
        %957 = vmatpush1.bf16.msra.mxu0 0
        %958 = vmatprep.subr.bf16.mxu0 0
        %959 = vmatpush1.bf16.msra.mxu0 0
        %960 = vmatprep.subr.bf16.mxu0 0
        %961 = vmatpush1.bf16.msra.mxu0 0
        %962 = vmatprep.mubr.bf16.mxu0 0
        %963 = vmatmul.mubr.bf16.gmra.mrb[0].mxu0 %v913
        %v964 = vpop.f32.mrb[0].mxu0
        %v965 = vadd.f32 0.0, %v964
        %v966 = vpop.f32.mrb[0].mxu0
        %v967 = vadd.f32 0.0, %v966
        %v968 = vpop.f32.mrb[0].mxu0
        %v969 = vadd.f32 0.0, %v968
        %v970 = vpop.f32.mrb[0].mxu0
        %v971 = vadd.f32 0.0, %v970
        %972 = vmatprep.mubr.bf16.mxu0 0
        %973 = vmatmul.mubr.bf16.gmra.mrb[0].mxu0 %v916
        %v974 = vpop.f32.mrb[0].mxu0
        %v975 = vadd.f32 0.0, %v974
        %v976 = vpop.f32.mrb[0].mxu0
        %v977 = vadd.f32 0.0, %v976
        %v978 = vpop.f32.mrb[0].mxu0
        %v979 = vadd.f32 0.0, %v978
        %v980 = vpop.f32.mrb[0].mxu0
        %v981 = vadd.f32 0.0, %v980
        %982 = vdwg.mxu0
        %983 = vmatprep.subr.bf16.mxu0 %v871
        %984 = vmatpush1.bf16.msra.mxu0 %v870
        %985 = vmatprep.subr.bf16.mxu0 %v875
        %986 = vmatpush1.bf16.msra.mxu0 %v874
        %987 = vmatprep.subr.bf16.mxu0 %v879
        %988 = vmatpush1.bf16.msra.mxu0 %v878
        %989 = vmatprep.subr.bf16.mxu0 %v883
        %990 = vmatpush1.bf16.msra.mxu0 %v882
        %991 = vmatprep.subr.bf16.mxu0 %v887
        %992 = vmatpush1.bf16.msra.mxu0 %v886
        %993 = vmatprep.subr.bf16.mxu0 %v928
        %994 = vmatpush1.bf16.msra.mxu0 %v925
        %995 = vmatprep.subr.bf16.mxu0 0
        %996 = vmatpush1.bf16.msra.mxu0 0
        %997 = vmatprep.subr.bf16.mxu0 0
        %998 = vmatpush1.bf16.msra.mxu0 0
        %999 = vmatprep.subr.bf16.mxu0 0
        %1000 = vmatpush1.bf16.msra.mxu0 0
        %1001 = vmatprep.subr.bf16.mxu0 0
        %1002 = vmatpush1.bf16.msra.mxu0 0
        %1003 = vmatprep.subr.bf16.mxu0 0
        %1004 = vmatpush1.bf16.msra.mxu0 0
        %1005 = vmatprep.subr.bf16.mxu0 0
        %1006 = vmatpush1.bf16.msra.mxu0 0
        %1007 = vmatprep.subr.bf16.mxu0 0
        %1008 = vmatpush1.bf16.msra.mxu0 0
        %1009 = vmatprep.subr.bf16.mxu0 0
        %1010 = vmatpush1.bf16.msra.mxu0 0
        %1011 = vmatprep.subr.bf16.mxu0 0
        %1012 = vmatpush1.bf16.msra.mxu0 0
        %1013 = vmatprep.subr.bf16.mxu0 0
        %1014 = vmatpush1.bf16.msra.mxu0 0
        %1015 = vmatprep.mubr.bf16.mxu0 0
        %1016 = vmatmul.mubr.bf16.gmra.mrb[0].mxu0 %v913
        %v1017 = vpop.f32.mrb[0].mxu0
        %v1018 = vadd.f32 0.0, %v1017
        %v1019 = vpop.f32.mrb[0].mxu0
        %v1020 = vadd.f32 0.0, %v1019
        %v1021 = vpop.f32.mrb[0].mxu0
        %v1022 = vadd.f32 0.0, %v1021
        %v1023 = vpop.f32.mrb[0].mxu0
        %v1024 = vadd.f32 0.0, %v1023
        %1025 = vmatprep.mubr.bf16.mxu0 0
        %1026 = vmatmul.mubr.bf16.gmra.mrb[0].mxu0 %v916
        %v1027 = vpop.f32.mrb[0].mxu0
        %v1028 = vadd.f32 0.0, %v1027
        %v1029 = vpop.f32.mrb[0].mxu0
        %v1030 = vadd.f32 0.0, %v1029
        %v1031 = vpop.f32.mrb[0].mxu0
        %v1032 = vadd.f32 0.0, %v1031
        %v1033 = vpop.f32.mrb[0].mxu0
        %v1034 = vadd.f32 0.0, %v1033
        %1035 = vdwg.mxu0
        %v1036 = vadd.f32 %v696, %v965
        %v1037 = vadd.f32 %v698, %v967
        %v1038 = vadd.f32 %v749, %v1018
        %v1039 = vadd.f32 %v751, %v1020
        %v1040 = vadd.f32 %v700, %v969
        %v1041 = vadd.f32 %v702, %v971
        %v1042 = vadd.f32 %v753, %v1022
        %v1043 = vadd.f32 %v755, %v1024
        %v1044 = vadd.f32 %v706, %v975
        %v1045 = vadd.f32 %v708, %v977
        %v1046 = vadd.f32 %v759, %v1028
        %v1047 = vadd.f32 %v761, %v1030
        %v1048 = vadd.f32 %v710, %v979
        %v1049 = vadd.f32 %v712, %v981
        %v1050 = vadd.f32 %v763, %v1032
        %v1051 = vadd.f32 %v765, %v1034
        %v1052 = vld [vmem:[%s185 + $0xc] sm:$0xf]
        %s1053 = scalar_lea.vmem [#allocation5], 576
        %v1054 = vld [vmem:[%s1053] sm:$0xff]
        %v1055 = vld [vmem:[%s1053 + $0x8] sm:$0xff]
        %v1056 = vld [vmem:[%s1053 + $0x10] sm:$0xff]
        %v1057 = vld [vmem:[%s1053 + $0x18] sm:$0xff]
        %v1058 = vld [vmem:[%s1053 + $0x20] sm:$0xff]
        %v1059 = vld [vmem:[%s1053 + $0x28] sm:$0xff]
        %v1060 = vld [vmem:[%s1053 + $0x30] sm:$0xff]
        %v1061 = vld [vmem:[%s1053 + $0x38] sm:$0xff]
        %v1062 = vld [vmem:[%s1053 + $0x40] sm:$0xff]
        %v1063 = vld [vmem:[%s1053 + $0x48] sm:$0xff]
        %v1064 = vld [vmem:[%s1053 + $0x50] sm:$0xff]
        %v1065 = vld [vmem:[%s1053 + $0x58] sm:$0xff]
        %v1066 = vld [vmem:[%s1053 + $0x60] sm:$0xff]
        %v1067 = vld [vmem:[%s1053 + $0x68] sm:$0xff]
        %v1068 = vld [vmem:[%s1053 + $0x70] sm:$0xff]
        %v1069 = vld [vmem:[%s1053 + $0x78] sm:$0xff]
        %v1070 = vld [vmem:[%s1053 + $0x80] sm:$0xff]
        %v1071 = vld [vmem:[%s1053 + $0x88] sm:$0xff]
        %v1072 = vld [vmem:[%s1053 + $0x90] sm:$0xff]
        %v1073 = vld [vmem:[%s1053 + $0x98] sm:$0xff]
        %v1074 = vld [vmem:[%s1053 + $0xa0] sm:$0xff]
        %v1075 = vld [vmem:[%s1053 + $0xa8] sm:$0xff]
        %v1076 = vld [vmem:[%s1053 + $0xb0] sm:$0x11]
        %v1077 = vld [vmem:[%s1053 + $0xb8] sm:$0x11]
        %v1079 = vunpack.c.l.b16 %v1052
        %v1080 = vpack.c.b16 %v1079, %v277
        %vm1081 = vsmask.f32 7424
        %v1082 = vshrl.u32 %v279, 16
        %v1084 = vshll.u32 %v279, 16
        %v1086 = vrot.slane %v1084, 1
        %v1087 = vor.u32 %v1082, %v1086
        %v1089 = vshll.u32 %v1080, 16
        %v1091 = vrot.slane %v1089, 1
        %v1092 = vsel %vm1081, %v1087, %v1091
        %v1093 = vshrl.u32 %v1080, 16
        %v1095 = vor.u32 %v1093, %v1091
        %v1120 = vunpack.c.l.b16 %v1054
        %v1121 = vunpack.c.h.b16 %v1054
        %v1122 = vunpack.c.l.b16 %v1055
        %v1123 = vunpack.c.h.b16 %v1055
        %v1124 = vunpack.c.l.b16 %v1056
        %v1125 = vunpack.c.h.b16 %v1056
        %v1126 = vunpack.c.l.b16 %v1057
        %v1127 = vunpack.c.h.b16 %v1057
        %v1128 = vunpack.c.l.b16 %v1058
        %v1129 = vunpack.c.h.b16 %v1058
        %v1130 = vunpack.c.l.b16 %v1059
        %v1131 = vunpack.c.h.b16 %v1059
        %v1132 = vunpack.c.l.b16 %v1060
        %v1133 = vunpack.c.h.b16 %v1060
        %v1134 = vunpack.c.l.b16 %v1061
        %v1135 = vunpack.c.h.b16 %v1061
        %v1136 = vunpack.c.l.b16 %v1062
        %v1137 = vunpack.c.h.b16 %v1062
        %v1138 = vunpack.c.l.b16 %v1063
        %v1139 = vunpack.c.h.b16 %v1063
        %v1140 = vunpack.c.l.b16 %v1064
        %v1141 = vunpack.c.h.b16 %v1064
        %v1142 = vunpack.c.l.b16 %v1065
        %v1143 = vunpack.c.h.b16 %v1065
        %v1144 = vunpack.c.l.b16 %v1066
        %v1145 = vunpack.c.h.b16 %v1066
        %v1146 = vunpack.c.l.b16 %v1067
        %v1147 = vunpack.c.h.b16 %v1067
        %v1148 = vunpack.c.l.b16 %v1068
        %v1149 = vunpack.c.h.b16 %v1068
        %v1150 = vunpack.c.l.b16 %v1069
        %v1151 = vunpack.c.h.b16 %v1069
        %v1152 = vunpack.c.l.b16 %v1070
        %v1153 = vunpack.c.h.b16 %v1070
        %v1154 = vunpack.c.l.b16 %v1071
        %v1155 = vunpack.c.h.b16 %v1071
        %v1156 = vunpack.c.l.b16 %v1072
        %v1157 = vunpack.c.h.b16 %v1072
        %v1158 = vunpack.c.l.b16 %v1073
        %v1159 = vunpack.c.h.b16 %v1073
        %v1160 = vunpack.c.l.b16 %v1074
        %v1161 = vunpack.c.h.b16 %v1074
        %v1162 = vunpack.c.l.b16 %v1075
        %v1163 = vunpack.c.h.b16 %v1075
        %v1164 = vunpack.c.l.b16 %v1076
        %v1165 = vunpack.c.h.b16 %v1076
        %v1166 = vunpack.c.l.b16 %v1077
        %v1167 = vunpack.c.h.b16 %v1077
        %v1168 = vpack.c.b16 %v1124, %v1120
        %v1169 = vpack.c.b16 %v1125, %v1121
        %v1170 = vpack.c.b16 %v1126, %v1122
        %v1171 = vpack.c.b16 %v1127, %v1123
        %v1172 = vpack.c.b16 %v1132, %v1128
        %v1173 = vpack.c.b16 %v1133, %v1129
        %v1174 = vpack.c.b16 %v1134, %v1130
        %v1175 = vpack.c.b16 %v1135, %v1131
        %v1176 = vpack.c.b16 %v1140, %v1136
        %v1177 = vpack.c.b16 %v1141, %v1137
        %v1178 = vpack.c.b16 %v1142, %v1138
        %v1179 = vpack.c.b16 %v1143, %v1139
        %v1180 = vpack.c.b16 %v1148, %v1144
        %v1181 = vpack.c.b16 %v1149, %v1145
        %v1182 = vpack.c.b16 %v1150, %v1146
        %v1183 = vpack.c.b16 %v1151, %v1147
        %v1184 = vpack.c.b16 %v1156, %v1152
        %v1185 = vpack.c.b16 %v1157, %v1153
        %v1186 = vpack.c.b16 %v1158, %v1154
        %v1187 = vpack.c.b16 %v1159, %v1155
        %v1188 = vpack.c.b16 %v1164, %v1160
        %v1189 = vpack.c.b16 %v1165, %v1161
        %v1190 = vpack.c.b16 %v1166, %v1162
        %v1191 = vpack.c.b16 %v1167, %v1163
        %v1213 = vsel %vm401, %v1092, 0
        %v1216 = vsel %vm401, %v1095, 0
        %v1219 = vsel %vm408, %v1188, 0
        %v1222 = vsel %vm408, %v1189, 0
        %v1225 = vsel %vm408, %v1190, 0
        %v1228 = vsel %vm408, %v1191, 0
        %1230 = vmatprep.subr.bf16.mxu0 %v1169
        %1231 = vmatpush1.bf16.msra.mxu0 %v1168
        %1232 = vmatprep.subr.bf16.mxu0 %v1173
        %1233 = vmatpush1.bf16.msra.mxu0 %v1172
        %1234 = vmatprep.subr.bf16.mxu0 %v1177
        %1235 = vmatpush1.bf16.msra.mxu0 %v1176
        %1236 = vmatprep.subr.bf16.mxu0 %v1181
        %1237 = vmatpush1.bf16.msra.mxu0 %v1180
        %1238 = vmatprep.subr.bf16.mxu0 %v1185
        %1239 = vmatpush1.bf16.msra.mxu0 %v1184
        %1240 = vmatprep.subr.bf16.mxu0 %v1222
        %1241 = vmatpush1.bf16.msra.mxu0 %v1219
        %1242 = vmatprep.subr.bf16.mxu0 0
        %1243 = vmatpush1.bf16.msra.mxu0 0
        %1244 = vmatprep.subr.bf16.mxu0 0
        %1245 = vmatpush1.bf16.msra.mxu0 0
        %1246 = vmatprep.subr.bf16.mxu0 0
        %1247 = vmatpush1.bf16.msra.mxu0 0
        %1248 = vmatprep.subr.bf16.mxu0 0
        %1249 = vmatpush1.bf16.msra.mxu0 0
        %1250 = vmatprep.subr.bf16.mxu0 0
        %1251 = vmatpush1.bf16.msra.mxu0 0
        %1252 = vmatprep.subr.bf16.mxu0 0
        %1253 = vmatpush1.bf16.msra.mxu0 0
        %1254 = vmatprep.subr.bf16.mxu0 0
        %1255 = vmatpush1.bf16.msra.mxu0 0
        %1256 = vmatprep.subr.bf16.mxu0 0
        %1257 = vmatpush1.bf16.msra.mxu0 0
        %1258 = vmatprep.subr.bf16.mxu0 0
        %1259 = vmatpush1.bf16.msra.mxu0 0
        %1260 = vmatprep.subr.bf16.mxu0 0
        %1261 = vmatpush1.bf16.msra.mxu0 0
        %1262 = vmatprep.mubr.bf16.mxu0 0
        %1263 = vmatmul.mubr.bf16.gmra.mrb[0].mxu0 %v1213
        %v1264 = vpop.f32.mrb[0].mxu0
        %v1265 = vadd.f32 0.0, %v1264
        %v1266 = vpop.f32.mrb[0].mxu0
        %v1267 = vadd.f32 0.0, %v1266
        %v1268 = vpop.f32.mrb[0].mxu0
        %v1269 = vadd.f32 0.0, %v1268
        %v1270 = vpop.f32.mrb[0].mxu0
        %v1271 = vadd.f32 0.0, %v1270
        %1272 = vmatprep.mubr.bf16.mxu0 0
        %1273 = vmatmul.mubr.bf16.gmra.mrb[0].mxu0 %v1216
        %v1274 = vpop.f32.mrb[0].mxu0
        %v1275 = vadd.f32 0.0, %v1274
        %v1276 = vpop.f32.mrb[0].mxu0
        %v1277 = vadd.f32 0.0, %v1276
        %v1278 = vpop.f32.mrb[0].mxu0
        %v1279 = vadd.f32 0.0, %v1278
        %v1280 = vpop.f32.mrb[0].mxu0
        %v1281 = vadd.f32 0.0, %v1280
        %1282 = vdwg.mxu0
        %1283 = vmatprep.subr.bf16.mxu0 %v1171
        %1284 = vmatpush1.bf16.msra.mxu0 %v1170
        %1285 = vmatprep.subr.bf16.mxu0 %v1175
        %1286 = vmatpush1.bf16.msra.mxu0 %v1174
        %1287 = vmatprep.subr.bf16.mxu0 %v1179
        %1288 = vmatpush1.bf16.msra.mxu0 %v1178
        %1289 = vmatprep.subr.bf16.mxu0 %v1183
        %1290 = vmatpush1.bf16.msra.mxu0 %v1182
        %1291 = vmatprep.subr.bf16.mxu0 %v1187
        %1292 = vmatpush1.bf16.msra.mxu0 %v1186
        %1293 = vmatprep.subr.bf16.mxu0 %v1228
        %1294 = vmatpush1.bf16.msra.mxu0 %v1225
        %1295 = vmatprep.subr.bf16.mxu0 0
        %1296 = vmatpush1.bf16.msra.mxu0 0
        %1297 = vmatprep.subr.bf16.mxu0 0
        %1298 = vmatpush1.bf16.msra.mxu0 0
        %1299 = vmatprep.subr.bf16.mxu0 0
        %1300 = vmatpush1.bf16.msra.mxu0 0
        %1301 = vmatprep.subr.bf16.mxu0 0
        %1302 = vmatpush1.bf16.msra.mxu0 0
        %1303 = vmatprep.subr.bf16.mxu0 0
        %1304 = vmatpush1.bf16.msra.mxu0 0
        %1305 = vmatprep.subr.bf16.mxu0 0
        %1306 = vmatpush1.bf16.msra.mxu0 0
        %1307 = vmatprep.subr.bf16.mxu0 0
        %1308 = vmatpush1.bf16.msra.mxu0 0
        %1309 = vmatprep.subr.bf16.mxu0 0
        %1310 = vmatpush1.bf16.msra.mxu0 0
        %1311 = vmatprep.subr.bf16.mxu0 0
        %1312 = vmatpush1.bf16.msra.mxu0 0
        %1313 = vmatprep.subr.bf16.mxu0 0
        %1314 = vmatpush1.bf16.msra.mxu0 0
        %1315 = vmatprep.mubr.bf16.mxu0 0
        %1316 = vmatmul.mubr.bf16.gmra.mrb[0].mxu0 %v1213
        %v1317 = vpop.f32.mrb[0].mxu0
        %v1318 = vadd.f32 0.0, %v1317
        %v1319 = vpop.f32.mrb[0].mxu0
        %v1320 = vadd.f32 0.0, %v1319
        %v1321 = vpop.f32.mrb[0].mxu0
        %v1322 = vadd.f32 0.0, %v1321
        %v1323 = vpop.f32.mrb[0].mxu0
        %v1324 = vadd.f32 0.0, %v1323
        %1325 = vmatprep.mubr.bf16.mxu0 0
        %1326 = vmatmul.mubr.bf16.gmra.mrb[0].mxu0 %v1216
        %v1327 = vpop.f32.mrb[0].mxu0
        %v1328 = vadd.f32 0.0, %v1327
        %v1329 = vpop.f32.mrb[0].mxu0
        %v1330 = vadd.f32 0.0, %v1329
        %v1331 = vpop.f32.mrb[0].mxu0
        %v1332 = vadd.f32 0.0, %v1331
        %v1333 = vpop.f32.mrb[0].mxu0
        %v1334 = vadd.f32 0.0, %v1333
        %1335 = vdwg.mxu0
        %v1336 = vadd.f32 %v1036, %v1265
        %v1337 = vadd.f32 %v1037, %v1267
        %v1338 = vadd.f32 %v1038, %v1318
        %v1339 = vadd.f32 %v1039, %v1320
        %v1340 = vadd.f32 %v1040, %v1269
        %v1341 = vadd.f32 %v1041, %v1271
        %v1342 = vadd.f32 %v1042, %v1322
        %v1343 = vadd.f32 %v1043, %v1324
        %v1344 = vadd.f32 %v1044, %v1275
        %v1345 = vadd.f32 %v1045, %v1277
        %v1346 = vadd.f32 %v1046, %v1328
        %v1347 = vadd.f32 %v1047, %v1330
        %v1348 = vadd.f32 %v1048, %v1279
        %v1349 = vadd.f32 %v1049, %v1281
        %v1350 = vadd.f32 %v1050, %v1332
        %v1351 = vadd.f32 %v1051, %v1334
        %s1352 = scalar_lea.vmem [#allocation5], 768
        %v1353 = vld [vmem:[%s1352] sm:$0xff]
        %v1354 = vld [vmem:[%s1352 + $0x8] sm:$0xff]
        %v1355 = vld [vmem:[%s1352 + $0x10] sm:$0xff]
        %v1356 = vld [vmem:[%s1352 + $0x18] sm:$0xff]
        %v1357 = vld [vmem:[%s1352 + $0x20] sm:$0xff]
        %v1358 = vld [vmem:[%s1352 + $0x28] sm:$0xff]
        %v1359 = vld [vmem:[%s1352 + $0x30] sm:$0xff]
        %v1360 = vld [vmem:[%s1352 + $0x38] sm:$0xff]
        %v1361 = vld [vmem:[%s1352 + $0x40] sm:$0xff]
        %v1362 = vld [vmem:[%s1352 + $0x48] sm:$0xff]
        %v1363 = vld [vmem:[%s1352 + $0x50] sm:$0xff]
        %v1364 = vld [vmem:[%s1352 + $0x58] sm:$0xff]
        %v1365 = vld [vmem:[%s1352 + $0x60] sm:$0xff]
        %v1366 = vld [vmem:[%s1352 + $0x68] sm:$0xff]
        %v1367 = vld [vmem:[%s1352 + $0x70] sm:$0xff]
        %v1368 = vld [vmem:[%s1352 + $0x78] sm:$0xff]
        %v1369 = vld [vmem:[%s1352 + $0x80] sm:$0xff]
        %v1370 = vld [vmem:[%s1352 + $0x88] sm:$0xff]
        %v1371 = vld [vmem:[%s1352 + $0x90] sm:$0xff]
        %v1372 = vld [vmem:[%s1352 + $0x98] sm:$0xff]
        %v1373 = vld [vmem:[%s1352 + $0xa0] sm:$0xff]
        %v1374 = vld [vmem:[%s1352 + $0xa8] sm:$0xff]
        %v1375 = vld [vmem:[%s1352 + $0xb0] sm:$0x11]
        %v1376 = vld [vmem:[%s1352 + $0xb8] sm:$0x11]
        %1377 = vrot.lane.b32.xlu0 %v1092, 125
        %v1378 = vpop.permute.xlu0 %1377
        %1379 = vrot.lane.b32.xlu0 %v1095, 125
        %v1380 = vpop.permute.xlu0 %1379
        %v1405 = vunpack.c.l.b16 %v1353
        %v1406 = vunpack.c.h.b16 %v1353
        %v1407 = vunpack.c.l.b16 %v1354
        %v1408 = vunpack.c.h.b16 %v1354
        %v1409 = vunpack.c.l.b16 %v1355
        %v1410 = vunpack.c.h.b16 %v1355
        %v1411 = vunpack.c.l.b16 %v1356
        %v1412 = vunpack.c.h.b16 %v1356
        %v1413 = vunpack.c.l.b16 %v1357
        %v1414 = vunpack.c.h.b16 %v1357
        %v1415 = vunpack.c.l.b16 %v1358
        %v1416 = vunpack.c.h.b16 %v1358
        %v1417 = vunpack.c.l.b16 %v1359
        %v1418 = vunpack.c.h.b16 %v1359
        %v1419 = vunpack.c.l.b16 %v1360
        %v1420 = vunpack.c.h.b16 %v1360
        %v1421 = vunpack.c.l.b16 %v1361
        %v1422 = vunpack.c.h.b16 %v1361
        %v1423 = vunpack.c.l.b16 %v1362
        %v1424 = vunpack.c.h.b16 %v1362
        %v1425 = vunpack.c.l.b16 %v1363
        %v1426 = vunpack.c.h.b16 %v1363
        %v1427 = vunpack.c.l.b16 %v1364
        %v1428 = vunpack.c.h.b16 %v1364
        %v1429 = vunpack.c.l.b16 %v1365
        %v1430 = vunpack.c.h.b16 %v1365
        %v1431 = vunpack.c.l.b16 %v1366
        %v1432 = vunpack.c.h.b16 %v1366
        %v1433 = vunpack.c.l.b16 %v1367
        %v1434 = vunpack.c.h.b16 %v1367
        %v1435 = vunpack.c.l.b16 %v1368
        %v1436 = vunpack.c.h.b16 %v1368
        %v1437 = vunpack.c.l.b16 %v1369
        %v1438 = vunpack.c.h.b16 %v1369
        %v1439 = vunpack.c.l.b16 %v1370
        %v1440 = vunpack.c.h.b16 %v1370
        %v1441 = vunpack.c.l.b16 %v1371
        %v1442 = vunpack.c.h.b16 %v1371
        %v1443 = vunpack.c.l.b16 %v1372
        %v1444 = vunpack.c.h.b16 %v1372
        %v1445 = vunpack.c.l.b16 %v1373
        %v1446 = vunpack.c.h.b16 %v1373
        %v1447 = vunpack.c.l.b16 %v1374
        %v1448 = vunpack.c.h.b16 %v1374
        %v1449 = vunpack.c.l.b16 %v1375
        %v1450 = vunpack.c.h.b16 %v1375
        %v1451 = vunpack.c.l.b16 %v1376
        %v1452 = vunpack.c.h.b16 %v1376
        %v1453 = vpack.c.b16 %v1409, %v1405
        %v1454 = vpack.c.b16 %v1410, %v1406
        %v1455 = vpack.c.b16 %v1411, %v1407
        %v1456 = vpack.c.b16 %v1412, %v1408
        %v1457 = vpack.c.b16 %v1417, %v1413
        %v1458 = vpack.c.b16 %v1418, %v1414
        %v1459 = vpack.c.b16 %v1419, %v1415
        %v1460 = vpack.c.b16 %v1420, %v1416
        %v1461 = vpack.c.b16 %v1425, %v1421
        %v1462 = vpack.c.b16 %v1426, %v1422
        %v1463 = vpack.c.b16 %v1427, %v1423
        %v1464 = vpack.c.b16 %v1428, %v1424
        %v1465 = vpack.c.b16 %v1433, %v1429
        %v1466 = vpack.c.b16 %v1434, %v1430
        %v1467 = vpack.c.b16 %v1435, %v1431
        %v1468 = vpack.c.b16 %v1436, %v1432
        %v1469 = vpack.c.b16 %v1441, %v1437
        %v1470 = vpack.c.b16 %v1442, %v1438
        %v1471 = vpack.c.b16 %v1443, %v1439
        %v1472 = vpack.c.b16 %v1444, %v1440
        %v1473 = vpack.c.b16 %v1449, %v1445
        %v1474 = vpack.c.b16 %v1450, %v1446
        %v1475 = vpack.c.b16 %v1451, %v1447
        %v1476 = vpack.c.b16 %v1452, %v1448
        %v1498 = vsel %vm401, %v1378, 0
        %v1501 = vsel %vm401, %v1380, 0
        %v1504 = vsel %vm408, %v1473, 0
        %v1507 = vsel %vm408, %v1474, 0
        %v1510 = vsel %vm408, %v1475, 0
        %v1513 = vsel %vm408, %v1476, 0
        %1515 = vmatprep.subr.bf16.mxu0 %v1454
        %1516 = vmatpush1.bf16.msra.mxu0 %v1453
        %1517 = vmatprep.subr.bf16.mxu0 %v1458
        %1518 = vmatpush1.bf16.msra.mxu0 %v1457
        %1519 = vmatprep.subr.bf16.mxu0 %v1462
        %1520 = vmatpush1.bf16.msra.mxu0 %v1461
        %1521 = vmatprep.subr.bf16.mxu0 %v1466
        %1522 = vmatpush1.bf16.msra.mxu0 %v1465
        %1523 = vmatprep.subr.bf16.mxu0 %v1470
        %1524 = vmatpush1.bf16.msra.mxu0 %v1469
        %1525 = vmatprep.subr.bf16.mxu0 %v1507
        %1526 = vmatpush1.bf16.msra.mxu0 %v1504
        %1527 = vmatprep.subr.bf16.mxu0 0
        %1528 = vmatpush1.bf16.msra.mxu0 0
        %1529 = vmatprep.subr.bf16.mxu0 0
        %1530 = vmatpush1.bf16.msra.mxu0 0
        %1531 = vmatprep.subr.bf16.mxu0 0
        %1532 = vmatpush1.bf16.msra.mxu0 0
        %1533 = vmatprep.subr.bf16.mxu0 0
        %1534 = vmatpush1.bf16.msra.mxu0 0
        %1535 = vmatprep.subr.bf16.mxu0 0
        %1536 = vmatpush1.bf16.msra.mxu0 0
        %1537 = vmatprep.subr.bf16.mxu0 0
        %1538 = vmatpush1.bf16.msra.mxu0 0
        %1539 = vmatprep.subr.bf16.mxu0 0
        %1540 = vmatpush1.bf16.msra.mxu0 0
        %1541 = vmatprep.subr.bf16.mxu0 0
        %1542 = vmatpush1.bf16.msra.mxu0 0
        %1543 = vmatprep.subr.bf16.mxu0 0
        %1544 = vmatpush1.bf16.msra.mxu0 0
        %1545 = vmatprep.subr.bf16.mxu0 0
        %1546 = vmatpush1.bf16.msra.mxu0 0
        %1547 = vmatprep.mubr.bf16.mxu0 0
        %1548 = vmatmul.mubr.bf16.gmra.mrb[0].mxu0 %v1498
        %v1549 = vpop.f32.mrb[0].mxu0
        %v1550 = vadd.f32 0.0, %v1549
        %v1551 = vpop.f32.mrb[0].mxu0
        %v1552 = vadd.f32 0.0, %v1551
        %v1553 = vpop.f32.mrb[0].mxu0
        %v1554 = vadd.f32 0.0, %v1553
        %v1555 = vpop.f32.mrb[0].mxu0
        %v1556 = vadd.f32 0.0, %v1555
        %1557 = vmatprep.mubr.bf16.mxu0 0
        %1558 = vmatmul.mubr.bf16.gmra.mrb[0].mxu0 %v1501
        %v1559 = vpop.f32.mrb[0].mxu0
        %v1560 = vadd.f32 0.0, %v1559
        %v1561 = vpop.f32.mrb[0].mxu0
        %v1562 = vadd.f32 0.0, %v1561
        %v1563 = vpop.f32.mrb[0].mxu0
        %v1564 = vadd.f32 0.0, %v1563
        %v1565 = vpop.f32.mrb[0].mxu0
        %v1566 = vadd.f32 0.0, %v1565
        %1567 = vdwg.mxu0
        %1568 = vmatprep.subr.bf16.mxu0 %v1456
        %1569 = vmatpush1.bf16.msra.mxu0 %v1455
        %1570 = vmatprep.subr.bf16.mxu0 %v1460
        %1571 = vmatpush1.bf16.msra.mxu0 %v1459
        %1572 = vmatprep.subr.bf16.mxu0 %v1464
        %1573 = vmatpush1.bf16.msra.mxu0 %v1463
        %1574 = vmatprep.subr.bf16.mxu0 %v1468
        %1575 = vmatpush1.bf16.msra.mxu0 %v1467
        %1576 = vmatprep.subr.bf16.mxu0 %v1472
        %1577 = vmatpush1.bf16.msra.mxu0 %v1471
        %1578 = vmatprep.subr.bf16.mxu0 %v1513
        %1579 = vmatpush1.bf16.msra.mxu0 %v1510
        %1580 = vmatprep.subr.bf16.mxu0 0
        %1581 = vmatpush1.bf16.msra.mxu0 0
        %1582 = vmatprep.subr.bf16.mxu0 0
        %1583 = vmatpush1.bf16.msra.mxu0 0
        %1584 = vmatprep.subr.bf16.mxu0 0
        %1585 = vmatpush1.bf16.msra.mxu0 0
        %1586 = vmatprep.subr.bf16.mxu0 0
        %1587 = vmatpush1.bf16.msra.mxu0 0
        %1588 = vmatprep.subr.bf16.mxu0 0
        %1589 = vmatpush1.bf16.msra.mxu0 0
        %1590 = vmatprep.subr.bf16.mxu0 0
        %1591 = vmatpush1.bf16.msra.mxu0 0
        %1592 = vmatprep.subr.bf16.mxu0 0
        %1593 = vmatpush1.bf16.msra.mxu0 0
        %1594 = vmatprep.subr.bf16.mxu0 0
        %1595 = vmatpush1.bf16.msra.mxu0 0
        %1596 = vmatprep.subr.bf16.mxu0 0
        %1597 = vmatpush1.bf16.msra.mxu0 0
        %1598 = vmatprep.subr.bf16.mxu0 0
        %1599 = vmatpush1.bf16.msra.mxu0 0
        %1600 = vmatprep.mubr.bf16.mxu0 0
        %1601 = vmatmul.mubr.bf16.gmra.mrb[0].mxu0 %v1498
        %v1602 = vpop.f32.mrb[0].mxu0
        %v1603 = vadd.f32 0.0, %v1602
        %v1604 = vpop.f32.mrb[0].mxu0
        %v1605 = vadd.f32 0.0, %v1604
        %v1606 = vpop.f32.mrb[0].mxu0
        %v1607 = vadd.f32 0.0, %v1606
        %v1608 = vpop.f32.mrb[0].mxu0
        %v1609 = vadd.f32 0.0, %v1608
        %1610 = vmatprep.mubr.bf16.mxu0 0
        %1611 = vmatmul.mubr.bf16.gmra.mrb[0].mxu0 %v1501
        %v1612 = vpop.f32.mrb[0].mxu0
        %v1613 = vadd.f32 0.0, %v1612
        %v1614 = vpop.f32.mrb[0].mxu0
        %v1615 = vadd.f32 0.0, %v1614
        %v1616 = vpop.f32.mrb[0].mxu0
        %v1617 = vadd.f32 0.0, %v1616
        %v1618 = vpop.f32.mrb[0].mxu0
        %v1619 = vadd.f32 0.0, %v1618
        %1620 = vdwg.mxu0
        %v1621 = vadd.f32 %v1336, %v1550
        %v1622 = vadd.f32 %v1337, %v1552
        %v1623 = vadd.f32 %v1338, %v1603
        %v1624 = vadd.f32 %v1339, %v1605
        %v1625 = vadd.f32 %v1340, %v1554
        %v1626 = vadd.f32 %v1341, %v1556
        %v1627 = vadd.f32 %v1342, %v1607
        %v1628 = vadd.f32 %v1343, %v1609
        %v1629 = vadd.f32 %v1344, %v1560
        %v1630 = vadd.f32 %v1345, %v1562
        %v1631 = vadd.f32 %v1346, %v1613
        %v1632 = vadd.f32 %v1347, %v1615
        %v1633 = vadd.f32 %v1348, %v1564
        %v1634 = vadd.f32 %v1349, %v1566
        %v1635 = vadd.f32 %v1350, %v1617
        %v1636 = vadd.f32 %v1351, %v1619
        %s1637 = scalar_lea.vmem [#allocation5], 960
        %v1638 = vld [vmem:[%s1637] sm:$0xff]
        %v1639 = vld [vmem:[%s1637 + $0x8] sm:$0xff]
        %v1640 = vld [vmem:[%s1637 + $0x10] sm:$0xff]
        %v1641 = vld [vmem:[%s1637 + $0x18] sm:$0xff]
        %v1642 = vld [vmem:[%s1637 + $0x20] sm:$0xff]
        %v1643 = vld [vmem:[%s1637 + $0x28] sm:$0xff]
        %v1644 = vld [vmem:[%s1637 + $0x30] sm:$0xff]
        %v1645 = vld [vmem:[%s1637 + $0x38] sm:$0xff]
        %v1646 = vld [vmem:[%s1637 + $0x40] sm:$0xff]
        %v1647 = vld [vmem:[%s1637 + $0x48] sm:$0xff]
        %v1648 = vld [vmem:[%s1637 + $0x50] sm:$0xff]
        %v1649 = vld [vmem:[%s1637 + $0x58] sm:$0xff]
        %v1650 = vld [vmem:[%s1637 + $0x60] sm:$0xff]
        %v1651 = vld [vmem:[%s1637 + $0x68] sm:$0xff]
        %v1652 = vld [vmem:[%s1637 + $0x70] sm:$0xff]
        %v1653 = vld [vmem:[%s1637 + $0x78] sm:$0xff]
        %v1654 = vld [vmem:[%s1637 + $0x80] sm:$0xff]
        %v1655 = vld [vmem:[%s1637 + $0x88] sm:$0xff]
        %v1656 = vld [vmem:[%s1637 + $0x90] sm:$0xff]
        %v1657 = vld [vmem:[%s1637 + $0x98] sm:$0xff]
        %v1658 = vld [vmem:[%s1637 + $0xa0] sm:$0xff]
        %v1659 = vld [vmem:[%s1637 + $0xa8] sm:$0xff]
        %v1660 = vld [vmem:[%s1637 + $0xb0] sm:$0x11]
        %v1661 = vld [vmem:[%s1637 + $0xb8] sm:$0x11]
        %1662 = vrot.lane.b32.xlu0 %v1092, 122
        %v1663 = vpop.permute.xlu0 %1662
        %1664 = vrot.lane.b32.xlu0 %v1095, 122
        %v1665 = vpop.permute.xlu0 %1664
        %v1690 = vunpack.c.l.b16 %v1638
        %v1691 = vunpack.c.h.b16 %v1638
        %v1692 = vunpack.c.l.b16 %v1639
        %v1693 = vunpack.c.h.b16 %v1639
        %v1694 = vunpack.c.l.b16 %v1640
        %v1695 = vunpack.c.h.b16 %v1640
        %v1696 = vunpack.c.l.b16 %v1641
        %v1697 = vunpack.c.h.b16 %v1641
        %v1698 = vunpack.c.l.b16 %v1642
        %v1699 = vunpack.c.h.b16 %v1642
        %v1700 = vunpack.c.l.b16 %v1643
        %v1701 = vunpack.c.h.b16 %v1643
        %v1702 = vunpack.c.l.b16 %v1644
        %v1703 = vunpack.c.h.b16 %v1644
        %v1704 = vunpack.c.l.b16 %v1645
        %v1705 = vunpack.c.h.b16 %v1645
        %v1706 = vunpack.c.l.b16 %v1646
        %v1707 = vunpack.c.h.b16 %v1646
        %v1708 = vunpack.c.l.b16 %v1647
        %v1709 = vunpack.c.h.b16 %v1647
        %v1710 = vunpack.c.l.b16 %v1648
        %v1711 = vunpack.c.h.b16 %v1648
        %v1712 = vunpack.c.l.b16 %v1649
        %v1713 = vunpack.c.h.b16 %v1649
        %v1714 = vunpack.c.l.b16 %v1650
        %v1715 = vunpack.c.h.b16 %v1650
        %v1716 = vunpack.c.l.b16 %v1651
        %v1717 = vunpack.c.h.b16 %v1651
        %v1718 = vunpack.c.l.b16 %v1652
        %v1719 = vunpack.c.h.b16 %v1652
        %v1720 = vunpack.c.l.b16 %v1653
        %v1721 = vunpack.c.h.b16 %v1653
        %v1722 = vunpack.c.l.b16 %v1654
        %v1723 = vunpack.c.h.b16 %v1654
        %v1724 = vunpack.c.l.b16 %v1655
        %v1725 = vunpack.c.h.b16 %v1655
        %v1726 = vunpack.c.l.b16 %v1656
        %v1727 = vunpack.c.h.b16 %v1656
        %v1728 = vunpack.c.l.b16 %v1657
        %v1729 = vunpack.c.h.b16 %v1657
        %v1730 = vunpack.c.l.b16 %v1658
        %v1731 = vunpack.c.h.b16 %v1658
        %v1732 = vunpack.c.l.b16 %v1659
        %v1733 = vunpack.c.h.b16 %v1659
        %v1734 = vunpack.c.l.b16 %v1660
        %v1735 = vunpack.c.h.b16 %v1660
        %v1736 = vunpack.c.l.b16 %v1661
        %v1737 = vunpack.c.h.b16 %v1661
        %v1738 = vpack.c.b16 %v1694, %v1690
        %v1739 = vpack.c.b16 %v1695, %v1691
        %v1740 = vpack.c.b16 %v1696, %v1692
        %v1741 = vpack.c.b16 %v1697, %v1693
        %v1742 = vpack.c.b16 %v1702, %v1698
        %v1743 = vpack.c.b16 %v1703, %v1699
        %v1744 = vpack.c.b16 %v1704, %v1700
        %v1745 = vpack.c.b16 %v1705, %v1701
        %v1746 = vpack.c.b16 %v1710, %v1706
        %v1747 = vpack.c.b16 %v1711, %v1707
        %v1748 = vpack.c.b16 %v1712, %v1708
        %v1749 = vpack.c.b16 %v1713, %v1709
        %v1750 = vpack.c.b16 %v1718, %v1714
        %v1751 = vpack.c.b16 %v1719, %v1715
        %v1752 = vpack.c.b16 %v1720, %v1716
        %v1753 = vpack.c.b16 %v1721, %v1717
        %v1754 = vpack.c.b16 %v1726, %v1722
        %v1755 = vpack.c.b16 %v1727, %v1723
        %v1756 = vpack.c.b16 %v1728, %v1724
        %v1757 = vpack.c.b16 %v1729, %v1725
        %v1758 = vpack.c.b16 %v1734, %v1730
        %v1759 = vpack.c.b16 %v1735, %v1731
        %v1760 = vpack.c.b16 %v1736, %v1732
        %v1761 = vpack.c.b16 %v1737, %v1733
        %v1783 = vsel %vm401, %v1663, 0
        %v1786 = vsel %vm401, %v1665, 0
        %v1789 = vsel %vm408, %v1758, 0
        %v1792 = vsel %vm408, %v1759, 0
        %v1795 = vsel %vm408, %v1760, 0
        %v1798 = vsel %vm408, %v1761, 0
        %1800 = vmatprep.subr.bf16.mxu0 %v1739
        %1801 = vmatpush1.bf16.msra.mxu0 %v1738
        %1802 = vmatprep.subr.bf16.mxu0 %v1743
        %1803 = vmatpush1.bf16.msra.mxu0 %v1742
        %1804 = vmatprep.subr.bf16.mxu0 %v1747
        %1805 = vmatpush1.bf16.msra.mxu0 %v1746
        %1806 = vmatprep.subr.bf16.mxu0 %v1751
        %1807 = vmatpush1.bf16.msra.mxu0 %v1750
        %1808 = vmatprep.subr.bf16.mxu0 %v1755
        %1809 = vmatpush1.bf16.msra.mxu0 %v1754
        %1810 = vmatprep.subr.bf16.mxu0 %v1792
        %1811 = vmatpush1.bf16.msra.mxu0 %v1789
        %1812 = vmatprep.subr.bf16.mxu0 0
        %1813 = vmatpush1.bf16.msra.mxu0 0
        %1814 = vmatprep.subr.bf16.mxu0 0
        %1815 = vmatpush1.bf16.msra.mxu0 0
        %1816 = vmatprep.subr.bf16.mxu0 0
        %1817 = vmatpush1.bf16.msra.mxu0 0
        %1818 = vmatprep.subr.bf16.mxu0 0
        %1819 = vmatpush1.bf16.msra.mxu0 0
        %1820 = vmatprep.subr.bf16.mxu0 0
        %1821 = vmatpush1.bf16.msra.mxu0 0
        %1822 = vmatprep.subr.bf16.mxu0 0
        %1823 = vmatpush1.bf16.msra.mxu0 0
        %1824 = vmatprep.subr.bf16.mxu0 0
        %1825 = vmatpush1.bf16.msra.mxu0 0
        %1826 = vmatprep.subr.bf16.mxu0 0
        %1827 = vmatpush1.bf16.msra.mxu0 0
        %1828 = vmatprep.subr.bf16.mxu0 0
        %1829 = vmatpush1.bf16.msra.mxu0 0
        %1830 = vmatprep.subr.bf16.mxu0 0
        %1831 = vmatpush1.bf16.msra.mxu0 0
        %1832 = vmatprep.mubr.bf16.mxu0 0
        %1833 = vmatmul.mubr.bf16.gmra.mrb[0].mxu0 %v1783
        %v1834 = vpop.f32.mrb[0].mxu0
        %v1835 = vadd.f32 0.0, %v1834
        %v1836 = vpop.f32.mrb[0].mxu0
        %v1837 = vadd.f32 0.0, %v1836
        %v1838 = vpop.f32.mrb[0].mxu0
        %v1839 = vadd.f32 0.0, %v1838
        %v1840 = vpop.f32.mrb[0].mxu0
        %v1841 = vadd.f32 0.0, %v1840
        %1842 = vmatprep.mubr.bf16.mxu0 0
        %1843 = vmatmul.mubr.bf16.gmra.mrb[0].mxu0 %v1786
        %v1844 = vpop.f32.mrb[0].mxu0
        %v1845 = vadd.f32 0.0, %v1844
        %v1846 = vpop.f32.mrb[0].mxu0
        %v1847 = vadd.f32 0.0, %v1846
        %v1848 = vpop.f32.mrb[0].mxu0
        %v1849 = vadd.f32 0.0, %v1848
        %v1850 = vpop.f32.mrb[0].mxu0
        %v1851 = vadd.f32 0.0, %v1850
        %1852 = vdwg.mxu0
        %1853 = vmatprep.subr.bf16.mxu0 %v1741
        %1854 = vmatpush1.bf16.msra.mxu0 %v1740
        %1855 = vmatprep.subr.bf16.mxu0 %v1745
        %1856 = vmatpush1.bf16.msra.mxu0 %v1744
        %1857 = vmatprep.subr.bf16.mxu0 %v1749
        %1858 = vmatpush1.bf16.msra.mxu0 %v1748
        %1859 = vmatprep.subr.bf16.mxu0 %v1753
        %1860 = vmatpush1.bf16.msra.mxu0 %v1752
        %1861 = vmatprep.subr.bf16.mxu0 %v1757
        %1862 = vmatpush1.bf16.msra.mxu0 %v1756
        %1863 = vmatprep.subr.bf16.mxu0 %v1798
        %1864 = vmatpush1.bf16.msra.mxu0 %v1795
        %1865 = vmatprep.subr.bf16.mxu0 0
        %1866 = vmatpush1.bf16.msra.mxu0 0
        %1867 = vmatprep.subr.bf16.mxu0 0
        %1868 = vmatpush1.bf16.msra.mxu0 0
        %1869 = vmatprep.subr.bf16.mxu0 0
        %1870 = vmatpush1.bf16.msra.mxu0 0
        %1871 = vmatprep.subr.bf16.mxu0 0
        %1872 = vmatpush1.bf16.msra.mxu0 0
        %1873 = vmatprep.subr.bf16.mxu0 0
        %1874 = vmatpush1.bf16.msra.mxu0 0
        %1875 = vmatprep.subr.bf16.mxu0 0
        %1876 = vmatpush1.bf16.msra.mxu0 0
        %1877 = vmatprep.subr.bf16.mxu0 0
        %1878 = vmatpush1.bf16.msra.mxu0 0
        %1879 = vmatprep.subr.bf16.mxu0 0
        %1880 = vmatpush1.bf16.msra.mxu0 0
        %1881 = vmatprep.subr.bf16.mxu0 0
        %1882 = vmatpush1.bf16.msra.mxu0 0
        %1883 = vmatprep.subr.bf16.mxu0 0
        %1884 = vmatpush1.bf16.msra.mxu0 0
        %1885 = vmatprep.mubr.bf16.mxu0 0
        %1886 = vmatmul.mubr.bf16.gmra.mrb[0].mxu0 %v1783
        %v1887 = vpop.f32.mrb[0].mxu0
        %v1888 = vadd.f32 0.0, %v1887
        %v1889 = vpop.f32.mrb[0].mxu0
        %v1890 = vadd.f32 0.0, %v1889
        %v1891 = vpop.f32.mrb[0].mxu0
        %v1892 = vadd.f32 0.0, %v1891
        %v1893 = vpop.f32.mrb[0].mxu0
        %v1894 = vadd.f32 0.0, %v1893
        %1895 = vmatprep.mubr.bf16.mxu0 0
        %1896 = vmatmul.mubr.bf16.gmra.mrb[0].mxu0 %v1786
        %v1897 = vpop.f32.mrb[0].mxu0
        %v1898 = vadd.f32 0.0, %v1897
        %v1899 = vpop.f32.mrb[0].mxu0
        %v1900 = vadd.f32 0.0, %v1899
        %v1901 = vpop.f32.mrb[0].mxu0
        %v1902 = vadd.f32 0.0, %v1901
        %v1903 = vpop.f32.mrb[0].mxu0
        %v1904 = vadd.f32 0.0, %v1903
        %1905 = vdwg.mxu0
        %v1906 = vadd.f32 %v1621, %v1835
        %v1907 = vadd.f32 %v1622, %v1837
        %v1908 = vadd.f32 %v1623, %v1888
        %v1909 = vadd.f32 %v1624, %v1890
        %v1910 = vadd.f32 %v1625, %v1839
        %v1911 = vadd.f32 %v1626, %v1841
        %v1912 = vadd.f32 %v1627, %v1892
        %v1913 = vadd.f32 %v1628, %v1894
        %v1914 = vadd.f32 %v1629, %v1845
        %v1915 = vadd.f32 %v1630, %v1847
        %v1916 = vadd.f32 %v1631, %v1898
        %v1917 = vadd.f32 %v1632, %v1900
        %v1918 = vadd.f32 %v1633, %v1849
        %v1919 = vadd.f32 %v1634, %v1851
        %v1920 = vadd.f32 %v1635, %v1902
        %v1921 = vadd.f32 %v1636, %v1904
        %v1922 = vld [vmem:[%s185] sm:$0xe]
        %s1923 = scalar_lea.vmem [#allocation5], 1152
        %v1924 = vld [vmem:[%s1923] sm:$0xff]
        %v1925 = vld [vmem:[%s1923 + $0x8] sm:$0xff]
        %v1926 = vld [vmem:[%s1923 + $0x10] sm:$0xff]
        %v1927 = vld [vmem:[%s1923 + $0x18] sm:$0xff]
        %v1928 = vld [vmem:[%s1923 + $0x20] sm:$0xff]
        %v1929 = vld [vmem:[%s1923 + $0x28] sm:$0xff]
        %v1930 = vld [vmem:[%s1923 + $0x30] sm:$0xff]
        %v1931 = vld [vmem:[%s1923 + $0x38] sm:$0xff]
        %v1932 = vld [vmem:[%s1923 + $0x40] sm:$0xff]
        %v1933 = vld [vmem:[%s1923 + $0x48] sm:$0xff]
        %v1934 = vld [vmem:[%s1923 + $0x50] sm:$0xff]
        %v1935 = vld [vmem:[%s1923 + $0x58] sm:$0xff]
        %v1936 = vld [vmem:[%s1923 + $0x60] sm:$0xff]
        %v1937 = vld [vmem:[%s1923 + $0x68] sm:$0xff]
        %v1938 = vld [vmem:[%s1923 + $0x70] sm:$0xff]
        %v1939 = vld [vmem:[%s1923 + $0x78] sm:$0xff]
        %v1940 = vld [vmem:[%s1923 + $0x80] sm:$0xff]
        %v1941 = vld [vmem:[%s1923 + $0x88] sm:$0xff]
        %v1942 = vld [vmem:[%s1923 + $0x90] sm:$0xff]
        %v1943 = vld [vmem:[%s1923 + $0x98] sm:$0xff]
        %v1944 = vld [vmem:[%s1923 + $0xa0] sm:$0xff]
        %v1945 = vld [vmem:[%s1923 + $0xa8] sm:$0xff]
        %v1946 = vld [vmem:[%s1923 + $0xb0] sm:$0x11]
        %v1947 = vld [vmem:[%s1923 + $0xb8] sm:$0x11]
        %v1949 = vunpack.c.l.b16 %v1922
        %v1950 = vpack.c.b16 %v276, %v1949
        %vm1951 = vcmask 1046528
        %v1952 = vrot.slane %v1950, 1
        %v1953 = vrot.slane %v1080, 1
        %v1954 = vsel %vm1951, %v1952, %v1953
        %v1979 = vunpack.c.l.b16 %v1924
        %v1980 = vunpack.c.h.b16 %v1924
        %v1981 = vunpack.c.l.b16 %v1925
        %v1982 = vunpack.c.h.b16 %v1925
        %v1983 = vunpack.c.l.b16 %v1926
        %v1984 = vunpack.c.h.b16 %v1926
        %v1985 = vunpack.c.l.b16 %v1927
        %v1986 = vunpack.c.h.b16 %v1927
        %v1987 = vunpack.c.l.b16 %v1928
        %v1988 = vunpack.c.h.b16 %v1928
        %v1989 = vunpack.c.l.b16 %v1929
        %v1990 = vunpack.c.h.b16 %v1929
        %v1991 = vunpack.c.l.b16 %v1930
        %v1992 = vunpack.c.h.b16 %v1930
        %v1993 = vunpack.c.l.b16 %v1931
        %v1994 = vunpack.c.h.b16 %v1931
        %v1995 = vunpack.c.l.b16 %v1932
        %v1996 = vunpack.c.h.b16 %v1932
        %v1997 = vunpack.c.l.b16 %v1933
        %v1998 = vunpack.c.h.b16 %v1933
        %v1999 = vunpack.c.l.b16 %v1934
        %v2000 = vunpack.c.h.b16 %v1934
        %v2001 = vunpack.c.l.b16 %v1935
        %v2002 = vunpack.c.h.b16 %v1935
        %v2003 = vunpack.c.l.b16 %v1936
        %v2004 = vunpack.c.h.b16 %v1936
        %v2005 = vunpack.c.l.b16 %v1937
        %v2006 = vunpack.c.h.b16 %v1937
        %v2007 = vunpack.c.l.b16 %v1938
        %v2008 = vunpack.c.h.b16 %v1938
        %v2009 = vunpack.c.l.b16 %v1939
        %v2010 = vunpack.c.h.b16 %v1939
        %v2011 = vunpack.c.l.b16 %v1940
        %v2012 = vunpack.c.h.b16 %v1940
        %v2013 = vunpack.c.l.b16 %v1941
        %v2014 = vunpack.c.h.b16 %v1941
        %v2015 = vunpack.c.l.b16 %v1942
        %v2016 = vunpack.c.h.b16 %v1942
        %v2017 = vunpack.c.l.b16 %v1943
        %v2018 = vunpack.c.h.b16 %v1943
        %v2019 = vunpack.c.l.b16 %v1944
        %v2020 = vunpack.c.h.b16 %v1944
        %v2021 = vunpack.c.l.b16 %v1945
        %v2022 = vunpack.c.h.b16 %v1945
        %v2023 = vunpack.c.l.b16 %v1946
        %v2024 = vunpack.c.h.b16 %v1946
        %v2025 = vunpack.c.l.b16 %v1947
        %v2026 = vunpack.c.h.b16 %v1947
        %v2027 = vpack.c.b16 %v1983, %v1979
        %v2028 = vpack.c.b16 %v1984, %v1980
        %v2029 = vpack.c.b16 %v1985, %v1981
        %v2030 = vpack.c.b16 %v1986, %v1982
        %v2031 = vpack.c.b16 %v1991, %v1987
        %v2032 = vpack.c.b16 %v1992, %v1988
        %v2033 = vpack.c.b16 %v1993, %v1989
        %v2034 = vpack.c.b16 %v1994, %v1990
        %v2035 = vpack.c.b16 %v1999, %v1995
        %v2036 = vpack.c.b16 %v2000, %v1996
        %v2037 = vpack.c.b16 %v2001, %v1997
        %v2038 = vpack.c.b16 %v2002, %v1998
        %v2039 = vpack.c.b16 %v2007, %v2003
        %v2040 = vpack.c.b16 %v2008, %v2004
        %v2041 = vpack.c.b16 %v2009, %v2005
        %v2042 = vpack.c.b16 %v2010, %v2006
        %v2043 = vpack.c.b16 %v2015, %v2011
        %v2044 = vpack.c.b16 %v2016, %v2012
        %v2045 = vpack.c.b16 %v2017, %v2013
        %v2046 = vpack.c.b16 %v2018, %v2014
        %v2047 = vpack.c.b16 %v2023, %v2019
        %v2048 = vpack.c.b16 %v2024, %v2020
        %v2049 = vpack.c.b16 %v2025, %v2021
        %v2050 = vpack.c.b16 %v2026, %v2022
        %v2072 = vsel %vm401, %v1954, 0
        %v2075 = vsel %vm401, %v1953, 0
        %v2078 = vsel %vm408, %v2047, 0
        %v2081 = vsel %vm408, %v2048, 0
        %v2084 = vsel %vm408, %v2049, 0
        %v2087 = vsel %vm408, %v2050, 0
        %2089 = vmatprep.subr.bf16.mxu0 %v2028
        %2090 = vmatpush1.bf16.msra.mxu0 %v2027
        %2091 = vmatprep.subr.bf16.mxu0 %v2032
        %2092 = vmatpush1.bf16.msra.mxu0 %v2031
        %2093 = vmatprep.subr.bf16.mxu0 %v2036
        %2094 = vmatpush1.bf16.msra.mxu0 %v2035
        %2095 = vmatprep.subr.bf16.mxu0 %v2040
        %2096 = vmatpush1.bf16.msra.mxu0 %v2039
        %2097 = vmatprep.subr.bf16.mxu0 %v2044
        %2098 = vmatpush1.bf16.msra.mxu0 %v2043
        %2099 = vmatprep.subr.bf16.mxu0 %v2081
        %2100 = vmatpush1.bf16.msra.mxu0 %v2078
        %2101 = vmatprep.subr.bf16.mxu0 0
        %2102 = vmatpush1.bf16.msra.mxu0 0
        %2103 = vmatprep.subr.bf16.mxu0 0
        %2104 = vmatpush1.bf16.msra.mxu0 0
        %2105 = vmatprep.subr.bf16.mxu0 0
        %2106 = vmatpush1.bf16.msra.mxu0 0
        %2107 = vmatprep.subr.bf16.mxu0 0
        %2108 = vmatpush1.bf16.msra.mxu0 0
        %2109 = vmatprep.subr.bf16.mxu0 0
        %2110 = vmatpush1.bf16.msra.mxu0 0
        %2111 = vmatprep.subr.bf16.mxu0 0
        %2112 = vmatpush1.bf16.msra.mxu0 0
        %2113 = vmatprep.subr.bf16.mxu0 0
        %2114 = vmatpush1.bf16.msra.mxu0 0
        %2115 = vmatprep.subr.bf16.mxu0 0
        %2116 = vmatpush1.bf16.msra.mxu0 0
        %2117 = vmatprep.subr.bf16.mxu0 0
        %2118 = vmatpush1.bf16.msra.mxu0 0
        %2119 = vmatprep.subr.bf16.mxu0 0
        %2120 = vmatpush1.bf16.msra.mxu0 0
        %2121 = vmatprep.mubr.bf16.mxu0 0
        %2122 = vmatmul.mubr.bf16.gmra.mrb[0].mxu0 %v2072
        %v2123 = vpop.f32.mrb[0].mxu0
        %v2124 = vadd.f32 0.0, %v2123
        %v2125 = vpop.f32.mrb[0].mxu0
        %v2126 = vadd.f32 0.0, %v2125
        %v2127 = vpop.f32.mrb[0].mxu0
        %v2128 = vadd.f32 0.0, %v2127
        %v2129 = vpop.f32.mrb[0].mxu0
        %v2130 = vadd.f32 0.0, %v2129
        %2131 = vmatprep.mubr.bf16.mxu0 0
        %2132 = vmatmul.mubr.bf16.gmra.mrb[0].mxu0 %v2075
        %v2133 = vpop.f32.mrb[0].mxu0
        %v2134 = vadd.f32 0.0, %v2133
        %v2135 = vpop.f32.mrb[0].mxu0
        %v2136 = vadd.f32 0.0, %v2135
        %v2137 = vpop.f32.mrb[0].mxu0
        %v2138 = vadd.f32 0.0, %v2137
        %v2139 = vpop.f32.mrb[0].mxu0
        %v2140 = vadd.f32 0.0, %v2139
        %2141 = vdwg.mxu0
        %2142 = vmatprep.subr.bf16.mxu0 %v2030
        %2143 = vmatpush1.bf16.msra.mxu0 %v2029
        %2144 = vmatprep.subr.bf16.mxu0 %v2034
        %2145 = vmatpush1.bf16.msra.mxu0 %v2033
        %2146 = vmatprep.subr.bf16.mxu0 %v2038
        %2147 = vmatpush1.bf16.msra.mxu0 %v2037
        %2148 = vmatprep.subr.bf16.mxu0 %v2042
        %2149 = vmatpush1.bf16.msra.mxu0 %v2041
        %2150 = vmatprep.subr.bf16.mxu0 %v2046
        %2151 = vmatpush1.bf16.msra.mxu0 %v2045
        %2152 = vmatprep.subr.bf16.mxu0 %v2087
        %2153 = vmatpush1.bf16.msra.mxu0 %v2084
        %2154 = vmatprep.subr.bf16.mxu0 0
        %2155 = vmatpush1.bf16.msra.mxu0 0
        %2156 = vmatprep.subr.bf16.mxu0 0
        %2157 = vmatpush1.bf16.msra.mxu0 0
        %2158 = vmatprep.subr.bf16.mxu0 0
        %2159 = vmatpush1.bf16.msra.mxu0 0
        %2160 = vmatprep.subr.bf16.mxu0 0
        %2161 = vmatpush1.bf16.msra.mxu0 0
        %2162 = vmatprep.subr.bf16.mxu0 0
        %2163 = vmatpush1.bf16.msra.mxu0 0
        %2164 = vmatprep.subr.bf16.mxu0 0
        %2165 = vmatpush1.bf16.msra.mxu0 0
        %2166 = vmatprep.subr.bf16.mxu0 0
        %2167 = vmatpush1.bf16.msra.mxu0 0
        %2168 = vmatprep.subr.bf16.mxu0 0
        %2169 = vmatpush1.bf16.msra.mxu0 0
        %2170 = vmatprep.subr.bf16.mxu0 0
        %2171 = vmatpush1.bf16.msra.mxu0 0
        %2172 = vmatprep.subr.bf16.mxu0 0
        %2173 = vmatpush1.bf16.msra.mxu0 0
        %2174 = vmatprep.mubr.bf16.mxu0 0
        %2175 = vmatmul.mubr.bf16.gmra.mrb[0].mxu0 %v2072
        %v2176 = vpop.f32.mrb[0].mxu0
        %v2177 = vadd.f32 0.0, %v2176
        %v2178 = vpop.f32.mrb[0].mxu0
        %v2179 = vadd.f32 0.0, %v2178
        %v2180 = vpop.f32.mrb[0].mxu0
        %v2181 = vadd.f32 0.0, %v2180
        %v2182 = vpop.f32.mrb[0].mxu0
        %v2183 = vadd.f32 0.0, %v2182
        %2184 = vmatprep.mubr.bf16.mxu0 0
        %2185 = vmatmul.mubr.bf16.gmra.mrb[0].mxu0 %v2075
        %v2186 = vpop.f32.mrb[0].mxu0
        %v2187 = vadd.f32 0.0, %v2186
        %v2188 = vpop.f32.mrb[0].mxu0
        %v2189 = vadd.f32 0.0, %v2188
        %v2190 = vpop.f32.mrb[0].mxu0
        %v2191 = vadd.f32 0.0, %v2190
        %v2192 = vpop.f32.mrb[0].mxu0
        %v2193 = vadd.f32 0.0, %v2192
        %2194 = vdwg.mxu0
        %v2195 = vadd.f32 %v1906, %v2124
        %v2196 = vadd.f32 %v1907, %v2126
        %v2197 = vadd.f32 %v1908, %v2177
        %v2198 = vadd.f32 %v1909, %v2179
        %v2199 = vadd.f32 %v1910, %v2128
        %v2200 = vadd.f32 %v1911, %v2130
        %v2201 = vadd.f32 %v1912, %v2181
        %v2202 = vadd.f32 %v1913, %v2183
        %v2203 = vadd.f32 %v1914, %v2134
        %v2204 = vadd.f32 %v1915, %v2136
        %v2205 = vadd.f32 %v1916, %v2187
        %v2206 = vadd.f32 %v1917, %v2189
        %v2207 = vadd.f32 %v1918, %v2138
        %v2208 = vadd.f32 %v1919, %v2140
        %v2209 = vadd.f32 %v1920, %v2191
        %v2210 = vadd.f32 %v1921, %v2193
        %s2211 = scalar_lea.vmem [#allocation5], 1344
        %v2212 = vld [vmem:[%s2211] sm:$0xff]
        %v2213 = vld [vmem:[%s2211 + $0x8] sm:$0xff]
        %v2214 = vld [vmem:[%s2211 + $0x10] sm:$0xff]
        %v2215 = vld [vmem:[%s2211 + $0x18] sm:$0xff]
        %v2216 = vld [vmem:[%s2211 + $0x20] sm:$0xff]
        %v2217 = vld [vmem:[%s2211 + $0x28] sm:$0xff]
        %v2218 = vld [vmem:[%s2211 + $0x30] sm:$0xff]
        %v2219 = vld [vmem:[%s2211 + $0x38] sm:$0xff]
        %v2220 = vld [vmem:[%s2211 + $0x40] sm:$0xff]
        %v2221 = vld [vmem:[%s2211 + $0x48] sm:$0xff]
        %v2222 = vld [vmem:[%s2211 + $0x50] sm:$0xff]
        %v2223 = vld [vmem:[%s2211 + $0x58] sm:$0xff]
        %v2224 = vld [vmem:[%s2211 + $0x60] sm:$0xff]
        %v2225 = vld [vmem:[%s2211 + $0x68] sm:$0xff]
        %v2226 = vld [vmem:[%s2211 + $0x70] sm:$0xff]
        %v2227 = vld [vmem:[%s2211 + $0x78] sm:$0xff]
        %v2228 = vld [vmem:[%s2211 + $0x80] sm:$0xff]
        %v2229 = vld [vmem:[%s2211 + $0x88] sm:$0xff]
        %v2230 = vld [vmem:[%s2211 + $0x90] sm:$0xff]
        %v2231 = vld [vmem:[%s2211 + $0x98] sm:$0xff]
        %v2232 = vld [vmem:[%s2211 + $0xa0] sm:$0xff]
        %v2233 = vld [vmem:[%s2211 + $0xa8] sm:$0xff]
        %v2234 = vld [vmem:[%s2211 + $0xb0] sm:$0x11]
        %v2235 = vld [vmem:[%s2211 + $0xb8] sm:$0x11]
        %2236 = vrot.lane.b32.xlu0 %v1954, 125
        %v2237 = vpop.permute.xlu0 %2236
        %2238 = vrot.lane.b32.xlu0 %v1953, 125
        %v2239 = vpop.permute.xlu0 %2238
        %v2264 = vunpack.c.l.b16 %v2212
        %v2265 = vunpack.c.h.b16 %v2212
        %v2266 = vunpack.c.l.b16 %v2213
        %v2267 = vunpack.c.h.b16 %v2213
        %v2268 = vunpack.c.l.b16 %v2214
        %v2269 = vunpack.c.h.b16 %v2214
        %v2270 = vunpack.c.l.b16 %v2215
        %v2271 = vunpack.c.h.b16 %v2215
        %v2272 = vunpack.c.l.b16 %v2216
        %v2273 = vunpack.c.h.b16 %v2216
        %v2274 = vunpack.c.l.b16 %v2217
        %v2275 = vunpack.c.h.b16 %v2217
        %v2276 = vunpack.c.l.b16 %v2218
        %v2277 = vunpack.c.h.b16 %v2218
        %v2278 = vunpack.c.l.b16 %v2219
        %v2279 = vunpack.c.h.b16 %v2219
        %v2280 = vunpack.c.l.b16 %v2220
        %v2281 = vunpack.c.h.b16 %v2220
        %v2282 = vunpack.c.l.b16 %v2221
        %v2283 = vunpack.c.h.b16 %v2221
        %v2284 = vunpack.c.l.b16 %v2222
        %v2285 = vunpack.c.h.b16 %v2222
        %v2286 = vunpack.c.l.b16 %v2223
        %v2287 = vunpack.c.h.b16 %v2223
        %v2288 = vunpack.c.l.b16 %v2224
        %v2289 = vunpack.c.h.b16 %v2224
        %v2290 = vunpack.c.l.b16 %v2225
        %v2291 = vunpack.c.h.b16 %v2225
        %v2292 = vunpack.c.l.b16 %v2226
        %v2293 = vunpack.c.h.b16 %v2226
        %v2294 = vunpack.c.l.b16 %v2227
        %v2295 = vunpack.c.h.b16 %v2227
        %v2296 = vunpack.c.l.b16 %v2228
        %v2297 = vunpack.c.h.b16 %v2228
        %v2298 = vunpack.c.l.b16 %v2229
        %v2299 = vunpack.c.h.b16 %v2229
        %v2300 = vunpack.c.l.b16 %v2230
        %v2301 = vunpack.c.h.b16 %v2230
        %v2302 = vunpack.c.l.b16 %v2231
        %v2303 = vunpack.c.h.b16 %v2231
        %v2304 = vunpack.c.l.b16 %v2232
        %v2305 = vunpack.c.h.b16 %v2232
        %v2306 = vunpack.c.l.b16 %v2233
        %v2307 = vunpack.c.h.b16 %v2233
        %v2308 = vunpack.c.l.b16 %v2234
        %v2309 = vunpack.c.h.b16 %v2234
        %v2310 = vunpack.c.l.b16 %v2235
        %v2311 = vunpack.c.h.b16 %v2235
        %v2312 = vpack.c.b16 %v2268, %v2264
        %v2313 = vpack.c.b16 %v2269, %v2265
        %v2314 = vpack.c.b16 %v2270, %v2266
        %v2315 = vpack.c.b16 %v2271, %v2267
        %v2316 = vpack.c.b16 %v2276, %v2272
        %v2317 = vpack.c.b16 %v2277, %v2273
        %v2318 = vpack.c.b16 %v2278, %v2274
        %v2319 = vpack.c.b16 %v2279, %v2275
        %v2320 = vpack.c.b16 %v2284, %v2280
        %v2321 = vpack.c.b16 %v2285, %v2281
        %v2322 = vpack.c.b16 %v2286, %v2282
        %v2323 = vpack.c.b16 %v2287, %v2283
        %v2324 = vpack.c.b16 %v2292, %v2288
        %v2325 = vpack.c.b16 %v2293, %v2289
        %v2326 = vpack.c.b16 %v2294, %v2290
        %v2327 = vpack.c.b16 %v2295, %v2291
        %v2328 = vpack.c.b16 %v2300, %v2296
        %v2329 = vpack.c.b16 %v2301, %v2297
        %v2330 = vpack.c.b16 %v2302, %v2298
        %v2331 = vpack.c.b16 %v2303, %v2299
        %v2332 = vpack.c.b16 %v2308, %v2304
        %v2333 = vpack.c.b16 %v2309, %v2305
        %v2334 = vpack.c.b16 %v2310, %v2306
        %v2335 = vpack.c.b16 %v2311, %v2307
        %v2357 = vsel %vm401, %v2237, 0
        %v2360 = vsel %vm401, %v2239, 0
        %v2363 = vsel %vm408, %v2332, 0
        %v2366 = vsel %vm408, %v2333, 0
        %v2369 = vsel %vm408, %v2334, 0
        %v2372 = vsel %vm408, %v2335, 0
        %2374 = vmatprep.subr.bf16.mxu0 %v2313
        %2375 = vmatpush1.bf16.msra.mxu0 %v2312
        %2376 = vmatprep.subr.bf16.mxu0 %v2317
        %2377 = vmatpush1.bf16.msra.mxu0 %v2316
        %2378 = vmatprep.subr.bf16.mxu0 %v2321
        %2379 = vmatpush1.bf16.msra.mxu0 %v2320
        %2380 = vmatprep.subr.bf16.mxu0 %v2325
        %2381 = vmatpush1.bf16.msra.mxu0 %v2324
        %2382 = vmatprep.subr.bf16.mxu0 %v2329
        %2383 = vmatpush1.bf16.msra.mxu0 %v2328
        %2384 = vmatprep.subr.bf16.mxu0 %v2366
        %2385 = vmatpush1.bf16.msra.mxu0 %v2363
        %2386 = vmatprep.subr.bf16.mxu0 0
        %2387 = vmatpush1.bf16.msra.mxu0 0
        %2388 = vmatprep.subr.bf16.mxu0 0
        %2389 = vmatpush1.bf16.msra.mxu0 0
        %2390 = vmatprep.subr.bf16.mxu0 0
        %2391 = vmatpush1.bf16.msra.mxu0 0
        %2392 = vmatprep.subr.bf16.mxu0 0
        %2393 = vmatpush1.bf16.msra.mxu0 0
        %2394 = vmatprep.subr.bf16.mxu0 0
        %2395 = vmatpush1.bf16.msra.mxu0 0
        %2396 = vmatprep.subr.bf16.mxu0 0
        %2397 = vmatpush1.bf16.msra.mxu0 0
        %2398 = vmatprep.subr.bf16.mxu0 0
        %2399 = vmatpush1.bf16.msra.mxu0 0
        %2400 = vmatprep.subr.bf16.mxu0 0
        %2401 = vmatpush1.bf16.msra.mxu0 0
        %2402 = vmatprep.subr.bf16.mxu0 0
        %2403 = vmatpush1.bf16.msra.mxu0 0
        %2404 = vmatprep.subr.bf16.mxu0 0
        %2405 = vmatpush1.bf16.msra.mxu0 0
        %2406 = vmatprep.mubr.bf16.mxu0 0
        %2407 = vmatmul.mubr.bf16.gmra.mrb[0].mxu0 %v2357
        %v2408 = vpop.f32.mrb[0].mxu0
        %v2409 = vadd.f32 0.0, %v2408
        %v2410 = vpop.f32.mrb[0].mxu0
        %v2411 = vadd.f32 0.0, %v2410
        %v2412 = vpop.f32.mrb[0].mxu0
        %v2413 = vadd.f32 0.0, %v2412
        %v2414 = vpop.f32.mrb[0].mxu0
        %v2415 = vadd.f32 0.0, %v2414
        %2416 = vmatprep.mubr.bf16.mxu0 0
        %2417 = vmatmul.mubr.bf16.gmra.mrb[0].mxu0 %v2360
        %v2418 = vpop.f32.mrb[0].mxu0
        %v2419 = vadd.f32 0.0, %v2418
        %v2420 = vpop.f32.mrb[0].mxu0
        %v2421 = vadd.f32 0.0, %v2420
        %v2422 = vpop.f32.mrb[0].mxu0
        %v2423 = vadd.f32 0.0, %v2422
        %v2424 = vpop.f32.mrb[0].mxu0
        %v2425 = vadd.f32 0.0, %v2424
        %2426 = vdwg.mxu0
        %2427 = vmatprep.subr.bf16.mxu0 %v2315
        %2428 = vmatpush1.bf16.msra.mxu0 %v2314
        %2429 = vmatprep.subr.bf16.mxu0 %v2319
        %2430 = vmatpush1.bf16.msra.mxu0 %v2318
        %2431 = vmatprep.subr.bf16.mxu0 %v2323
        %2432 = vmatpush1.bf16.msra.mxu0 %v2322
        %2433 = vmatprep.subr.bf16.mxu0 %v2327
        %2434 = vmatpush1.bf16.msra.mxu0 %v2326
        %2435 = vmatprep.subr.bf16.mxu0 %v2331
        %2436 = vmatpush1.bf16.msra.mxu0 %v2330
        %2437 = vmatprep.subr.bf16.mxu0 %v2372
        %2438 = vmatpush1.bf16.msra.mxu0 %v2369
        %2439 = vmatprep.subr.bf16.mxu0 0
        %2440 = vmatpush1.bf16.msra.mxu0 0
        %2441 = vmatprep.subr.bf16.mxu0 0
        %2442 = vmatpush1.bf16.msra.mxu0 0
        %2443 = vmatprep.subr.bf16.mxu0 0
        %2444 = vmatpush1.bf16.msra.mxu0 0
        %2445 = vmatprep.subr.bf16.mxu0 0
        %2446 = vmatpush1.bf16.msra.mxu0 0
        %2447 = vmatprep.subr.bf16.mxu0 0
        %2448 = vmatpush1.bf16.msra.mxu0 0
        %2449 = vmatprep.subr.bf16.mxu0 0
        %2450 = vmatpush1.bf16.msra.mxu0 0
        %2451 = vmatprep.subr.bf16.mxu0 0
        %2452 = vmatpush1.bf16.msra.mxu0 0
        %2453 = vmatprep.subr.bf16.mxu0 0
        %2454 = vmatpush1.bf16.msra.mxu0 0
        %2455 = vmatprep.subr.bf16.mxu0 0
        %2456 = vmatpush1.bf16.msra.mxu0 0
        %2457 = vmatprep.subr.bf16.mxu0 0
        %2458 = vmatpush1.bf16.msra.mxu0 0
        %2459 = vmatprep.mubr.bf16.mxu0 0
        %2460 = vmatmul.mubr.bf16.gmra.mrb[0].mxu0 %v2357
        %v2461 = vpop.f32.mrb[0].mxu0
        %v2462 = vadd.f32 0.0, %v2461
        %v2463 = vpop.f32.mrb[0].mxu0
        %v2464 = vadd.f32 0.0, %v2463
        %v2465 = vpop.f32.mrb[0].mxu0
        %v2466 = vadd.f32 0.0, %v2465
        %v2467 = vpop.f32.mrb[0].mxu0
        %v2468 = vadd.f32 0.0, %v2467
        %2469 = vmatprep.mubr.bf16.mxu0 0
        %2470 = vmatmul.mubr.bf16.gmra.mrb[0].mxu0 %v2360
        %v2471 = vpop.f32.mrb[0].mxu0
        %v2472 = vadd.f32 0.0, %v2471
        %v2473 = vpop.f32.mrb[0].mxu0
        %v2474 = vadd.f32 0.0, %v2473
        %v2475 = vpop.f32.mrb[0].mxu0
        %v2476 = vadd.f32 0.0, %v2475
        %v2477 = vpop.f32.mrb[0].mxu0
        %v2478 = vadd.f32 0.0, %v2477
        %2479 = vdwg.mxu0
        %v2480 = vadd.f32 %v2195, %v2409
        %v2481 = vadd.f32 %v2196, %v2411
        %v2482 = vadd.f32 %v2197, %v2462
        %v2483 = vadd.f32 %v2198, %v2464
        %v2484 = vadd.f32 %v2199, %v2413
        %v2485 = vadd.f32 %v2200, %v2415
        %v2486 = vadd.f32 %v2201, %v2466
        %v2487 = vadd.f32 %v2202, %v2468
        %v2488 = vadd.f32 %v2203, %v2419
        %v2489 = vadd.f32 %v2204, %v2421
        %v2490 = vadd.f32 %v2205, %v2472
        %v2491 = vadd.f32 %v2206, %v2474
        %v2492 = vadd.f32 %v2207, %v2423
        %v2493 = vadd.f32 %v2208, %v2425
        %v2494 = vadd.f32 %v2209, %v2476
        %v2495 = vadd.f32 %v2210, %v2478
        %s2496 = scalar_lea.vmem [#allocation5], 1536
        %v2497 = vld [vmem:[%s2496] sm:$0xff]
        %v2498 = vld [vmem:[%s2496 + $0x8] sm:$0xff]
        %v2499 = vld [vmem:[%s2496 + $0x10] sm:$0xff]
        %v2500 = vld [vmem:[%s2496 + $0x18] sm:$0xff]
        %v2501 = vld [vmem:[%s2496 + $0x20] sm:$0xff]
        %v2502 = vld [vmem:[%s2496 + $0x28] sm:$0xff]
        %v2503 = vld [vmem:[%s2496 + $0x30] sm:$0xff]
        %v2504 = vld [vmem:[%s2496 + $0x38] sm:$0xff]
        %v2505 = vld [vmem:[%s2496 + $0x40] sm:$0xff]
        %v2506 = vld [vmem:[%s2496 + $0x48] sm:$0xff]
        %v2507 = vld [vmem:[%s2496 + $0x50] sm:$0xff]
        %v2508 = vld [vmem:[%s2496 + $0x58] sm:$0xff]
        %v2509 = vld [vmem:[%s2496 + $0x60] sm:$0xff]
        %v2510 = vld [vmem:[%s2496 + $0x68] sm:$0xff]
        %v2511 = vld [vmem:[%s2496 + $0x70] sm:$0xff]
        %v2512 = vld [vmem:[%s2496 + $0x78] sm:$0xff]
        %v2513 = vld [vmem:[%s2496 + $0x80] sm:$0xff]
        %v2514 = vld [vmem:[%s2496 + $0x88] sm:$0xff]
        %v2515 = vld [vmem:[%s2496 + $0x90] sm:$0xff]
        %v2516 = vld [vmem:[%s2496 + $0x98] sm:$0xff]
        %v2517 = vld [vmem:[%s2496 + $0xa0] sm:$0xff]
        %v2518 = vld [vmem:[%s2496 + $0xa8] sm:$0xff]
        %v2519 = vld [vmem:[%s2496 + $0xb0] sm:$0x11]
        %v2520 = vld [vmem:[%s2496 + $0xb8] sm:$0x11]
        %2521 = vrot.lane.b32.xlu0 %v1954, 122
        %v2522 = vpop.permute.xlu0 %2521
        %2523 = vrot.lane.b32.xlu0 %v1953, 122
        %v2524 = vpop.permute.xlu0 %2523
        %v2549 = vunpack.c.l.b16 %v2497
        %v2550 = vunpack.c.h.b16 %v2497
        %v2551 = vunpack.c.l.b16 %v2498
        %v2552 = vunpack.c.h.b16 %v2498
        %v2553 = vunpack.c.l.b16 %v2499
        %v2554 = vunpack.c.h.b16 %v2499
        %v2555 = vunpack.c.l.b16 %v2500
        %v2556 = vunpack.c.h.b16 %v2500
        %v2557 = vunpack.c.l.b16 %v2501
        %v2558 = vunpack.c.h.b16 %v2501
        %v2559 = vunpack.c.l.b16 %v2502
        %v2560 = vunpack.c.h.b16 %v2502
        %v2561 = vunpack.c.l.b16 %v2503
        %v2562 = vunpack.c.h.b16 %v2503
        %v2563 = vunpack.c.l.b16 %v2504
        %v2564 = vunpack.c.h.b16 %v2504
        %v2565 = vunpack.c.l.b16 %v2505
        %v2566 = vunpack.c.h.b16 %v2505
        %v2567 = vunpack.c.l.b16 %v2506
        %v2568 = vunpack.c.h.b16 %v2506
        %v2569 = vunpack.c.l.b16 %v2507
        %v2570 = vunpack.c.h.b16 %v2507
        %v2571 = vunpack.c.l.b16 %v2508
        %v2572 = vunpack.c.h.b16 %v2508
        %v2573 = vunpack.c.l.b16 %v2509
        %v2574 = vunpack.c.h.b16 %v2509
        %v2575 = vunpack.c.l.b16 %v2510
        %v2576 = vunpack.c.h.b16 %v2510
        %v2577 = vunpack.c.l.b16 %v2511
        %v2578 = vunpack.c.h.b16 %v2511
        %v2579 = vunpack.c.l.b16 %v2512
        %v2580 = vunpack.c.h.b16 %v2512
        %v2581 = vunpack.c.l.b16 %v2513
        %v2582 = vunpack.c.h.b16 %v2513
        %v2583 = vunpack.c.l.b16 %v2514
        %v2584 = vunpack.c.h.b16 %v2514
        %v2585 = vunpack.c.l.b16 %v2515
        %v2586 = vunpack.c.h.b16 %v2515
        %v2587 = vunpack.c.l.b16 %v2516
        %v2588 = vunpack.c.h.b16 %v2516
        %v2589 = vunpack.c.l.b16 %v2517
        %v2590 = vunpack.c.h.b16 %v2517
        %v2591 = vunpack.c.l.b16 %v2518
        %v2592 = vunpack.c.h.b16 %v2518
        %v2593 = vunpack.c.l.b16 %v2519
        %v2594 = vunpack.c.h.b16 %v2519
        %v2595 = vunpack.c.l.b16 %v2520
        %v2596 = vunpack.c.h.b16 %v2520
        %v2597 = vpack.c.b16 %v2553, %v2549
        %v2598 = vpack.c.b16 %v2554, %v2550
        %v2599 = vpack.c.b16 %v2555, %v2551
        %v2600 = vpack.c.b16 %v2556, %v2552
        %v2601 = vpack.c.b16 %v2561, %v2557
        %v2602 = vpack.c.b16 %v2562, %v2558
        %v2603 = vpack.c.b16 %v2563, %v2559
        %v2604 = vpack.c.b16 %v2564, %v2560
        %v2605 = vpack.c.b16 %v2569, %v2565
        %v2606 = vpack.c.b16 %v2570, %v2566
        %v2607 = vpack.c.b16 %v2571, %v2567
        %v2608 = vpack.c.b16 %v2572, %v2568
        %v2609 = vpack.c.b16 %v2577, %v2573
        %v2610 = vpack.c.b16 %v2578, %v2574
        %v2611 = vpack.c.b16 %v2579, %v2575
        %v2612 = vpack.c.b16 %v2580, %v2576
        %v2613 = vpack.c.b16 %v2585, %v2581
        %v2614 = vpack.c.b16 %v2586, %v2582
        %v2615 = vpack.c.b16 %v2587, %v2583
        %v2616 = vpack.c.b16 %v2588, %v2584
        %v2617 = vpack.c.b16 %v2593, %v2589
        %v2618 = vpack.c.b16 %v2594, %v2590
        %v2619 = vpack.c.b16 %v2595, %v2591
        %v2620 = vpack.c.b16 %v2596, %v2592
        %v2642 = vsel %vm401, %v2522, 0
        %v2645 = vsel %vm401, %v2524, 0
        %v2648 = vsel %vm408, %v2617, 0
        %v2651 = vsel %vm408, %v2618, 0
        %v2654 = vsel %vm408, %v2619, 0
        %v2657 = vsel %vm408, %v2620, 0
        %2659 = vmatprep.subr.bf16.mxu0 %v2598
        %2660 = vmatpush1.bf16.msra.mxu0 %v2597
        %2661 = vmatprep.subr.bf16.mxu0 %v2602
        %2662 = vmatpush1.bf16.msra.mxu0 %v2601
        %2663 = vmatprep.subr.bf16.mxu0 %v2606
        %2664 = vmatpush1.bf16.msra.mxu0 %v2605
        %2665 = vmatprep.subr.bf16.mxu0 %v2610
        %2666 = vmatpush1.bf16.msra.mxu0 %v2609
        %2667 = vmatprep.subr.bf16.mxu0 %v2614
        %2668 = vmatpush1.bf16.msra.mxu0 %v2613
        %2669 = vmatprep.subr.bf16.mxu0 %v2651
        %2670 = vmatpush1.bf16.msra.mxu0 %v2648
        %2671 = vmatprep.subr.bf16.mxu0 0
        %2672 = vmatpush1.bf16.msra.mxu0 0
        %2673 = vmatprep.subr.bf16.mxu0 0
        %2674 = vmatpush1.bf16.msra.mxu0 0
        %2675 = vmatprep.subr.bf16.mxu0 0
        %2676 = vmatpush1.bf16.msra.mxu0 0
        %2677 = vmatprep.subr.bf16.mxu0 0
        %2678 = vmatpush1.bf16.msra.mxu0 0
        %2679 = vmatprep.subr.bf16.mxu0 0
        %2680 = vmatpush1.bf16.msra.mxu0 0
        %2681 = vmatprep.subr.bf16.mxu0 0
        %2682 = vmatpush1.bf16.msra.mxu0 0
        %2683 = vmatprep.subr.bf16.mxu0 0
        %2684 = vmatpush1.bf16.msra.mxu0 0
        %2685 = vmatprep.subr.bf16.mxu0 0
        %2686 = vmatpush1.bf16.msra.mxu0 0
        %2687 = vmatprep.subr.bf16.mxu0 0
        %2688 = vmatpush1.bf16.msra.mxu0 0
        %2689 = vmatprep.subr.bf16.mxu0 0
        %2690 = vmatpush1.bf16.msra.mxu0 0
        %2691 = vmatprep.mubr.bf16.mxu0 0
        %2692 = vmatmul.mubr.bf16.gmra.mrb[0].mxu0 %v2642
        %v2693 = vpop.f32.mrb[0].mxu0
        %v2694 = vadd.f32 0.0, %v2693
        %v2695 = vpop.f32.mrb[0].mxu0
        %v2696 = vadd.f32 0.0, %v2695
        %v2697 = vpop.f32.mrb[0].mxu0
        %v2698 = vadd.f32 0.0, %v2697
        %v2699 = vpop.f32.mrb[0].mxu0
        %v2700 = vadd.f32 0.0, %v2699
        %2701 = vmatprep.mubr.bf16.mxu0 0
        %2702 = vmatmul.mubr.bf16.gmra.mrb[0].mxu0 %v2645
        %v2703 = vpop.f32.mrb[0].mxu0
        %v2704 = vadd.f32 0.0, %v2703
        %v2705 = vpop.f32.mrb[0].mxu0
        %v2706 = vadd.f32 0.0, %v2705
        %v2707 = vpop.f32.mrb[0].mxu0
        %v2708 = vadd.f32 0.0, %v2707
        %v2709 = vpop.f32.mrb[0].mxu0
        %v2710 = vadd.f32 0.0, %v2709
        %2711 = vdwg.mxu0
        %2712 = vmatprep.subr.bf16.mxu0 %v2600
        %2713 = vmatpush1.bf16.msra.mxu0 %v2599
        %2714 = vmatprep.subr.bf16.mxu0 %v2604
        %2715 = vmatpush1.bf16.msra.mxu0 %v2603
        %2716 = vmatprep.subr.bf16.mxu0 %v2608
        %2717 = vmatpush1.bf16.msra.mxu0 %v2607
        %2718 = vmatprep.subr.bf16.mxu0 %v2612
        %2719 = vmatpush1.bf16.msra.mxu0 %v2611
        %2720 = vmatprep.subr.bf16.mxu0 %v2616
        %2721 = vmatpush1.bf16.msra.mxu0 %v2615
        %2722 = vmatprep.subr.bf16.mxu0 %v2657
        %2723 = vmatpush1.bf16.msra.mxu0 %v2654
        %2724 = vmatprep.subr.bf16.mxu0 0
        %2725 = vmatpush1.bf16.msra.mxu0 0
        %2726 = vmatprep.subr.bf16.mxu0 0
        %2727 = vmatpush1.bf16.msra.mxu0 0
        %2728 = vmatprep.subr.bf16.mxu0 0
        %2729 = vmatpush1.bf16.msra.mxu0 0
        %2730 = vmatprep.subr.bf16.mxu0 0
        %2731 = vmatpush1.bf16.msra.mxu0 0
        %2732 = vmatprep.subr.bf16.mxu0 0
        %2733 = vmatpush1.bf16.msra.mxu0 0
        %2734 = vmatprep.subr.bf16.mxu0 0
        %2735 = vmatpush1.bf16.msra.mxu0 0
        %2736 = vmatprep.subr.bf16.mxu0 0
        %2737 = vmatpush1.bf16.msra.mxu0 0
        %2738 = vmatprep.subr.bf16.mxu0 0
        %2739 = vmatpush1.bf16.msra.mxu0 0
        %2740 = vmatprep.subr.bf16.mxu0 0
        %2741 = vmatpush1.bf16.msra.mxu0 0
        %2742 = vmatprep.subr.bf16.mxu0 0
        %2743 = vmatpush1.bf16.msra.mxu0 0
        %2744 = vmatprep.mubr.bf16.mxu0 0
        %2745 = vmatmul.mubr.bf16.gmra.mrb[0].mxu0 %v2642
        %v2746 = vpop.f32.mrb[0].mxu0
        %v2747 = vadd.f32 0.0, %v2746
        %v2748 = vpop.f32.mrb[0].mxu0
        %v2749 = vadd.f32 0.0, %v2748
        %v2750 = vpop.f32.mrb[0].mxu0
        %v2751 = vadd.f32 0.0, %v2750
        %v2752 = vpop.f32.mrb[0].mxu0
        %v2753 = vadd.f32 0.0, %v2752
        %2754 = vmatprep.mubr.bf16.mxu0 0
        %2755 = vmatmul.mubr.bf16.gmra.mrb[0].mxu0 %v2645
        %v2756 = vpop.f32.mrb[0].mxu0
        %v2757 = vadd.f32 0.0, %v2756
        %v2758 = vpop.f32.mrb[0].mxu0
        %v2759 = vadd.f32 0.0, %v2758
        %v2760 = vpop.f32.mrb[0].mxu0
        %v2761 = vadd.f32 0.0, %v2760
        %v2762 = vpop.f32.mrb[0].mxu0
        %v2763 = vadd.f32 0.0, %v2762
        %2764 = vdwg.mxu0
        %v2765 = vadd.f32 %v2480, %v2694
        %v2766 = vadd.f32 %v2481, %v2696
        %v2767 = vadd.f32 %v2482, %v2747
        %v2768 = vadd.f32 %v2483, %v2749
        %v2769 = vadd.f32 %v2484, %v2698
        %v2770 = vadd.f32 %v2485, %v2700
        %v2771 = vadd.f32 %v2486, %v2751
        %v2772 = vadd.f32 %v2487, %v2753
        %v2773 = vadd.f32 %v2488, %v2704
        %v2774 = vadd.f32 %v2489, %v2706
        %v2775 = vadd.f32 %v2490, %v2757
        %v2776 = vadd.f32 %v2491, %v2759
        %v2777 = vadd.f32 %v2492, %v2708
        %v2778 = vadd.f32 %v2493, %v2710
        %v2779 = vadd.f32 %v2494, %v2761
        %v2780 = vadd.f32 %v2495, %v2763
        %v2782 = vlaneseq
        %v2783 = vshrl.u32 %v2782, 7
        %v2784 = vsub.s32 0, %v2783
        %v2785 = vrot.slane %v217, %v2784
        %v2786 = vlaneseq
        %v2787 = vshrl.u32 %v2786, 7
        %v2788 = vsub.s32 1, %v2787
        %v2789 = vrot.slane %v217, %v2788
        %v2790 = vlaneseq
        %v2791 = vshrl.u32 %v2790, 7
        %v2792 = vsub.s32 2, %v2791
        %v2793 = vrot.slane %v217, %v2792
        %v2794 = vlaneseq
        %v2795 = vshrl.u32 %v2794, 7
        %v2796 = vsub.s32 3, %v2795
        %v2797 = vrot.slane %v217, %v2796
        %v2802 = vadd.f32 %v2765, %v2785
        %v2803 = vadd.f32 %v2766, %v2789
        %v2804 = vadd.f32 %v2767, %v2793
        %v2805 = vadd.f32 %v2768, %v2797
        %v2806 = vadd.f32 %v2769, %v2785
        %v2807 = vadd.f32 %v2770, %v2789
        %v2808 = vadd.f32 %v2771, %v2793
        %v2809 = vadd.f32 %v2772, %v2797
        %v2810 = vadd.f32 %v2773, %v2785
        %v2811 = vadd.f32 %v2774, %v2789
        %v2812 = vadd.f32 %v2775, %v2793
        %v2813 = vadd.f32 %v2776, %v2797
        %v2814 = vadd.f32 %v2777, %v2785
        %v2815 = vadd.f32 %v2778, %v2789
        %v2816 = vadd.f32 %v2779, %v2793
        %v2817 = vadd.f32 %v2780, %v2797
        %v2818 = vmax.f32 %v2802, 0.0
        %v2819 = vmax.f32 %v2803, 0.0
        %v2820 = vmax.f32 %v2804, 0.0
        %v2821 = vmax.f32 %v2805, 0.0
        %v2822 = vmax.f32 %v2806, 0.0
        %v2823 = vmax.f32 %v2807, 0.0
        %v2824 = vmax.f32 %v2808, 0.0
        %v2825 = vmax.f32 %v2809, 0.0
        %v2826 = vmax.f32 %v2810, 0.0
        %v2827 = vmax.f32 %v2811, 0.0
        %v2828 = vmax.f32 %v2812, 0.0
        %v2829 = vmax.f32 %v2813, 0.0
        %v2830 = vmax.f32 %v2814, 0.0
        %v2831 = vmax.f32 %v2815, 0.0
        %v2832 = vmax.f32 %v2816, 0.0
        %v2833 = vmax.f32 %v2817, 0.0
        %v2834 = vpack.c.bf16 %v2822, %v2818
        %v2835 = vpack.c.bf16 %v2823, %v2819
        %v2836 = vpack.c.bf16 %v2824, %v2820
        %v2837 = vpack.c.bf16 %v2825, %v2821
        %v2838 = vpack.c.bf16 %v2830, %v2826
        %v2839 = vpack.c.bf16 %v2831, %v2827
        %v2840 = vpack.c.bf16 %v2832, %v2828
        %v2841 = vpack.c.bf16 %v2833, %v2829
        %v2850 = vunpack.c.l.b16 %v2834
        %v2851 = vunpack.c.l.b16 %v2835
        %v2852 = vunpack.c.l.b16 %v2836
        %v2853 = vunpack.c.l.b16 %v2837
        %v2854 = vunpack.c.h.b16 %v2834
        %v2855 = vunpack.c.h.b16 %v2835
        %v2856 = vunpack.c.h.b16 %v2836
        %v2857 = vunpack.c.h.b16 %v2837
        %v2858 = vunpack.c.l.b16 %v2838
        %v2859 = vunpack.c.l.b16 %v2839
        %v2860 = vunpack.c.l.b16 %v2840
        %v2861 = vunpack.c.l.b16 %v2841
        %v2862 = vunpack.c.h.b16 %v2838
        %v2863 = vunpack.c.h.b16 %v2839
        %v2864 = vunpack.c.h.b16 %v2840
        %v2865 = vunpack.c.h.b16 %v2841
        %v2866 = vpack.c.b16 %v2851, %v2850
        %v2867 = vpack.c.b16 %v2853, %v2852
        %v2868 = vpack.c.b16 %v2855, %v2854
        %v2869 = vpack.c.b16 %v2857, %v2856
        %v2870 = vpack.c.b16 %v2859, %v2858
        %v2871 = vpack.c.b16 %v2861, %v2860
        %v2872 = vpack.c.b16 %v2863, %v2862
        %v2873 = vpack.c.b16 %v2865, %v2864
        %2882 = vst [vmem:[%s215] sm:$0xff] %v2866
        %vm2883 = vcmask 1043456
        %vm2884 = vcmask 785412
        %vm2885 = vmor %vm2884, %vm2883
        %2886 = vst.msk [vmem:[%s215 + $0x8] sm:$0xff] %vm2885, %v2867
        %2887 = vst [vmem:[%s215 + $0x10] sm:$0xff] %v2868
        %2888 = vst.msk [vmem:[%s215 + $0x18] sm:$0xff] %vm2885, %v2869
        %2889 = vst [vmem:[%s215 + $0x20] sm:$0xff] %v2870
        %2890 = vst.msk [vmem:[%s215 + $0x28] sm:$0xff] %vm2885, %v2871
        %2891 = vst [vmem:[%s215 + $0x30] sm:$0x77] %v2872
        %vm2892 = vcmask 1042432
        %vm2893 = vcmask 784388
        %vm2894 = vmor %vm2893, %vm2892
        %2895 = vst.msk [vmem:[%s215 + $0x38] sm:$0x77] %vm2894, %v2873
        %s2896 = sand.u32 %s97, 1
        %s2897 = scalar_lea.sflag [#allocation4], %s2896
        %s2898 = sand.u32 %s97, 1
        %s2899 = smul.addr %s2898, 64
        %s2900 = scalar_lea.vmem [#allocation8], %s2899
        // Predicated region
        $region45: #{convnet_forward.7} parent=31 // pred_check
          %p2901 = pneg %p107
        $region46: #{convnet_forward.7} parent=31 // pred_check_branch
          %2903 = sbr.rel (%p2901) target = $region48
        $region47: #{convnet_forward.7} parent=31 // pred_region
          %s2905 = ssub.s32 1024, 1024
          %2906 = vsyncadd %s2897, %s2905
          %s2907 = smul.addr %s21, 16
          %s2908 = smul.addr %s2907, 64
          %s2909 = scalar_lea.hbm %s3, %s2908
          %s2910 = sshll.u32 %s2900, 4
          %s2911 = int_to_ptr.vmem [resolvable:$true] %s2910
          %2916 = dma.vmem_to_hbm [thread:$0]  %s2911, 1024, %s2909, %s2897, 256, 256, 16
        $region48: #{convnet_forward.7} parent=31 // pred_fallthru
          _
      $region32: #{convnet_forward.7} parent=5 // pred_fallthru
        _
      %p2917 = scmp.le.s32.totalorder 2, %s16
      // Predicated region
      $region49: #{convnet_forward.7} parent=5 // pred_check
        %p2918 = pneg %p2917
      $region50: #{convnet_forward.7} parent=5 // pred_check_branch
        %2920 = sbr.rel (%p2918) target = $region52
      $region51: #{convnet_forward.7} parent=5 // pred_region
        %s2921 = ssub.s32 %s16, 2
        // Predicated region
        $region53: #{convnet_forward.7} parent=51 // pred_check
          %p2922 = pneg %p113
        $region54: #{convnet_forward.7} parent=51 // pred_check_branch
          %2924 = sbr.rel (%p2922) target = $region56
        $region55: #{convnet_forward.7} parent=51 // pred_region
          %s2925 = sand.u32 %s98, 1
          %s2926 = scalar_lea.sflag [#allocation4], %s2925
          %s2927 = sand.u32 %s98, 1
          %s2928 = smul.addr %s2927, 64
          %s2929 = scalar_lea.vmem [#allocation8], %s2928
          %2930 = dma.done %s2926, 1024
        $region56: #{convnet_forward.7} parent=51 // pred_fallthru
          _
      $region52: #{convnet_forward.7} parent=5 // pred_fallthru
        _
    $region6: #{convnet_forward.7} parent=1 // loop_footer
      %s20 = sadd.s32 1, %s16
    $region7: #{convnet_forward.7} parent=1 // loop_footer_branch
      %15 = sbr.rel target = $region3
    $region8: #{convnet_forward.7} parent=1 // loop_exit
      _
    %2931 = vsyncpa [#allocation3], 1
    %s2932 = scalar_lea.sflag [#allocation3], 1
    %2933 = vsyncpa %s2932, 1
    %2934 = vsyncpa [#allocation6], 1
    %2935 = vsyncpa [#allocation4], 1
    %s2936 = scalar_lea.sflag [#allocation4], 1
    %2937 = vsyncpa %s2936, 1

// kernel: convnet_forward.10
$region0: #{convnet_forward.10}
  #allocation0 [shape = 'u32[]', space=smem, size = 0x4, offset = 0x4, fixed_abs, tag = 'smem constant byte address 0x4 - core index']
  #allocation1 [shape = 'u32[144,128]{1,0:T(1,128)}', space=vmem, size = 0x12000, scoped, tag = 'internal scratch']
  %s0 = inlined_call_operand.hbm [shape: bf16[16,192], index: 0, kind: input, shape index: {}]
  %s1 = inlined_call_operand.hbm [shape: bf16[16,192], index: 1, kind: input, shape index: {}]
  %s2 = inlined_call_operand.hbm [shape: bf16[16,192], index: 2, kind: input, shape index: {}]
  %s3 = inlined_call_operand.hbm [shape: bf16[16,192], index: 3, kind: input, shape index: {}]
  %s4 = inlined_call_operand.hbm [shape: bf16[16,192], index: 4, kind: output, shape index: {}]
  %s5 = sld [smem:[#allocation0]]
  $region42: #{convnet_forward.10} parent=0
    _
  %s7 = ssub.s32 1, %s5
  %s8 = scalar_select 0, %s7, %s5
  $region1: #{convnet_forward.10} parent=0
    #allocation2 [shape = 'u8[8192]{0}', space=vmem, size = 0x2000, scoped, tag = 'input window, operand 0, single buffered']
    #allocation3 [shape = 's32[1]{0}', space=sflag, size = 0x4, scoped, tag = 'scoped memory for convnet_forward.10']
    #allocation4 [shape = 's32[1]{0}', space=sflag, size = 0x4, scoped, tag = 'scoped memory for convnet_forward.10']
    #allocation5 [shape = 'u8[8192]{0}', space=vmem, size = 0x2000, scoped, tag = 'input window, operand 1, single buffered']
    #allocation6 [shape = 's32[1]{0}', space=sflag, size = 0x4, scoped, tag = 'scoped memory for convnet_forward.10']
    #allocation7 [shape = 'u8[8192]{0}', space=vmem, size = 0x2000, scoped, tag = 'input window, operand 2, single buffered']
    #allocation8 [shape = 'u8[8192]{0}', space=vmem, size = 0x2000, scoped, tag = 'input window, operand 3, single buffered']
    #allocation9 [shape = 's32[1]{0}', space=sflag, size = 0x4, scoped, tag = 'scoped memory for convnet_forward.10']
    #allocation10 [shape = 'u8[8192]{0}', space=vmem, size = 0x2000, scoped, tag = 'output window, operand 0, single buffered']
    %9 = vsyncpa [#allocation3], 0
    %10 = vsyncpa [#allocation6], 0
    %11 = vsyncpa [#allocation9], 0
    %12 = vsyncpa [#allocation4], 0
    // Predicated region
    $region2: #{convnet_forward.10} parent=1 // pred_check
      _
    $region3: #{convnet_forward.10} parent=1 // pred_check_branch
      %14 = sbr.rel (0) target = $region5
    $region4: #{convnet_forward.10} parent=1 // pred_region
      %s16 = ssub.s32 256, 256
      %17 = vsyncadd [#allocation3], %s16
      %s18 = sshll.u32 [#allocation2], 4
      %s19 = int_to_ptr.vmem [resolvable:$true] %s18
      %24 = dma.hbm_to_vmem [thread:$0]  %s0, 256, %s19, [#allocation3], 128, 128, 8
    $region5: #{convnet_forward.10} parent=1 // pred_fallthru
      _
    // Predicated region
    $region6: #{convnet_forward.10} parent=1 // pred_check
      _
    $region7: #{convnet_forward.10} parent=1 // pred_check_branch
      %26 = sbr.rel (0) target = $region9
    $region8: #{convnet_forward.10} parent=1 // pred_region
      %s28 = ssub.s32 256, 256
      %29 = vsyncadd [#allocation6], %s28
      %s30 = sshll.u32 [#allocation5], 4
      %s31 = int_to_ptr.vmem [resolvable:$true] %s30
      %36 = dma.hbm_to_vmem [thread:$0]  %s1, 256, %s31, [#allocation6], 128, 128, 8
    $region9: #{convnet_forward.10} parent=1 // pred_fallthru
      _
    // Predicated region
    $region10: #{convnet_forward.10} parent=1 // pred_check
      _
    $region11: #{convnet_forward.10} parent=1 // pred_check_branch
      %38 = sbr.rel (0) target = $region13
    $region12: #{convnet_forward.10} parent=1 // pred_region
      %s40 = ssub.s32 256, 256
      %41 = vsyncadd [#allocation6], %s40
      %s42 = sshll.u32 [#allocation7], 4
      %s43 = int_to_ptr.vmem [resolvable:$true] %s42
      %48 = dma.hbm_to_vmem [thread:$0]  %s2, 256, %s43, [#allocation6], 128, 128, 8
    $region13: #{convnet_forward.10} parent=1 // pred_fallthru
      _
    // Predicated region
    $region14: #{convnet_forward.10} parent=1 // pred_check
      _
    $region15: #{convnet_forward.10} parent=1 // pred_check_branch
      %50 = sbr.rel (0) target = $region17
    $region16: #{convnet_forward.10} parent=1 // pred_region
      %s52 = ssub.s32 256, 256
      %53 = vsyncadd [#allocation9], %s52
      %s54 = sshll.u32 [#allocation8], 4
      %s55 = int_to_ptr.vmem [resolvable:$true] %s54
      %60 = dma.hbm_to_vmem [thread:$0]  %s3, 256, %s55, [#allocation9], 128, 128, 8
    $region17: #{convnet_forward.10} parent=1 // pred_fallthru
      _
    // Predicated region
    $region18: #{convnet_forward.10} parent=1 // pred_check
      _
    $region19: #{convnet_forward.10} parent=1 // pred_check_branch
      %62 = sbr.rel (0) target = $region21
    $region20: #{convnet_forward.10} parent=1 // pred_region
      %63 = dma.done [#allocation3], 256
    $region21: #{convnet_forward.10} parent=1 // pred_fallthru
      _
    // Predicated region
    $region22: #{convnet_forward.10} parent=1 // pred_check
      _
    $region23: #{convnet_forward.10} parent=1 // pred_check_branch
      %65 = sbr.rel (0) target = $region25
    $region24: #{convnet_forward.10} parent=1 // pred_region
      %66 = dma.done [#allocation6], 256
    $region25: #{convnet_forward.10} parent=1 // pred_fallthru
      _
    // Predicated region
    $region26: #{convnet_forward.10} parent=1 // pred_check
      _
    $region27: #{convnet_forward.10} parent=1 // pred_check_branch
      %68 = sbr.rel (0) target = $region29
    $region28: #{convnet_forward.10} parent=1 // pred_region
      %69 = dma.done [#allocation6], 256
    $region29: #{convnet_forward.10} parent=1 // pred_fallthru
      _
    // Predicated region
    $region30: #{convnet_forward.10} parent=1 // pred_check
      _
    $region31: #{convnet_forward.10} parent=1 // pred_check_branch
      %71 = sbr.rel (0) target = $region33
    $region32: #{convnet_forward.10} parent=1 // pred_region
      %72 = dma.done [#allocation9], 256
    $region33: #{convnet_forward.10} parent=1 // pred_fallthru
      _
    %v73 = vld [vmem:[#allocation2] sm:$0xff]
    %v74 = vld [vmem:[#allocation2 + $0x8] sm:$0xff]
    %v75 = vld [vmem:[#allocation5] sm:$0xff]
    %v76 = vld [vmem:[#allocation5 + $0x8] sm:$0xff]
    %v77 = vmax.bf16 %v73, %v75
    %v78 = vmax.bf16 %v74, %v76
    %v79 = vld [vmem:[#allocation7] sm:$0xff]
    %v80 = vld [vmem:[#allocation7 + $0x8] sm:$0xff]
    %v81 = vld [vmem:[#allocation8] sm:$0xff]
    %v82 = vld [vmem:[#allocation8 + $0x8] sm:$0xff]
    %v83 = vmax.bf16 %v79, %v81
    %v84 = vmax.bf16 %v80, %v82
    %v85 = vmax.bf16 %v77, %v83
    %v86 = vmax.bf16 %v78, %v84
    %vm87 = vcmask 1043456
    %vm88 = vcmask 523268
    %vm89 = vmor %vm88, %vm87
    %90 = vst.msk [vmem:[#allocation10] sm:$0xff] %vm89, %v85
    %91 = vst.msk [vmem:[#allocation10 + $0x8] sm:$0xff] %vm89, %v86
    // Predicated region
    $region34: #{convnet_forward.10} parent=1 // pred_check
      _
    $region35: #{convnet_forward.10} parent=1 // pred_check_branch
      %93 = sbr.rel (0) target = $region37
    $region36: #{convnet_forward.10} parent=1 // pred_region
      %s95 = ssub.s32 256, 256
      %96 = vsyncadd [#allocation4], %s95
      %s97 = sshll.u32 [#allocation10], 4
      %s98 = int_to_ptr.vmem [resolvable:$true] %s97
      %103 = dma.vmem_to_hbm [thread:$0]  %s98, 256, %s4, [#allocation4], 128, 128, 8
    $region37: #{convnet_forward.10} parent=1 // pred_fallthru
      _
    // Predicated region
    $region38: #{convnet_forward.10} parent=1 // pred_check
      _
    $region39: #{convnet_forward.10} parent=1 // pred_check_branch
      %105 = sbr.rel (0) target = $region41
    $region40: #{convnet_forward.10} parent=1 // pred_region
      %106 = dma.done [#allocation4], 256
    $region41: #{convnet_forward.10} parent=1 // pred_fallthru
      _
    %107 = vsyncpa [#allocation3], 1
    %108 = vsyncpa [#allocation6], 1
    %109 = vsyncpa [#allocation9], 1
    %110 = vsyncpa [#allocation4], 1

// kernel: convnet_forward.12
$region0: #{convnet_forward.12}
  #allocation0 [shape = 'u32[]', space=smem, size = 0x4, offset = 0x4, fixed_abs, tag = 'smem constant byte address 0x4 - core index']
  #allocation1 [shape = 'u32[144,128]{1,0:T(1,128)}', space=vmem, size = 0x12000, scoped, tag = 'internal scratch']
  #allocation2 [shape = 'f32[16,128]{1,0:T(8,128)}', space=vmem, size = 0x2000, scoped, tag = 'scratch operand']
  %s0 = inlined_call_operand.hbm [shape: bf16[16,1280], index: 0, kind: input, shape index: {}]
  %s1 = inlined_call_operand.hbm [shape: bf16[1280,128], index: 1, kind: input, shape index: {}]
  %s2 = inlined_call_operand.hbm [shape: f32[1,128], index: 2, kind: input, shape index: {}]
  %s3 = inlined_call_operand.hbm [shape: f32[2,16,128], index: 3, kind: output, shape index: {}]
  %s4 = sld [smem:[#allocation0]]
  $region65: #{convnet_forward.12} parent=0
    _
  %s6 = ssub.s32 1, %s4
  %s7 = scalar_select 0, %s6, %s4
  $region1: #{convnet_forward.12} parent=0
    #allocation3 [shape = 'u8[40960]{0}', space=vmem, size = 0xa000, scoped, tag = 'input window, operand 0']
    #allocation4 [shape = 's32[2]{0}', space=sflag, size = 0x8, scoped, tag = 'scoped memory for convnet_forward.12']
    #allocation5 [shape = 's32[2]{0}', space=sflag, size = 0x8, scoped, tag = 'scoped memory for convnet_forward.12']
    #allocation6 [shape = 'u8[327680]{0}', space=vmem, size = 0x50000, scoped, tag = 'input window, operand 1']
    #allocation7 [shape = 's32[2]{0}', space=sflag, size = 0x8, scoped, tag = 'scoped memory for convnet_forward.12']
    #allocation8 [shape = 'u8[512]{0}', space=vmem, size = 0x400, scoped, tag = 'input window, operand 2, single buffered']
    #allocation9 [shape = 'u8[16384]{0}', space=vmem, size = 0x4000, scoped, tag = 'output window, operand 0']
    %8 = vsyncpa [#allocation4], 0
    %s9 = scalar_lea.sflag [#allocation4], 1
    %10 = vsyncpa %s9, 0
    %11 = vsyncpa [#allocation7], 0
    %s12 = scalar_lea.sflag [#allocation7], 1
    %13 = vsyncpa %s12, 0
    %14 = vsyncpa [#allocation5], 0
    %s15 = scalar_lea.sflag [#allocation5], 1
    %16 = vsyncpa %s15, 0
    loop: start=0, step=1, limit=4
    $region2: #{convnet_forward.12} parent=1 // loop_pre_header
      _
    $region3: #{convnet_forward.12} parent=1 // loop_header
      %s18 = sphi 0, %s22
      %p19 = scmp.ge.s32.totalorder %s18, 4
      %s25 = sphi 0, %s51
      %s26 = sphi 0, %s47
      %s27 = sphi 0, %s43
      %s28 = sphi 0, %s39
      %s29 = sphi 0, %s25
      %s30 = sphi 0, %s26
      %s31 = sphi 0, %s27
      %s32 = sphi 0, %s28
      %s33 = sphi 0, %s29
      %s34 = sphi 0, %s30
      %s35 = sphi 0, %s31
      %s36 = sphi 0, %s32
      %s58 = sphi 0, %s60
      %s61 = sphi 0, %s58
      %s62 = sphi 0, %s61
      %s78 = sphi 0, %s62
      %s88 = sphi 0, %s90
      %s91 = sphi 0, %s88
      %s92 = sphi 0, %s91
      %s108 = sphi 0, %s92
      %s114 = sphi 0, %s116
      %s117 = sphi 0, %s114
      %s118 = sphi 0, %s117
      %s134 = sphi 0, %s118
      %s144 = sphi 0, %s146
      %s147 = sphi 0, %s144
      %s148 = sphi 0, %s147
      %s164 = sphi 0, %s148
    $region4: #{convnet_forward.12} parent=1 // loop_header_branch
      %21 = sbr.rel (%p19) target = $region8
    $region5: #{convnet_forward.12} parent=1 // loop_body
      %s23 = ssub.s32 %s18, 1
      %s24 = ssub.s32 %s18, 2
      %s37 = sadd.s32 1, %s28
      %p38 = scmp.ge.s32.totalorder %s37, 1
      %s39 = scalar_select %p38, 0, %s37
      %s40 = sadd.s32 1, %s27
      %s41 = scalar_select %p38, %s40, %s27
      %p42 = scmp.ge.s32.totalorder %s41, 1
      %s43 = scalar_select %p42, 0, %s41
      %s44 = sadd.s32 1, %s26
      %s45 = scalar_select %p42, %s44, %s26
      %p46 = scmp.ge.s32.totalorder %s45, 1
      %s47 = scalar_select %p46, 0, %s45
      %s48 = sadd.s32 1, %s25
      %s49 = scalar_select %p46, %s48, %s25
      %p50 = scmp.ge.s32.totalorder %s49, 2
      %s51 = scalar_select %p50, 0, %s49
      %s52 = sadd.s32 %s25, %s28
      %s53 = sadd.s32 %s51, %s39
      %s54 = ssub.s32 %s26, %s47
      %s55 = ssub.s32 %s52, %s53
      %s56 = sor.u32 %s54, %s55
      %p57 = scmp.eq.s32.totalorder %s56, 0
      %s59 = sadd.s32 %s58, 1
      %s60 = scalar_select %p57, %s58, %s59
      %p63 = pneg %p57
      %p64 = scmp.eq.s32.totalorder %s18, 1
      %p65 = por %p63, %p64
      %p66 = scmp.ne.s32.totalorder %s58, %s61
      %p67 = scmp.eq.s32.totalorder %s18, 0
      %p68 = por %p66, %p67
      %p69 = scmp.ne.s32.totalorder %s58, %s61
      %p70 = scmp.eq.s32.totalorder %s23, 1
      %p71 = por %p69, %p70
      %p72 = scmp.ne.s32.totalorder %s61, %s62
      %p73 = scmp.eq.s32.totalorder %s23, 0
      %p74 = por %p72, %p73
      %p75 = scmp.ne.s32.totalorder %s61, %s62
      %p76 = scmp.eq.s32.totalorder %s24, 1
      %p77 = por %p75, %p76
      %p79 = scmp.ne.s32.totalorder %s62, %s78
      %p80 = scmp.eq.s32.totalorder %s24, 0
      %p81 = por %p79, %p80
      %s82 = sadd.s32 %s25, %s28
      %s83 = sadd.s32 %s51, %s39
      %s84 = ssub.s32 %s82, %s83
      %s85 = ssub.s32 %s27, %s43
      %s86 = sor.u32 %s84, %s85
      %p87 = scmp.eq.s32.totalorder %s86, 0
      %s89 = sadd.s32 %s88, 1
      %s90 = scalar_select %p87, %s88, %s89
      %p93 = pneg %p87
      %p94 = scmp.eq.s32.totalorder %s18, 1
      %p95 = por %p93, %p94
      %p96 = scmp.ne.s32.totalorder %s88, %s91
      %p97 = scmp.eq.s32.totalorder %s18, 0
      %p98 = por %p96, %p97
      %p99 = scmp.ne.s32.totalorder %s88, %s91
      %p100 = scmp.eq.s32.totalorder %s23, 1
      %p101 = por %p99, %p100
      %p102 = scmp.ne.s32.totalorder %s91, %s92
      %p103 = scmp.eq.s32.totalorder %s23, 0
      %p104 = por %p102, %p103
      %p105 = scmp.ne.s32.totalorder %s91, %s92
      %p106 = scmp.eq.s32.totalorder %s24, 1
      %p107 = por %p105, %p106
      %p109 = scmp.ne.s32.totalorder %s92, %s108
      %p110 = scmp.eq.s32.totalorder %s24, 0
      %p111 = por %p109, %p110
      %s112 = ssub.s32 %s27, %s43
      %p113 = scmp.eq.s32.totalorder %s112, 0
      %s115 = sadd.s32 %s114, 1
      %s116 = scalar_select %p113, %s114, %s115
      %p119 = pneg %p113
      %p120 = scmp.eq.s32.totalorder %s18, 1
      %p121 = por %p119, %p120
      %p122 = scmp.ne.s32.totalorder %s114, %s117
      %p123 = scmp.eq.s32.totalorder %s18, 0
      %p124 = por %p122, %p123
      %p125 = scmp.ne.s32.totalorder %s114, %s117
      %p126 = scmp.eq.s32.totalorder %s23, 1
      %p127 = por %p125, %p126
      %p128 = scmp.ne.s32.totalorder %s117, %s118
      %p129 = scmp.eq.s32.totalorder %s23, 0
      %p130 = por %p128, %p129
      %p131 = scmp.ne.s32.totalorder %s117, %s118
      %p132 = scmp.eq.s32.totalorder %s24, 1
      %p133 = por %p131, %p132
      %p135 = scmp.ne.s32.totalorder %s118, %s134
      %p136 = scmp.eq.s32.totalorder %s24, 0
      %p137 = por %p135, %p136
      %s138 = ssub.s32 %s25, %s51
      %s139 = ssub.s32 %s26, %s47
      %s140 = sor.u32 %s138, %s139
      %s141 = ssub.s32 %s27, %s43
      %s142 = sor.u32 %s140, %s141
      %p143 = scmp.eq.s32.totalorder %s142, 0
      %s145 = sadd.s32 %s144, 1
      %s146 = scalar_select %p143, %s144, %s145
      %p149 = pneg %p143
      %p150 = scmp.eq.s32.totalorder %s18, 1
      %p151 = por %p149, %p150
      %p152 = scmp.ne.s32.totalorder %s144, %s147
      %p153 = scmp.eq.s32.totalorder %s18, 0
      %p154 = por %p152, %p153
      %p155 = scmp.ne.s32.totalorder %s144, %s147
      %p156 = scmp.eq.s32.totalorder %s23, 1
      %p157 = por %p155, %p156
      %p158 = scmp.ne.s32.totalorder %s147, %s148
      %p159 = scmp.eq.s32.totalorder %s23, 0
      %p160 = por %p158, %p159
      %p161 = scmp.ne.s32.totalorder %s147, %s148
      %p162 = scmp.eq.s32.totalorder %s24, 1
      %p163 = por %p161, %p162
      %p165 = scmp.ne.s32.totalorder %s148, %s164
      %p166 = scmp.eq.s32.totalorder %s24, 0
      %p167 = por %p165, %p166
      %p168 = scmp.le.s32.totalorder 1, %s18
      %p169 = scmp.lt.s32.totalorder %s18, 3
      %p170 = pnand %p168, %p169
      %p171 = pneg %p170
      // Predicated region
      $region9: #{convnet_forward.12} parent=5 // pred_check
        _
      $region10: #{convnet_forward.12} parent=5 // pred_check_branch
        %173 = sbr.rel (%p170) target = $region12
      $region11: #{convnet_forward.12} parent=5 // pred_region
        %s174 = ssub.s32 %s18, 1
        // Predicated region
        $region13: #{convnet_forward.12} parent=11 // pred_check
          %p175 = pneg %p130
        $region14: #{convnet_forward.12} parent=11 // pred_check_branch
          %177 = sbr.rel (%p175) target = $region16
        $region15: #{convnet_forward.12} parent=11 // pred_region
          %s179 = ssub.s32 16, 16
          %180 = vsyncadd [#allocation7], %s179
          %s181 = smul.addr %s31, 16
          %s182 = scalar_lea.hbm %s2, %s181
          %s184 = sshll.u32 [#allocation8], 4
          %s185 = int_to_ptr.vmem [resolvable:$true] %s184
          %187 = dma.hbm_to_vmem [thread:$0]  %s182, 16, %s185, [#allocation7]
        $region16: #{convnet_forward.12} parent=11 // pred_fallthru
          _
      $region12: #{convnet_forward.12} parent=5 // pred_fallthru
        _
      %p188 = scmp.lt.s32.totalorder %s18, 2
      // Predicated region
      $region17: #{convnet_forward.12} parent=5 // pred_check
        %p189 = pneg %p188
      $region18: #{convnet_forward.12} parent=5 // pred_check_branch
        %191 = sbr.rel (%p189) target = $region20
      $region19: #{convnet_forward.12} parent=5 // pred_region
        // Predicated region
        $region21: #{convnet_forward.12} parent=19 // pred_check
          %p192 = pneg %p68
        $region22: #{convnet_forward.12} parent=19 // pred_check_branch
          %194 = sbr.rel (%p192) target = $region24
        $region23: #{convnet_forward.12} parent=19 // pred_region
          %s195 = sand.u32 %s58, 1
          %s196 = scalar_lea.sflag [#allocation4], %s195
          %s197 = sand.u32 %s58, 1
          %s198 = smul.addr %s197, 40
          %s199 = scalar_lea.vmem [#allocation3], %s198
          %s200 = sadd.s32 %s25, %s28
          %s201 = smul.u32 2, %s26
          %s202 = smul.u32 5, %s200
          %s204 = ssub.s32 640, 640
          %205 = vsyncadd %s196, %s204
          %s206 = smul.addr %s201, 10
          %s207 = sadd.s32 %s202, %s206
          %s208 = smul.addr %s207, 64
          %s209 = scalar_lea.hbm %s0, %s208
          %s210 = sshll.u32 %s199, 4
          %s211 = int_to_ptr.vmem [resolvable:$true] %s210
          %216 = dma.hbm_to_vmem [thread:$0]  %s209, 640, %s211, %s196, 640, 320, 20
        $region24: #{convnet_forward.12} parent=19 // pred_fallthru
          _
        // Predicated region
        $region25: #{convnet_forward.12} parent=19 // pred_check
          %p217 = pneg %p98
        $region26: #{convnet_forward.12} parent=19 // pred_check_branch
          %219 = sbr.rel (%p217) target = $region28
        $region27: #{convnet_forward.12} parent=19 // pred_region
          %s220 = sand.u32 %s18, 1
          %s221 = scalar_lea.sflag [#allocation7], %s220
          %s222 = sand.u32 %s88, 1
          %s223 = smul.addr %s222, 320
          %s224 = scalar_lea.vmem [#allocation6], %s223
          %s225 = sadd.s32 %s25, %s28
          %s226 = smul.u32 80, %s225
          %s228 = ssub.s32 5120, 5120
          %229 = vsyncadd %s221, %s228
          %s230 = sadd.s32 %s27, %s226
          %s231 = smul.addr %s230, 64
          %s232 = scalar_lea.hbm %s1, %s231
          %s233 = sshll.u32 %s224, 4
          %s234 = int_to_ptr.vmem [resolvable:$true] %s233
          %239 = dma.hbm_to_vmem [thread:$0]  %s232, 5120, %s234, %s221, 64, 64, 4
        $region28: #{convnet_forward.12} parent=19 // pred_fallthru
          _
      $region20: #{convnet_forward.12} parent=5 // pred_fallthru
        _
      %p240 = scmp.le.s32.totalorder 1, %s18
      %p241 = scmp.lt.s32.totalorder %s18, 3
      %p242 = pnand %p240, %p241
      %p243 = pneg %p242
      // Predicated region
      $region29: #{convnet_forward.12} parent=5 // pred_check
        _
      $region30: #{convnet_forward.12} parent=5 // pred_check_branch
        %245 = sbr.rel (%p242) target = $region32
      $region31: #{convnet_forward.12} parent=5 // pred_region
        %s246 = ssub.s32 %s18, 1
        %s247 = sand.u32 %s61, 1
        %s248 = scalar_lea.sflag [#allocation4], %s247
        %s249 = sand.u32 %s61, 1
        %s250 = smul.addr %s249, 40
        %s251 = scalar_lea.vmem [#allocation3], %s250
        // Predicated region
        $region33: #{convnet_forward.12} parent=31 // pred_check
          %p252 = pneg %p74
        $region34: #{convnet_forward.12} parent=31 // pred_check_branch
          %254 = sbr.rel (%p252) target = $region36
        $region35: #{convnet_forward.12} parent=31 // pred_region
          %255 = dma.done %s248, 640
        $region36: #{convnet_forward.12} parent=31 // pred_fallthru
          _
        %s256 = sand.u32 %s23, 1
        %s257 = scalar_lea.sflag [#allocation7], %s256
        %s258 = sand.u32 %s91, 1
        %s259 = smul.addr %s258, 320
        %s260 = scalar_lea.vmem [#allocation6], %s259
        // Predicated region
        $region37: #{convnet_forward.12} parent=31 // pred_check
          %p261 = pneg %p104
        $region38: #{convnet_forward.12} parent=31 // pred_check_branch
          %263 = sbr.rel (%p261) target = $region40
        $region39: #{convnet_forward.12} parent=31 // pred_region
          %264 = dma.done %s257, 5120
        $region40: #{convnet_forward.12} parent=31 // pred_fallthru
          _
        // Predicated region
        $region41: #{convnet_forward.12} parent=31 // pred_check
          %p265 = pneg %p130
        $region42: #{convnet_forward.12} parent=31 // pred_check_branch
          %267 = sbr.rel (%p265) target = $region44
        $region43: #{convnet_forward.12} parent=31 // pred_region
          %268 = dma.done [#allocation7], 16
        $region44: #{convnet_forward.12} parent=31 // pred_fallthru
          _
        %s269 = sand.u32 %s61, 1
        %s270 = scalar_lea.sflag [#allocation4], %s269
        %s271 = sand.u32 %s61, 1
        %s272 = smul.addr %s271, 40
        %s273 = scalar_lea.vmem [#allocation3], %s272
        %p274 = pneg %p74
        %p275 = pneg %p71
        %s276 = sand.u32 %s23, 1
        %s277 = scalar_lea.sflag [#allocation7], %s276
        %s278 = sand.u32 %s91, 1
        %s279 = smul.addr %s278, 320
        %s280 = scalar_lea.vmem [#allocation6], %s279
        %p281 = pneg %p104
        %p282 = pneg %p101
        %p283 = pneg %p130
        %p284 = pneg %p127
        %p285 = pneg %p160
        %p286 = pneg %p157
        %s287 = sand.u32 %s147, 1
        %s288 = scalar_lea.sflag [#allocation5], %s287
        %s289 = sand.u32 %s147, 1
        %s290 = smul.addr %s289, 16
        %s291 = scalar_lea.vmem [#allocation9], %s290
        %s292 = sadd.s32 %s29, %s32
        %s293 = smul.u32 2, %s30
        %s294 = smul.u32 5, %s292
        %s295 = sadd.s32 %s29, %s32
        %s296 = smul.u32 80, %s295
        %s297 = smul.u32 2, %s30
        %p299 = scmp.eq.s32.totalorder %s32, 0
        // Predicated region
        $region45: #{convnet_forward.12} parent=31 // pred_check
          %p300 = pneg %p299
        $region46: #{convnet_forward.12} parent=31 // pred_check_branch
          %302 = sbr.rel (%p300) target = $region48
        $region47: #{convnet_forward.12} parent=31 // pred_region
          %303 = vst [vmem:[#allocation2] sm:$0xff] 0.0
          %304 = vst [vmem:[#allocation2 + $0x8] sm:$0xff] 0.0
        $region48: #{convnet_forward.12} parent=31 // pred_fallthru
          _
        %v305 = vld [vmem:[#allocation2] sm:$0xff]
        %v306 = vld [vmem:[#allocation2 + $0x8] sm:$0xff]
        %v307 = vld [vmem:[%s251] sm:$0xff]
        %v308 = vld [vmem:[%s251 + $0x8] sm:$0xff]
        %v309 = vld [vmem:[%s251 + $0x10] sm:$0xf]
        %v310 = vld [vmem:[%s251 + $0x14] sm:$0xff]
        %v311 = vld [vmem:[%s251 + $0x1c] sm:$0xff]
        %v312 = vld [vmem:[%s251 + $0x24] sm:$0xf]
        %v313 = vld [vmem:[%s260] sm:$0xf]
        %v314 = vld [vmem:[%s260 + $0x4] sm:$0xf]
        %v315 = vld [vmem:[%s260 + $0x8] sm:$0xf]
        %v316 = vld [vmem:[%s260 + $0xc] sm:$0xf]
        %v317 = vld [vmem:[%s260 + $0x10] sm:$0xf]
        %v318 = vld [vmem:[%s260 + $0x14] sm:$0xf]
        %v319 = vld [vmem:[%s260 + $0x18] sm:$0xf]
        %v320 = vld [vmem:[%s260 + $0x1c] sm:$0xf]
        %v321 = vld [vmem:[%s260 + $0x20] sm:$0xf]
        %v322 = vld [vmem:[%s260 + $0x24] sm:$0xf]
        %v323 = vld [vmem:[%s260 + $0x28] sm:$0xf]
        %v324 = vld [vmem:[%s260 + $0x2c] sm:$0xf]
        %v325 = vld [vmem:[%s260 + $0x30] sm:$0xf]
        %v326 = vld [vmem:[%s260 + $0x34] sm:$0xf]
        %v327 = vld [vmem:[%s260 + $0x38] sm:$0xf]
        %v328 = vld [vmem:[%s260 + $0x3c] sm:$0xf]
        %v329 = vld [vmem:[%s260 + $0x40] sm:$0xf]
        %v330 = vld [vmem:[%s260 + $0x44] sm:$0xf]
        %v331 = vld [vmem:[%s260 + $0x48] sm:$0xf]
        %v332 = vld [vmem:[%s260 + $0x4c] sm:$0xf]
        %v333 = vld [vmem:[%s260 + $0x50] sm:$0xf]
        %v334 = vld [vmem:[%s260 + $0x54] sm:$0xf]
        %v335 = vld [vmem:[%s260 + $0x58] sm:$0xf]
        %v336 = vld [vmem:[%s260 + $0x5c] sm:$0xf]
        %v337 = vld [vmem:[%s260 + $0x60] sm:$0xf]
        %v338 = vld [vmem:[%s260 + $0x64] sm:$0xf]
        %v339 = vld [vmem:[%s260 + $0x68] sm:$0xf]
        %v340 = vld [vmem:[%s260 + $0x6c] sm:$0xf]
        %v341 = vld [vmem:[%s260 + $0x70] sm:$0xf]
        %v342 = vld [vmem:[%s260 + $0x74] sm:$0xf]
        %v343 = vld [vmem:[%s260 + $0x78] sm:$0xf]
        %v344 = vld [vmem:[%s260 + $0x7c] sm:$0xf]
        %v345 = vld [vmem:[%s260 + $0x80] sm:$0xf]
        %v346 = vld [vmem:[%s260 + $0x84] sm:$0xf]
        %v347 = vld [vmem:[%s260 + $0x88] sm:$0xf]
        %v348 = vld [vmem:[%s260 + $0x8c] sm:$0xf]
        %v349 = vld [vmem:[%s260 + $0x90] sm:$0xf]
        %v350 = vld [vmem:[%s260 + $0x94] sm:$0xf]
        %v351 = vld [vmem:[%s260 + $0x98] sm:$0xf]
        %v352 = vld [vmem:[%s260 + $0x9c] sm:$0xf]
        %v353 = vld [vmem:[%s260 + $0xa0] sm:$0xf]
        %v354 = vld [vmem:[%s260 + $0xa4] sm:$0xf]
        %v355 = vld [vmem:[%s260 + $0xa8] sm:$0xf]
        %v356 = vld [vmem:[%s260 + $0xac] sm:$0xf]
        %v357 = vld [vmem:[%s260 + $0xb0] sm:$0xf]
        %v358 = vld [vmem:[%s260 + $0xb4] sm:$0xf]
        %v359 = vld [vmem:[%s260 + $0xb8] sm:$0xf]
        %v360 = vld [vmem:[%s260 + $0xbc] sm:$0xf]
        %v361 = vld [vmem:[%s260 + $0xc0] sm:$0xf]
        %v362 = vld [vmem:[%s260 + $0xc4] sm:$0xf]
        %v363 = vld [vmem:[%s260 + $0xc8] sm:$0xf]
        %v364 = vld [vmem:[%s260 + $0xcc] sm:$0xf]
        %v365 = vld [vmem:[%s260 + $0xd0] sm:$0xf]
        %v366 = vld [vmem:[%s260 + $0xd4] sm:$0xf]
        %v367 = vld [vmem:[%s260 + $0xd8] sm:$0xf]
        %v368 = vld [vmem:[%s260 + $0xdc] sm:$0xf]
        %v369 = vld [vmem:[%s260 + $0xe0] sm:$0xf]
        %v370 = vld [vmem:[%s260 + $0xe4] sm:$0xf]
        %v371 = vld [vmem:[%s260 + $0xe8] sm:$0xf]
        %v372 = vld [vmem:[%s260 + $0xec] sm:$0xf]
        %v373 = vld [vmem:[%s260 + $0xf0] sm:$0xf]
        %v374 = vld [vmem:[%s260 + $0xf4] sm:$0xf]
        %v375 = vld [vmem:[%s260 + $0xf8] sm:$0xf]
        %v376 = vld [vmem:[%s260 + $0xfc] sm:$0xf]
        %v377 = vld [vmem:[%s260 + $0x100] sm:$0xf]
        %v378 = vld [vmem:[%s260 + $0x104] sm:$0xf]
        %v379 = vld [vmem:[%s260 + $0x108] sm:$0xf]
        %v380 = vld [vmem:[%s260 + $0x10c] sm:$0xf]
        %v381 = vld [vmem:[%s260 + $0x110] sm:$0xf]
        %v382 = vld [vmem:[%s260 + $0x114] sm:$0xf]
        %v383 = vld [vmem:[%s260 + $0x118] sm:$0xf]
        %v384 = vld [vmem:[%s260 + $0x11c] sm:$0xf]
        %v385 = vld [vmem:[%s260 + $0x120] sm:$0xf]
        %v386 = vld [vmem:[%s260 + $0x124] sm:$0xf]
        %v387 = vld [vmem:[%s260 + $0x128] sm:$0xf]
        %v388 = vld [vmem:[%s260 + $0x12c] sm:$0xf]
        %v389 = vld [vmem:[%s260 + $0x130] sm:$0xf]
        %v390 = vld [vmem:[%s260 + $0x134] sm:$0xf]
        %v391 = vld [vmem:[%s260 + $0x138] sm:$0xf]
        %v392 = vld [vmem:[%s260 + $0x13c] sm:$0xf]
        %v399 = vunpack.c.l.b16 %v307
        %v400 = vunpack.c.h.b16 %v307
        %v401 = vunpack.c.l.b16 %v308
        %v402 = vunpack.c.h.b16 %v308
        %v403 = vunpack.c.l.b16 %v309
        %v404 = vunpack.c.l.b16 %v310
        %v405 = vunpack.c.h.b16 %v310
        %v406 = vunpack.c.l.b16 %v311
        %v407 = vunpack.c.h.b16 %v311
        %v408 = vunpack.c.l.b16 %v312
        %v409 = vpack.c.b16 %v404, %v399
        %v410 = vpack.c.b16 %v405, %v400
        %v411 = vpack.c.b16 %v406, %v401
        %v412 = vpack.c.b16 %v407, %v402
        %v413 = vpack.c.b16 %v408, %v403
        %v499 = vunpack.c.l.b16 %v313
        %v500 = vunpack.c.l.b16 %v314
        %v501 = vunpack.c.l.b16 %v315
        %v502 = vunpack.c.l.b16 %v316
        %v503 = vunpack.c.l.b16 %v317
        %v504 = vunpack.c.l.b16 %v318
        %v505 = vunpack.c.l.b16 %v319
        %v506 = vunpack.c.l.b16 %v320
        %v507 = vunpack.c.l.b16 %v321
        %v508 = vunpack.c.l.b16 %v322
        %v509 = vunpack.c.l.b16 %v323
        %v510 = vunpack.c.l.b16 %v324
        %v511 = vunpack.c.l.b16 %v325
        %v512 = vunpack.c.l.b16 %v326
        %v513 = vunpack.c.l.b16 %v327
        %v514 = vunpack.c.l.b16 %v328
        %v515 = vunpack.c.l.b16 %v329
        %v516 = vunpack.c.l.b16 %v330
        %v517 = vunpack.c.l.b16 %v331
        %v518 = vunpack.c.l.b16 %v332
        %v519 = vunpack.c.l.b16 %v333
        %v520 = vunpack.c.l.b16 %v334
        %v521 = vunpack.c.l.b16 %v335
        %v522 = vunpack.c.l.b16 %v336
        %v523 = vunpack.c.l.b16 %v337
        %v524 = vunpack.c.l.b16 %v338
        %v525 = vunpack.c.l.b16 %v339
        %v526 = vunpack.c.l.b16 %v340
        %v527 = vunpack.c.l.b16 %v341
        %v528 = vunpack.c.l.b16 %v342
        %v529 = vunpack.c.l.b16 %v343
        %v530 = vunpack.c.l.b16 %v344
        %v531 = vunpack.c.l.b16 %v345
        %v532 = vunpack.c.l.b16 %v346
        %v533 = vunpack.c.l.b16 %v347
        %v534 = vunpack.c.l.b16 %v348
        %v535 = vunpack.c.l.b16 %v349
        %v536 = vunpack.c.l.b16 %v350
        %v537 = vunpack.c.l.b16 %v351
        %v538 = vunpack.c.l.b16 %v352
        %v539 = vunpack.c.l.b16 %v353
        %v540 = vunpack.c.l.b16 %v354
        %v541 = vunpack.c.l.b16 %v355
        %v542 = vunpack.c.l.b16 %v356
        %v543 = vunpack.c.l.b16 %v357
        %v544 = vunpack.c.l.b16 %v358
        %v545 = vunpack.c.l.b16 %v359
        %v546 = vunpack.c.l.b16 %v360
        %v547 = vunpack.c.l.b16 %v361
        %v548 = vunpack.c.l.b16 %v362
        %v549 = vunpack.c.l.b16 %v363
        %v550 = vunpack.c.l.b16 %v364
        %v551 = vunpack.c.l.b16 %v365
        %v552 = vunpack.c.l.b16 %v366
        %v553 = vunpack.c.l.b16 %v367
        %v554 = vunpack.c.l.b16 %v368
        %v555 = vunpack.c.l.b16 %v369
        %v556 = vunpack.c.l.b16 %v370
        %v557 = vunpack.c.l.b16 %v371
        %v558 = vunpack.c.l.b16 %v372
        %v559 = vunpack.c.l.b16 %v373
        %v560 = vunpack.c.l.b16 %v374
        %v561 = vunpack.c.l.b16 %v375
        %v562 = vunpack.c.l.b16 %v376
        %v563 = vunpack.c.l.b16 %v377
        %v564 = vunpack.c.l.b16 %v378
        %v565 = vunpack.c.l.b16 %v379
        %v566 = vunpack.c.l.b16 %v380
        %v567 = vunpack.c.l.b16 %v381
        %v568 = vunpack.c.l.b16 %v382
        %v569 = vunpack.c.l.b16 %v383
        %v570 = vunpack.c.l.b16 %v384
        %v571 = vunpack.c.l.b16 %v385
        %v572 = vunpack.c.l.b16 %v386
        %v573 = vunpack.c.l.b16 %v387
        %v574 = vunpack.c.l.b16 %v388
        %v575 = vunpack.c.l.b16 %v389
        %v576 = vunpack.c.l.b16 %v390
        %v577 = vunpack.c.l.b16 %v391
        %v578 = vunpack.c.l.b16 %v392
        %v579 = vpack.c.b16 %v500, %v499
        %v580 = vpack.c.b16 %v502, %v501
        %v581 = vpack.c.b16 %v504, %v503
        %v582 = vpack.c.b16 %v506, %v505
        %v583 = vpack.c.b16 %v508, %v507
        %v584 = vpack.c.b16 %v510, %v509
        %v585 = vpack.c.b16 %v512, %v511
        %v586 = vpack.c.b16 %v514, %v513
        %v587 = vpack.c.b16 %v516, %v515
        %v588 = vpack.c.b16 %v518, %v517
        %v589 = vpack.c.b16 %v520, %v519
        %v590 = vpack.c.b16 %v522, %v521
        %v591 = vpack.c.b16 %v524, %v523
        %v592 = vpack.c.b16 %v526, %v525
        %v593 = vpack.c.b16 %v528, %v527
        %v594 = vpack.c.b16 %v530, %v529
        %v595 = vpack.c.b16 %v532, %v531
        %v596 = vpack.c.b16 %v534, %v533
        %v597 = vpack.c.b16 %v536, %v535
        %v598 = vpack.c.b16 %v538, %v537
        %v599 = vpack.c.b16 %v540, %v539
        %v600 = vpack.c.b16 %v542, %v541
        %v601 = vpack.c.b16 %v544, %v543
        %v602 = vpack.c.b16 %v546, %v545
        %v603 = vpack.c.b16 %v548, %v547
        %v604 = vpack.c.b16 %v550, %v549
        %v605 = vpack.c.b16 %v552, %v551
        %v606 = vpack.c.b16 %v554, %v553
        %v607 = vpack.c.b16 %v556, %v555
        %v608 = vpack.c.b16 %v558, %v557
        %v609 = vpack.c.b16 %v560, %v559
        %v610 = vpack.c.b16 %v562, %v561
        %v611 = vpack.c.b16 %v564, %v563
        %v612 = vpack.c.b16 %v566, %v565
        %v613 = vpack.c.b16 %v568, %v567
        %v614 = vpack.c.b16 %v570, %v569
        %v615 = vpack.c.b16 %v572, %v571
        %v616 = vpack.c.b16 %v574, %v573
        %v617 = vpack.c.b16 %v576, %v575
        %v618 = vpack.c.b16 %v578, %v577
        %659 = vmatprep.subr.bf16.mxu0 0
        %660 = vmatpush1.bf16.msra.mxu0 %v579
        %661 = vmatprep.subr.bf16.mxu0 0
        %662 = vmatpush1.bf16.msra.mxu0 %v580
        %663 = vmatprep.subr.bf16.mxu0 0
        %664 = vmatpush1.bf16.msra.mxu0 %v581
        %665 = vmatprep.subr.bf16.mxu0 0
        %666 = vmatpush1.bf16.msra.mxu0 %v582
        %667 = vmatprep.subr.bf16.mxu0 0
        %668 = vmatpush1.bf16.msra.mxu0 %v583
        %669 = vmatprep.subr.bf16.mxu0 0
        %670 = vmatpush1.bf16.msra.mxu0 %v584
        %671 = vmatprep.subr.bf16.mxu0 0
        %672 = vmatpush1.bf16.msra.mxu0 %v585
        %673 = vmatprep.subr.bf16.mxu0 0
        %674 = vmatpush1.bf16.msra.mxu0 %v586
        %675 = vmatprep.subr.bf16.mxu0 0
        %676 = vmatpush1.bf16.msra.mxu0 %v587
        %677 = vmatprep.subr.bf16.mxu0 0
        %678 = vmatpush1.bf16.msra.mxu0 %v588
        %679 = vmatprep.subr.bf16.mxu0 0
        %680 = vmatpush1.bf16.msra.mxu0 %v589
        %681 = vmatprep.subr.bf16.mxu0 0
        %682 = vmatpush1.bf16.msra.mxu0 %v590
        %683 = vmatprep.subr.bf16.mxu0 0
        %684 = vmatpush1.bf16.msra.mxu0 %v591
        %685 = vmatprep.subr.bf16.mxu0 0
        %686 = vmatpush1.bf16.msra.mxu0 %v592
        %687 = vmatprep.subr.bf16.mxu0 0
        %688 = vmatpush1.bf16.msra.mxu0 %v593
        %689 = vmatprep.subr.bf16.mxu0 0
        %690 = vmatpush1.bf16.msra.mxu0 %v594
        %691 = vmatprep.mubr.bf16.mxu0 %v410
        %692 = vmatmul.mubr.bf16.gmra.mrb[0].mxu0 %v409
        %v693 = vpop.f32.mrb[0].mxu0
        %v694 = vadd.f32 0.0, %v693
        %v695 = vpop.f32.mrb[0].mxu0
        %v696 = vpop.f32.mrb[0].mxu0
        %v697 = vadd.f32 0.0, %v696
        %v698 = vpop.f32.mrb[0].mxu0
        %699 = vdwg.mxu0
        %700 = vmatprep.subr.bf16.mxu0 0
        %701 = vmatpush1.bf16.msra.mxu0 %v595
        %702 = vmatprep.subr.bf16.mxu0 0
        %703 = vmatpush1.bf16.msra.mxu0 %v596
        %704 = vmatprep.subr.bf16.mxu0 0
        %705 = vmatpush1.bf16.msra.mxu0 %v597
        %706 = vmatprep.subr.bf16.mxu0 0
        %707 = vmatpush1.bf16.msra.mxu0 %v598
        %708 = vmatprep.subr.bf16.mxu0 0
        %709 = vmatpush1.bf16.msra.mxu0 %v599
        %710 = vmatprep.subr.bf16.mxu0 0
        %711 = vmatpush1.bf16.msra.mxu0 %v600
        %712 = vmatprep.subr.bf16.mxu0 0
        %713 = vmatpush1.bf16.msra.mxu0 %v601
        %714 = vmatprep.subr.bf16.mxu0 0
        %715 = vmatpush1.bf16.msra.mxu0 %v602
        %716 = vmatprep.subr.bf16.mxu0 0
        %717 = vmatpush1.bf16.msra.mxu0 %v603
        %718 = vmatprep.subr.bf16.mxu0 0
        %719 = vmatpush1.bf16.msra.mxu0 %v604
        %720 = vmatprep.subr.bf16.mxu0 0
        %721 = vmatpush1.bf16.msra.mxu0 %v605
        %722 = vmatprep.subr.bf16.mxu0 0
        %723 = vmatpush1.bf16.msra.mxu0 %v606
        %724 = vmatprep.subr.bf16.mxu0 0
        %725 = vmatpush1.bf16.msra.mxu0 %v607
        %726 = vmatprep.subr.bf16.mxu0 0
        %727 = vmatpush1.bf16.msra.mxu0 %v608
        %728 = vmatprep.subr.bf16.mxu0 0
        %729 = vmatpush1.bf16.msra.mxu0 %v609
        %730 = vmatprep.subr.bf16.mxu0 0
        %731 = vmatpush1.bf16.msra.mxu0 %v610
        %732 = vmatprep.mubr.bf16.mxu0 %v412
        %733 = vmatmul.mubr.bf16.gmra.mrb[0].mxu0 %v411
        %v734 = vpop.f32.mrb[0].mxu0
        %v735 = vadd.f32 %v694, %v734
        %v736 = vpop.f32.mrb[0].mxu0
        %v737 = vpop.f32.mrb[0].mxu0
        %v738 = vadd.f32 %v697, %v737
        %v739 = vpop.f32.mrb[0].mxu0
        %740 = vdwg.mxu0
        %741 = vmatprep.subr.bf16.mxu0 0
        %742 = vmatpush1.bf16.msra.mxu0 %v611
        %743 = vmatprep.subr.bf16.mxu0 0
        %744 = vmatpush1.bf16.msra.mxu0 %v612
        %745 = vmatprep.subr.bf16.mxu0 0
        %746 = vmatpush1.bf16.msra.mxu0 %v613
        %747 = vmatprep.subr.bf16.mxu0 0
        %748 = vmatpush1.bf16.msra.mxu0 %v614
        %749 = vmatprep.subr.bf16.mxu0 0
        %750 = vmatpush1.bf16.msra.mxu0 %v615
        %751 = vmatprep.subr.bf16.mxu0 0
        %752 = vmatpush1.bf16.msra.mxu0 %v616
        %753 = vmatprep.subr.bf16.mxu0 0
        %754 = vmatpush1.bf16.msra.mxu0 %v617
        %755 = vmatprep.subr.bf16.mxu0 0
        %756 = vmatpush1.bf16.msra.mxu0 %v618
        %757 = vmatprep.subr.bf16.mxu0 0
        %758 = vmatpush1.bf16.msra.mxu0 0
        %759 = vmatprep.subr.bf16.mxu0 0
        %760 = vmatpush1.bf16.msra.mxu0 0
        %761 = vmatprep.subr.bf16.mxu0 0
        %762 = vmatpush1.bf16.msra.mxu0 0
        %763 = vmatprep.subr.bf16.mxu0 0
        %764 = vmatpush1.bf16.msra.mxu0 0
        %765 = vmatprep.subr.bf16.mxu0 0
        %766 = vmatpush1.bf16.msra.mxu0 0
        %767 = vmatprep.subr.bf16.mxu0 0
        %768 = vmatpush1.bf16.msra.mxu0 0
        %769 = vmatprep.subr.bf16.mxu0 0
        %770 = vmatpush1.bf16.msra.mxu0 0
        %771 = vmatprep.subr.bf16.mxu0 0
        %772 = vmatpush1.bf16.msra.mxu0 0
        %773 = vmatprep.mubr.bf16.mxu0 0
        %774 = vmatmul.mubr.bf16.gmra.mrb[0].mxu0 %v413
        %v775 = vpop.f32.mrb[0].mxu0
        %v776 = vadd.f32 %v735, %v775
        %v777 = vpop.f32.mrb[0].mxu0
        %v778 = vpop.f32.mrb[0].mxu0
        %v779 = vadd.f32 %v738, %v778
        %v780 = vpop.f32.mrb[0].mxu0
        %781 = vdwg.mxu0
        %v782 = vadd.f32 %v305, %v776
        %v783 = vadd.f32 %v306, %v779
        %784 = vst [vmem:[#allocation2] sm:$0xff] %v782
        %785 = vst [vmem:[#allocation2 + $0x8] sm:$0xff] %v783
        // Predicated region
        $region49: #{convnet_forward.12} parent=31 // pred_check
          %p786 = pneg %p299
        $region50: #{convnet_forward.12} parent=31 // pred_check_branch
          %788 = sbr.rel (%p786) target = $region52
        $region51: #{convnet_forward.12} parent=31 // pred_region
          %v789 = vld [vmem:[#allocation2] sm:$0xff]
          %v790 = vld [vmem:[#allocation2 + $0x8] sm:$0xff]
          %v791 = vld [vmem:[#allocation8] sm:$0x1]
          %v793 = vlaneseq
          %v794 = vshrl.u32 %v793, 7
          %v795 = vsub.s32 0, %v794
          %v796 = vrot.slane %v791, %v795
          %v798 = vadd.f32 %v789, %v796
          %v799 = vadd.f32 %v790, %v796
          %800 = vst [vmem:[%s291] sm:$0xff] %v798
          %801 = vst [vmem:[%s291 + $0x8] sm:$0xff] %v799
        $region52: #{convnet_forward.12} parent=31 // pred_fallthru
          _
        %s802 = sand.u32 %s147, 1
        %s803 = scalar_lea.sflag [#allocation5], %s802
        %s804 = sand.u32 %s147, 1
        %s805 = smul.addr %s804, 16
        %s806 = scalar_lea.vmem [#allocation9], %s805
        // Predicated region
        $region53: #{convnet_forward.12} parent=31 // pred_check
          %p807 = pneg %p157
        $region54: #{convnet_forward.12} parent=31 // pred_check_branch
          %809 = sbr.rel (%p807) target = $region56
        $region55: #{convnet_forward.12} parent=31 // pred_region
          %s810 = smul.u32 2, %s30
          %s812 = ssub.s32 256, 256
          %813 = vsyncadd %s803, %s812
          %s814 = sadd.s32 %s31, %s810
          %s815 = smul.addr %s29, 2
          %s816 = sadd.s32 %s814, %s815
          %s817 = smul.addr %s816, 128
          %s818 = scalar_lea.hbm %s3, %s817
          %s819 = sshll.u32 %s806, 4
          %s820 = int_to_ptr.vmem [resolvable:$true] %s819
          %825 = dma.vmem_to_hbm [thread:$0]  %s820, 256, %s818, %s803, 128, 128, 8
        $region56: #{convnet_forward.12} parent=31 // pred_fallthru
          _
      $region32: #{convnet_forward.12} parent=5 // pred_fallthru
        _
      %p826 = scmp.le.s32.totalorder 2, %s18
      // Predicated region
      $region57: #{convnet_forward.12} parent=5 // pred_check
        %p827 = pneg %p826
      $region58: #{convnet_forward.12} parent=5 // pred_check_branch
        %829 = sbr.rel (%p827) target = $region60
      $region59: #{convnet_forward.12} parent=5 // pred_region
        %s830 = ssub.s32 %s18, 2
        // Predicated region
        $region61: #{convnet_forward.12} parent=59 // pred_check
          %p831 = pneg %p163
        $region62: #{convnet_forward.12} parent=59 // pred_check_branch
          %833 = sbr.rel (%p831) target = $region64
        $region63: #{convnet_forward.12} parent=59 // pred_region
          %s834 = sand.u32 %s148, 1
          %s835 = scalar_lea.sflag [#allocation5], %s834
          %s836 = sand.u32 %s148, 1
          %s837 = smul.addr %s836, 16
          %s838 = scalar_lea.vmem [#allocation9], %s837
          %839 = dma.done %s835, 256
        $region64: #{convnet_forward.12} parent=59 // pred_fallthru
          _
      $region60: #{convnet_forward.12} parent=5 // pred_fallthru
        _
    $region6: #{convnet_forward.12} parent=1 // loop_footer
      %s22 = sadd.s32 1, %s18
    $region7: #{convnet_forward.12} parent=1 // loop_footer_branch
      %17 = sbr.rel target = $region3
    $region8: #{convnet_forward.12} parent=1 // loop_exit
      _
    %840 = vsyncpa [#allocation4], 1
    %s841 = scalar_lea.sflag [#allocation4], 1
    %842 = vsyncpa %s841, 1
    %843 = vsyncpa [#allocation7], 1
    %s844 = scalar_lea.sflag [#allocation7], 1
    %845 = vsyncpa %s844, 1
    %846 = vsyncpa [#allocation5], 1
    %s847 = scalar_lea.sflag [#allocation5], 1
    %848 = vsyncpa %s847, 1

// kernel: convnet_forward.11
$region0: #{convnet_forward.11}
  #allocation0 [shape = 'u32[]', space=smem, size = 0x4, offset = 0x4, fixed_abs, tag = 'smem constant byte address 0x4 - core index']
  #allocation1 [shape = 'u32[144,128]{1,0:T(1,128)}', space=vmem, size = 0x12000, scoped, tag = 'internal scratch']
  %s0 = inlined_call_operand.hbm [shape: bf16[16,8], index: 0, kind: input, shape index: {}]
  %s1 = inlined_call_operand.hbm [shape: bf16[8,64], index: 1, kind: input, shape index: {}]
  %s2 = inlined_call_operand.hbm [shape: f32[1,64], index: 2, kind: input, shape index: {}]
  %s3 = inlined_call_operand.hbm [shape: bf16[64,32], index: 3, kind: input, shape index: {}]
  %s4 = inlined_call_operand.hbm [shape: f32[1,32], index: 4, kind: input, shape index: {}]
  %s5 = inlined_call_operand.hbm [shape: bf16[32,128], index: 5, kind: input, shape index: {}]
  %s6 = inlined_call_operand.hbm [shape: f32[1,128], index: 6, kind: input, shape index: {}]
  %s7 = inlined_call_operand.hbm [shape: f32[16,128], index: 7, kind: output, shape index: {}]
  %s8 = sld [smem:[#allocation0]]
  $region66: #{convnet_forward.11} parent=0
    _
  %s10 = ssub.s32 1, %s8
  %s11 = scalar_select 0, %s10, %s8
  $region1: #{convnet_forward.11} parent=0
    #allocation2 [shape = 'u8[4096]{0}', space=vmem, size = 0x1000, scoped, tag = 'input window, operand 0, single buffered']
    #allocation3 [shape = 's32[1]{0}', space=sflag, size = 0x4, scoped, tag = 'scoped memory for convnet_forward.11']
    #allocation4 [shape = 's32[1]{0}', space=sflag, size = 0x4, scoped, tag = 'scoped memory for convnet_forward.11']
    #allocation5 [shape = 'u8[2048]{0}', space=vmem, size = 0x800, scoped, tag = 'input window, operand 1, single buffered']
    #allocation6 [shape = 's32[1]{0}', space=sflag, size = 0x4, scoped, tag = 'scoped memory for convnet_forward.11']
    #allocation7 [shape = 'u8[512]{0}', space=vmem, size = 0x400, scoped, tag = 'input window, operand 2, single buffered']
    #allocation8 [shape = 'u8[16384]{0}', space=vmem, size = 0x4000, scoped, tag = 'input window, operand 3, single buffered']
    #allocation9 [shape = 's32[1]{0}', space=sflag, size = 0x4, scoped, tag = 'scoped memory for convnet_forward.11']
    #allocation10 [shape = 'u8[512]{0}', space=vmem, size = 0x400, scoped, tag = 'input window, operand 4, single buffered']
    #allocation11 [shape = 'u8[8192]{0}', space=vmem, size = 0x2000, scoped, tag = 'input window, operand 5, single buffered']
    #allocation12 [shape = 's32[1]{0}', space=sflag, size = 0x4, scoped, tag = 'scoped memory for convnet_forward.11']
    #allocation13 [shape = 'u8[512]{0}', space=vmem, size = 0x400, scoped, tag = 'input window, operand 6, single buffered']
    #allocation14 [shape = 'u8[8192]{0}', space=vmem, size = 0x2000, scoped, tag = 'output window, operand 0, single buffered']
    %12 = vsyncpa [#allocation3], 0
    %13 = vsyncpa [#allocation6], 0
    %14 = vsyncpa [#allocation9], 0
    %15 = vsyncpa [#allocation12], 0
    %16 = vsyncpa [#allocation4], 0
    // Predicated region
    $region2: #{convnet_forward.11} parent=1 // pred_check
      _
    $region3: #{convnet_forward.11} parent=1 // pred_check_branch
      %18 = sbr.rel (0) target = $region5
    $region4: #{convnet_forward.11} parent=1 // pred_region
      %s20 = ssub.s32 128, 128
      %21 = vsyncadd [#allocation3], %s20
      %s22 = sshll.u32 [#allocation2], 4
      %s23 = int_to_ptr.vmem [resolvable:$true] %s22
      %28 = dma.hbm_to_vmem [thread:$0]  %s0, 128, %s23, [#allocation3], 64, 64, 4
    $region5: #{convnet_forward.11} parent=1 // pred_fallthru
      _
    // Predicated region
    $region6: #{convnet_forward.11} parent=1 // pred_check
      _
    $region7: #{convnet_forward.11} parent=1 // pred_check_branch
      %30 = sbr.rel (0) target = $region9
    $region8: #{convnet_forward.11} parent=1 // pred_region
      %s32 = ssub.s32 64, 64
      %33 = vsyncadd [#allocation6], %s32
      %s35 = sshll.u32 [#allocation5], 4
      %s36 = int_to_ptr.vmem [resolvable:$true] %s35
      %38 = dma.hbm_to_vmem [thread:$0]  %s1, 64, %s36, [#allocation6]
    $region9: #{convnet_forward.11} parent=1 // pred_fallthru
      _
    // Predicated region
    $region10: #{convnet_forward.11} parent=1 // pred_check
      _
    $region11: #{convnet_forward.11} parent=1 // pred_check_branch
      %40 = sbr.rel (0) target = $region13
    $region12: #{convnet_forward.11} parent=1 // pred_region
      %s42 = ssub.s32 16, 16
      %43 = vsyncadd [#allocation6], %s42
      %s45 = sshll.u32 [#allocation7], 4
      %s46 = int_to_ptr.vmem [resolvable:$true] %s45
      %48 = dma.hbm_to_vmem [thread:$0]  %s2, 16, %s46, [#allocation6]
    $region13: #{convnet_forward.11} parent=1 // pred_fallthru
      _
    // Predicated region
    $region14: #{convnet_forward.11} parent=1 // pred_check
      _
    $region15: #{convnet_forward.11} parent=1 // pred_check_branch
      %50 = sbr.rel (0) target = $region17
    $region16: #{convnet_forward.11} parent=1 // pred_region
      %s52 = ssub.s32 512, 512
      %53 = vsyncadd [#allocation9], %s52
      %s54 = sshll.u32 [#allocation8], 4
      %s55 = int_to_ptr.vmem [resolvable:$true] %s54
      %60 = dma.hbm_to_vmem [thread:$0]  %s3, 512, %s55, [#allocation9], 64, 64, 4
    $region17: #{convnet_forward.11} parent=1 // pred_fallthru
      _
    // Predicated region
    $region18: #{convnet_forward.11} parent=1 // pred_check
      _
    $region19: #{convnet_forward.11} parent=1 // pred_check_branch
      %62 = sbr.rel (0) target = $region21
    $region20: #{convnet_forward.11} parent=1 // pred_region
      %s64 = ssub.s32 16, 16
      %65 = vsyncadd [#allocation9], %s64
      %s67 = sshll.u32 [#allocation10], 4
      %s68 = int_to_ptr.vmem [resolvable:$true] %s67
      %70 = dma.hbm_to_vmem [thread:$0]  %s4, 16, %s68, [#allocation9]
    $region21: #{convnet_forward.11} parent=1 // pred_fallthru
      _
    // Predicated region
    $region22: #{convnet_forward.11} parent=1 // pred_check
      _
    $region23: #{convnet_forward.11} parent=1 // pred_check_branch
      %72 = sbr.rel (0) target = $region25
    $region24: #{convnet_forward.11} parent=1 // pred_region
      %s74 = ssub.s32 256, 256
      %75 = vsyncadd [#allocation12], %s74
      %s76 = sshll.u32 [#allocation11], 4
      %s77 = int_to_ptr.vmem [resolvable:$true] %s76
      %82 = dma.hbm_to_vmem [thread:$0]  %s5, 256, %s77, [#allocation12], 64, 64, 4
    $region25: #{convnet_forward.11} parent=1 // pred_fallthru
      _
    // Predicated region
    $region26: #{convnet_forward.11} parent=1 // pred_check
      _
    $region27: #{convnet_forward.11} parent=1 // pred_check_branch
      %84 = sbr.rel (0) target = $region29
    $region28: #{convnet_forward.11} parent=1 // pred_region
      %s86 = ssub.s32 16, 16
      %87 = vsyncadd [#allocation12], %s86
      %s89 = sshll.u32 [#allocation13], 4
      %s90 = int_to_ptr.vmem [resolvable:$true] %s89
      %92 = dma.hbm_to_vmem [thread:$0]  %s6, 16, %s90, [#allocation12]
    $region29: #{convnet_forward.11} parent=1 // pred_fallthru
      _
    // Predicated region
    $region30: #{convnet_forward.11} parent=1 // pred_check
      _
    $region31: #{convnet_forward.11} parent=1 // pred_check_branch
      %94 = sbr.rel (0) target = $region33
    $region32: #{convnet_forward.11} parent=1 // pred_region
      %95 = dma.done [#allocation3], 128
    $region33: #{convnet_forward.11} parent=1 // pred_fallthru
      _
    // Predicated region
    $region34: #{convnet_forward.11} parent=1 // pred_check
      _
    $region35: #{convnet_forward.11} parent=1 // pred_check_branch
      %97 = sbr.rel (0) target = $region37
    $region36: #{convnet_forward.11} parent=1 // pred_region
      %98 = dma.done [#allocation6], 64
    $region37: #{convnet_forward.11} parent=1 // pred_fallthru
      _
    // Predicated region
    $region38: #{convnet_forward.11} parent=1 // pred_check
      _
    $region39: #{convnet_forward.11} parent=1 // pred_check_branch
      %100 = sbr.rel (0) target = $region41
    $region40: #{convnet_forward.11} parent=1 // pred_region
      %101 = dma.done [#allocation6], 16
    $region41: #{convnet_forward.11} parent=1 // pred_fallthru
      _
    // Predicated region
    $region42: #{convnet_forward.11} parent=1 // pred_check
      _
    $region43: #{convnet_forward.11} parent=1 // pred_check_branch
      %103 = sbr.rel (0) target = $region45
    $region44: #{convnet_forward.11} parent=1 // pred_region
      %104 = dma.done [#allocation9], 512
    $region45: #{convnet_forward.11} parent=1 // pred_fallthru
      _
    // Predicated region
    $region46: #{convnet_forward.11} parent=1 // pred_check
      _
    $region47: #{convnet_forward.11} parent=1 // pred_check_branch
      %106 = sbr.rel (0) target = $region49
    $region48: #{convnet_forward.11} parent=1 // pred_region
      %107 = dma.done [#allocation9], 16
    $region49: #{convnet_forward.11} parent=1 // pred_fallthru
      _
    // Predicated region
    $region50: #{convnet_forward.11} parent=1 // pred_check
      _
    $region51: #{convnet_forward.11} parent=1 // pred_check_branch
      %109 = sbr.rel (0) target = $region53
    $region52: #{convnet_forward.11} parent=1 // pred_region
      %110 = dma.done [#allocation12], 256
    $region53: #{convnet_forward.11} parent=1 // pred_fallthru
      _
    // Predicated region
    $region54: #{convnet_forward.11} parent=1 // pred_check
      _
    $region55: #{convnet_forward.11} parent=1 // pred_check_branch
      %112 = sbr.rel (0) target = $region57
    $region56: #{convnet_forward.11} parent=1 // pred_region
      %113 = dma.done [#allocation12], 16
    $region57: #{convnet_forward.11} parent=1 // pred_fallthru
      _
    %v115 = vld [vmem:[#allocation2] sm:$0xf]
    %v116 = vld [vmem:[#allocation2 + $0x4] sm:$0xf]
    %v117 = vld [vmem:[#allocation5] sm:$0xf]
    %v118 = vld [vmem:[#allocation7] sm:$0x1]
    %v120 = vlaneseq
    %v121 = vshrl.u32 %v120, 7
    %v122 = vsub.s32 0, %v121
    %v123 = vrot.slane %v118, %v122
    %v127 = vunpack.c.l.b16 %v115
    %v128 = vunpack.c.l.b16 %v116
    %v129 = vpack.c.b16 %v128, %v127
    %vm130 = vcmask 64512
    %v132 = vsel %vm130, %v129, 0
    %vm134 = vcmask 1043456
    %v136 = vsel %vm134, %v117, 0
    %138 = vmatprep.subr.bf16.mxu0 0
    %139 = vmatpush1.bf16.msra.mxu0 %v136
    %140 = vmatprep.subr.bf16.mxu0 0
    %141 = vmatpush1.bf16.msra.mxu0 0
    %142 = vmatprep.subr.bf16.mxu0 0
    %143 = vmatpush1.bf16.msra.mxu0 0
    %144 = vmatprep.subr.bf16.mxu0 0
    %145 = vmatpush1.bf16.msra.mxu0 0
    %146 = vmatprep.subr.bf16.mxu0 0
    %147 = vmatpush1.bf16.msra.mxu0 0
    %148 = vmatprep.subr.bf16.mxu0 0
    %149 = vmatpush1.bf16.msra.mxu0 0
    %150 = vmatprep.subr.bf16.mxu0 0
    %151 = vmatpush1.bf16.msra.mxu0 0
    %152 = vmatprep.subr.bf16.mxu0 0
    %153 = vmatpush1.bf16.msra.mxu0 0
    %154 = vmatprep.subr.bf16.mxu0 0
    %155 = vmatpush1.bf16.msra.mxu0 0
    %156 = vmatprep.subr.bf16.mxu0 0
    %157 = vmatpush1.bf16.msra.mxu0 0
    %158 = vmatprep.subr.bf16.mxu0 0
    %159 = vmatpush1.bf16.msra.mxu0 0
    %160 = vmatprep.subr.bf16.mxu0 0
    %161 = vmatpush1.bf16.msra.mxu0 0
    %162 = vmatprep.subr.bf16.mxu0 0
    %163 = vmatpush1.bf16.msra.mxu0 0
    %164 = vmatprep.subr.bf16.mxu0 0
    %165 = vmatpush1.bf16.msra.mxu0 0
    %166 = vmatprep.subr.bf16.mxu0 0
    %167 = vmatpush1.bf16.msra.mxu0 0
    %168 = vmatprep.subr.bf16.mxu0 0
    %169 = vmatpush1.bf16.msra.mxu0 0
    %170 = vmatprep.mubr.bf16.mxu0 0
    %171 = vmatmul.mubr.bf16.gmra.mrb[0].mxu0 %v132
    %v172 = vpop.f32.mrb[0].mxu0
    %v173 = vadd.f32 %v123, %v172
    %v174 = vpop.f32.mrb[0].mxu0
    %v175 = vpop.f32.mrb[0].mxu0
    %v176 = vadd.f32 %v123, %v175
    %v177 = vpop.f32.mrb[0].mxu0
    %178 = vdwg.mxu0
    %v179 = vmax.f32 %v173, 0.0
    %v180 = vmax.f32 %v176, 0.0
    %v181 = vpack.c.bf16 %v180, %v179
    %v182 = vld [vmem:[#allocation8] sm:$0xf]
    %v183 = vld [vmem:[#allocation8 + $0x4] sm:$0xf]
    %v184 = vld [vmem:[#allocation8 + $0x8] sm:$0xf]
    %v185 = vld [vmem:[#allocation8 + $0xc] sm:$0xf]
    %v186 = vld [vmem:[#allocation8 + $0x10] sm:$0xf]
    %v187 = vld [vmem:[#allocation8 + $0x14] sm:$0xf]
    %v188 = vld [vmem:[#allocation8 + $0x18] sm:$0xf]
    %v189 = vld [vmem:[#allocation8 + $0x1c] sm:$0xf]
    %v190 = vld [vmem:[#allocation10] sm:$0x1]
    %v192 = vlaneseq
    %v193 = vshrl.u32 %v192, 7
    %v194 = vsub.s32 0, %v193
    %v195 = vrot.slane %v190, %v194
    %v205 = vunpack.c.l.b16 %v182
    %v206 = vunpack.c.l.b16 %v183
    %v207 = vunpack.c.l.b16 %v184
    %v208 = vunpack.c.l.b16 %v185
    %v209 = vunpack.c.l.b16 %v186
    %v210 = vunpack.c.l.b16 %v187
    %v211 = vunpack.c.l.b16 %v188
    %v212 = vunpack.c.l.b16 %v189
    %v213 = vpack.c.b16 %v206, %v205
    %v214 = vpack.c.b16 %v208, %v207
    %v215 = vpack.c.b16 %v210, %v209
    %v216 = vpack.c.b16 %v212, %v211
    %vm221 = vcmask 523264
    %v223 = vsel %vm221, %v181, 0
    %225 = vmatprep.subr.bf16.mxu0 0
    %226 = vmatpush1.bf16.msra.mxu0 %v213
    %227 = vmatprep.subr.bf16.mxu0 0
    %228 = vmatpush1.bf16.msra.mxu0 %v214
    %229 = vmatprep.subr.bf16.mxu0 0
    %230 = vmatpush1.bf16.msra.mxu0 %v215
    %231 = vmatprep.subr.bf16.mxu0 0
    %232 = vmatpush1.bf16.msra.mxu0 %v216
    %233 = vmatprep.subr.bf16.mxu0 0
    %234 = vmatpush1.bf16.msra.mxu0 0
    %235 = vmatprep.subr.bf16.mxu0 0
    %236 = vmatpush1.bf16.msra.mxu0 0
    %237 = vmatprep.subr.bf16.mxu0 0
    %238 = vmatpush1.bf16.msra.mxu0 0
    %239 = vmatprep.subr.bf16.mxu0 0
    %240 = vmatpush1.bf16.msra.mxu0 0
    %241 = vmatprep.subr.bf16.mxu0 0
    %242 = vmatpush1.bf16.msra.mxu0 0
    %243 = vmatprep.subr.bf16.mxu0 0
    %244 = vmatpush1.bf16.msra.mxu0 0
    %245 = vmatprep.subr.bf16.mxu0 0
    %246 = vmatpush1.bf16.msra.mxu0 0
    %247 = vmatprep.subr.bf16.mxu0 0
    %248 = vmatpush1.bf16.msra.mxu0 0
    %249 = vmatprep.subr.bf16.mxu0 0
    %250 = vmatpush1.bf16.msra.mxu0 0
    %251 = vmatprep.subr.bf16.mxu0 0
    %252 = vmatpush1.bf16.msra.mxu0 0
    %253 = vmatprep.subr.bf16.mxu0 0
    %254 = vmatpush1.bf16.msra.mxu0 0
    %255 = vmatprep.subr.bf16.mxu0 0
    %256 = vmatpush1.bf16.msra.mxu0 0
    %257 = vmatprep.mubr.bf16.mxu0 0
    %258 = vmatmul.mubr.bf16.gmra.mrb[0].mxu0 %v223
    %v259 = vpop.f32.mrb[0].mxu0
    %v260 = vadd.f32 %v195, %v259
    %v261 = vpop.f32.mrb[0].mxu0
    %v262 = vpop.f32.mrb[0].mxu0
    %v263 = vadd.f32 %v195, %v262
    %v264 = vpop.f32.mrb[0].mxu0
    %265 = vdwg.mxu0
    %v266 = vmax.f32 %v260, 0.0
    %v267 = vmax.f32 %v263, 0.0
    %v268 = vpack.c.bf16 %v267, %v266
    %v269 = vld [vmem:[#allocation11] sm:$0xf]
    %v270 = vld [vmem:[#allocation11 + $0x4] sm:$0xf]
    %v271 = vld [vmem:[#allocation11 + $0x8] sm:$0xf]
    %v272 = vld [vmem:[#allocation11 + $0xc] sm:$0xf]
    %v273 = vld [vmem:[#allocation13] sm:$0x1]
    %v275 = vlaneseq
    %v276 = vshrl.u32 %v275, 7
    %v277 = vsub.s32 0, %v276
    %v278 = vrot.slane %v273, %v277
    %v284 = vunpack.c.l.b16 %v269
    %v285 = vunpack.c.l.b16 %v270
    %v286 = vunpack.c.l.b16 %v271
    %v287 = vunpack.c.l.b16 %v272
    %v288 = vpack.c.b16 %v285, %v284
    %v289 = vpack.c.b16 %v287, %v286
    %vm292 = vcmask 261120
    %v294 = vsel %vm292, %v268, 0
    %296 = vmatprep.subr.bf16.mxu0 0
    %297 = vmatpush1.bf16.msra.mxu0 %v288
    %298 = vmatprep.subr.bf16.mxu0 0
    %299 = vmatpush1.bf16.msra.mxu0 %v289
    %300 = vmatprep.subr.bf16.mxu0 0
    %301 = vmatpush1.bf16.msra.mxu0 0
    %302 = vmatprep.subr.bf16.mxu0 0
    %303 = vmatpush1.bf16.msra.mxu0 0
    %304 = vmatprep.subr.bf16.mxu0 0
    %305 = vmatpush1.bf16.msra.mxu0 0
    %306 = vmatprep.subr.bf16.mxu0 0
    %307 = vmatpush1.bf16.msra.mxu0 0
    %308 = vmatprep.subr.bf16.mxu0 0
    %309 = vmatpush1.bf16.msra.mxu0 0
    %310 = vmatprep.subr.bf16.mxu0 0
    %311 = vmatpush1.bf16.msra.mxu0 0
    %312 = vmatprep.subr.bf16.mxu0 0
    %313 = vmatpush1.bf16.msra.mxu0 0
    %314 = vmatprep.subr.bf16.mxu0 0
    %315 = vmatpush1.bf16.msra.mxu0 0
    %316 = vmatprep.subr.bf16.mxu0 0
    %317 = vmatpush1.bf16.msra.mxu0 0
    %318 = vmatprep.subr.bf16.mxu0 0
    %319 = vmatpush1.bf16.msra.mxu0 0
    %320 = vmatprep.subr.bf16.mxu0 0
    %321 = vmatpush1.bf16.msra.mxu0 0
    %322 = vmatprep.subr.bf16.mxu0 0
    %323 = vmatpush1.bf16.msra.mxu0 0
    %324 = vmatprep.subr.bf16.mxu0 0
    %325 = vmatpush1.bf16.msra.mxu0 0
    %326 = vmatprep.subr.bf16.mxu0 0
    %327 = vmatpush1.bf16.msra.mxu0 0
    %328 = vmatprep.mubr.bf16.mxu0 0
    %329 = vmatmul.mubr.bf16.gmra.mrb[0].mxu0 %v294
    %v330 = vpop.f32.mrb[0].mxu0
    %v331 = vadd.f32 %v278, %v330
    %v332 = vpop.f32.mrb[0].mxu0
    %v333 = vpop.f32.mrb[0].mxu0
    %v334 = vadd.f32 %v278, %v333
    %v335 = vpop.f32.mrb[0].mxu0
    %336 = vdwg.mxu0
    %337 = vst [vmem:[#allocation14] sm:$0xff] %v331
    %338 = vst [vmem:[#allocation14 + $0x8] sm:$0xff] %v334
    // Predicated region
    $region58: #{convnet_forward.11} parent=1 // pred_check
      _
    $region59: #{convnet_forward.11} parent=1 // pred_check_branch
      %340 = sbr.rel (0) target = $region61
    $region60: #{convnet_forward.11} parent=1 // pred_region
      %s342 = ssub.s32 256, 256
      %343 = vsyncadd [#allocation4], %s342
      %s344 = sshll.u32 [#allocation14], 4
      %s345 = int_to_ptr.vmem [resolvable:$true] %s344
      %350 = dma.vmem_to_hbm [thread:$0]  %s345, 256, %s7, [#allocation4], 128, 128, 8
    $region61: #{convnet_forward.11} parent=1 // pred_fallthru
      _
    // Predicated region
    $region62: #{convnet_forward.11} parent=1 // pred_check
      _
    $region63: #{convnet_forward.11} parent=1 // pred_check_branch
      %352 = sbr.rel (0) target = $region65
    $region64: #{convnet_forward.11} parent=1 // pred_region
      %353 = dma.done [#allocation4], 256
    $region65: #{convnet_forward.11} parent=1 // pred_fallthru
      _
    %354 = vsyncpa [#allocation3], 1
    %355 = vsyncpa [#allocation6], 1
    %356 = vsyncpa [#allocation9], 1
    %357 = vsyncpa [#allocation12], 1
    %358 = vsyncpa [#allocation4], 1

// kernel: convnet_forward.13
$region0: #{convnet_forward.13}
  #allocation0 [shape = 'u32[]', space=smem, size = 0x4, offset = 0x4, fixed_abs, tag = 'smem constant byte address 0x4 - core index']
  #allocation1 [shape = 'u32[144,128]{1,0:T(1,128)}', space=vmem, size = 0x12000, scoped, tag = 'internal scratch']
  #allocation2 [shape = 'f32[16,128]{1,0:T(8,128)}', space=vmem, size = 0x2000, scoped, tag = 'scratch operand']
  %s0 = inlined_call_operand.hbm [shape: bf16[16,128], index: 0, kind: input, shape index: {}]
  %s1 = inlined_call_operand.hbm [shape: bf16[128,128], index: 1, kind: input, shape index: {}]
  %s2 = inlined_call_operand.hbm [shape: f32[1,128], index: 2, kind: input, shape index: {}]
  %s3 = inlined_call_operand.hbm [shape: f32[1,16,128], index: 3, kind: output, shape index: {}]
  %s4 = sld [smem:[#allocation0]]
  $region42: #{convnet_forward.13} parent=0
    _
  %s6 = ssub.s32 1, %s4
  %s7 = scalar_select 0, %s6, %s4
  $region1: #{convnet_forward.13} parent=0
    #allocation3 [shape = 'u8[4096]{0}', space=vmem, size = 0x1000, scoped, tag = 'input window, operand 0, single buffered']
    #allocation4 [shape = 's32[1]{0}', space=sflag, size = 0x4, scoped, tag = 'scoped memory for convnet_forward.13']
    #allocation5 [shape = 's32[1]{0}', space=sflag, size = 0x4, scoped, tag = 'scoped memory for convnet_forward.13']
    #allocation6 [shape = 'u8[32768]{0}', space=vmem, size = 0x8000, scoped, tag = 'input window, operand 1, single buffered']
    #allocation7 [shape = 's32[1]{0}', space=sflag, size = 0x4, scoped, tag = 'scoped memory for convnet_forward.13']
    #allocation8 [shape = 'u8[512]{0}', space=vmem, size = 0x400, scoped, tag = 'input window, operand 2, single buffered']
    #allocation9 [shape = 'u8[8192]{0}', space=vmem, size = 0x2000, scoped, tag = 'output window, operand 0, single buffered']
    %8 = vsyncpa [#allocation4], 0
    %9 = vsyncpa [#allocation7], 0
    %10 = vsyncpa [#allocation5], 0
    // Predicated region
    $region2: #{convnet_forward.13} parent=1 // pred_check
      _
    $region3: #{convnet_forward.13} parent=1 // pred_check_branch
      %12 = sbr.rel (0) target = $region5
    $region4: #{convnet_forward.13} parent=1 // pred_region
      %s13 = sadd.s32 0, 0
      %s15 = ssub.s32 128, 128
      %16 = vsyncadd [#allocation4], %s15
      %s17 = smul.addr %s13, 64
      %s18 = scalar_lea.hbm %s0, %s17
      %s19 = sshll.u32 [#allocation3], 4
      %s20 = int_to_ptr.vmem [resolvable:$true] %s19
      %25 = dma.hbm_to_vmem [thread:$0]  %s18, 128, %s20, [#allocation4], 64, 64, 4
    $region5: #{convnet_forward.13} parent=1 // pred_fallthru
      _
    // Predicated region
    $region6: #{convnet_forward.13} parent=1 // pred_check
      _
    $region7: #{convnet_forward.13} parent=1 // pred_check_branch
      %27 = sbr.rel (0) target = $region9
    $region8: #{convnet_forward.13} parent=1 // pred_region
      %s28 = sadd.s32 0, 0
      %s29 = smul.u32 16, %s28
      %s31 = ssub.s32 1024, 1024
      %32 = vsyncadd [#allocation7], %s31
      %s33 = smul.addr %s29, 64
      %s34 = scalar_lea.hbm %s1, %s33
      %s35 = sshll.u32 [#allocation6], 4
      %s36 = int_to_ptr.vmem [resolvable:$true] %s35
      %41 = dma.hbm_to_vmem [thread:$0]  %s34, 1024, %s36, [#allocation7], 64, 64, 4
    $region9: #{convnet_forward.13} parent=1 // pred_fallthru
      _
    // Predicated region
    $region10: #{convnet_forward.13} parent=1 // pred_check
      _
    $region11: #{convnet_forward.13} parent=1 // pred_check_branch
      %43 = sbr.rel (0) target = $region13
    $region12: #{convnet_forward.13} parent=1 // pred_region
      %s45 = ssub.s32 16, 16
      %46 = vsyncadd [#allocation7], %s45
      %s48 = sshll.u32 [#allocation8], 4
      %s49 = int_to_ptr.vmem [resolvable:$true] %s48
      %51 = dma.hbm_to_vmem [thread:$0]  %s2, 16, %s49, [#allocation7]
    $region13: #{convnet_forward.13} parent=1 // pred_fallthru
      _
    // Predicated region
    $region14: #{convnet_forward.13} parent=1 // pred_check
      _
    $region15: #{convnet_forward.13} parent=1 // pred_check_branch
      %53 = sbr.rel (0) target = $region17
    $region16: #{convnet_forward.13} parent=1 // pred_region
      %54 = dma.done [#allocation4], 128
    $region17: #{convnet_forward.13} parent=1 // pred_fallthru
      _
    // Predicated region
    $region18: #{convnet_forward.13} parent=1 // pred_check
      _
    $region19: #{convnet_forward.13} parent=1 // pred_check_branch
      %56 = sbr.rel (0) target = $region21
    $region20: #{convnet_forward.13} parent=1 // pred_region
      %57 = dma.done [#allocation7], 1024
    $region21: #{convnet_forward.13} parent=1 // pred_fallthru
      _
    // Predicated region
    $region22: #{convnet_forward.13} parent=1 // pred_check
      _
    $region23: #{convnet_forward.13} parent=1 // pred_check_branch
      %59 = sbr.rel (0) target = $region25
    $region24: #{convnet_forward.13} parent=1 // pred_region
      %60 = dma.done [#allocation7], 16
    $region25: #{convnet_forward.13} parent=1 // pred_fallthru
      _
    %s61 = sadd.s32 0, 0
    %s62 = sadd.s32 0, 0
    %s63 = smul.u32 16, %s62
    %p65 = scmp.eq.s32.totalorder 0, 0
    // Predicated region
    $region26: #{convnet_forward.13} parent=1 // pred_check
      %p66 = pneg %p65
    $region27: #{convnet_forward.13} parent=1 // pred_check_branch
      %68 = sbr.rel (%p66) target = $region29
    $region28: #{convnet_forward.13} parent=1 // pred_region
      %69 = vst [vmem:[#allocation2] sm:$0xff] 0.0
      %70 = vst [vmem:[#allocation2 + $0x8] sm:$0xff] 0.0
    $region29: #{convnet_forward.13} parent=1 // pred_fallthru
      _
    %v71 = vld [vmem:[#allocation2] sm:$0xff]
    %v72 = vld [vmem:[#allocation2 + $0x8] sm:$0xff]
    %v73 = vld [vmem:[#allocation3] sm:$0xf]
    %v74 = vld [vmem:[#allocation3 + $0x4] sm:$0xf]
    %v75 = vld [vmem:[#allocation6] sm:$0xf]
    %v76 = vld [vmem:[#allocation6 + $0x4] sm:$0xf]
    %v77 = vld [vmem:[#allocation6 + $0x8] sm:$0xf]
    %v78 = vld [vmem:[#allocation6 + $0xc] sm:$0xf]
    %v79 = vld [vmem:[#allocation6 + $0x10] sm:$0xf]
    %v80 = vld [vmem:[#allocation6 + $0x14] sm:$0xf]
    %v81 = vld [vmem:[#allocation6 + $0x18] sm:$0xf]
    %v82 = vld [vmem:[#allocation6 + $0x1c] sm:$0xf]
    %v83 = vld [vmem:[#allocation6 + $0x20] sm:$0xf]
    %v84 = vld [vmem:[#allocation6 + $0x24] sm:$0xf]
    %v85 = vld [vmem:[#allocation6 + $0x28] sm:$0xf]
    %v86 = vld [vmem:[#allocation6 + $0x2c] sm:$0xf]
    %v87 = vld [vmem:[#allocation6 + $0x30] sm:$0xf]
    %v88 = vld [vmem:[#allocation6 + $0x34] sm:$0xf]
    %v89 = vld [vmem:[#allocation6 + $0x38] sm:$0xf]
    %v90 = vld [vmem:[#allocation6 + $0x3c] sm:$0xf]
    %v93 = vunpack.c.l.b16 %v73
    %v94 = vunpack.c.l.b16 %v74
    %v95 = vpack.c.b16 %v94, %v93
    %v113 = vunpack.c.l.b16 %v75
    %v114 = vunpack.c.l.b16 %v76
    %v115 = vunpack.c.l.b16 %v77
    %v116 = vunpack.c.l.b16 %v78
    %v117 = vunpack.c.l.b16 %v79
    %v118 = vunpack.c.l.b16 %v80
    %v119 = vunpack.c.l.b16 %v81
    %v120 = vunpack.c.l.b16 %v82
    %v121 = vunpack.c.l.b16 %v83
    %v122 = vunpack.c.l.b16 %v84
    %v123 = vunpack.c.l.b16 %v85
    %v124 = vunpack.c.l.b16 %v86
    %v125 = vunpack.c.l.b16 %v87
    %v126 = vunpack.c.l.b16 %v88
    %v127 = vunpack.c.l.b16 %v89
    %v128 = vunpack.c.l.b16 %v90
    %v129 = vpack.c.b16 %v114, %v113
    %v130 = vpack.c.b16 %v116, %v115
    %v131 = vpack.c.b16 %v118, %v117
    %v132 = vpack.c.b16 %v120, %v119
    %v133 = vpack.c.b16 %v122, %v121
    %v134 = vpack.c.b16 %v124, %v123
    %v135 = vpack.c.b16 %v126, %v125
    %v136 = vpack.c.b16 %v128, %v127
    %145 = vmatprep.subr.bf16.mxu0 0
    %146 = vmatpush1.bf16.msra.mxu0 %v129
    %147 = vmatprep.subr.bf16.mxu0 0
    %148 = vmatpush1.bf16.msra.mxu0 %v130
    %149 = vmatprep.subr.bf16.mxu0 0
    %150 = vmatpush1.bf16.msra.mxu0 %v131
    %151 = vmatprep.subr.bf16.mxu0 0
    %152 = vmatpush1.bf16.msra.mxu0 %v132
    %153 = vmatprep.subr.bf16.mxu0 0
    %154 = vmatpush1.bf16.msra.mxu0 %v133
    %155 = vmatprep.subr.bf16.mxu0 0
    %156 = vmatpush1.bf16.msra.mxu0 %v134
    %157 = vmatprep.subr.bf16.mxu0 0
    %158 = vmatpush1.bf16.msra.mxu0 %v135
    %159 = vmatprep.subr.bf16.mxu0 0
    %160 = vmatpush1.bf16.msra.mxu0 %v136
    %161 = vmatprep.subr.bf16.mxu0 0
    %162 = vmatpush1.bf16.msra.mxu0 0
    %163 = vmatprep.subr.bf16.mxu0 0
    %164 = vmatpush1.bf16.msra.mxu0 0
    %165 = vmatprep.subr.bf16.mxu0 0
    %166 = vmatpush1.bf16.msra.mxu0 0
    %167 = vmatprep.subr.bf16.mxu0 0
    %168 = vmatpush1.bf16.msra.mxu0 0
    %169 = vmatprep.subr.bf16.mxu0 0
    %170 = vmatpush1.bf16.msra.mxu0 0
    %171 = vmatprep.subr.bf16.mxu0 0
    %172 = vmatpush1.bf16.msra.mxu0 0
    %173 = vmatprep.subr.bf16.mxu0 0
    %174 = vmatpush1.bf16.msra.mxu0 0
    %175 = vmatprep.subr.bf16.mxu0 0
    %176 = vmatpush1.bf16.msra.mxu0 0
    %177 = vmatprep.mubr.bf16.mxu0 0
    %178 = vmatmul.mubr.bf16.gmra.mrb[0].mxu0 %v95
    %v179 = vpop.f32.mrb[0].mxu0
    %v180 = vadd.f32 0.0, %v179
    %v181 = vpop.f32.mrb[0].mxu0
    %v182 = vpop.f32.mrb[0].mxu0
    %v183 = vadd.f32 0.0, %v182
    %v184 = vpop.f32.mrb[0].mxu0
    %185 = vdwg.mxu0
    %v186 = vadd.f32 %v71, %v180
    %v187 = vadd.f32 %v72, %v183
    %188 = vst [vmem:[#allocation2] sm:$0xff] %v186
    %189 = vst [vmem:[#allocation2 + $0x8] sm:$0xff] %v187
    // Predicated region
    $region30: #{convnet_forward.13} parent=1 // pred_check
      %p190 = pneg %p65
    $region31: #{convnet_forward.13} parent=1 // pred_check_branch
      %192 = sbr.rel (%p190) target = $region33
    $region32: #{convnet_forward.13} parent=1 // pred_region
      %v193 = vld [vmem:[#allocation2] sm:$0xff]
      %v194 = vld [vmem:[#allocation2 + $0x8] sm:$0xff]
      %v195 = vld [vmem:[#allocation8] sm:$0x1]
      %v197 = vlaneseq
      %v198 = vshrl.u32 %v197, 7
      %v199 = vsub.s32 0, %v198
      %v200 = vrot.slane %v195, %v199
      %v202 = vadd.f32 %v193, %v200
      %v203 = vadd.f32 %v194, %v200
      %204 = vst [vmem:[#allocation9] sm:$0xff] %v202
      %205 = vst [vmem:[#allocation9 + $0x8] sm:$0xff] %v203
    $region33: #{convnet_forward.13} parent=1 // pred_fallthru
      _
    // Predicated region
    $region34: #{convnet_forward.13} parent=1 // pred_check
      _
    $region35: #{convnet_forward.13} parent=1 // pred_check_branch
      %207 = sbr.rel (0) target = $region37
    $region36: #{convnet_forward.13} parent=1 // pred_region
      %s209 = ssub.s32 256, 256
      %210 = vsyncadd [#allocation5], %s209
      %s211 = sshll.u32 [#allocation9], 4
      %s212 = int_to_ptr.vmem [resolvable:$true] %s211
      %217 = dma.vmem_to_hbm [thread:$0]  %s212, 256, %s3, [#allocation5], 128, 128, 8
    $region37: #{convnet_forward.13} parent=1 // pred_fallthru
      _
    // Predicated region
    $region38: #{convnet_forward.13} parent=1 // pred_check
      _
    $region39: #{convnet_forward.13} parent=1 // pred_check_branch
      %219 = sbr.rel (0) target = $region41
    $region40: #{convnet_forward.13} parent=1 // pred_region
      %220 = dma.done [#allocation5], 256
    $region41: #{convnet_forward.13} parent=1 // pred_fallthru
      _
    %221 = vsyncpa [#allocation4], 1
    %222 = vsyncpa [#allocation7], 1
    %223 = vsyncpa [#allocation5], 1

// kernel: convnet_forward.9
$region0: #{convnet_forward.9}
  #allocation0 [shape = 'u32[]', space=smem, size = 0x4, offset = 0x4, fixed_abs, tag = 'smem constant byte address 0x4 - core index']
  #allocation1 [shape = 'u32[144,128]{1,0:T(1,128)}', space=vmem, size = 0x12000, scoped, tag = 'internal scratch']
  %s0 = inlined_call_operand.hbm [shape: bf16[2,15,240], index: 0, kind: input, shape index: {}]
  %s1 = inlined_call_operand.hbm [shape: bf16[9,208,416], index: 1, kind: input, shape index: {}]
  %s2 = inlined_call_operand.hbm [shape: f32[1,416], index: 2, kind: input, shape index: {}]
  %s3 = inlined_call_operand.hbm [shape: bf16[2,13,416], index: 3, kind: output, shape index: {}]
  %s4 = sld [smem:[#allocation0]]
  $region57: #{convnet_forward.9} parent=0
    _
  %s6 = ssub.s32 1, %s4
  %s7 = scalar_select 0, %s6, %s4
  $region1: #{convnet_forward.9} parent=0
    #allocation2 [shape = 'u8[16384]{0}', space=vmem, size = 0x4000, scoped, tag = 'input window, operand 0']
    #allocation3 [shape = 's32[2]{0}', space=sflag, size = 0x8, scoped, tag = 'scoped memory for convnet_forward.9']
    #allocation4 [shape = 's32[2]{0}', space=sflag, size = 0x8, scoped, tag = 'scoped memory for convnet_forward.9']
    #allocation5 [shape = 'u8[1916928]{0}', space=vmem, size = 0x1d4000, scoped, tag = 'input window, operand 1, single buffered']
    #allocation6 [shape = 's32[1]{0}', space=sflag, size = 0x4, scoped, tag = 'scoped memory for convnet_forward.9']
    #allocation7 [shape = 'u8[2048]{0}', space=vmem, size = 0x800, scoped, tag = 'input window, operand 2, single buffered']
    #allocation8 [shape = 'u8[32768]{0}', space=vmem, size = 0x8000, scoped, tag = 'output window, operand 0']
    %8 = vsyncpa [#allocation3], 0
    %s9 = scalar_lea.sflag [#allocation3], 1
    %10 = vsyncpa %s9, 0
    %11 = vsyncpa [#allocation6], 0
    %12 = vsyncpa [#allocation4], 0
    %s13 = scalar_lea.sflag [#allocation4], 1
    %14 = vsyncpa %s13, 0
    loop: start=0, step=1, limit=4
    $region2: #{convnet_forward.9} parent=1 // loop_pre_header
      _
    $region3: #{convnet_forward.9} parent=1 // loop_header
      %s16 = sphi 0, %s20
      %p17 = scmp.ge.s32.totalorder %s16, 4
      %s26 = sphi 0, %s28
      %s29 = sphi 0, %s26
      %s30 = sphi 0, %s29
      %s46 = sphi 0, %s30
      %s50 = sphi 0, %s50
      %s52 = sphi 0, %s50
      %s53 = sphi 0, %s52
      %s67 = sphi 0, %s53
      %s71 = sphi 0, %s71
      %s73 = sphi 0, %s71
      %s74 = sphi 0, %s73
      %s88 = sphi 0, %s74
      %s94 = sphi 0, %s96
      %s97 = sphi 0, %s94
      %s98 = sphi 0, %s97
      %s114 = sphi 0, %s98
    $region4: #{convnet_forward.9} parent=1 // loop_header_branch
      %19 = sbr.rel (%p17) target = $region8
    $region5: #{convnet_forward.9} parent=1 // loop_body
      %s21 = ssub.s32 %s16, 1
      %s22 = ssub.s32 %s16, 2
      %s23 = sadd.s32 %s16, 1
      %s24 = ssub.s32 %s16, %s23
      %p25 = scmp.eq.s32.totalorder %s24, 0
      %s27 = sadd.s32 %s26, 1
      %s28 = scalar_select %p25, %s26, %s27
      %p31 = pneg %p25
      %p32 = scmp.eq.s32.totalorder %s16, 1
      %p33 = por %p31, %p32
      %p34 = scmp.ne.s32.totalorder %s26, %s29
      %p35 = scmp.eq.s32.totalorder %s16, 0
      %p36 = por %p34, %p35
      %p37 = scmp.ne.s32.totalorder %s26, %s29
      %p38 = scmp.eq.s32.totalorder %s21, 1
      %p39 = por %p37, %p38
      %p40 = scmp.ne.s32.totalorder %s29, %s30
      %p41 = scmp.eq.s32.totalorder %s21, 0
      %p42 = por %p40, %p41
      %p43 = scmp.ne.s32.totalorder %s29, %s30
      %p44 = scmp.eq.s32.totalorder %s22, 1
      %p45 = por %p43, %p44
      %p47 = scmp.ne.s32.totalorder %s30, %s46
      %p48 = scmp.eq.s32.totalorder %s22, 0
      %p49 = por %p47, %p48
      %s51 = sadd.s32 %s50, 1
      %p54 = scmp.eq.s32.totalorder %s16, 1
      %p55 = scmp.ne.s32.totalorder %s50, %s52
      %p56 = scmp.eq.s32.totalorder %s16, 0
      %p57 = por %p55, %p56
      %p58 = scmp.ne.s32.totalorder %s50, %s52
      %p59 = scmp.eq.s32.totalorder %s21, 1
      %p60 = por %p58, %p59
      %p61 = scmp.ne.s32.totalorder %s52, %s53
      %p62 = scmp.eq.s32.totalorder %s21, 0
      %p63 = por %p61, %p62
      %p64 = scmp.ne.s32.totalorder %s52, %s53
      %p65 = scmp.eq.s32.totalorder %s22, 1
      %p66 = por %p64, %p65
      %p68 = scmp.ne.s32.totalorder %s53, %s67
      %p69 = scmp.eq.s32.totalorder %s22, 0
      %p70 = por %p68, %p69
      %s72 = sadd.s32 %s71, 1
      %p75 = scmp.eq.s32.totalorder %s16, 1
      %p76 = scmp.ne.s32.totalorder %s71, %s73
      %p77 = scmp.eq.s32.totalorder %s16, 0
      %p78 = por %p76, %p77
      %p79 = scmp.ne.s32.totalorder %s71, %s73
      %p80 = scmp.eq.s32.totalorder %s21, 1
      %p81 = por %p79, %p80
      %p82 = scmp.ne.s32.totalorder %s73, %s74
      %p83 = scmp.eq.s32.totalorder %s21, 0
      %p84 = por %p82, %p83
      %p85 = scmp.ne.s32.totalorder %s73, %s74
      %p86 = scmp.eq.s32.totalorder %s22, 1
      %p87 = por %p85, %p86
      %p89 = scmp.ne.s32.totalorder %s74, %s88
      %p90 = scmp.eq.s32.totalorder %s22, 0
      %p91 = por %p89, %p90
      %s92 = ssub.s32 %s16, %s23
      %p93 = scmp.eq.s32.totalorder %s92, 0
      %s95 = sadd.s32 %s94, 1
      %s96 = scalar_select %p93, %s94, %s95
      %p99 = pneg %p93
      %p100 = scmp.eq.s32.totalorder %s16, 1
      %p101 = por %p99, %p100
      %p102 = scmp.ne.s32.totalorder %s94, %s97
      %p103 = scmp.eq.s32.totalorder %s16, 0
      %p104 = por %p102, %p103
      %p105 = scmp.ne.s32.totalorder %s94, %s97
      %p106 = scmp.eq.s32.totalorder %s21, 1
      %p107 = por %p105, %p106
      %p108 = scmp.ne.s32.totalorder %s97, %s98
      %p109 = scmp.eq.s32.totalorder %s21, 0
      %p110 = por %p108, %p109
      %p111 = scmp.ne.s32.totalorder %s97, %s98
      %p112 = scmp.eq.s32.totalorder %s22, 1
      %p113 = por %p111, %p112
      %p115 = scmp.ne.s32.totalorder %s98, %s114
      %p116 = scmp.eq.s32.totalorder %s22, 0
      %p117 = por %p115, %p116
      %p118 = scmp.le.s32.totalorder 1, %s16
      %p119 = scmp.lt.s32.totalorder %s16, 3
      %p120 = pnand %p118, %p119
      %p121 = pneg %p120
      // Predicated region
      $region9: #{convnet_forward.9} parent=5 // pred_check
        _
      $region10: #{convnet_forward.9} parent=5 // pred_check_branch
        %123 = sbr.rel (%p120) target = $region12
      $region11: #{convnet_forward.9} parent=5 // pred_region
        %s124 = ssub.s32 %s16, 1
        // Predicated region
        $region13: #{convnet_forward.9} parent=11 // pred_check
          %p125 = pneg %p63
        $region14: #{convnet_forward.9} parent=11 // pred_check_branch
          %127 = sbr.rel (%p125) target = $region16
        $region15: #{convnet_forward.9} parent=11 // pred_region
          %s129 = ssub.s32 59904, 59904
          %130 = vsyncadd [#allocation6], %s129
          %s131 = sshll.u32 [#allocation5], 4
          %s132 = int_to_ptr.vmem [resolvable:$true] %s131
          %137 = dma.hbm_to_vmem [thread:$0]  %s1, 59904, %s132, [#allocation6], 256, 256, 16
        $region16: #{convnet_forward.9} parent=11 // pred_fallthru
          _
        // Predicated region
        $region17: #{convnet_forward.9} parent=11 // pred_check
          %p138 = pneg %p84
        $region18: #{convnet_forward.9} parent=11 // pred_check_branch
          %140 = sbr.rel (%p138) target = $region20
        $region19: #{convnet_forward.9} parent=11 // pred_region
          %s142 = ssub.s32 64, 64
          %143 = vsyncadd [#allocation6], %s142
          %s145 = sshll.u32 [#allocation7], 4
          %s146 = int_to_ptr.vmem [resolvable:$true] %s145
          %148 = dma.hbm_to_vmem [thread:$0]  %s2, 64, %s146, [#allocation6]
        $region20: #{convnet_forward.9} parent=11 // pred_fallthru
          _
      $region12: #{convnet_forward.9} parent=5 // pred_fallthru
        _
      %p149 = scmp.lt.s32.totalorder %s16, 2
      // Predicated region
      $region21: #{convnet_forward.9} parent=5 // pred_check
        %p150 = pneg %p149
      $region22: #{convnet_forward.9} parent=5 // pred_check_branch
        %152 = sbr.rel (%p150) target = $region24
      $region23: #{convnet_forward.9} parent=5 // pred_region
        // Predicated region
        $region25: #{convnet_forward.9} parent=23 // pred_check
          %p153 = pneg %p36
        $region26: #{convnet_forward.9} parent=23 // pred_check_branch
          %155 = sbr.rel (%p153) target = $region28
        $region27: #{convnet_forward.9} parent=23 // pred_region
          %s156 = sand.u32 %s26, 1
          %s157 = scalar_lea.sflag [#allocation3], %s156
          %s158 = sand.u32 %s26, 1
          %s159 = smul.addr %s158, 16
          %s160 = scalar_lea.vmem [#allocation2], %s159
          %s162 = ssub.s32 256, 256
          %163 = vsyncadd %s157, %s162
          %s164 = smul.addr %s16, 4
          %s165 = smul.addr %s164, 64
          %s166 = scalar_lea.hbm %s0, %s165
          %s167 = sshll.u32 %s160, 4
          %s168 = int_to_ptr.vmem [resolvable:$true] %s167
          %173 = dma.hbm_to_vmem [thread:$0]  %s166, 256, %s168, %s157, 128, 128, 8
        $region28: #{convnet_forward.9} parent=23 // pred_fallthru
          _
      $region24: #{convnet_forward.9} parent=5 // pred_fallthru
        _
      %p174 = scmp.le.s32.totalorder 1, %s16
      %p175 = scmp.lt.s32.totalorder %s16, 3
      %p176 = pnand %p174, %p175
      %p177 = pneg %p176
      // Predicated region
      $region29: #{convnet_forward.9} parent=5 // pred_check
        _
      $region30: #{convnet_forward.9} parent=5 // pred_check_branch
        %179 = sbr.rel (%p176) target = $region32
      $region31: #{convnet_forward.9} parent=5 // pred_region
        %s180 = ssub.s32 %s16, 1
        %s181 = sand.u32 %s29, 1
        %s182 = scalar_lea.sflag [#allocation3], %s181
        %s183 = sand.u32 %s29, 1
        %s184 = smul.addr %s183, 16
        %s185 = scalar_lea.vmem [#allocation2], %s184
        // Predicated region
        $region33: #{convnet_forward.9} parent=31 // pred_check
          %p186 = pneg %p42
        $region34: #{convnet_forward.9} parent=31 // pred_check_branch
          %188 = sbr.rel (%p186) target = $region36
        $region35: #{convnet_forward.9} parent=31 // pred_region
          %189 = dma.done %s182, 256
        $region36: #{convnet_forward.9} parent=31 // pred_fallthru
          _
        // Predicated region
        $region37: #{convnet_forward.9} parent=31 // pred_check
          %p190 = pneg %p63
        $region38: #{convnet_forward.9} parent=31 // pred_check_branch
          %192 = sbr.rel (%p190) target = $region40
        $region39: #{convnet_forward.9} parent=31 // pred_region
          %193 = dma.done [#allocation6], 59904
        $region40: #{convnet_forward.9} parent=31 // pred_fallthru
          _
        // Predicated region
        $region41: #{convnet_forward.9} parent=31 // pred_check
          %p194 = pneg %p84
        $region42: #{convnet_forward.9} parent=31 // pred_check_branch
          %196 = sbr.rel (%p194) target = $region44
        $region43: #{convnet_forward.9} parent=31 // pred_region
          %197 = dma.done [#allocation6], 64
        $region44: #{convnet_forward.9} parent=31 // pred_fallthru
          _
        %s198 = sand.u32 %s29, 1
        %s199 = scalar_lea.sflag [#allocation3], %s198
        %s200 = sand.u32 %s29, 1
        %s201 = smul.addr %s200, 16
        %s202 = scalar_lea.vmem [#allocation2], %s201
        %p203 = pneg %p42
        %p204 = pneg %p39
        %p205 = pneg %p63
        %p206 = pneg %p60
        %p207 = pneg %p84
        %p208 = pneg %p81
        %p209 = pneg %p110
        %p210 = pneg %p107
        %s211 = sand.u32 %s97, 1
        %s212 = scalar_lea.sflag [#allocation4], %s211
        %s213 = sand.u32 %s97, 1
        %s214 = smul.addr %s213, 32
        %s215 = scalar_lea.vmem [#allocation8], %s214
        %v217 = vld [vmem:[#allocation7] sm:$0xf]
        %v218 = vld [vmem:[%s185] sm:$0xff]
        %v219 = vld [vmem:[%s185 + $0x8] sm:$0x77]
        %v220 = vld [vmem:[#allocation5] sm:$0xff]
        %v221 = vld [vmem:[#allocation5 + $0x8] sm:$0xff]
        %v222 = vld [vmem:[#allocation5 + $0x10] sm:$0xff]
        %v223 = vld [vmem:[#allocation5 + $0x18] sm:$0xff]
        %v224 = vld [vmem:[#allocation5 + $0x20] sm:$0xff]
        %v225 = vld [vmem:[#allocation5 + $0x28] sm:$0xff]
        %v226 = vld [vmem:[#allocation5 + $0x30] sm:$0xff]
        %v227 = vld [vmem:[#allocation5 + $0x38] sm:$0xff]
        %v228 = vld [vmem:[#allocation5 + $0x40] sm:$0xff]
        %v229 = vld [vmem:[#allocation5 + $0x48] sm:$0xff]
        %v230 = vld [vmem:[#allocation5 + $0x50] sm:$0xff]
        %v231 = vld [vmem:[#allocation5 + $0x58] sm:$0xff]
        %v232 = vld [vmem:[#allocation5 + $0x60] sm:$0xff]
        %v233 = vld [vmem:[#allocation5 + $0x68] sm:$0xff]
        %v234 = vld [vmem:[#allocation5 + $0x70] sm:$0xff]
        %v235 = vld [vmem:[#allocation5 + $0x78] sm:$0xff]
        %v236 = vld [vmem:[#allocation5 + $0x80] sm:$0xff]
        %v237 = vld [vmem:[#allocation5 + $0x88] sm:$0xff]
        %v238 = vld [vmem:[#allocation5 + $0x90] sm:$0xff]
        %v239 = vld [vmem:[#allocation5 + $0x98] sm:$0xff]
        %v240 = vld [vmem:[#allocation5 + $0xa0] sm:$0xff]
        %v241 = vld [vmem:[#allocation5 + $0xa8] sm:$0xff]
        %v242 = vld [vmem:[#allocation5 + $0xb0] sm:$0xff]
        %v243 = vld [vmem:[#allocation5 + $0xb8] sm:$0xff]
        %v244 = vld [vmem:[#allocation5 + $0xc0] sm:$0xff]
        %v245 = vld [vmem:[#allocation5 + $0xc8] sm:$0xff]
        %v246 = vld [vmem:[#allocation5 + $0xd0] sm:$0xff]
        %v247 = vld [vmem:[#allocation5 + $0xd8] sm:$0xff]
        %v248 = vld [vmem:[#allocation5 + $0xe0] sm:$0xff]
        %v249 = vld [vmem:[#allocation5 + $0xe8] sm:$0xff]
        %v250 = vld [vmem:[#allocation5 + $0xf0] sm:$0xff]
        %v251 = vld [vmem:[#allocation5 + $0xf8] sm:$0xff]
        %v252 = vld [vmem:[#allocation5 + $0x100] sm:$0xff]
        %v253 = vld [vmem:[#allocation5 + $0x108] sm:$0xff]
        %v254 = vld [vmem:[#allocation5 + $0x110] sm:$0xff]
        %v255 = vld [vmem:[#allocation5 + $0x118] sm:$0xff]
        %v256 = vld [vmem:[#allocation5 + $0x120] sm:$0xff]
        %v257 = vld [vmem:[#allocation5 + $0x128] sm:$0xff]
        %v258 = vld [vmem:[#allocation5 + $0x130] sm:$0xff]
        %v259 = vld [vmem:[#allocation5 + $0x138] sm:$0xff]
        %v260 = vld [vmem:[#allocation5 + $0x140] sm:$0xff]
        %v261 = vld [vmem:[#allocation5 + $0x148] sm:$0xff]
        %v262 = vld [vmem:[#allocation5 + $0x150] sm:$0xff]
        %v263 = vld [vmem:[#allocation5 + $0x158] sm:$0xff]
        %v264 = vld [vmem:[#allocation5 + $0x160] sm:$0xff]
        %v265 = vld [vmem:[#allocation5 + $0x168] sm:$0xff]
        %v266 = vld [vmem:[#allocation5 + $0x170] sm:$0xff]
        %v267 = vld [vmem:[#allocation5 + $0x178] sm:$0xff]
        %v268 = vld [vmem:[#allocation5 + $0x180] sm:$0xff]
        %v269 = vld [vmem:[#allocation5 + $0x188] sm:$0xff]
        %v270 = vld [vmem:[#allocation5 + $0x190] sm:$0xff]
        %v271 = vld [vmem:[#allocation5 + $0x198] sm:$0xff]
        %s272 = scalar_lea.vmem [#allocation5], 416
        %v273 = vld [vmem:[%s272] sm:$0xff]
        %v274 = vld [vmem:[%s272 + $0x8] sm:$0xff]
        %v275 = vld [vmem:[%s272 + $0x10] sm:$0xff]
        %v276 = vld [vmem:[%s272 + $0x18] sm:$0xff]
        %v277 = vld [vmem:[%s272 + $0x20] sm:$0xff]
        %v278 = vld [vmem:[%s272 + $0x28] sm:$0xff]
        %v279 = vld [vmem:[%s272 + $0x30] sm:$0xff]
        %v280 = vld [vmem:[%s272 + $0x38] sm:$0xff]
        %v281 = vld [vmem:[%s272 + $0x40] sm:$0xff]
        %v282 = vld [vmem:[%s272 + $0x48] sm:$0xff]
        %v283 = vld [vmem:[%s272 + $0x50] sm:$0xff]
        %v284 = vld [vmem:[%s272 + $0x58] sm:$0xff]
        %v285 = vld [vmem:[%s272 + $0x60] sm:$0xff]
        %v286 = vld [vmem:[%s272 + $0x68] sm:$0xff]
        %v287 = vld [vmem:[%s272 + $0x70] sm:$0xff]
        %v288 = vld [vmem:[%s272 + $0x78] sm:$0xff]
        %v289 = vld [vmem:[%s272 + $0x80] sm:$0xff]
        %v290 = vld [vmem:[%s272 + $0x88] sm:$0xff]
        %v291 = vld [vmem:[%s272 + $0x90] sm:$0xff]
        %v292 = vld [vmem:[%s272 + $0x98] sm:$0xff]
        %v293 = vld [vmem:[%s272 + $0xa0] sm:$0xff]
        %v294 = vld [vmem:[%s272 + $0xa8] sm:$0xff]
        %v295 = vld [vmem:[%s272 + $0xb0] sm:$0xff]
        %v296 = vld [vmem:[%s272 + $0xb8] sm:$0xff]
        %v297 = vld [vmem:[%s272 + $0xc0] sm:$0xff]
        %v298 = vld [vmem:[%s272 + $0xc8] sm:$0xff]
        %v299 = vld [vmem:[%s272 + $0xd0] sm:$0xff]
        %v300 = vld [vmem:[%s272 + $0xd8] sm:$0xff]
        %v301 = vld [vmem:[%s272 + $0xe0] sm:$0xff]
        %v302 = vld [vmem:[%s272 + $0xe8] sm:$0xff]
        %v303 = vld [vmem:[%s272 + $0xf0] sm:$0xff]
        %v304 = vld [vmem:[%s272 + $0xf8] sm:$0xff]
        %v305 = vld [vmem:[%s272 + $0x100] sm:$0xff]
        %v306 = vld [vmem:[%s272 + $0x108] sm:$0xff]
        %v307 = vld [vmem:[%s272 + $0x110] sm:$0xff]
        %v308 = vld [vmem:[%s272 + $0x118] sm:$0xff]
        %v309 = vld [vmem:[%s272 + $0x120] sm:$0xff]
        %v310 = vld [vmem:[%s272 + $0x128] sm:$0xff]
        %v311 = vld [vmem:[%s272 + $0x130] sm:$0xff]
        %v312 = vld [vmem:[%s272 + $0x138] sm:$0xff]
        %v313 = vld [vmem:[%s272 + $0x140] sm:$0xff]
        %v314 = vld [vmem:[%s272 + $0x148] sm:$0xff]
        %v315 = vld [vmem:[%s272 + $0x150] sm:$0xff]
        %v316 = vld [vmem:[%s272 + $0x158] sm:$0xff]
        %v317 = vld [vmem:[%s272 + $0x160] sm:$0xff]
        %v318 = vld [vmem:[%s272 + $0x168] sm:$0xff]
        %v319 = vld [vmem:[%s272 + $0x170] sm:$0xff]
        %v320 = vld [vmem:[%s272 + $0x178] sm:$0xff]
        %v321 = vld [vmem:[%s272 + $0x180] sm:$0xff]
        %v322 = vld [vmem:[%s272 + $0x188] sm:$0xff]
        %v323 = vld [vmem:[%s272 + $0x190] sm:$0xff]
        %v324 = vld [vmem:[%s272 + $0x198] sm:$0xff]
        %v327 = vunpack.c.l.b16 %v218
        %v328 = vunpack.c.h.b16 %v218
        %v329 = vunpack.c.l.b16 %v219
        %v330 = vunpack.c.h.b16 %v219
        %v331 = vpack.c.b16 %v329, %v327
        %v332 = vpack.c.b16 %v330, %v328
        %333 = vrot.lane.b32.xlu0 %v331, 112
        %v334 = vpop.permute.xlu0 %333
        %335 = vrot.lane.b32.xlu0 %v332, 112
        %v336 = vpop.permute.xlu0 %335
        %vm337 = vcmask 916480
        %v338 = vsel %vm337, %v334, %v336
        %v392 = vunpack.c.l.b16 %v273
        %v393 = vunpack.c.h.b16 %v273
        %v394 = vunpack.c.l.b16 %v274
        %v395 = vunpack.c.h.b16 %v274
        %v396 = vunpack.c.l.b16 %v275
        %v397 = vunpack.c.h.b16 %v275
        %v398 = vunpack.c.l.b16 %v276
        %v399 = vunpack.c.h.b16 %v276
        %v400 = vunpack.c.l.b16 %v277
        %v401 = vunpack.c.h.b16 %v277
        %v402 = vunpack.c.l.b16 %v278
        %v403 = vunpack.c.h.b16 %v278
        %v404 = vunpack.c.l.b16 %v279
        %v405 = vunpack.c.h.b16 %v279
        %v406 = vunpack.c.l.b16 %v280
        %v407 = vunpack.c.h.b16 %v280
        %v408 = vunpack.c.l.b16 %v281
        %v409 = vunpack.c.h.b16 %v281
        %v410 = vunpack.c.l.b16 %v282
        %v411 = vunpack.c.h.b16 %v282
        %v412 = vunpack.c.l.b16 %v283
        %v413 = vunpack.c.h.b16 %v283
        %v414 = vunpack.c.l.b16 %v284
        %v415 = vunpack.c.h.b16 %v284
        %v416 = vunpack.c.l.b16 %v285
        %v417 = vunpack.c.h.b16 %v285
        %v418 = vunpack.c.l.b16 %v286
        %v419 = vunpack.c.h.b16 %v286
        %v420 = vunpack.c.l.b16 %v287
        %v421 = vunpack.c.h.b16 %v287
        %v422 = vunpack.c.l.b16 %v288
        %v423 = vunpack.c.h.b16 %v288
        %v424 = vunpack.c.l.b16 %v289
        %v425 = vunpack.c.h.b16 %v289
        %v426 = vunpack.c.l.b16 %v290
        %v427 = vunpack.c.h.b16 %v290
        %v428 = vunpack.c.l.b16 %v291
        %v429 = vunpack.c.h.b16 %v291
        %v430 = vunpack.c.l.b16 %v292
        %v431 = vunpack.c.h.b16 %v292
        %v432 = vunpack.c.l.b16 %v293
        %v433 = vunpack.c.h.b16 %v293
        %v434 = vunpack.c.l.b16 %v294
        %v435 = vunpack.c.h.b16 %v294
        %v436 = vunpack.c.l.b16 %v295
        %v437 = vunpack.c.h.b16 %v295
        %v438 = vunpack.c.l.b16 %v296
        %v439 = vunpack.c.h.b16 %v296
        %v440 = vunpack.c.l.b16 %v297
        %v441 = vunpack.c.h.b16 %v297
        %v442 = vunpack.c.l.b16 %v298
        %v443 = vunpack.c.h.b16 %v298
        %v444 = vunpack.c.l.b16 %v299
        %v445 = vunpack.c.h.b16 %v299
        %v446 = vunpack.c.l.b16 %v300
        %v447 = vunpack.c.h.b16 %v300
        %v448 = vunpack.c.l.b16 %v301
        %v449 = vunpack.c.h.b16 %v301
        %v450 = vunpack.c.l.b16 %v302
        %v451 = vunpack.c.h.b16 %v302
        %v452 = vunpack.c.l.b16 %v303
        %v453 = vunpack.c.h.b16 %v303
        %v454 = vunpack.c.l.b16 %v304
        %v455 = vunpack.c.h.b16 %v304
        %v456 = vunpack.c.l.b16 %v305
        %v457 = vunpack.c.h.b16 %v305
        %v458 = vunpack.c.l.b16 %v306
        %v459 = vunpack.c.h.b16 %v306
        %v460 = vunpack.c.l.b16 %v307
        %v461 = vunpack.c.h.b16 %v307
        %v462 = vunpack.c.l.b16 %v308
        %v463 = vunpack.c.h.b16 %v308
        %v464 = vunpack.c.l.b16 %v309
        %v465 = vunpack.c.h.b16 %v309
        %v466 = vunpack.c.l.b16 %v310
        %v467 = vunpack.c.h.b16 %v310
        %v468 = vunpack.c.l.b16 %v311
        %v469 = vunpack.c.h.b16 %v311
        %v470 = vunpack.c.l.b16 %v312
        %v471 = vunpack.c.h.b16 %v312
        %v472 = vunpack.c.l.b16 %v313
        %v473 = vunpack.c.h.b16 %v313
        %v474 = vunpack.c.l.b16 %v314
        %v475 = vunpack.c.h.b16 %v314
        %v476 = vunpack.c.l.b16 %v315
        %v477 = vunpack.c.h.b16 %v315
        %v478 = vunpack.c.l.b16 %v316
        %v479 = vunpack.c.h.b16 %v316
        %v480 = vunpack.c.l.b16 %v317
        %v481 = vunpack.c.h.b16 %v317
        %v482 = vunpack.c.l.b16 %v318
        %v483 = vunpack.c.h.b16 %v318
        %v484 = vunpack.c.l.b16 %v319
        %v485 = vunpack.c.h.b16 %v319
        %v486 = vunpack.c.l.b16 %v320
        %v487 = vunpack.c.h.b16 %v320
        %v488 = vunpack.c.l.b16 %v321
        %v489 = vunpack.c.h.b16 %v321
        %v490 = vunpack.c.l.b16 %v322
        %v491 = vunpack.c.h.b16 %v322
        %v492 = vunpack.c.l.b16 %v323
        %v493 = vunpack.c.h.b16 %v323
        %v494 = vunpack.c.l.b16 %v324
        %v495 = vunpack.c.h.b16 %v324
        %v496 = vpack.c.b16 %v396, %v392
        %v497 = vpack.c.b16 %v397, %v393
        %v498 = vpack.c.b16 %v398, %v394
        %v499 = vpack.c.b16 %v399, %v395
        %v500 = vpack.c.b16 %v404, %v400
        %v501 = vpack.c.b16 %v405, %v401
        %v502 = vpack.c.b16 %v406, %v402
        %v503 = vpack.c.b16 %v407, %v403
        %v504 = vpack.c.b16 %v412, %v408
        %v505 = vpack.c.b16 %v413, %v409
        %v506 = vpack.c.b16 %v414, %v410
        %v507 = vpack.c.b16 %v415, %v411
        %v508 = vpack.c.b16 %v420, %v416
        %v509 = vpack.c.b16 %v421, %v417
        %v510 = vpack.c.b16 %v422, %v418
        %v511 = vpack.c.b16 %v423, %v419
        %v512 = vpack.c.b16 %v428, %v424
        %v513 = vpack.c.b16 %v429, %v425
        %v514 = vpack.c.b16 %v430, %v426
        %v515 = vpack.c.b16 %v431, %v427
        %v516 = vpack.c.b16 %v436, %v432
        %v517 = vpack.c.b16 %v437, %v433
        %v518 = vpack.c.b16 %v438, %v434
        %v519 = vpack.c.b16 %v439, %v435
        %v520 = vpack.c.b16 %v444, %v440
        %v521 = vpack.c.b16 %v445, %v441
        %v522 = vpack.c.b16 %v446, %v442
        %v523 = vpack.c.b16 %v447, %v443
        %v524 = vpack.c.b16 %v452, %v448
        %v525 = vpack.c.b16 %v453, %v449
        %v526 = vpack.c.b16 %v454, %v450
        %v527 = vpack.c.b16 %v455, %v451
        %v528 = vpack.c.b16 %v460, %v456
        %v529 = vpack.c.b16 %v461, %v457
        %v530 = vpack.c.b16 %v462, %v458
        %v531 = vpack.c.b16 %v463, %v459
        %v532 = vpack.c.b16 %v468, %v464
        %v533 = vpack.c.b16 %v469, %v465
        %v534 = vpack.c.b16 %v470, %v466
        %v535 = vpack.c.b16 %v471, %v467
        %v536 = vpack.c.b16 %v476, %v472
        %v537 = vpack.c.b16 %v477, %v473
        %v538 = vpack.c.b16 %v478, %v474
        %v539 = vpack.c.b16 %v479, %v475
        %v540 = vpack.c.b16 %v484, %v480
        %v541 = vpack.c.b16 %v485, %v481
        %v542 = vpack.c.b16 %v486, %v482
        %v543 = vpack.c.b16 %v487, %v483
        %v544 = vpack.c.b16 %v492, %v488
        %v545 = vpack.c.b16 %v493, %v489
        %v546 = vpack.c.b16 %v494, %v490
        %v547 = vpack.c.b16 %v495, %v491
        %vm600 = vcmask 654336
        %v602 = vsel %vm600, %v336, 0
        %604 = vmatprep.subr.bf16.mxu0 %v497
        %605 = vmatpush1.bf16.msra.mxu0 %v496
        %606 = vmatprep.subr.bf16.mxu0 %v501
        %607 = vmatpush1.bf16.msra.mxu0 %v500
        %608 = vmatprep.subr.bf16.mxu0 %v505
        %609 = vmatpush1.bf16.msra.mxu0 %v504
        %610 = vmatprep.subr.bf16.mxu0 %v509
        %611 = vmatpush1.bf16.msra.mxu0 %v508
        %612 = vmatprep.subr.bf16.mxu0 %v513
        %613 = vmatpush1.bf16.msra.mxu0 %v512
        %614 = vmatprep.subr.bf16.mxu0 %v517
        %615 = vmatpush1.bf16.msra.mxu0 %v516
        %616 = vmatprep.subr.bf16.mxu0 %v521
        %617 = vmatpush1.bf16.msra.mxu0 %v520
        %618 = vmatprep.subr.bf16.mxu0 %v525
        %619 = vmatpush1.bf16.msra.mxu0 %v524
        %620 = vmatprep.subr.bf16.mxu0 %v529
        %621 = vmatpush1.bf16.msra.mxu0 %v528
        %622 = vmatprep.subr.bf16.mxu0 %v533
        %623 = vmatpush1.bf16.msra.mxu0 %v532
        %624 = vmatprep.subr.bf16.mxu0 %v537
        %625 = vmatpush1.bf16.msra.mxu0 %v536
        %626 = vmatprep.subr.bf16.mxu0 %v541
        %627 = vmatpush1.bf16.msra.mxu0 %v540
        %628 = vmatprep.subr.bf16.mxu0 %v545
        %629 = vmatpush1.bf16.msra.mxu0 %v544
        %630 = vmatprep.subr.bf16.mxu0 0
        %631 = vmatpush1.bf16.msra.mxu0 0
        %632 = vmatprep.subr.bf16.mxu0 0
        %633 = vmatpush1.bf16.msra.mxu0 0
        %634 = vmatprep.subr.bf16.mxu0 0
        %635 = vmatpush1.bf16.msra.mxu0 0
        %636 = vmatprep.mubr.bf16.mxu0 %v602
        %637 = vmatmul.mubr.bf16.gmra.mrb[0].mxu0 %v338
        %v638 = vpop.f32.mrb[0].mxu0
        %v639 = vadd.f32 0.0, %v638
        %v640 = vpop.f32.mrb[0].mxu0
        %v641 = vadd.f32 0.0, %v640
        %v642 = vpop.f32.mrb[0].mxu0
        %v643 = vadd.f32 0.0, %v642
        %v644 = vpop.f32.mrb[0].mxu0
        %v645 = vadd.f32 0.0, %v644
        %646 = vdwg.mxu0
        %647 = vmatprep.subr.bf16.mxu0 %v499
        %648 = vmatpush1.bf16.msra.mxu0 %v498
        %649 = vmatprep.subr.bf16.mxu0 %v503
        %650 = vmatpush1.bf16.msra.mxu0 %v502
        %651 = vmatprep.subr.bf16.mxu0 %v507
        %652 = vmatpush1.bf16.msra.mxu0 %v506
        %653 = vmatprep.subr.bf16.mxu0 %v511
        %654 = vmatpush1.bf16.msra.mxu0 %v510
        %655 = vmatprep.subr.bf16.mxu0 %v515
        %656 = vmatpush1.bf16.msra.mxu0 %v514
        %657 = vmatprep.subr.bf16.mxu0 %v519
        %658 = vmatpush1.bf16.msra.mxu0 %v518
        %659 = vmatprep.subr.bf16.mxu0 %v523
        %660 = vmatpush1.bf16.msra.mxu0 %v522
        %661 = vmatprep.subr.bf16.mxu0 %v527
        %662 = vmatpush1.bf16.msra.mxu0 %v526
        %663 = vmatprep.subr.bf16.mxu0 %v531
        %664 = vmatpush1.bf16.msra.mxu0 %v530
        %665 = vmatprep.subr.bf16.mxu0 %v535
        %666 = vmatpush1.bf16.msra.mxu0 %v534
        %667 = vmatprep.subr.bf16.mxu0 %v539
        %668 = vmatpush1.bf16.msra.mxu0 %v538
        %669 = vmatprep.subr.bf16.mxu0 %v543
        %670 = vmatpush1.bf16.msra.mxu0 %v542
        %671 = vmatprep.subr.bf16.mxu0 %v547
        %672 = vmatpush1.bf16.msra.mxu0 %v546
        %673 = vmatprep.subr.bf16.mxu0 0
        %674 = vmatpush1.bf16.msra.mxu0 0
        %675 = vmatprep.subr.bf16.mxu0 0
        %676 = vmatpush1.bf16.msra.mxu0 0
        %677 = vmatprep.subr.bf16.mxu0 0
        %678 = vmatpush1.bf16.msra.mxu0 0
        %679 = vmatprep.mubr.bf16.mxu0 %v602
        %680 = vmatmul.mubr.bf16.gmra.mrb[0].mxu0 %v338
        %v681 = vpop.f32.mrb[0].mxu0
        %v682 = vadd.f32 0.0, %v681
        %v683 = vpop.f32.mrb[0].mxu0
        %v684 = vadd.f32 0.0, %v683
        %v685 = vpop.f32.mrb[0].mxu0
        %v686 = vadd.f32 0.0, %v685
        %v687 = vpop.f32.mrb[0].mxu0
        %v688 = vadd.f32 0.0, %v687
        %689 = vdwg.mxu0
        %v743 = vunpack.c.l.b16 %v220
        %v744 = vunpack.c.h.b16 %v220
        %v745 = vunpack.c.l.b16 %v221
        %v746 = vunpack.c.h.b16 %v221
        %v747 = vunpack.c.l.b16 %v222
        %v748 = vunpack.c.h.b16 %v222
        %v749 = vunpack.c.l.b16 %v223
        %v750 = vunpack.c.h.b16 %v223
        %v751 = vunpack.c.l.b16 %v224
        %v752 = vunpack.c.h.b16 %v224
        %v753 = vunpack.c.l.b16 %v225
        %v754 = vunpack.c.h.b16 %v225
        %v755 = vunpack.c.l.b16 %v226
        %v756 = vunpack.c.h.b16 %v226
        %v757 = vunpack.c.l.b16 %v227
        %v758 = vunpack.c.h.b16 %v227
        %v759 = vunpack.c.l.b16 %v228
        %v760 = vunpack.c.h.b16 %v228
        %v761 = vunpack.c.l.b16 %v229
        %v762 = vunpack.c.h.b16 %v229
        %v763 = vunpack.c.l.b16 %v230
        %v764 = vunpack.c.h.b16 %v230
        %v765 = vunpack.c.l.b16 %v231
        %v766 = vunpack.c.h.b16 %v231
        %v767 = vunpack.c.l.b16 %v232
        %v768 = vunpack.c.h.b16 %v232
        %v769 = vunpack.c.l.b16 %v233
        %v770 = vunpack.c.h.b16 %v233
        %v771 = vunpack.c.l.b16 %v234
        %v772 = vunpack.c.h.b16 %v234
        %v773 = vunpack.c.l.b16 %v235
        %v774 = vunpack.c.h.b16 %v235
        %v775 = vunpack.c.l.b16 %v236
        %v776 = vunpack.c.h.b16 %v236
        %v777 = vunpack.c.l.b16 %v237
        %v778 = vunpack.c.h.b16 %v237
        %v779 = vunpack.c.l.b16 %v238
        %v780 = vunpack.c.h.b16 %v238
        %v781 = vunpack.c.l.b16 %v239
        %v782 = vunpack.c.h.b16 %v239
        %v783 = vunpack.c.l.b16 %v240
        %v784 = vunpack.c.h.b16 %v240
        %v785 = vunpack.c.l.b16 %v241
        %v786 = vunpack.c.h.b16 %v241
        %v787 = vunpack.c.l.b16 %v242
        %v788 = vunpack.c.h.b16 %v242
        %v789 = vunpack.c.l.b16 %v243
        %v790 = vunpack.c.h.b16 %v243
        %v791 = vunpack.c.l.b16 %v244
        %v792 = vunpack.c.h.b16 %v244
        %v793 = vunpack.c.l.b16 %v245
        %v794 = vunpack.c.h.b16 %v245
        %v795 = vunpack.c.l.b16 %v246
        %v796 = vunpack.c.h.b16 %v246
        %v797 = vunpack.c.l.b16 %v247
        %v798 = vunpack.c.h.b16 %v247
        %v799 = vunpack.c.l.b16 %v248
        %v800 = vunpack.c.h.b16 %v248
        %v801 = vunpack.c.l.b16 %v249
        %v802 = vunpack.c.h.b16 %v249
        %v803 = vunpack.c.l.b16 %v250
        %v804 = vunpack.c.h.b16 %v250
        %v805 = vunpack.c.l.b16 %v251
        %v806 = vunpack.c.h.b16 %v251
        %v807 = vunpack.c.l.b16 %v252
        %v808 = vunpack.c.h.b16 %v252
        %v809 = vunpack.c.l.b16 %v253
        %v810 = vunpack.c.h.b16 %v253
        %v811 = vunpack.c.l.b16 %v254
        %v812 = vunpack.c.h.b16 %v254
        %v813 = vunpack.c.l.b16 %v255
        %v814 = vunpack.c.h.b16 %v255
        %v815 = vunpack.c.l.b16 %v256
        %v816 = vunpack.c.h.b16 %v256
        %v817 = vunpack.c.l.b16 %v257
        %v818 = vunpack.c.h.b16 %v257
        %v819 = vunpack.c.l.b16 %v258
        %v820 = vunpack.c.h.b16 %v258
        %v821 = vunpack.c.l.b16 %v259
        %v822 = vunpack.c.h.b16 %v259
        %v823 = vunpack.c.l.b16 %v260
        %v824 = vunpack.c.h.b16 %v260
        %v825 = vunpack.c.l.b16 %v261
        %v826 = vunpack.c.h.b16 %v261
        %v827 = vunpack.c.l.b16 %v262
        %v828 = vunpack.c.h.b16 %v262
        %v829 = vunpack.c.l.b16 %v263
        %v830 = vunpack.c.h.b16 %v263
        %v831 = vunpack.c.l.b16 %v264
        %v832 = vunpack.c.h.b16 %v264
        %v833 = vunpack.c.l.b16 %v265
        %v834 = vunpack.c.h.b16 %v265
        %v835 = vunpack.c.l.b16 %v266
        %v836 = vunpack.c.h.b16 %v266
        %v837 = vunpack.c.l.b16 %v267
        %v838 = vunpack.c.h.b16 %v267
        %v839 = vunpack.c.l.b16 %v268
        %v840 = vunpack.c.h.b16 %v268
        %v841 = vunpack.c.l.b16 %v269
        %v842 = vunpack.c.h.b16 %v269
        %v843 = vunpack.c.l.b16 %v270
        %v844 = vunpack.c.h.b16 %v270
        %v845 = vunpack.c.l.b16 %v271
        %v846 = vunpack.c.h.b16 %v271
        %v847 = vpack.c.b16 %v747, %v743
        %v848 = vpack.c.b16 %v748, %v744
        %v849 = vpack.c.b16 %v749, %v745
        %v850 = vpack.c.b16 %v750, %v746
        %v851 = vpack.c.b16 %v755, %v751
        %v852 = vpack.c.b16 %v756, %v752
        %v853 = vpack.c.b16 %v757, %v753
        %v854 = vpack.c.b16 %v758, %v754
        %v855 = vpack.c.b16 %v763, %v759
        %v856 = vpack.c.b16 %v764, %v760
        %v857 = vpack.c.b16 %v765, %v761
        %v858 = vpack.c.b16 %v766, %v762
        %v859 = vpack.c.b16 %v771, %v767
        %v860 = vpack.c.b16 %v772, %v768
        %v861 = vpack.c.b16 %v773, %v769
        %v862 = vpack.c.b16 %v774, %v770
        %v863 = vpack.c.b16 %v779, %v775
        %v864 = vpack.c.b16 %v780, %v776
        %v865 = vpack.c.b16 %v781, %v777
        %v866 = vpack.c.b16 %v782, %v778
        %v867 = vpack.c.b16 %v787, %v783
        %v868 = vpack.c.b16 %v788, %v784
        %v869 = vpack.c.b16 %v789, %v785
        %v870 = vpack.c.b16 %v790, %v786
        %v871 = vpack.c.b16 %v795, %v791
        %v872 = vpack.c.b16 %v796, %v792
        %v873 = vpack.c.b16 %v797, %v793
        %v874 = vpack.c.b16 %v798, %v794
        %v875 = vpack.c.b16 %v803, %v799
        %v876 = vpack.c.b16 %v804, %v800
        %v877 = vpack.c.b16 %v805, %v801
        %v878 = vpack.c.b16 %v806, %v802
        %v879 = vpack.c.b16 %v811, %v807
        %v880 = vpack.c.b16 %v812, %v808
        %v881 = vpack.c.b16 %v813, %v809
        %v882 = vpack.c.b16 %v814, %v810
        %v883 = vpack.c.b16 %v819, %v815
        %v884 = vpack.c.b16 %v820, %v816
        %v885 = vpack.c.b16 %v821, %v817
        %v886 = vpack.c.b16 %v822, %v818
        %v887 = vpack.c.b16 %v827, %v823
        %v888 = vpack.c.b16 %v828, %v824
        %v889 = vpack.c.b16 %v829, %v825
        %v890 = vpack.c.b16 %v830, %v826
        %v891 = vpack.c.b16 %v835, %v831
        %v892 = vpack.c.b16 %v836, %v832
        %v893 = vpack.c.b16 %v837, %v833
        %v894 = vpack.c.b16 %v838, %v834
        %v895 = vpack.c.b16 %v843, %v839
        %v896 = vpack.c.b16 %v844, %v840
        %v897 = vpack.c.b16 %v845, %v841
        %v898 = vpack.c.b16 %v846, %v842
        %v952 = vsel %vm600, %v332, 0
        %954 = vmatprep.subr.bf16.mxu0 %v848
        %955 = vmatpush1.bf16.msra.mxu0 %v847
        %956 = vmatprep.subr.bf16.mxu0 %v852
        %957 = vmatpush1.bf16.msra.mxu0 %v851
        %958 = vmatprep.subr.bf16.mxu0 %v856
        %959 = vmatpush1.bf16.msra.mxu0 %v855
        %960 = vmatprep.subr.bf16.mxu0 %v860
        %961 = vmatpush1.bf16.msra.mxu0 %v859
        %962 = vmatprep.subr.bf16.mxu0 %v864
        %963 = vmatpush1.bf16.msra.mxu0 %v863
        %964 = vmatprep.subr.bf16.mxu0 %v868
        %965 = vmatpush1.bf16.msra.mxu0 %v867
        %966 = vmatprep.subr.bf16.mxu0 %v872
        %967 = vmatpush1.bf16.msra.mxu0 %v871
        %968 = vmatprep.subr.bf16.mxu0 %v876
        %969 = vmatpush1.bf16.msra.mxu0 %v875
        %970 = vmatprep.subr.bf16.mxu0 %v880
        %971 = vmatpush1.bf16.msra.mxu0 %v879
        %972 = vmatprep.subr.bf16.mxu0 %v884
        %973 = vmatpush1.bf16.msra.mxu0 %v883
        %974 = vmatprep.subr.bf16.mxu0 %v888
        %975 = vmatpush1.bf16.msra.mxu0 %v887
        %976 = vmatprep.subr.bf16.mxu0 %v892
        %977 = vmatpush1.bf16.msra.mxu0 %v891
        %978 = vmatprep.subr.bf16.mxu0 %v896
        %979 = vmatpush1.bf16.msra.mxu0 %v895
        %980 = vmatprep.subr.bf16.mxu0 0
        %981 = vmatpush1.bf16.msra.mxu0 0
        %982 = vmatprep.subr.bf16.mxu0 0
        %983 = vmatpush1.bf16.msra.mxu0 0
        %984 = vmatprep.subr.bf16.mxu0 0
        %985 = vmatpush1.bf16.msra.mxu0 0
        %986 = vmatprep.mubr.bf16.mxu0 %v952
        %987 = vmatmul.mubr.bf16.gmra.mrb[0].mxu0 %v331
        %v988 = vpop.f32.mrb[0].mxu0
        %v989 = vadd.f32 %v639, %v988
        %v990 = vpop.f32.mrb[0].mxu0
        %v991 = vadd.f32 %v641, %v990
        %v992 = vpop.f32.mrb[0].mxu0
        %v993 = vadd.f32 %v643, %v992
        %v994 = vpop.f32.mrb[0].mxu0
        %v995 = vadd.f32 %v645, %v994
        %996 = vdwg.mxu0
        %997 = vmatprep.subr.bf16.mxu0 %v850
        %998 = vmatpush1.bf16.msra.mxu0 %v849
        %999 = vmatprep.subr.bf16.mxu0 %v854
        %1000 = vmatpush1.bf16.msra.mxu0 %v853
        %1001 = vmatprep.subr.bf16.mxu0 %v858
        %1002 = vmatpush1.bf16.msra.mxu0 %v857
        %1003 = vmatprep.subr.bf16.mxu0 %v862
        %1004 = vmatpush1.bf16.msra.mxu0 %v861
        %1005 = vmatprep.subr.bf16.mxu0 %v866
        %1006 = vmatpush1.bf16.msra.mxu0 %v865
        %1007 = vmatprep.subr.bf16.mxu0 %v870
        %1008 = vmatpush1.bf16.msra.mxu0 %v869
        %1009 = vmatprep.subr.bf16.mxu0 %v874
        %1010 = vmatpush1.bf16.msra.mxu0 %v873
        %1011 = vmatprep.subr.bf16.mxu0 %v878
        %1012 = vmatpush1.bf16.msra.mxu0 %v877
        %1013 = vmatprep.subr.bf16.mxu0 %v882
        %1014 = vmatpush1.bf16.msra.mxu0 %v881
        %1015 = vmatprep.subr.bf16.mxu0 %v886
        %1016 = vmatpush1.bf16.msra.mxu0 %v885
        %1017 = vmatprep.subr.bf16.mxu0 %v890
        %1018 = vmatpush1.bf16.msra.mxu0 %v889
        %1019 = vmatprep.subr.bf16.mxu0 %v894
        %1020 = vmatpush1.bf16.msra.mxu0 %v893
        %1021 = vmatprep.subr.bf16.mxu0 %v898
        %1022 = vmatpush1.bf16.msra.mxu0 %v897
        %1023 = vmatprep.subr.bf16.mxu0 0
        %1024 = vmatpush1.bf16.msra.mxu0 0
        %1025 = vmatprep.subr.bf16.mxu0 0
        %1026 = vmatpush1.bf16.msra.mxu0 0
        %1027 = vmatprep.subr.bf16.mxu0 0
        %1028 = vmatpush1.bf16.msra.mxu0 0
        %1029 = vmatprep.mubr.bf16.mxu0 %v952
        %1030 = vmatmul.mubr.bf16.gmra.mrb[0].mxu0 %v331
        %v1031 = vpop.f32.mrb[0].mxu0
        %v1032 = vadd.f32 %v682, %v1031
        %v1033 = vpop.f32.mrb[0].mxu0
        %v1034 = vadd.f32 %v684, %v1033
        %v1035 = vpop.f32.mrb[0].mxu0
        %v1036 = vadd.f32 %v686, %v1035
        %v1037 = vpop.f32.mrb[0].mxu0
        %v1038 = vadd.f32 %v688, %v1037
        %1039 = vdwg.mxu0
        %s1040 = scalar_lea.vmem [#allocation5], 832
        %v1041 = vld [vmem:[%s1040] sm:$0xff]
        %v1042 = vld [vmem:[%s1040 + $0x8] sm:$0xff]
        %v1043 = vld [vmem:[%s1040 + $0x10] sm:$0xff]
        %v1044 = vld [vmem:[%s1040 + $0x18] sm:$0xff]
        %v1045 = vld [vmem:[%s1040 + $0x20] sm:$0xff]
        %v1046 = vld [vmem:[%s1040 + $0x28] sm:$0xff]
        %v1047 = vld [vmem:[%s1040 + $0x30] sm:$0xff]
        %v1048 = vld [vmem:[%s1040 + $0x38] sm:$0xff]
        %v1049 = vld [vmem:[%s1040 + $0x40] sm:$0xff]
        %v1050 = vld [vmem:[%s1040 + $0x48] sm:$0xff]
        %v1051 = vld [vmem:[%s1040 + $0x50] sm:$0xff]
        %v1052 = vld [vmem:[%s1040 + $0x58] sm:$0xff]
        %v1053 = vld [vmem:[%s1040 + $0x60] sm:$0xff]
        %v1054 = vld [vmem:[%s1040 + $0x68] sm:$0xff]
        %v1055 = vld [vmem:[%s1040 + $0x70] sm:$0xff]
        %v1056 = vld [vmem:[%s1040 + $0x78] sm:$0xff]
        %v1057 = vld [vmem:[%s1040 + $0x80] sm:$0xff]
        %v1058 = vld [vmem:[%s1040 + $0x88] sm:$0xff]
        %v1059 = vld [vmem:[%s1040 + $0x90] sm:$0xff]
        %v1060 = vld [vmem:[%s1040 + $0x98] sm:$0xff]
        %v1061 = vld [vmem:[%s1040 + $0xa0] sm:$0xff]
        %v1062 = vld [vmem:[%s1040 + $0xa8] sm:$0xff]
        %v1063 = vld [vmem:[%s1040 + $0xb0] sm:$0xff]
        %v1064 = vld [vmem:[%s1040 + $0xb8] sm:$0xff]
        %v1065 = vld [vmem:[%s1040 + $0xc0] sm:$0xff]
        %v1066 = vld [vmem:[%s1040 + $0xc8] sm:$0xff]
        %v1067 = vld [vmem:[%s1040 + $0xd0] sm:$0xff]
        %v1068 = vld [vmem:[%s1040 + $0xd8] sm:$0xff]
        %v1069 = vld [vmem:[%s1040 + $0xe0] sm:$0xff]
        %v1070 = vld [vmem:[%s1040 + $0xe8] sm:$0xff]
        %v1071 = vld [vmem:[%s1040 + $0xf0] sm:$0xff]
        %v1072 = vld [vmem:[%s1040 + $0xf8] sm:$0xff]
        %v1073 = vld [vmem:[%s1040 + $0x100] sm:$0xff]
        %v1074 = vld [vmem:[%s1040 + $0x108] sm:$0xff]
        %v1075 = vld [vmem:[%s1040 + $0x110] sm:$0xff]
        %v1076 = vld [vmem:[%s1040 + $0x118] sm:$0xff]
        %v1077 = vld [vmem:[%s1040 + $0x120] sm:$0xff]
        %v1078 = vld [vmem:[%s1040 + $0x128] sm:$0xff]
        %v1079 = vld [vmem:[%s1040 + $0x130] sm:$0xff]
        %v1080 = vld [vmem:[%s1040 + $0x138] sm:$0xff]
        %v1081 = vld [vmem:[%s1040 + $0x140] sm:$0xff]
        %v1082 = vld [vmem:[%s1040 + $0x148] sm:$0xff]
        %v1083 = vld [vmem:[%s1040 + $0x150] sm:$0xff]
        %v1084 = vld [vmem:[%s1040 + $0x158] sm:$0xff]
        %v1085 = vld [vmem:[%s1040 + $0x160] sm:$0xff]
        %v1086 = vld [vmem:[%s1040 + $0x168] sm:$0xff]
        %v1087 = vld [vmem:[%s1040 + $0x170] sm:$0xff]
        %v1088 = vld [vmem:[%s1040 + $0x178] sm:$0xff]
        %v1089 = vld [vmem:[%s1040 + $0x180] sm:$0xff]
        %v1090 = vld [vmem:[%s1040 + $0x188] sm:$0xff]
        %v1091 = vld [vmem:[%s1040 + $0x190] sm:$0xff]
        %v1092 = vld [vmem:[%s1040 + $0x198] sm:$0xff]
        %1093 = vrot.lane.b32.xlu0 %v331, 96
        %v1094 = vpop.permute.xlu0 %1093
        %1095 = vrot.lane.b32.xlu0 %v332, 96
        %v1096 = vpop.permute.xlu0 %1095
        %vm1097 = vcmask 785408
        %v1098 = vsel %vm1097, %v1094, %v1096
        %v1152 = vunpack.c.l.b16 %v1041
        %v1153 = vunpack.c.h.b16 %v1041
        %v1154 = vunpack.c.l.b16 %v1042
        %v1155 = vunpack.c.h.b16 %v1042
        %v1156 = vunpack.c.l.b16 %v1043
        %v1157 = vunpack.c.h.b16 %v1043
        %v1158 = vunpack.c.l.b16 %v1044
        %v1159 = vunpack.c.h.b16 %v1044
        %v1160 = vunpack.c.l.b16 %v1045
        %v1161 = vunpack.c.h.b16 %v1045
        %v1162 = vunpack.c.l.b16 %v1046
        %v1163 = vunpack.c.h.b16 %v1046
        %v1164 = vunpack.c.l.b16 %v1047
        %v1165 = vunpack.c.h.b16 %v1047
        %v1166 = vunpack.c.l.b16 %v1048
        %v1167 = vunpack.c.h.b16 %v1048
        %v1168 = vunpack.c.l.b16 %v1049
        %v1169 = vunpack.c.h.b16 %v1049
        %v1170 = vunpack.c.l.b16 %v1050
        %v1171 = vunpack.c.h.b16 %v1050
        %v1172 = vunpack.c.l.b16 %v1051
        %v1173 = vunpack.c.h.b16 %v1051
        %v1174 = vunpack.c.l.b16 %v1052
        %v1175 = vunpack.c.h.b16 %v1052
        %v1176 = vunpack.c.l.b16 %v1053
        %v1177 = vunpack.c.h.b16 %v1053
        %v1178 = vunpack.c.l.b16 %v1054
        %v1179 = vunpack.c.h.b16 %v1054
        %v1180 = vunpack.c.l.b16 %v1055
        %v1181 = vunpack.c.h.b16 %v1055
        %v1182 = vunpack.c.l.b16 %v1056
        %v1183 = vunpack.c.h.b16 %v1056
        %v1184 = vunpack.c.l.b16 %v1057
        %v1185 = vunpack.c.h.b16 %v1057
        %v1186 = vunpack.c.l.b16 %v1058
        %v1187 = vunpack.c.h.b16 %v1058
        %v1188 = vunpack.c.l.b16 %v1059
        %v1189 = vunpack.c.h.b16 %v1059
        %v1190 = vunpack.c.l.b16 %v1060
        %v1191 = vunpack.c.h.b16 %v1060
        %v1192 = vunpack.c.l.b16 %v1061
        %v1193 = vunpack.c.h.b16 %v1061
        %v1194 = vunpack.c.l.b16 %v1062
        %v1195 = vunpack.c.h.b16 %v1062
        %v1196 = vunpack.c.l.b16 %v1063
        %v1197 = vunpack.c.h.b16 %v1063
        %v1198 = vunpack.c.l.b16 %v1064
        %v1199 = vunpack.c.h.b16 %v1064
        %v1200 = vunpack.c.l.b16 %v1065
        %v1201 = vunpack.c.h.b16 %v1065
        %v1202 = vunpack.c.l.b16 %v1066
        %v1203 = vunpack.c.h.b16 %v1066
        %v1204 = vunpack.c.l.b16 %v1067
        %v1205 = vunpack.c.h.b16 %v1067
        %v1206 = vunpack.c.l.b16 %v1068
        %v1207 = vunpack.c.h.b16 %v1068
        %v1208 = vunpack.c.l.b16 %v1069
        %v1209 = vunpack.c.h.b16 %v1069
        %v1210 = vunpack.c.l.b16 %v1070
        %v1211 = vunpack.c.h.b16 %v1070
        %v1212 = vunpack.c.l.b16 %v1071
        %v1213 = vunpack.c.h.b16 %v1071
        %v1214 = vunpack.c.l.b16 %v1072
        %v1215 = vunpack.c.h.b16 %v1072
        %v1216 = vunpack.c.l.b16 %v1073
        %v1217 = vunpack.c.h.b16 %v1073
        %v1218 = vunpack.c.l.b16 %v1074
        %v1219 = vunpack.c.h.b16 %v1074
        %v1220 = vunpack.c.l.b16 %v1075
        %v1221 = vunpack.c.h.b16 %v1075
        %v1222 = vunpack.c.l.b16 %v1076
        %v1223 = vunpack.c.h.b16 %v1076
        %v1224 = vunpack.c.l.b16 %v1077
        %v1225 = vunpack.c.h.b16 %v1077
        %v1226 = vunpack.c.l.b16 %v1078
        %v1227 = vunpack.c.h.b16 %v1078
        %v1228 = vunpack.c.l.b16 %v1079
        %v1229 = vunpack.c.h.b16 %v1079
        %v1230 = vunpack.c.l.b16 %v1080
        %v1231 = vunpack.c.h.b16 %v1080
        %v1232 = vunpack.c.l.b16 %v1081
        %v1233 = vunpack.c.h.b16 %v1081
        %v1234 = vunpack.c.l.b16 %v1082
        %v1235 = vunpack.c.h.b16 %v1082
        %v1236 = vunpack.c.l.b16 %v1083
        %v1237 = vunpack.c.h.b16 %v1083
        %v1238 = vunpack.c.l.b16 %v1084
        %v1239 = vunpack.c.h.b16 %v1084
        %v1240 = vunpack.c.l.b16 %v1085
        %v1241 = vunpack.c.h.b16 %v1085
        %v1242 = vunpack.c.l.b16 %v1086
        %v1243 = vunpack.c.h.b16 %v1086
        %v1244 = vunpack.c.l.b16 %v1087
        %v1245 = vunpack.c.h.b16 %v1087
        %v1246 = vunpack.c.l.b16 %v1088
        %v1247 = vunpack.c.h.b16 %v1088
        %v1248 = vunpack.c.l.b16 %v1089
        %v1249 = vunpack.c.h.b16 %v1089
        %v1250 = vunpack.c.l.b16 %v1090
        %v1251 = vunpack.c.h.b16 %v1090
        %v1252 = vunpack.c.l.b16 %v1091
        %v1253 = vunpack.c.h.b16 %v1091
        %v1254 = vunpack.c.l.b16 %v1092
        %v1255 = vunpack.c.h.b16 %v1092
        %v1256 = vpack.c.b16 %v1156, %v1152
        %v1257 = vpack.c.b16 %v1157, %v1153
        %v1258 = vpack.c.b16 %v1158, %v1154
        %v1259 = vpack.c.b16 %v1159, %v1155
        %v1260 = vpack.c.b16 %v1164, %v1160
        %v1261 = vpack.c.b16 %v1165, %v1161
        %v1262 = vpack.c.b16 %v1166, %v1162
        %v1263 = vpack.c.b16 %v1167, %v1163
        %v1264 = vpack.c.b16 %v1172, %v1168
        %v1265 = vpack.c.b16 %v1173, %v1169
        %v1266 = vpack.c.b16 %v1174, %v1170
        %v1267 = vpack.c.b16 %v1175, %v1171
        %v1268 = vpack.c.b16 %v1180, %v1176
        %v1269 = vpack.c.b16 %v1181, %v1177
        %v1270 = vpack.c.b16 %v1182, %v1178
        %v1271 = vpack.c.b16 %v1183, %v1179
        %v1272 = vpack.c.b16 %v1188, %v1184
        %v1273 = vpack.c.b16 %v1189, %v1185
        %v1274 = vpack.c.b16 %v1190, %v1186
        %v1275 = vpack.c.b16 %v1191, %v1187
        %v1276 = vpack.c.b16 %v1196, %v1192
        %v1277 = vpack.c.b16 %v1197, %v1193
        %v1278 = vpack.c.b16 %v1198, %v1194
        %v1279 = vpack.c.b16 %v1199, %v1195
        %v1280 = vpack.c.b16 %v1204, %v1200
        %v1281 = vpack.c.b16 %v1205, %v1201
        %v1282 = vpack.c.b16 %v1206, %v1202
        %v1283 = vpack.c.b16 %v1207, %v1203
        %v1284 = vpack.c.b16 %v1212, %v1208
        %v1285 = vpack.c.b16 %v1213, %v1209
        %v1286 = vpack.c.b16 %v1214, %v1210
        %v1287 = vpack.c.b16 %v1215, %v1211
        %v1288 = vpack.c.b16 %v1220, %v1216
        %v1289 = vpack.c.b16 %v1221, %v1217
        %v1290 = vpack.c.b16 %v1222, %v1218
        %v1291 = vpack.c.b16 %v1223, %v1219
        %v1292 = vpack.c.b16 %v1228, %v1224
        %v1293 = vpack.c.b16 %v1229, %v1225
        %v1294 = vpack.c.b16 %v1230, %v1226
        %v1295 = vpack.c.b16 %v1231, %v1227
        %v1296 = vpack.c.b16 %v1236, %v1232
        %v1297 = vpack.c.b16 %v1237, %v1233
        %v1298 = vpack.c.b16 %v1238, %v1234
        %v1299 = vpack.c.b16 %v1239, %v1235
        %v1300 = vpack.c.b16 %v1244, %v1240
        %v1301 = vpack.c.b16 %v1245, %v1241
        %v1302 = vpack.c.b16 %v1246, %v1242
        %v1303 = vpack.c.b16 %v1247, %v1243
        %v1304 = vpack.c.b16 %v1252, %v1248
        %v1305 = vpack.c.b16 %v1253, %v1249
        %v1306 = vpack.c.b16 %v1254, %v1250
        %v1307 = vpack.c.b16 %v1255, %v1251
        %v1361 = vsel %vm600, %v1096, 0
        %1363 = vmatprep.subr.bf16.mxu0 %v1257
        %1364 = vmatpush1.bf16.msra.mxu0 %v1256
        %1365 = vmatprep.subr.bf16.mxu0 %v1261
        %1366 = vmatpush1.bf16.msra.mxu0 %v1260
        %1367 = vmatprep.subr.bf16.mxu0 %v1265
        %1368 = vmatpush1.bf16.msra.mxu0 %v1264
        %1369 = vmatprep.subr.bf16.mxu0 %v1269
        %1370 = vmatpush1.bf16.msra.mxu0 %v1268
        %1371 = vmatprep.subr.bf16.mxu0 %v1273
        %1372 = vmatpush1.bf16.msra.mxu0 %v1272
        %1373 = vmatprep.subr.bf16.mxu0 %v1277
        %1374 = vmatpush1.bf16.msra.mxu0 %v1276
        %1375 = vmatprep.subr.bf16.mxu0 %v1281
        %1376 = vmatpush1.bf16.msra.mxu0 %v1280
        %1377 = vmatprep.subr.bf16.mxu0 %v1285
        %1378 = vmatpush1.bf16.msra.mxu0 %v1284
        %1379 = vmatprep.subr.bf16.mxu0 %v1289
        %1380 = vmatpush1.bf16.msra.mxu0 %v1288
        %1381 = vmatprep.subr.bf16.mxu0 %v1293
        %1382 = vmatpush1.bf16.msra.mxu0 %v1292
        %1383 = vmatprep.subr.bf16.mxu0 %v1297
        %1384 = vmatpush1.bf16.msra.mxu0 %v1296
        %1385 = vmatprep.subr.bf16.mxu0 %v1301
        %1386 = vmatpush1.bf16.msra.mxu0 %v1300
        %1387 = vmatprep.subr.bf16.mxu0 %v1305
        %1388 = vmatpush1.bf16.msra.mxu0 %v1304
        %1389 = vmatprep.subr.bf16.mxu0 0
        %1390 = vmatpush1.bf16.msra.mxu0 0
        %1391 = vmatprep.subr.bf16.mxu0 0
        %1392 = vmatpush1.bf16.msra.mxu0 0
        %1393 = vmatprep.subr.bf16.mxu0 0
        %1394 = vmatpush1.bf16.msra.mxu0 0
        %1395 = vmatprep.mubr.bf16.mxu0 %v1361
        %1396 = vmatmul.mubr.bf16.gmra.mrb[0].mxu0 %v1098
        %v1397 = vpop.f32.mrb[0].mxu0
        %v1398 = vadd.f32 0.0, %v1397
        %v1399 = vpop.f32.mrb[0].mxu0
        %v1400 = vadd.f32 0.0, %v1399
        %v1401 = vpop.f32.mrb[0].mxu0
        %v1402 = vadd.f32 0.0, %v1401
        %v1403 = vpop.f32.mrb[0].mxu0
        %v1404 = vadd.f32 0.0, %v1403
        %1405 = vdwg.mxu0
        %1406 = vmatprep.subr.bf16.mxu0 %v1259
        %1407 = vmatpush1.bf16.msra.mxu0 %v1258
        %1408 = vmatprep.subr.bf16.mxu0 %v1263
        %1409 = vmatpush1.bf16.msra.mxu0 %v1262
        %1410 = vmatprep.subr.bf16.mxu0 %v1267
        %1411 = vmatpush1.bf16.msra.mxu0 %v1266
        %1412 = vmatprep.subr.bf16.mxu0 %v1271
        %1413 = vmatpush1.bf16.msra.mxu0 %v1270
        %1414 = vmatprep.subr.bf16.mxu0 %v1275
        %1415 = vmatpush1.bf16.msra.mxu0 %v1274
        %1416 = vmatprep.subr.bf16.mxu0 %v1279
        %1417 = vmatpush1.bf16.msra.mxu0 %v1278
        %1418 = vmatprep.subr.bf16.mxu0 %v1283
        %1419 = vmatpush1.bf16.msra.mxu0 %v1282
        %1420 = vmatprep.subr.bf16.mxu0 %v1287
        %1421 = vmatpush1.bf16.msra.mxu0 %v1286
        %1422 = vmatprep.subr.bf16.mxu0 %v1291
        %1423 = vmatpush1.bf16.msra.mxu0 %v1290
        %1424 = vmatprep.subr.bf16.mxu0 %v1295
        %1425 = vmatpush1.bf16.msra.mxu0 %v1294
        %1426 = vmatprep.subr.bf16.mxu0 %v1299
        %1427 = vmatpush1.bf16.msra.mxu0 %v1298
        %1428 = vmatprep.subr.bf16.mxu0 %v1303
        %1429 = vmatpush1.bf16.msra.mxu0 %v1302
        %1430 = vmatprep.subr.bf16.mxu0 %v1307
        %1431 = vmatpush1.bf16.msra.mxu0 %v1306
        %1432 = vmatprep.subr.bf16.mxu0 0
        %1433 = vmatpush1.bf16.msra.mxu0 0
        %1434 = vmatprep.subr.bf16.mxu0 0
        %1435 = vmatpush1.bf16.msra.mxu0 0
        %1436 = vmatprep.subr.bf16.mxu0 0
        %1437 = vmatpush1.bf16.msra.mxu0 0
        %1438 = vmatprep.mubr.bf16.mxu0 %v1361
        %1439 = vmatmul.mubr.bf16.gmra.mrb[0].mxu0 %v1098
        %v1440 = vpop.f32.mrb[0].mxu0
        %v1441 = vadd.f32 0.0, %v1440
        %v1442 = vpop.f32.mrb[0].mxu0
        %v1443 = vadd.f32 0.0, %v1442
        %v1444 = vpop.f32.mrb[0].mxu0
        %v1445 = vadd.f32 0.0, %v1444
        %v1446 = vpop.f32.mrb[0].mxu0
        %v1447 = vadd.f32 0.0, %v1446
        %1448 = vdwg.mxu0
        %v1449 = vadd.f32 %v989, %v1398
        %v1450 = vadd.f32 %v991, %v1400
        %v1451 = vadd.f32 %v1032, %v1441
        %v1452 = vadd.f32 %v1034, %v1443
        %v1453 = vadd.f32 %v993, %v1402
        %v1454 = vadd.f32 %v995, %v1404
        %v1455 = vadd.f32 %v1036, %v1445
        %v1456 = vadd.f32 %v1038, %v1447
        %s1457 = scalar_lea.vmem [#allocation5], 1248
        %v1458 = vld [vmem:[%s1457] sm:$0xff]
        %v1459 = vld [vmem:[%s1457 + $0x8] sm:$0xff]
        %v1460 = vld [vmem:[%s1457 + $0x10] sm:$0xff]
        %v1461 = vld [vmem:[%s1457 + $0x18] sm:$0xff]
        %v1462 = vld [vmem:[%s1457 + $0x20] sm:$0xff]
        %v1463 = vld [vmem:[%s1457 + $0x28] sm:$0xff]
        %v1464 = vld [vmem:[%s1457 + $0x30] sm:$0xff]
        %v1465 = vld [vmem:[%s1457 + $0x38] sm:$0xff]
        %v1466 = vld [vmem:[%s1457 + $0x40] sm:$0xff]
        %v1467 = vld [vmem:[%s1457 + $0x48] sm:$0xff]
        %v1468 = vld [vmem:[%s1457 + $0x50] sm:$0xff]
        %v1469 = vld [vmem:[%s1457 + $0x58] sm:$0xff]
        %v1470 = vld [vmem:[%s1457 + $0x60] sm:$0xff]
        %v1471 = vld [vmem:[%s1457 + $0x68] sm:$0xff]
        %v1472 = vld [vmem:[%s1457 + $0x70] sm:$0xff]
        %v1473 = vld [vmem:[%s1457 + $0x78] sm:$0xff]
        %v1474 = vld [vmem:[%s1457 + $0x80] sm:$0xff]
        %v1475 = vld [vmem:[%s1457 + $0x88] sm:$0xff]
        %v1476 = vld [vmem:[%s1457 + $0x90] sm:$0xff]
        %v1477 = vld [vmem:[%s1457 + $0x98] sm:$0xff]
        %v1478 = vld [vmem:[%s1457 + $0xa0] sm:$0xff]
        %v1479 = vld [vmem:[%s1457 + $0xa8] sm:$0xff]
        %v1480 = vld [vmem:[%s1457 + $0xb0] sm:$0xff]
        %v1481 = vld [vmem:[%s1457 + $0xb8] sm:$0xff]
        %v1482 = vld [vmem:[%s1457 + $0xc0] sm:$0xff]
        %v1483 = vld [vmem:[%s1457 + $0xc8] sm:$0xff]
        %v1484 = vld [vmem:[%s1457 + $0xd0] sm:$0xff]
        %v1485 = vld [vmem:[%s1457 + $0xd8] sm:$0xff]
        %v1486 = vld [vmem:[%s1457 + $0xe0] sm:$0xff]
        %v1487 = vld [vmem:[%s1457 + $0xe8] sm:$0xff]
        %v1488 = vld [vmem:[%s1457 + $0xf0] sm:$0xff]
        %v1489 = vld [vmem:[%s1457 + $0xf8] sm:$0xff]
        %v1490 = vld [vmem:[%s1457 + $0x100] sm:$0xff]
        %v1491 = vld [vmem:[%s1457 + $0x108] sm:$0xff]
        %v1492 = vld [vmem:[%s1457 + $0x110] sm:$0xff]
        %v1493 = vld [vmem:[%s1457 + $0x118] sm:$0xff]
        %v1494 = vld [vmem:[%s1457 + $0x120] sm:$0xff]
        %v1495 = vld [vmem:[%s1457 + $0x128] sm:$0xff]
        %v1496 = vld [vmem:[%s1457 + $0x130] sm:$0xff]
        %v1497 = vld [vmem:[%s1457 + $0x138] sm:$0xff]
        %v1498 = vld [vmem:[%s1457 + $0x140] sm:$0xff]
        %v1499 = vld [vmem:[%s1457 + $0x148] sm:$0xff]
        %v1500 = vld [vmem:[%s1457 + $0x150] sm:$0xff]
        %v1501 = vld [vmem:[%s1457 + $0x158] sm:$0xff]
        %v1502 = vld [vmem:[%s1457 + $0x160] sm:$0xff]
        %v1503 = vld [vmem:[%s1457 + $0x168] sm:$0xff]
        %v1504 = vld [vmem:[%s1457 + $0x170] sm:$0xff]
        %v1505 = vld [vmem:[%s1457 + $0x178] sm:$0xff]
        %v1506 = vld [vmem:[%s1457 + $0x180] sm:$0xff]
        %v1507 = vld [vmem:[%s1457 + $0x188] sm:$0xff]
        %v1508 = vld [vmem:[%s1457 + $0x190] sm:$0xff]
        %v1509 = vld [vmem:[%s1457 + $0x198] sm:$0xff]
        %v1511 = vshrl.u32 %v331, 16
        %v1513 = vshll.u32 %v331, 16
        %v1515 = vrot.slane %v1513, 1
        %v1516 = vor.u32 %v1511, %v1515
        %v1517 = vshrl.u32 %v332, 16
        %v1519 = vshll.u32 %v332, 16
        %v1521 = vrot.slane %v1519, 1
        %v1522 = vor.u32 %v1517, %v1521
        %v1576 = vunpack.c.l.b16 %v1458
        %v1577 = vunpack.c.h.b16 %v1458
        %v1578 = vunpack.c.l.b16 %v1459
        %v1579 = vunpack.c.h.b16 %v1459
        %v1580 = vunpack.c.l.b16 %v1460
        %v1581 = vunpack.c.h.b16 %v1460
        %v1582 = vunpack.c.l.b16 %v1461
        %v1583 = vunpack.c.h.b16 %v1461
        %v1584 = vunpack.c.l.b16 %v1462
        %v1585 = vunpack.c.h.b16 %v1462
        %v1586 = vunpack.c.l.b16 %v1463
        %v1587 = vunpack.c.h.b16 %v1463
        %v1588 = vunpack.c.l.b16 %v1464
        %v1589 = vunpack.c.h.b16 %v1464
        %v1590 = vunpack.c.l.b16 %v1465
        %v1591 = vunpack.c.h.b16 %v1465
        %v1592 = vunpack.c.l.b16 %v1466
        %v1593 = vunpack.c.h.b16 %v1466
        %v1594 = vunpack.c.l.b16 %v1467
        %v1595 = vunpack.c.h.b16 %v1467
        %v1596 = vunpack.c.l.b16 %v1468
        %v1597 = vunpack.c.h.b16 %v1468
        %v1598 = vunpack.c.l.b16 %v1469
        %v1599 = vunpack.c.h.b16 %v1469
        %v1600 = vunpack.c.l.b16 %v1470
        %v1601 = vunpack.c.h.b16 %v1470
        %v1602 = vunpack.c.l.b16 %v1471
        %v1603 = vunpack.c.h.b16 %v1471
        %v1604 = vunpack.c.l.b16 %v1472
        %v1605 = vunpack.c.h.b16 %v1472
        %v1606 = vunpack.c.l.b16 %v1473
        %v1607 = vunpack.c.h.b16 %v1473
        %v1608 = vunpack.c.l.b16 %v1474
        %v1609 = vunpack.c.h.b16 %v1474
        %v1610 = vunpack.c.l.b16 %v1475
        %v1611 = vunpack.c.h.b16 %v1475
        %v1612 = vunpack.c.l.b16 %v1476
        %v1613 = vunpack.c.h.b16 %v1476
        %v1614 = vunpack.c.l.b16 %v1477
        %v1615 = vunpack.c.h.b16 %v1477
        %v1616 = vunpack.c.l.b16 %v1478
        %v1617 = vunpack.c.h.b16 %v1478
        %v1618 = vunpack.c.l.b16 %v1479
        %v1619 = vunpack.c.h.b16 %v1479
        %v1620 = vunpack.c.l.b16 %v1480
        %v1621 = vunpack.c.h.b16 %v1480
        %v1622 = vunpack.c.l.b16 %v1481
        %v1623 = vunpack.c.h.b16 %v1481
        %v1624 = vunpack.c.l.b16 %v1482
        %v1625 = vunpack.c.h.b16 %v1482
        %v1626 = vunpack.c.l.b16 %v1483
        %v1627 = vunpack.c.h.b16 %v1483
        %v1628 = vunpack.c.l.b16 %v1484
        %v1629 = vunpack.c.h.b16 %v1484
        %v1630 = vunpack.c.l.b16 %v1485
        %v1631 = vunpack.c.h.b16 %v1485
        %v1632 = vunpack.c.l.b16 %v1486
        %v1633 = vunpack.c.h.b16 %v1486
        %v1634 = vunpack.c.l.b16 %v1487
        %v1635 = vunpack.c.h.b16 %v1487
        %v1636 = vunpack.c.l.b16 %v1488
        %v1637 = vunpack.c.h.b16 %v1488
        %v1638 = vunpack.c.l.b16 %v1489
        %v1639 = vunpack.c.h.b16 %v1489
        %v1640 = vunpack.c.l.b16 %v1490
        %v1641 = vunpack.c.h.b16 %v1490
        %v1642 = vunpack.c.l.b16 %v1491
        %v1643 = vunpack.c.h.b16 %v1491
        %v1644 = vunpack.c.l.b16 %v1492
        %v1645 = vunpack.c.h.b16 %v1492
        %v1646 = vunpack.c.l.b16 %v1493
        %v1647 = vunpack.c.h.b16 %v1493
        %v1648 = vunpack.c.l.b16 %v1494
        %v1649 = vunpack.c.h.b16 %v1494
        %v1650 = vunpack.c.l.b16 %v1495
        %v1651 = vunpack.c.h.b16 %v1495
        %v1652 = vunpack.c.l.b16 %v1496
        %v1653 = vunpack.c.h.b16 %v1496
        %v1654 = vunpack.c.l.b16 %v1497
        %v1655 = vunpack.c.h.b16 %v1497
        %v1656 = vunpack.c.l.b16 %v1498
        %v1657 = vunpack.c.h.b16 %v1498
        %v1658 = vunpack.c.l.b16 %v1499
        %v1659 = vunpack.c.h.b16 %v1499
        %v1660 = vunpack.c.l.b16 %v1500
        %v1661 = vunpack.c.h.b16 %v1500
        %v1662 = vunpack.c.l.b16 %v1501
        %v1663 = vunpack.c.h.b16 %v1501
        %v1664 = vunpack.c.l.b16 %v1502
        %v1665 = vunpack.c.h.b16 %v1502
        %v1666 = vunpack.c.l.b16 %v1503
        %v1667 = vunpack.c.h.b16 %v1503
        %v1668 = vunpack.c.l.b16 %v1504
        %v1669 = vunpack.c.h.b16 %v1504
        %v1670 = vunpack.c.l.b16 %v1505
        %v1671 = vunpack.c.h.b16 %v1505
        %v1672 = vunpack.c.l.b16 %v1506
        %v1673 = vunpack.c.h.b16 %v1506
        %v1674 = vunpack.c.l.b16 %v1507
        %v1675 = vunpack.c.h.b16 %v1507
        %v1676 = vunpack.c.l.b16 %v1508
        %v1677 = vunpack.c.h.b16 %v1508
        %v1678 = vunpack.c.l.b16 %v1509
        %v1679 = vunpack.c.h.b16 %v1509
        %v1680 = vpack.c.b16 %v1580, %v1576
        %v1681 = vpack.c.b16 %v1581, %v1577
        %v1682 = vpack.c.b16 %v1582, %v1578
        %v1683 = vpack.c.b16 %v1583, %v1579
        %v1684 = vpack.c.b16 %v1588, %v1584
        %v1685 = vpack.c.b16 %v1589, %v1585
        %v1686 = vpack.c.b16 %v1590, %v1586
        %v1687 = vpack.c.b16 %v1591, %v1587
        %v1688 = vpack.c.b16 %v1596, %v1592
        %v1689 = vpack.c.b16 %v1597, %v1593
        %v1690 = vpack.c.b16 %v1598, %v1594
        %v1691 = vpack.c.b16 %v1599, %v1595
        %v1692 = vpack.c.b16 %v1604, %v1600
        %v1693 = vpack.c.b16 %v1605, %v1601
        %v1694 = vpack.c.b16 %v1606, %v1602
        %v1695 = vpack.c.b16 %v1607, %v1603
        %v1696 = vpack.c.b16 %v1612, %v1608
        %v1697 = vpack.c.b16 %v1613, %v1609
        %v1698 = vpack.c.b16 %v1614, %v1610
        %v1699 = vpack.c.b16 %v1615, %v1611
        %v1700 = vpack.c.b16 %v1620, %v1616
        %v1701 = vpack.c.b16 %v1621, %v1617
        %v1702 = vpack.c.b16 %v1622, %v1618
        %v1703 = vpack.c.b16 %v1623, %v1619
        %v1704 = vpack.c.b16 %v1628, %v1624
        %v1705 = vpack.c.b16 %v1629, %v1625
        %v1706 = vpack.c.b16 %v1630, %v1626
        %v1707 = vpack.c.b16 %v1631, %v1627
        %v1708 = vpack.c.b16 %v1636, %v1632
        %v1709 = vpack.c.b16 %v1637, %v1633
        %v1710 = vpack.c.b16 %v1638, %v1634
        %v1711 = vpack.c.b16 %v1639, %v1635
        %v1712 = vpack.c.b16 %v1644, %v1640
        %v1713 = vpack.c.b16 %v1645, %v1641
        %v1714 = vpack.c.b16 %v1646, %v1642
        %v1715 = vpack.c.b16 %v1647, %v1643
        %v1716 = vpack.c.b16 %v1652, %v1648
        %v1717 = vpack.c.b16 %v1653, %v1649
        %v1718 = vpack.c.b16 %v1654, %v1650
        %v1719 = vpack.c.b16 %v1655, %v1651
        %v1720 = vpack.c.b16 %v1660, %v1656
        %v1721 = vpack.c.b16 %v1661, %v1657
        %v1722 = vpack.c.b16 %v1662, %v1658
        %v1723 = vpack.c.b16 %v1663, %v1659
        %v1724 = vpack.c.b16 %v1668, %v1664
        %v1725 = vpack.c.b16 %v1669, %v1665
        %v1726 = vpack.c.b16 %v1670, %v1666
        %v1727 = vpack.c.b16 %v1671, %v1667
        %v1728 = vpack.c.b16 %v1676, %v1672
        %v1729 = vpack.c.b16 %v1677, %v1673
        %v1730 = vpack.c.b16 %v1678, %v1674
        %v1731 = vpack.c.b16 %v1679, %v1675
        %v1785 = vsel %vm600, %v1522, 0
        %1787 = vmatprep.subr.bf16.mxu0 %v1681
        %1788 = vmatpush1.bf16.msra.mxu0 %v1680
        %1789 = vmatprep.subr.bf16.mxu0 %v1685
        %1790 = vmatpush1.bf16.msra.mxu0 %v1684
        %1791 = vmatprep.subr.bf16.mxu0 %v1689
        %1792 = vmatpush1.bf16.msra.mxu0 %v1688
        %1793 = vmatprep.subr.bf16.mxu0 %v1693
        %1794 = vmatpush1.bf16.msra.mxu0 %v1692
        %1795 = vmatprep.subr.bf16.mxu0 %v1697
        %1796 = vmatpush1.bf16.msra.mxu0 %v1696
        %1797 = vmatprep.subr.bf16.mxu0 %v1701
        %1798 = vmatpush1.bf16.msra.mxu0 %v1700
        %1799 = vmatprep.subr.bf16.mxu0 %v1705
        %1800 = vmatpush1.bf16.msra.mxu0 %v1704
        %1801 = vmatprep.subr.bf16.mxu0 %v1709
        %1802 = vmatpush1.bf16.msra.mxu0 %v1708
        %1803 = vmatprep.subr.bf16.mxu0 %v1713
        %1804 = vmatpush1.bf16.msra.mxu0 %v1712
        %1805 = vmatprep.subr.bf16.mxu0 %v1717
        %1806 = vmatpush1.bf16.msra.mxu0 %v1716
        %1807 = vmatprep.subr.bf16.mxu0 %v1721
        %1808 = vmatpush1.bf16.msra.mxu0 %v1720
        %1809 = vmatprep.subr.bf16.mxu0 %v1725
        %1810 = vmatpush1.bf16.msra.mxu0 %v1724
        %1811 = vmatprep.subr.bf16.mxu0 %v1729
        %1812 = vmatpush1.bf16.msra.mxu0 %v1728
        %1813 = vmatprep.subr.bf16.mxu0 0
        %1814 = vmatpush1.bf16.msra.mxu0 0
        %1815 = vmatprep.subr.bf16.mxu0 0
        %1816 = vmatpush1.bf16.msra.mxu0 0
        %1817 = vmatprep.subr.bf16.mxu0 0
        %1818 = vmatpush1.bf16.msra.mxu0 0
        %1819 = vmatprep.mubr.bf16.mxu0 %v1785
        %1820 = vmatmul.mubr.bf16.gmra.mrb[0].mxu0 %v1516
        %v1821 = vpop.f32.mrb[0].mxu0
        %v1822 = vadd.f32 0.0, %v1821
        %v1823 = vpop.f32.mrb[0].mxu0
        %v1824 = vadd.f32 0.0, %v1823
        %v1825 = vpop.f32.mrb[0].mxu0
        %v1826 = vadd.f32 0.0, %v1825
        %v1827 = vpop.f32.mrb[0].mxu0
        %v1828 = vadd.f32 0.0, %v1827
        %1829 = vdwg.mxu0
        %1830 = vmatprep.subr.bf16.mxu0 %v1683
        %1831 = vmatpush1.bf16.msra.mxu0 %v1682
        %1832 = vmatprep.subr.bf16.mxu0 %v1687
        %1833 = vmatpush1.bf16.msra.mxu0 %v1686
        %1834 = vmatprep.subr.bf16.mxu0 %v1691
        %1835 = vmatpush1.bf16.msra.mxu0 %v1690
        %1836 = vmatprep.subr.bf16.mxu0 %v1695
        %1837 = vmatpush1.bf16.msra.mxu0 %v1694
        %1838 = vmatprep.subr.bf16.mxu0 %v1699
        %1839 = vmatpush1.bf16.msra.mxu0 %v1698
        %1840 = vmatprep.subr.bf16.mxu0 %v1703
        %1841 = vmatpush1.bf16.msra.mxu0 %v1702
        %1842 = vmatprep.subr.bf16.mxu0 %v1707
        %1843 = vmatpush1.bf16.msra.mxu0 %v1706
        %1844 = vmatprep.subr.bf16.mxu0 %v1711
        %1845 = vmatpush1.bf16.msra.mxu0 %v1710
        %1846 = vmatprep.subr.bf16.mxu0 %v1715
        %1847 = vmatpush1.bf16.msra.mxu0 %v1714
        %1848 = vmatprep.subr.bf16.mxu0 %v1719
        %1849 = vmatpush1.bf16.msra.mxu0 %v1718
        %1850 = vmatprep.subr.bf16.mxu0 %v1723
        %1851 = vmatpush1.bf16.msra.mxu0 %v1722
        %1852 = vmatprep.subr.bf16.mxu0 %v1727
        %1853 = vmatpush1.bf16.msra.mxu0 %v1726
        %1854 = vmatprep.subr.bf16.mxu0 %v1731
        %1855 = vmatpush1.bf16.msra.mxu0 %v1730
        %1856 = vmatprep.subr.bf16.mxu0 0
        %1857 = vmatpush1.bf16.msra.mxu0 0
        %1858 = vmatprep.subr.bf16.mxu0 0
        %1859 = vmatpush1.bf16.msra.mxu0 0
        %1860 = vmatprep.subr.bf16.mxu0 0
        %1861 = vmatpush1.bf16.msra.mxu0 0
        %1862 = vmatprep.mubr.bf16.mxu0 %v1785
        %1863 = vmatmul.mubr.bf16.gmra.mrb[0].mxu0 %v1516
        %v1864 = vpop.f32.mrb[0].mxu0
        %v1865 = vadd.f32 0.0, %v1864
        %v1866 = vpop.f32.mrb[0].mxu0
        %v1867 = vadd.f32 0.0, %v1866
        %v1868 = vpop.f32.mrb[0].mxu0
        %v1869 = vadd.f32 0.0, %v1868
        %v1870 = vpop.f32.mrb[0].mxu0
        %v1871 = vadd.f32 0.0, %v1870
        %1872 = vdwg.mxu0
        %v1873 = vadd.f32 %v1449, %v1822
        %v1874 = vadd.f32 %v1450, %v1824
        %v1875 = vadd.f32 %v1451, %v1865
        %v1876 = vadd.f32 %v1452, %v1867
        %v1877 = vadd.f32 %v1453, %v1826
        %v1878 = vadd.f32 %v1454, %v1828
        %v1879 = vadd.f32 %v1455, %v1869
        %v1880 = vadd.f32 %v1456, %v1871
        %s1881 = scalar_lea.vmem [#allocation5], 1664
        %v1882 = vld [vmem:[%s1881] sm:$0xff]
        %v1883 = vld [vmem:[%s1881 + $0x8] sm:$0xff]
        %v1884 = vld [vmem:[%s1881 + $0x10] sm:$0xff]
        %v1885 = vld [vmem:[%s1881 + $0x18] sm:$0xff]
        %v1886 = vld [vmem:[%s1881 + $0x20] sm:$0xff]
        %v1887 = vld [vmem:[%s1881 + $0x28] sm:$0xff]
        %v1888 = vld [vmem:[%s1881 + $0x30] sm:$0xff]
        %v1889 = vld [vmem:[%s1881 + $0x38] sm:$0xff]
        %v1890 = vld [vmem:[%s1881 + $0x40] sm:$0xff]
        %v1891 = vld [vmem:[%s1881 + $0x48] sm:$0xff]
        %v1892 = vld [vmem:[%s1881 + $0x50] sm:$0xff]
        %v1893 = vld [vmem:[%s1881 + $0x58] sm:$0xff]
        %v1894 = vld [vmem:[%s1881 + $0x60] sm:$0xff]
        %v1895 = vld [vmem:[%s1881 + $0x68] sm:$0xff]
        %v1896 = vld [vmem:[%s1881 + $0x70] sm:$0xff]
        %v1897 = vld [vmem:[%s1881 + $0x78] sm:$0xff]
        %v1898 = vld [vmem:[%s1881 + $0x80] sm:$0xff]
        %v1899 = vld [vmem:[%s1881 + $0x88] sm:$0xff]
        %v1900 = vld [vmem:[%s1881 + $0x90] sm:$0xff]
        %v1901 = vld [vmem:[%s1881 + $0x98] sm:$0xff]
        %v1902 = vld [vmem:[%s1881 + $0xa0] sm:$0xff]
        %v1903 = vld [vmem:[%s1881 + $0xa8] sm:$0xff]
        %v1904 = vld [vmem:[%s1881 + $0xb0] sm:$0xff]
        %v1905 = vld [vmem:[%s1881 + $0xb8] sm:$0xff]
        %v1906 = vld [vmem:[%s1881 + $0xc0] sm:$0xff]
        %v1907 = vld [vmem:[%s1881 + $0xc8] sm:$0xff]
        %v1908 = vld [vmem:[%s1881 + $0xd0] sm:$0xff]
        %v1909 = vld [vmem:[%s1881 + $0xd8] sm:$0xff]
        %v1910 = vld [vmem:[%s1881 + $0xe0] sm:$0xff]
        %v1911 = vld [vmem:[%s1881 + $0xe8] sm:$0xff]
        %v1912 = vld [vmem:[%s1881 + $0xf0] sm:$0xff]
        %v1913 = vld [vmem:[%s1881 + $0xf8] sm:$0xff]
        %v1914 = vld [vmem:[%s1881 + $0x100] sm:$0xff]
        %v1915 = vld [vmem:[%s1881 + $0x108] sm:$0xff]
        %v1916 = vld [vmem:[%s1881 + $0x110] sm:$0xff]
        %v1917 = vld [vmem:[%s1881 + $0x118] sm:$0xff]
        %v1918 = vld [vmem:[%s1881 + $0x120] sm:$0xff]
        %v1919 = vld [vmem:[%s1881 + $0x128] sm:$0xff]
        %v1920 = vld [vmem:[%s1881 + $0x130] sm:$0xff]
        %v1921 = vld [vmem:[%s1881 + $0x138] sm:$0xff]
        %v1922 = vld [vmem:[%s1881 + $0x140] sm:$0xff]
        %v1923 = vld [vmem:[%s1881 + $0x148] sm:$0xff]
        %v1924 = vld [vmem:[%s1881 + $0x150] sm:$0xff]
        %v1925 = vld [vmem:[%s1881 + $0x158] sm:$0xff]
        %v1926 = vld [vmem:[%s1881 + $0x160] sm:$0xff]
        %v1927 = vld [vmem:[%s1881 + $0x168] sm:$0xff]
        %v1928 = vld [vmem:[%s1881 + $0x170] sm:$0xff]
        %v1929 = vld [vmem:[%s1881 + $0x178] sm:$0xff]
        %v1930 = vld [vmem:[%s1881 + $0x180] sm:$0xff]
        %v1931 = vld [vmem:[%s1881 + $0x188] sm:$0xff]
        %v1932 = vld [vmem:[%s1881 + $0x190] sm:$0xff]
        %v1933 = vld [vmem:[%s1881 + $0x198] sm:$0xff]
        %1934 = vrot.lane.b32.xlu0 %v1516, 112
        %v1935 = vpop.permute.xlu0 %1934
        %1936 = vrot.lane.b32.xlu0 %v1522, 112
        %v1937 = vpop.permute.xlu0 %1936
        %v1938 = vsel %vm337, %v1935, %v1937
        %v1992 = vunpack.c.l.b16 %v1882
        %v1993 = vunpack.c.h.b16 %v1882
        %v1994 = vunpack.c.l.b16 %v1883
        %v1995 = vunpack.c.h.b16 %v1883
        %v1996 = vunpack.c.l.b16 %v1884
        %v1997 = vunpack.c.h.b16 %v1884
        %v1998 = vunpack.c.l.b16 %v1885
        %v1999 = vunpack.c.h.b16 %v1885
        %v2000 = vunpack.c.l.b16 %v1886
        %v2001 = vunpack.c.h.b16 %v1886
        %v2002 = vunpack.c.l.b16 %v1887
        %v2003 = vunpack.c.h.b16 %v1887
        %v2004 = vunpack.c.l.b16 %v1888
        %v2005 = vunpack.c.h.b16 %v1888
        %v2006 = vunpack.c.l.b16 %v1889
        %v2007 = vunpack.c.h.b16 %v1889
        %v2008 = vunpack.c.l.b16 %v1890
        %v2009 = vunpack.c.h.b16 %v1890
        %v2010 = vunpack.c.l.b16 %v1891
        %v2011 = vunpack.c.h.b16 %v1891
        %v2012 = vunpack.c.l.b16 %v1892
        %v2013 = vunpack.c.h.b16 %v1892
        %v2014 = vunpack.c.l.b16 %v1893
        %v2015 = vunpack.c.h.b16 %v1893
        %v2016 = vunpack.c.l.b16 %v1894
        %v2017 = vunpack.c.h.b16 %v1894
        %v2018 = vunpack.c.l.b16 %v1895
        %v2019 = vunpack.c.h.b16 %v1895
        %v2020 = vunpack.c.l.b16 %v1896
        %v2021 = vunpack.c.h.b16 %v1896
        %v2022 = vunpack.c.l.b16 %v1897
        %v2023 = vunpack.c.h.b16 %v1897
        %v2024 = vunpack.c.l.b16 %v1898
        %v2025 = vunpack.c.h.b16 %v1898
        %v2026 = vunpack.c.l.b16 %v1899
        %v2027 = vunpack.c.h.b16 %v1899
        %v2028 = vunpack.c.l.b16 %v1900
        %v2029 = vunpack.c.h.b16 %v1900
        %v2030 = vunpack.c.l.b16 %v1901
        %v2031 = vunpack.c.h.b16 %v1901
        %v2032 = vunpack.c.l.b16 %v1902
        %v2033 = vunpack.c.h.b16 %v1902
        %v2034 = vunpack.c.l.b16 %v1903
        %v2035 = vunpack.c.h.b16 %v1903
        %v2036 = vunpack.c.l.b16 %v1904
        %v2037 = vunpack.c.h.b16 %v1904
        %v2038 = vunpack.c.l.b16 %v1905
        %v2039 = vunpack.c.h.b16 %v1905
        %v2040 = vunpack.c.l.b16 %v1906
        %v2041 = vunpack.c.h.b16 %v1906
        %v2042 = vunpack.c.l.b16 %v1907
        %v2043 = vunpack.c.h.b16 %v1907
        %v2044 = vunpack.c.l.b16 %v1908
        %v2045 = vunpack.c.h.b16 %v1908
        %v2046 = vunpack.c.l.b16 %v1909
        %v2047 = vunpack.c.h.b16 %v1909
        %v2048 = vunpack.c.l.b16 %v1910
        %v2049 = vunpack.c.h.b16 %v1910
        %v2050 = vunpack.c.l.b16 %v1911
        %v2051 = vunpack.c.h.b16 %v1911
        %v2052 = vunpack.c.l.b16 %v1912
        %v2053 = vunpack.c.h.b16 %v1912
        %v2054 = vunpack.c.l.b16 %v1913
        %v2055 = vunpack.c.h.b16 %v1913
        %v2056 = vunpack.c.l.b16 %v1914
        %v2057 = vunpack.c.h.b16 %v1914
        %v2058 = vunpack.c.l.b16 %v1915
        %v2059 = vunpack.c.h.b16 %v1915
        %v2060 = vunpack.c.l.b16 %v1916
        %v2061 = vunpack.c.h.b16 %v1916
        %v2062 = vunpack.c.l.b16 %v1917
        %v2063 = vunpack.c.h.b16 %v1917
        %v2064 = vunpack.c.l.b16 %v1918
        %v2065 = vunpack.c.h.b16 %v1918
        %v2066 = vunpack.c.l.b16 %v1919
        %v2067 = vunpack.c.h.b16 %v1919
        %v2068 = vunpack.c.l.b16 %v1920
        %v2069 = vunpack.c.h.b16 %v1920
        %v2070 = vunpack.c.l.b16 %v1921
        %v2071 = vunpack.c.h.b16 %v1921
        %v2072 = vunpack.c.l.b16 %v1922
        %v2073 = vunpack.c.h.b16 %v1922
        %v2074 = vunpack.c.l.b16 %v1923
        %v2075 = vunpack.c.h.b16 %v1923
        %v2076 = vunpack.c.l.b16 %v1924
        %v2077 = vunpack.c.h.b16 %v1924
        %v2078 = vunpack.c.l.b16 %v1925
        %v2079 = vunpack.c.h.b16 %v1925
        %v2080 = vunpack.c.l.b16 %v1926
        %v2081 = vunpack.c.h.b16 %v1926
        %v2082 = vunpack.c.l.b16 %v1927
        %v2083 = vunpack.c.h.b16 %v1927
        %v2084 = vunpack.c.l.b16 %v1928
        %v2085 = vunpack.c.h.b16 %v1928
        %v2086 = vunpack.c.l.b16 %v1929
        %v2087 = vunpack.c.h.b16 %v1929
        %v2088 = vunpack.c.l.b16 %v1930
        %v2089 = vunpack.c.h.b16 %v1930
        %v2090 = vunpack.c.l.b16 %v1931
        %v2091 = vunpack.c.h.b16 %v1931
        %v2092 = vunpack.c.l.b16 %v1932
        %v2093 = vunpack.c.h.b16 %v1932
        %v2094 = vunpack.c.l.b16 %v1933
        %v2095 = vunpack.c.h.b16 %v1933
        %v2096 = vpack.c.b16 %v1996, %v1992
        %v2097 = vpack.c.b16 %v1997, %v1993
        %v2098 = vpack.c.b16 %v1998, %v1994
        %v2099 = vpack.c.b16 %v1999, %v1995
        %v2100 = vpack.c.b16 %v2004, %v2000
        %v2101 = vpack.c.b16 %v2005, %v2001
        %v2102 = vpack.c.b16 %v2006, %v2002
        %v2103 = vpack.c.b16 %v2007, %v2003
        %v2104 = vpack.c.b16 %v2012, %v2008
        %v2105 = vpack.c.b16 %v2013, %v2009
        %v2106 = vpack.c.b16 %v2014, %v2010
        %v2107 = vpack.c.b16 %v2015, %v2011
        %v2108 = vpack.c.b16 %v2020, %v2016
        %v2109 = vpack.c.b16 %v2021, %v2017
        %v2110 = vpack.c.b16 %v2022, %v2018
        %v2111 = vpack.c.b16 %v2023, %v2019
        %v2112 = vpack.c.b16 %v2028, %v2024
        %v2113 = vpack.c.b16 %v2029, %v2025
        %v2114 = vpack.c.b16 %v2030, %v2026
        %v2115 = vpack.c.b16 %v2031, %v2027
        %v2116 = vpack.c.b16 %v2036, %v2032
        %v2117 = vpack.c.b16 %v2037, %v2033
        %v2118 = vpack.c.b16 %v2038, %v2034
        %v2119 = vpack.c.b16 %v2039, %v2035
        %v2120 = vpack.c.b16 %v2044, %v2040
        %v2121 = vpack.c.b16 %v2045, %v2041
        %v2122 = vpack.c.b16 %v2046, %v2042
        %v2123 = vpack.c.b16 %v2047, %v2043
        %v2124 = vpack.c.b16 %v2052, %v2048
        %v2125 = vpack.c.b16 %v2053, %v2049
        %v2126 = vpack.c.b16 %v2054, %v2050
        %v2127 = vpack.c.b16 %v2055, %v2051
        %v2128 = vpack.c.b16 %v2060, %v2056
        %v2129 = vpack.c.b16 %v2061, %v2057
        %v2130 = vpack.c.b16 %v2062, %v2058
        %v2131 = vpack.c.b16 %v2063, %v2059
        %v2132 = vpack.c.b16 %v2068, %v2064
        %v2133 = vpack.c.b16 %v2069, %v2065
        %v2134 = vpack.c.b16 %v2070, %v2066
        %v2135 = vpack.c.b16 %v2071, %v2067
        %v2136 = vpack.c.b16 %v2076, %v2072
        %v2137 = vpack.c.b16 %v2077, %v2073
        %v2138 = vpack.c.b16 %v2078, %v2074
        %v2139 = vpack.c.b16 %v2079, %v2075
        %v2140 = vpack.c.b16 %v2084, %v2080
        %v2141 = vpack.c.b16 %v2085, %v2081
        %v2142 = vpack.c.b16 %v2086, %v2082
        %v2143 = vpack.c.b16 %v2087, %v2083
        %v2144 = vpack.c.b16 %v2092, %v2088
        %v2145 = vpack.c.b16 %v2093, %v2089
        %v2146 = vpack.c.b16 %v2094, %v2090
        %v2147 = vpack.c.b16 %v2095, %v2091
        %v2201 = vsel %vm600, %v1937, 0
        %2203 = vmatprep.subr.bf16.mxu0 %v2097
        %2204 = vmatpush1.bf16.msra.mxu0 %v2096
        %2205 = vmatprep.subr.bf16.mxu0 %v2101
        %2206 = vmatpush1.bf16.msra.mxu0 %v2100
        %2207 = vmatprep.subr.bf16.mxu0 %v2105
        %2208 = vmatpush1.bf16.msra.mxu0 %v2104
        %2209 = vmatprep.subr.bf16.mxu0 %v2109
        %2210 = vmatpush1.bf16.msra.mxu0 %v2108
        %2211 = vmatprep.subr.bf16.mxu0 %v2113
        %2212 = vmatpush1.bf16.msra.mxu0 %v2112
        %2213 = vmatprep.subr.bf16.mxu0 %v2117
        %2214 = vmatpush1.bf16.msra.mxu0 %v2116
        %2215 = vmatprep.subr.bf16.mxu0 %v2121
        %2216 = vmatpush1.bf16.msra.mxu0 %v2120
        %2217 = vmatprep.subr.bf16.mxu0 %v2125
        %2218 = vmatpush1.bf16.msra.mxu0 %v2124
        %2219 = vmatprep.subr.bf16.mxu0 %v2129
        %2220 = vmatpush1.bf16.msra.mxu0 %v2128
        %2221 = vmatprep.subr.bf16.mxu0 %v2133
        %2222 = vmatpush1.bf16.msra.mxu0 %v2132
        %2223 = vmatprep.subr.bf16.mxu0 %v2137
        %2224 = vmatpush1.bf16.msra.mxu0 %v2136
        %2225 = vmatprep.subr.bf16.mxu0 %v2141
        %2226 = vmatpush1.bf16.msra.mxu0 %v2140
        %2227 = vmatprep.subr.bf16.mxu0 %v2145
        %2228 = vmatpush1.bf16.msra.mxu0 %v2144
        %2229 = vmatprep.subr.bf16.mxu0 0
        %2230 = vmatpush1.bf16.msra.mxu0 0
        %2231 = vmatprep.subr.bf16.mxu0 0
        %2232 = vmatpush1.bf16.msra.mxu0 0
        %2233 = vmatprep.subr.bf16.mxu0 0
        %2234 = vmatpush1.bf16.msra.mxu0 0
        %2235 = vmatprep.mubr.bf16.mxu0 %v2201
        %2236 = vmatmul.mubr.bf16.gmra.mrb[0].mxu0 %v1938
        %v2237 = vpop.f32.mrb[0].mxu0
        %v2238 = vadd.f32 0.0, %v2237
        %v2239 = vpop.f32.mrb[0].mxu0
        %v2240 = vadd.f32 0.0, %v2239
        %v2241 = vpop.f32.mrb[0].mxu0
        %v2242 = vadd.f32 0.0, %v2241
        %v2243 = vpop.f32.mrb[0].mxu0
        %v2244 = vadd.f32 0.0, %v2243
        %2245 = vdwg.mxu0
        %2246 = vmatprep.subr.bf16.mxu0 %v2099
        %2247 = vmatpush1.bf16.msra.mxu0 %v2098
        %2248 = vmatprep.subr.bf16.mxu0 %v2103
        %2249 = vmatpush1.bf16.msra.mxu0 %v2102
        %2250 = vmatprep.subr.bf16.mxu0 %v2107
        %2251 = vmatpush1.bf16.msra.mxu0 %v2106
        %2252 = vmatprep.subr.bf16.mxu0 %v2111
        %2253 = vmatpush1.bf16.msra.mxu0 %v2110
        %2254 = vmatprep.subr.bf16.mxu0 %v2115
        %2255 = vmatpush1.bf16.msra.mxu0 %v2114
        %2256 = vmatprep.subr.bf16.mxu0 %v2119
        %2257 = vmatpush1.bf16.msra.mxu0 %v2118
        %2258 = vmatprep.subr.bf16.mxu0 %v2123
        %2259 = vmatpush1.bf16.msra.mxu0 %v2122
        %2260 = vmatprep.subr.bf16.mxu0 %v2127
        %2261 = vmatpush1.bf16.msra.mxu0 %v2126
        %2262 = vmatprep.subr.bf16.mxu0 %v2131
        %2263 = vmatpush1.bf16.msra.mxu0 %v2130
        %2264 = vmatprep.subr.bf16.mxu0 %v2135
        %2265 = vmatpush1.bf16.msra.mxu0 %v2134
        %2266 = vmatprep.subr.bf16.mxu0 %v2139
        %2267 = vmatpush1.bf16.msra.mxu0 %v2138
        %2268 = vmatprep.subr.bf16.mxu0 %v2143
        %2269 = vmatpush1.bf16.msra.mxu0 %v2142
        %2270 = vmatprep.subr.bf16.mxu0 %v2147
        %2271 = vmatpush1.bf16.msra.mxu0 %v2146
        %2272 = vmatprep.subr.bf16.mxu0 0
        %2273 = vmatpush1.bf16.msra.mxu0 0
        %2274 = vmatprep.subr.bf16.mxu0 0
        %2275 = vmatpush1.bf16.msra.mxu0 0
        %2276 = vmatprep.subr.bf16.mxu0 0
        %2277 = vmatpush1.bf16.msra.mxu0 0
        %2278 = vmatprep.mubr.bf16.mxu0 %v2201
        %2279 = vmatmul.mubr.bf16.gmra.mrb[0].mxu0 %v1938
        %v2280 = vpop.f32.mrb[0].mxu0
        %v2281 = vadd.f32 0.0, %v2280
        %v2282 = vpop.f32.mrb[0].mxu0
        %v2283 = vadd.f32 0.0, %v2282
        %v2284 = vpop.f32.mrb[0].mxu0
        %v2285 = vadd.f32 0.0, %v2284
        %v2286 = vpop.f32.mrb[0].mxu0
        %v2287 = vadd.f32 0.0, %v2286
        %2288 = vdwg.mxu0
        %v2289 = vadd.f32 %v1873, %v2238
        %v2290 = vadd.f32 %v1874, %v2240
        %v2291 = vadd.f32 %v1875, %v2281
        %v2292 = vadd.f32 %v1876, %v2283
        %v2293 = vadd.f32 %v1877, %v2242
        %v2294 = vadd.f32 %v1878, %v2244
        %v2295 = vadd.f32 %v1879, %v2285
        %v2296 = vadd.f32 %v1880, %v2287
        %s2297 = scalar_lea.vmem [#allocation5], 2080
        %v2298 = vld [vmem:[%s2297] sm:$0xff]
        %v2299 = vld [vmem:[%s2297 + $0x8] sm:$0xff]
        %v2300 = vld [vmem:[%s2297 + $0x10] sm:$0xff]
        %v2301 = vld [vmem:[%s2297 + $0x18] sm:$0xff]
        %v2302 = vld [vmem:[%s2297 + $0x20] sm:$0xff]
        %v2303 = vld [vmem:[%s2297 + $0x28] sm:$0xff]
        %v2304 = vld [vmem:[%s2297 + $0x30] sm:$0xff]
        %v2305 = vld [vmem:[%s2297 + $0x38] sm:$0xff]
        %v2306 = vld [vmem:[%s2297 + $0x40] sm:$0xff]
        %v2307 = vld [vmem:[%s2297 + $0x48] sm:$0xff]
        %v2308 = vld [vmem:[%s2297 + $0x50] sm:$0xff]
        %v2309 = vld [vmem:[%s2297 + $0x58] sm:$0xff]
        %v2310 = vld [vmem:[%s2297 + $0x60] sm:$0xff]
        %v2311 = vld [vmem:[%s2297 + $0x68] sm:$0xff]
        %v2312 = vld [vmem:[%s2297 + $0x70] sm:$0xff]
        %v2313 = vld [vmem:[%s2297 + $0x78] sm:$0xff]
        %v2314 = vld [vmem:[%s2297 + $0x80] sm:$0xff]
        %v2315 = vld [vmem:[%s2297 + $0x88] sm:$0xff]
        %v2316 = vld [vmem:[%s2297 + $0x90] sm:$0xff]
        %v2317 = vld [vmem:[%s2297 + $0x98] sm:$0xff]
        %v2318 = vld [vmem:[%s2297 + $0xa0] sm:$0xff]
        %v2319 = vld [vmem:[%s2297 + $0xa8] sm:$0xff]
        %v2320 = vld [vmem:[%s2297 + $0xb0] sm:$0xff]
        %v2321 = vld [vmem:[%s2297 + $0xb8] sm:$0xff]
        %v2322 = vld [vmem:[%s2297 + $0xc0] sm:$0xff]
        %v2323 = vld [vmem:[%s2297 + $0xc8] sm:$0xff]
        %v2324 = vld [vmem:[%s2297 + $0xd0] sm:$0xff]
        %v2325 = vld [vmem:[%s2297 + $0xd8] sm:$0xff]
        %v2326 = vld [vmem:[%s2297 + $0xe0] sm:$0xff]
        %v2327 = vld [vmem:[%s2297 + $0xe8] sm:$0xff]
        %v2328 = vld [vmem:[%s2297 + $0xf0] sm:$0xff]
        %v2329 = vld [vmem:[%s2297 + $0xf8] sm:$0xff]
        %v2330 = vld [vmem:[%s2297 + $0x100] sm:$0xff]
        %v2331 = vld [vmem:[%s2297 + $0x108] sm:$0xff]
        %v2332 = vld [vmem:[%s2297 + $0x110] sm:$0xff]
        %v2333 = vld [vmem:[%s2297 + $0x118] sm:$0xff]
        %v2334 = vld [vmem:[%s2297 + $0x120] sm:$0xff]
        %v2335 = vld [vmem:[%s2297 + $0x128] sm:$0xff]
        %v2336 = vld [vmem:[%s2297 + $0x130] sm:$0xff]
        %v2337 = vld [vmem:[%s2297 + $0x138] sm:$0xff]
        %v2338 = vld [vmem:[%s2297 + $0x140] sm:$0xff]
        %v2339 = vld [vmem:[%s2297 + $0x148] sm:$0xff]
        %v2340 = vld [vmem:[%s2297 + $0x150] sm:$0xff]
        %v2341 = vld [vmem:[%s2297 + $0x158] sm:$0xff]
        %v2342 = vld [vmem:[%s2297 + $0x160] sm:$0xff]
        %v2343 = vld [vmem:[%s2297 + $0x168] sm:$0xff]
        %v2344 = vld [vmem:[%s2297 + $0x170] sm:$0xff]
        %v2345 = vld [vmem:[%s2297 + $0x178] sm:$0xff]
        %v2346 = vld [vmem:[%s2297 + $0x180] sm:$0xff]
        %v2347 = vld [vmem:[%s2297 + $0x188] sm:$0xff]
        %v2348 = vld [vmem:[%s2297 + $0x190] sm:$0xff]
        %v2349 = vld [vmem:[%s2297 + $0x198] sm:$0xff]
        %2350 = vrot.lane.b32.xlu0 %v1516, 96
        %v2351 = vpop.permute.xlu0 %2350
        %2352 = vrot.lane.b32.xlu0 %v1522, 96
        %v2353 = vpop.permute.xlu0 %2352
        %v2354 = vsel %vm1097, %v2351, %v2353
        %v2408 = vunpack.c.l.b16 %v2298
        %v2409 = vunpack.c.h.b16 %v2298
        %v2410 = vunpack.c.l.b16 %v2299
        %v2411 = vunpack.c.h.b16 %v2299
        %v2412 = vunpack.c.l.b16 %v2300
        %v2413 = vunpack.c.h.b16 %v2300
        %v2414 = vunpack.c.l.b16 %v2301
        %v2415 = vunpack.c.h.b16 %v2301
        %v2416 = vunpack.c.l.b16 %v2302
        %v2417 = vunpack.c.h.b16 %v2302
        %v2418 = vunpack.c.l.b16 %v2303
        %v2419 = vunpack.c.h.b16 %v2303
        %v2420 = vunpack.c.l.b16 %v2304
        %v2421 = vunpack.c.h.b16 %v2304
        %v2422 = vunpack.c.l.b16 %v2305
        %v2423 = vunpack.c.h.b16 %v2305
        %v2424 = vunpack.c.l.b16 %v2306
        %v2425 = vunpack.c.h.b16 %v2306
        %v2426 = vunpack.c.l.b16 %v2307
        %v2427 = vunpack.c.h.b16 %v2307
        %v2428 = vunpack.c.l.b16 %v2308
        %v2429 = vunpack.c.h.b16 %v2308
        %v2430 = vunpack.c.l.b16 %v2309
        %v2431 = vunpack.c.h.b16 %v2309
        %v2432 = vunpack.c.l.b16 %v2310
        %v2433 = vunpack.c.h.b16 %v2310
        %v2434 = vunpack.c.l.b16 %v2311
        %v2435 = vunpack.c.h.b16 %v2311
        %v2436 = vunpack.c.l.b16 %v2312
        %v2437 = vunpack.c.h.b16 %v2312
        %v2438 = vunpack.c.l.b16 %v2313
        %v2439 = vunpack.c.h.b16 %v2313
        %v2440 = vunpack.c.l.b16 %v2314
        %v2441 = vunpack.c.h.b16 %v2314
        %v2442 = vunpack.c.l.b16 %v2315
        %v2443 = vunpack.c.h.b16 %v2315
        %v2444 = vunpack.c.l.b16 %v2316
        %v2445 = vunpack.c.h.b16 %v2316
        %v2446 = vunpack.c.l.b16 %v2317
        %v2447 = vunpack.c.h.b16 %v2317
        %v2448 = vunpack.c.l.b16 %v2318
        %v2449 = vunpack.c.h.b16 %v2318
        %v2450 = vunpack.c.l.b16 %v2319
        %v2451 = vunpack.c.h.b16 %v2319
        %v2452 = vunpack.c.l.b16 %v2320
        %v2453 = vunpack.c.h.b16 %v2320
        %v2454 = vunpack.c.l.b16 %v2321
        %v2455 = vunpack.c.h.b16 %v2321
        %v2456 = vunpack.c.l.b16 %v2322
        %v2457 = vunpack.c.h.b16 %v2322
        %v2458 = vunpack.c.l.b16 %v2323
        %v2459 = vunpack.c.h.b16 %v2323
        %v2460 = vunpack.c.l.b16 %v2324
        %v2461 = vunpack.c.h.b16 %v2324
        %v2462 = vunpack.c.l.b16 %v2325
        %v2463 = vunpack.c.h.b16 %v2325
        %v2464 = vunpack.c.l.b16 %v2326
        %v2465 = vunpack.c.h.b16 %v2326
        %v2466 = vunpack.c.l.b16 %v2327
        %v2467 = vunpack.c.h.b16 %v2327
        %v2468 = vunpack.c.l.b16 %v2328
        %v2469 = vunpack.c.h.b16 %v2328
        %v2470 = vunpack.c.l.b16 %v2329
        %v2471 = vunpack.c.h.b16 %v2329
        %v2472 = vunpack.c.l.b16 %v2330
        %v2473 = vunpack.c.h.b16 %v2330
        %v2474 = vunpack.c.l.b16 %v2331
        %v2475 = vunpack.c.h.b16 %v2331
        %v2476 = vunpack.c.l.b16 %v2332
        %v2477 = vunpack.c.h.b16 %v2332
        %v2478 = vunpack.c.l.b16 %v2333
        %v2479 = vunpack.c.h.b16 %v2333
        %v2480 = vunpack.c.l.b16 %v2334
        %v2481 = vunpack.c.h.b16 %v2334
        %v2482 = vunpack.c.l.b16 %v2335
        %v2483 = vunpack.c.h.b16 %v2335
        %v2484 = vunpack.c.l.b16 %v2336
        %v2485 = vunpack.c.h.b16 %v2336
        %v2486 = vunpack.c.l.b16 %v2337
        %v2487 = vunpack.c.h.b16 %v2337
        %v2488 = vunpack.c.l.b16 %v2338
        %v2489 = vunpack.c.h.b16 %v2338
        %v2490 = vunpack.c.l.b16 %v2339
        %v2491 = vunpack.c.h.b16 %v2339
        %v2492 = vunpack.c.l.b16 %v2340
        %v2493 = vunpack.c.h.b16 %v2340
        %v2494 = vunpack.c.l.b16 %v2341
        %v2495 = vunpack.c.h.b16 %v2341
        %v2496 = vunpack.c.l.b16 %v2342
        %v2497 = vunpack.c.h.b16 %v2342
        %v2498 = vunpack.c.l.b16 %v2343
        %v2499 = vunpack.c.h.b16 %v2343
        %v2500 = vunpack.c.l.b16 %v2344
        %v2501 = vunpack.c.h.b16 %v2344
        %v2502 = vunpack.c.l.b16 %v2345
        %v2503 = vunpack.c.h.b16 %v2345
        %v2504 = vunpack.c.l.b16 %v2346
        %v2505 = vunpack.c.h.b16 %v2346
        %v2506 = vunpack.c.l.b16 %v2347
        %v2507 = vunpack.c.h.b16 %v2347
        %v2508 = vunpack.c.l.b16 %v2348
        %v2509 = vunpack.c.h.b16 %v2348
        %v2510 = vunpack.c.l.b16 %v2349
        %v2511 = vunpack.c.h.b16 %v2349
        %v2512 = vpack.c.b16 %v2412, %v2408
        %v2513 = vpack.c.b16 %v2413, %v2409
        %v2514 = vpack.c.b16 %v2414, %v2410
        %v2515 = vpack.c.b16 %v2415, %v2411
        %v2516 = vpack.c.b16 %v2420, %v2416
        %v2517 = vpack.c.b16 %v2421, %v2417
        %v2518 = vpack.c.b16 %v2422, %v2418
        %v2519 = vpack.c.b16 %v2423, %v2419
        %v2520 = vpack.c.b16 %v2428, %v2424
        %v2521 = vpack.c.b16 %v2429, %v2425
        %v2522 = vpack.c.b16 %v2430, %v2426
        %v2523 = vpack.c.b16 %v2431, %v2427
        %v2524 = vpack.c.b16 %v2436, %v2432
        %v2525 = vpack.c.b16 %v2437, %v2433
        %v2526 = vpack.c.b16 %v2438, %v2434
        %v2527 = vpack.c.b16 %v2439, %v2435
        %v2528 = vpack.c.b16 %v2444, %v2440
        %v2529 = vpack.c.b16 %v2445, %v2441
        %v2530 = vpack.c.b16 %v2446, %v2442
        %v2531 = vpack.c.b16 %v2447, %v2443
        %v2532 = vpack.c.b16 %v2452, %v2448
        %v2533 = vpack.c.b16 %v2453, %v2449
        %v2534 = vpack.c.b16 %v2454, %v2450
        %v2535 = vpack.c.b16 %v2455, %v2451
        %v2536 = vpack.c.b16 %v2460, %v2456
        %v2537 = vpack.c.b16 %v2461, %v2457
        %v2538 = vpack.c.b16 %v2462, %v2458
        %v2539 = vpack.c.b16 %v2463, %v2459
        %v2540 = vpack.c.b16 %v2468, %v2464
        %v2541 = vpack.c.b16 %v2469, %v2465
        %v2542 = vpack.c.b16 %v2470, %v2466
        %v2543 = vpack.c.b16 %v2471, %v2467
        %v2544 = vpack.c.b16 %v2476, %v2472
        %v2545 = vpack.c.b16 %v2477, %v2473
        %v2546 = vpack.c.b16 %v2478, %v2474
        %v2547 = vpack.c.b16 %v2479, %v2475
        %v2548 = vpack.c.b16 %v2484, %v2480
        %v2549 = vpack.c.b16 %v2485, %v2481
        %v2550 = vpack.c.b16 %v2486, %v2482
        %v2551 = vpack.c.b16 %v2487, %v2483
        %v2552 = vpack.c.b16 %v2492, %v2488
        %v2553 = vpack.c.b16 %v2493, %v2489
        %v2554 = vpack.c.b16 %v2494, %v2490
        %v2555 = vpack.c.b16 %v2495, %v2491
        %v2556 = vpack.c.b16 %v2500, %v2496
        %v2557 = vpack.c.b16 %v2501, %v2497
        %v2558 = vpack.c.b16 %v2502, %v2498
        %v2559 = vpack.c.b16 %v2503, %v2499
        %v2560 = vpack.c.b16 %v2508, %v2504
        %v2561 = vpack.c.b16 %v2509, %v2505
        %v2562 = vpack.c.b16 %v2510, %v2506
        %v2563 = vpack.c.b16 %v2511, %v2507
        %v2617 = vsel %vm600, %v2353, 0
        %2619 = vmatprep.subr.bf16.mxu0 %v2513
        %2620 = vmatpush1.bf16.msra.mxu0 %v2512
        %2621 = vmatprep.subr.bf16.mxu0 %v2517
        %2622 = vmatpush1.bf16.msra.mxu0 %v2516
        %2623 = vmatprep.subr.bf16.mxu0 %v2521
        %2624 = vmatpush1.bf16.msra.mxu0 %v2520
        %2625 = vmatprep.subr.bf16.mxu0 %v2525
        %2626 = vmatpush1.bf16.msra.mxu0 %v2524
        %2627 = vmatprep.subr.bf16.mxu0 %v2529
        %2628 = vmatpush1.bf16.msra.mxu0 %v2528
        %2629 = vmatprep.subr.bf16.mxu0 %v2533
        %2630 = vmatpush1.bf16.msra.mxu0 %v2532
        %2631 = vmatprep.subr.bf16.mxu0 %v2537
        %2632 = vmatpush1.bf16.msra.mxu0 %v2536
        %2633 = vmatprep.subr.bf16.mxu0 %v2541
        %2634 = vmatpush1.bf16.msra.mxu0 %v2540
        %2635 = vmatprep.subr.bf16.mxu0 %v2545
        %2636 = vmatpush1.bf16.msra.mxu0 %v2544
        %2637 = vmatprep.subr.bf16.mxu0 %v2549
        %2638 = vmatpush1.bf16.msra.mxu0 %v2548
        %2639 = vmatprep.subr.bf16.mxu0 %v2553
        %2640 = vmatpush1.bf16.msra.mxu0 %v2552
        %2641 = vmatprep.subr.bf16.mxu0 %v2557
        %2642 = vmatpush1.bf16.msra.mxu0 %v2556
        %2643 = vmatprep.subr.bf16.mxu0 %v2561
        %2644 = vmatpush1.bf16.msra.mxu0 %v2560
        %2645 = vmatprep.subr.bf16.mxu0 0
        %2646 = vmatpush1.bf16.msra.mxu0 0
        %2647 = vmatprep.subr.bf16.mxu0 0
        %2648 = vmatpush1.bf16.msra.mxu0 0
        %2649 = vmatprep.subr.bf16.mxu0 0
        %2650 = vmatpush1.bf16.msra.mxu0 0
        %2651 = vmatprep.mubr.bf16.mxu0 %v2617
        %2652 = vmatmul.mubr.bf16.gmra.mrb[0].mxu0 %v2354
        %v2653 = vpop.f32.mrb[0].mxu0
        %v2654 = vadd.f32 0.0, %v2653
        %v2655 = vpop.f32.mrb[0].mxu0
        %v2656 = vadd.f32 0.0, %v2655
        %v2657 = vpop.f32.mrb[0].mxu0
        %v2658 = vadd.f32 0.0, %v2657
        %v2659 = vpop.f32.mrb[0].mxu0
        %v2660 = vadd.f32 0.0, %v2659
        %2661 = vdwg.mxu0
        %2662 = vmatprep.subr.bf16.mxu0 %v2515
        %2663 = vmatpush1.bf16.msra.mxu0 %v2514
        %2664 = vmatprep.subr.bf16.mxu0 %v2519
        %2665 = vmatpush1.bf16.msra.mxu0 %v2518
        %2666 = vmatprep.subr.bf16.mxu0 %v2523
        %2667 = vmatpush1.bf16.msra.mxu0 %v2522
        %2668 = vmatprep.subr.bf16.mxu0 %v2527
        %2669 = vmatpush1.bf16.msra.mxu0 %v2526
        %2670 = vmatprep.subr.bf16.mxu0 %v2531
        %2671 = vmatpush1.bf16.msra.mxu0 %v2530
        %2672 = vmatprep.subr.bf16.mxu0 %v2535
        %2673 = vmatpush1.bf16.msra.mxu0 %v2534
        %2674 = vmatprep.subr.bf16.mxu0 %v2539
        %2675 = vmatpush1.bf16.msra.mxu0 %v2538
        %2676 = vmatprep.subr.bf16.mxu0 %v2543
        %2677 = vmatpush1.bf16.msra.mxu0 %v2542
        %2678 = vmatprep.subr.bf16.mxu0 %v2547
        %2679 = vmatpush1.bf16.msra.mxu0 %v2546
        %2680 = vmatprep.subr.bf16.mxu0 %v2551
        %2681 = vmatpush1.bf16.msra.mxu0 %v2550
        %2682 = vmatprep.subr.bf16.mxu0 %v2555
        %2683 = vmatpush1.bf16.msra.mxu0 %v2554
        %2684 = vmatprep.subr.bf16.mxu0 %v2559
        %2685 = vmatpush1.bf16.msra.mxu0 %v2558
        %2686 = vmatprep.subr.bf16.mxu0 %v2563
        %2687 = vmatpush1.bf16.msra.mxu0 %v2562
        %2688 = vmatprep.subr.bf16.mxu0 0
        %2689 = vmatpush1.bf16.msra.mxu0 0
        %2690 = vmatprep.subr.bf16.mxu0 0
        %2691 = vmatpush1.bf16.msra.mxu0 0
        %2692 = vmatprep.subr.bf16.mxu0 0
        %2693 = vmatpush1.bf16.msra.mxu0 0
        %2694 = vmatprep.mubr.bf16.mxu0 %v2617
        %2695 = vmatmul.mubr.bf16.gmra.mrb[0].mxu0 %v2354
        %v2696 = vpop.f32.mrb[0].mxu0
        %v2697 = vadd.f32 0.0, %v2696
        %v2698 = vpop.f32.mrb[0].mxu0
        %v2699 = vadd.f32 0.0, %v2698
        %v2700 = vpop.f32.mrb[0].mxu0
        %v2701 = vadd.f32 0.0, %v2700
        %v2702 = vpop.f32.mrb[0].mxu0
        %v2703 = vadd.f32 0.0, %v2702
        %2704 = vdwg.mxu0
        %v2705 = vadd.f32 %v2289, %v2654
        %v2706 = vadd.f32 %v2290, %v2656
        %v2707 = vadd.f32 %v2291, %v2697
        %v2708 = vadd.f32 %v2292, %v2699
        %v2709 = vadd.f32 %v2293, %v2658
        %v2710 = vadd.f32 %v2294, %v2660
        %v2711 = vadd.f32 %v2295, %v2701
        %v2712 = vadd.f32 %v2296, %v2703
        %v2713 = vld [vmem:[%s185] sm:$0xee]
        %v2714 = vld [vmem:[%s185 + $0x8] sm:$0xff]
        %s2715 = scalar_lea.vmem [#allocation5], 2496
        %v2716 = vld [vmem:[%s2715] sm:$0xff]
        %v2717 = vld [vmem:[%s2715 + $0x8] sm:$0xff]
        %v2718 = vld [vmem:[%s2715 + $0x10] sm:$0xff]
        %v2719 = vld [vmem:[%s2715 + $0x18] sm:$0xff]
        %v2720 = vld [vmem:[%s2715 + $0x20] sm:$0xff]
        %v2721 = vld [vmem:[%s2715 + $0x28] sm:$0xff]
        %v2722 = vld [vmem:[%s2715 + $0x30] sm:$0xff]
        %v2723 = vld [vmem:[%s2715 + $0x38] sm:$0xff]
        %v2724 = vld [vmem:[%s2715 + $0x40] sm:$0xff]
        %v2725 = vld [vmem:[%s2715 + $0x48] sm:$0xff]
        %v2726 = vld [vmem:[%s2715 + $0x50] sm:$0xff]
        %v2727 = vld [vmem:[%s2715 + $0x58] sm:$0xff]
        %v2728 = vld [vmem:[%s2715 + $0x60] sm:$0xff]
        %v2729 = vld [vmem:[%s2715 + $0x68] sm:$0xff]
        %v2730 = vld [vmem:[%s2715 + $0x70] sm:$0xff]
        %v2731 = vld [vmem:[%s2715 + $0x78] sm:$0xff]
        %v2732 = vld [vmem:[%s2715 + $0x80] sm:$0xff]
        %v2733 = vld [vmem:[%s2715 + $0x88] sm:$0xff]
        %v2734 = vld [vmem:[%s2715 + $0x90] sm:$0xff]
        %v2735 = vld [vmem:[%s2715 + $0x98] sm:$0xff]
        %v2736 = vld [vmem:[%s2715 + $0xa0] sm:$0xff]
        %v2737 = vld [vmem:[%s2715 + $0xa8] sm:$0xff]
        %v2738 = vld [vmem:[%s2715 + $0xb0] sm:$0xff]
        %v2739 = vld [vmem:[%s2715 + $0xb8] sm:$0xff]
        %v2740 = vld [vmem:[%s2715 + $0xc0] sm:$0xff]
        %v2741 = vld [vmem:[%s2715 + $0xc8] sm:$0xff]
        %v2742 = vld [vmem:[%s2715 + $0xd0] sm:$0xff]
        %v2743 = vld [vmem:[%s2715 + $0xd8] sm:$0xff]
        %v2744 = vld [vmem:[%s2715 + $0xe0] sm:$0xff]
        %v2745 = vld [vmem:[%s2715 + $0xe8] sm:$0xff]
        %v2746 = vld [vmem:[%s2715 + $0xf0] sm:$0xff]
        %v2747 = vld [vmem:[%s2715 + $0xf8] sm:$0xff]
        %v2748 = vld [vmem:[%s2715 + $0x100] sm:$0xff]
        %v2749 = vld [vmem:[%s2715 + $0x108] sm:$0xff]
        %v2750 = vld [vmem:[%s2715 + $0x110] sm:$0xff]
        %v2751 = vld [vmem:[%s2715 + $0x118] sm:$0xff]
        %v2752 = vld [vmem:[%s2715 + $0x120] sm:$0xff]
        %v2753 = vld [vmem:[%s2715 + $0x128] sm:$0xff]
        %v2754 = vld [vmem:[%s2715 + $0x130] sm:$0xff]
        %v2755 = vld [vmem:[%s2715 + $0x138] sm:$0xff]
        %v2756 = vld [vmem:[%s2715 + $0x140] sm:$0xff]
        %v2757 = vld [vmem:[%s2715 + $0x148] sm:$0xff]
        %v2758 = vld [vmem:[%s2715 + $0x150] sm:$0xff]
        %v2759 = vld [vmem:[%s2715 + $0x158] sm:$0xff]
        %v2760 = vld [vmem:[%s2715 + $0x160] sm:$0xff]
        %v2761 = vld [vmem:[%s2715 + $0x168] sm:$0xff]
        %v2762 = vld [vmem:[%s2715 + $0x170] sm:$0xff]
        %v2763 = vld [vmem:[%s2715 + $0x178] sm:$0xff]
        %v2764 = vld [vmem:[%s2715 + $0x180] sm:$0xff]
        %v2765 = vld [vmem:[%s2715 + $0x188] sm:$0xff]
        %v2766 = vld [vmem:[%s2715 + $0x190] sm:$0xff]
        %v2767 = vld [vmem:[%s2715 + $0x198] sm:$0xff]
        %v2770 = vunpack.c.l.b16 %v2713
        %v2771 = vunpack.c.h.b16 %v2713
        %v2772 = vunpack.c.l.b16 %v2714
        %v2773 = vunpack.c.h.b16 %v2714
        %v2774 = vpack.c.b16 %v2772, %v2770
        %v2775 = vpack.c.b16 %v2773, %v2771
        %v2776 = vrot.slane %v2774, 1
        %v2777 = vrot.slane %v2775, 1
        %v2831 = vunpack.c.l.b16 %v2716
        %v2832 = vunpack.c.h.b16 %v2716
        %v2833 = vunpack.c.l.b16 %v2717
        %v2834 = vunpack.c.h.b16 %v2717
        %v2835 = vunpack.c.l.b16 %v2718
        %v2836 = vunpack.c.h.b16 %v2718
        %v2837 = vunpack.c.l.b16 %v2719
        %v2838 = vunpack.c.h.b16 %v2719
        %v2839 = vunpack.c.l.b16 %v2720
        %v2840 = vunpack.c.h.b16 %v2720
        %v2841 = vunpack.c.l.b16 %v2721
        %v2842 = vunpack.c.h.b16 %v2721
        %v2843 = vunpack.c.l.b16 %v2722
        %v2844 = vunpack.c.h.b16 %v2722
        %v2845 = vunpack.c.l.b16 %v2723
        %v2846 = vunpack.c.h.b16 %v2723
        %v2847 = vunpack.c.l.b16 %v2724
        %v2848 = vunpack.c.h.b16 %v2724
        %v2849 = vunpack.c.l.b16 %v2725
        %v2850 = vunpack.c.h.b16 %v2725
        %v2851 = vunpack.c.l.b16 %v2726
        %v2852 = vunpack.c.h.b16 %v2726
        %v2853 = vunpack.c.l.b16 %v2727
        %v2854 = vunpack.c.h.b16 %v2727
        %v2855 = vunpack.c.l.b16 %v2728
        %v2856 = vunpack.c.h.b16 %v2728
        %v2857 = vunpack.c.l.b16 %v2729
        %v2858 = vunpack.c.h.b16 %v2729
        %v2859 = vunpack.c.l.b16 %v2730
        %v2860 = vunpack.c.h.b16 %v2730
        %v2861 = vunpack.c.l.b16 %v2731
        %v2862 = vunpack.c.h.b16 %v2731
        %v2863 = vunpack.c.l.b16 %v2732
        %v2864 = vunpack.c.h.b16 %v2732
        %v2865 = vunpack.c.l.b16 %v2733
        %v2866 = vunpack.c.h.b16 %v2733
        %v2867 = vunpack.c.l.b16 %v2734
        %v2868 = vunpack.c.h.b16 %v2734
        %v2869 = vunpack.c.l.b16 %v2735
        %v2870 = vunpack.c.h.b16 %v2735
        %v2871 = vunpack.c.l.b16 %v2736
        %v2872 = vunpack.c.h.b16 %v2736
        %v2873 = vunpack.c.l.b16 %v2737
        %v2874 = vunpack.c.h.b16 %v2737
        %v2875 = vunpack.c.l.b16 %v2738
        %v2876 = vunpack.c.h.b16 %v2738
        %v2877 = vunpack.c.l.b16 %v2739
        %v2878 = vunpack.c.h.b16 %v2739
        %v2879 = vunpack.c.l.b16 %v2740
        %v2880 = vunpack.c.h.b16 %v2740
        %v2881 = vunpack.c.l.b16 %v2741
        %v2882 = vunpack.c.h.b16 %v2741
        %v2883 = vunpack.c.l.b16 %v2742
        %v2884 = vunpack.c.h.b16 %v2742
        %v2885 = vunpack.c.l.b16 %v2743
        %v2886 = vunpack.c.h.b16 %v2743
        %v2887 = vunpack.c.l.b16 %v2744
        %v2888 = vunpack.c.h.b16 %v2744
        %v2889 = vunpack.c.l.b16 %v2745
        %v2890 = vunpack.c.h.b16 %v2745
        %v2891 = vunpack.c.l.b16 %v2746
        %v2892 = vunpack.c.h.b16 %v2746
        %v2893 = vunpack.c.l.b16 %v2747
        %v2894 = vunpack.c.h.b16 %v2747
        %v2895 = vunpack.c.l.b16 %v2748
        %v2896 = vunpack.c.h.b16 %v2748
        %v2897 = vunpack.c.l.b16 %v2749
        %v2898 = vunpack.c.h.b16 %v2749
        %v2899 = vunpack.c.l.b16 %v2750
        %v2900 = vunpack.c.h.b16 %v2750
        %v2901 = vunpack.c.l.b16 %v2751
        %v2902 = vunpack.c.h.b16 %v2751
        %v2903 = vunpack.c.l.b16 %v2752
        %v2904 = vunpack.c.h.b16 %v2752
        %v2905 = vunpack.c.l.b16 %v2753
        %v2906 = vunpack.c.h.b16 %v2753
        %v2907 = vunpack.c.l.b16 %v2754
        %v2908 = vunpack.c.h.b16 %v2754
        %v2909 = vunpack.c.l.b16 %v2755
        %v2910 = vunpack.c.h.b16 %v2755
        %v2911 = vunpack.c.l.b16 %v2756
        %v2912 = vunpack.c.h.b16 %v2756
        %v2913 = vunpack.c.l.b16 %v2757
        %v2914 = vunpack.c.h.b16 %v2757
        %v2915 = vunpack.c.l.b16 %v2758
        %v2916 = vunpack.c.h.b16 %v2758
        %v2917 = vunpack.c.l.b16 %v2759
        %v2918 = vunpack.c.h.b16 %v2759
        %v2919 = vunpack.c.l.b16 %v2760
        %v2920 = vunpack.c.h.b16 %v2760
        %v2921 = vunpack.c.l.b16 %v2761
        %v2922 = vunpack.c.h.b16 %v2761
        %v2923 = vunpack.c.l.b16 %v2762
        %v2924 = vunpack.c.h.b16 %v2762
        %v2925 = vunpack.c.l.b16 %v2763
        %v2926 = vunpack.c.h.b16 %v2763
        %v2927 = vunpack.c.l.b16 %v2764
        %v2928 = vunpack.c.h.b16 %v2764
        %v2929 = vunpack.c.l.b16 %v2765
        %v2930 = vunpack.c.h.b16 %v2765
        %v2931 = vunpack.c.l.b16 %v2766
        %v2932 = vunpack.c.h.b16 %v2766
        %v2933 = vunpack.c.l.b16 %v2767
        %v2934 = vunpack.c.h.b16 %v2767
        %v2935 = vpack.c.b16 %v2835, %v2831
        %v2936 = vpack.c.b16 %v2836, %v2832
        %v2937 = vpack.c.b16 %v2837, %v2833
        %v2938 = vpack.c.b16 %v2838, %v2834
        %v2939 = vpack.c.b16 %v2843, %v2839
        %v2940 = vpack.c.b16 %v2844, %v2840
        %v2941 = vpack.c.b16 %v2845, %v2841
        %v2942 = vpack.c.b16 %v2846, %v2842
        %v2943 = vpack.c.b16 %v2851, %v2847
        %v2944 = vpack.c.b16 %v2852, %v2848
        %v2945 = vpack.c.b16 %v2853, %v2849
        %v2946 = vpack.c.b16 %v2854, %v2850
        %v2947 = vpack.c.b16 %v2859, %v2855
        %v2948 = vpack.c.b16 %v2860, %v2856
        %v2949 = vpack.c.b16 %v2861, %v2857
        %v2950 = vpack.c.b16 %v2862, %v2858
        %v2951 = vpack.c.b16 %v2867, %v2863
        %v2952 = vpack.c.b16 %v2868, %v2864
        %v2953 = vpack.c.b16 %v2869, %v2865
        %v2954 = vpack.c.b16 %v2870, %v2866
        %v2955 = vpack.c.b16 %v2875, %v2871
        %v2956 = vpack.c.b16 %v2876, %v2872
        %v2957 = vpack.c.b16 %v2877, %v2873
        %v2958 = vpack.c.b16 %v2878, %v2874
        %v2959 = vpack.c.b16 %v2883, %v2879
        %v2960 = vpack.c.b16 %v2884, %v2880
        %v2961 = vpack.c.b16 %v2885, %v2881
        %v2962 = vpack.c.b16 %v2886, %v2882
        %v2963 = vpack.c.b16 %v2891, %v2887
        %v2964 = vpack.c.b16 %v2892, %v2888
        %v2965 = vpack.c.b16 %v2893, %v2889
        %v2966 = vpack.c.b16 %v2894, %v2890
        %v2967 = vpack.c.b16 %v2899, %v2895
        %v2968 = vpack.c.b16 %v2900, %v2896
        %v2969 = vpack.c.b16 %v2901, %v2897
        %v2970 = vpack.c.b16 %v2902, %v2898
        %v2971 = vpack.c.b16 %v2907, %v2903
        %v2972 = vpack.c.b16 %v2908, %v2904
        %v2973 = vpack.c.b16 %v2909, %v2905
        %v2974 = vpack.c.b16 %v2910, %v2906
        %v2975 = vpack.c.b16 %v2915, %v2911
        %v2976 = vpack.c.b16 %v2916, %v2912
        %v2977 = vpack.c.b16 %v2917, %v2913
        %v2978 = vpack.c.b16 %v2918, %v2914
        %v2979 = vpack.c.b16 %v2923, %v2919
        %v2980 = vpack.c.b16 %v2924, %v2920
        %v2981 = vpack.c.b16 %v2925, %v2921
        %v2982 = vpack.c.b16 %v2926, %v2922
        %v2983 = vpack.c.b16 %v2931, %v2927
        %v2984 = vpack.c.b16 %v2932, %v2928
        %v2985 = vpack.c.b16 %v2933, %v2929
        %v2986 = vpack.c.b16 %v2934, %v2930
        %v3040 = vsel %vm600, %v2777, 0
        %3042 = vmatprep.subr.bf16.mxu0 %v2936
        %3043 = vmatpush1.bf16.msra.mxu0 %v2935
        %3044 = vmatprep.subr.bf16.mxu0 %v2940
        %3045 = vmatpush1.bf16.msra.mxu0 %v2939
        %3046 = vmatprep.subr.bf16.mxu0 %v2944
        %3047 = vmatpush1.bf16.msra.mxu0 %v2943
        %3048 = vmatprep.subr.bf16.mxu0 %v2948
        %3049 = vmatpush1.bf16.msra.mxu0 %v2947
        %3050 = vmatprep.subr.bf16.mxu0 %v2952
        %3051 = vmatpush1.bf16.msra.mxu0 %v2951
        %3052 = vmatprep.subr.bf16.mxu0 %v2956
        %3053 = vmatpush1.bf16.msra.mxu0 %v2955
        %3054 = vmatprep.subr.bf16.mxu0 %v2960
        %3055 = vmatpush1.bf16.msra.mxu0 %v2959
        %3056 = vmatprep.subr.bf16.mxu0 %v2964
        %3057 = vmatpush1.bf16.msra.mxu0 %v2963
        %3058 = vmatprep.subr.bf16.mxu0 %v2968
        %3059 = vmatpush1.bf16.msra.mxu0 %v2967
        %3060 = vmatprep.subr.bf16.mxu0 %v2972
        %3061 = vmatpush1.bf16.msra.mxu0 %v2971
        %3062 = vmatprep.subr.bf16.mxu0 %v2976
        %3063 = vmatpush1.bf16.msra.mxu0 %v2975
        %3064 = vmatprep.subr.bf16.mxu0 %v2980
        %3065 = vmatpush1.bf16.msra.mxu0 %v2979
        %3066 = vmatprep.subr.bf16.mxu0 %v2984
        %3067 = vmatpush1.bf16.msra.mxu0 %v2983
        %3068 = vmatprep.subr.bf16.mxu0 0
        %3069 = vmatpush1.bf16.msra.mxu0 0
        %3070 = vmatprep.subr.bf16.mxu0 0
        %3071 = vmatpush1.bf16.msra.mxu0 0
        %3072 = vmatprep.subr.bf16.mxu0 0
        %3073 = vmatpush1.bf16.msra.mxu0 0
        %3074 = vmatprep.mubr.bf16.mxu0 %v3040
        %3075 = vmatmul.mubr.bf16.gmra.mrb[0].mxu0 %v2776
        %v3076 = vpop.f32.mrb[0].mxu0
        %v3077 = vadd.f32 0.0, %v3076
        %v3078 = vpop.f32.mrb[0].mxu0
        %v3079 = vadd.f32 0.0, %v3078
        %v3080 = vpop.f32.mrb[0].mxu0
        %v3081 = vadd.f32 0.0, %v3080
        %v3082 = vpop.f32.mrb[0].mxu0
        %v3083 = vadd.f32 0.0, %v3082
        %3084 = vdwg.mxu0
        %3085 = vmatprep.subr.bf16.mxu0 %v2938
        %3086 = vmatpush1.bf16.msra.mxu0 %v2937
        %3087 = vmatprep.subr.bf16.mxu0 %v2942
        %3088 = vmatpush1.bf16.msra.mxu0 %v2941
        %3089 = vmatprep.subr.bf16.mxu0 %v2946
        %3090 = vmatpush1.bf16.msra.mxu0 %v2945
        %3091 = vmatprep.subr.bf16.mxu0 %v2950
        %3092 = vmatpush1.bf16.msra.mxu0 %v2949
        %3093 = vmatprep.subr.bf16.mxu0 %v2954
        %3094 = vmatpush1.bf16.msra.mxu0 %v2953
        %3095 = vmatprep.subr.bf16.mxu0 %v2958
        %3096 = vmatpush1.bf16.msra.mxu0 %v2957
        %3097 = vmatprep.subr.bf16.mxu0 %v2962
        %3098 = vmatpush1.bf16.msra.mxu0 %v2961
        %3099 = vmatprep.subr.bf16.mxu0 %v2966
        %3100 = vmatpush1.bf16.msra.mxu0 %v2965
        %3101 = vmatprep.subr.bf16.mxu0 %v2970
        %3102 = vmatpush1.bf16.msra.mxu0 %v2969
        %3103 = vmatprep.subr.bf16.mxu0 %v2974
        %3104 = vmatpush1.bf16.msra.mxu0 %v2973
        %3105 = vmatprep.subr.bf16.mxu0 %v2978
        %3106 = vmatpush1.bf16.msra.mxu0 %v2977
        %3107 = vmatprep.subr.bf16.mxu0 %v2982
        %3108 = vmatpush1.bf16.msra.mxu0 %v2981
        %3109 = vmatprep.subr.bf16.mxu0 %v2986
        %3110 = vmatpush1.bf16.msra.mxu0 %v2985
        %3111 = vmatprep.subr.bf16.mxu0 0
        %3112 = vmatpush1.bf16.msra.mxu0 0
        %3113 = vmatprep.subr.bf16.mxu0 0
        %3114 = vmatpush1.bf16.msra.mxu0 0
        %3115 = vmatprep.subr.bf16.mxu0 0
        %3116 = vmatpush1.bf16.msra.mxu0 0
        %3117 = vmatprep.mubr.bf16.mxu0 %v3040
        %3118 = vmatmul.mubr.bf16.gmra.mrb[0].mxu0 %v2776
        %v3119 = vpop.f32.mrb[0].mxu0
        %v3120 = vadd.f32 0.0, %v3119
        %v3121 = vpop.f32.mrb[0].mxu0
        %v3122 = vadd.f32 0.0, %v3121
        %v3123 = vpop.f32.mrb[0].mxu0
        %v3124 = vadd.f32 0.0, %v3123
        %v3125 = vpop.f32.mrb[0].mxu0
        %v3126 = vadd.f32 0.0, %v3125
        %3127 = vdwg.mxu0
        %v3128 = vadd.f32 %v2705, %v3077
        %v3129 = vadd.f32 %v2706, %v3079
        %v3130 = vadd.f32 %v2707, %v3120
        %v3131 = vadd.f32 %v2708, %v3122
        %v3132 = vadd.f32 %v2709, %v3081
        %v3133 = vadd.f32 %v2710, %v3083
        %v3134 = vadd.f32 %v2711, %v3124
        %v3135 = vadd.f32 %v2712, %v3126
        %s3136 = scalar_lea.vmem [#allocation5], 2912
        %v3137 = vld [vmem:[%s3136] sm:$0xff]
        %v3138 = vld [vmem:[%s3136 + $0x8] sm:$0xff]
        %v3139 = vld [vmem:[%s3136 + $0x10] sm:$0xff]
        %v3140 = vld [vmem:[%s3136 + $0x18] sm:$0xff]
        %v3141 = vld [vmem:[%s3136 + $0x20] sm:$0xff]
        %v3142 = vld [vmem:[%s3136 + $0x28] sm:$0xff]
        %v3143 = vld [vmem:[%s3136 + $0x30] sm:$0xff]
        %v3144 = vld [vmem:[%s3136 + $0x38] sm:$0xff]
        %v3145 = vld [vmem:[%s3136 + $0x40] sm:$0xff]
        %v3146 = vld [vmem:[%s3136 + $0x48] sm:$0xff]
        %v3147 = vld [vmem:[%s3136 + $0x50] sm:$0xff]
        %v3148 = vld [vmem:[%s3136 + $0x58] sm:$0xff]
        %v3149 = vld [vmem:[%s3136 + $0x60] sm:$0xff]
        %v3150 = vld [vmem:[%s3136 + $0x68] sm:$0xff]
        %v3151 = vld [vmem:[%s3136 + $0x70] sm:$0xff]
        %v3152 = vld [vmem:[%s3136 + $0x78] sm:$0xff]
        %v3153 = vld [vmem:[%s3136 + $0x80] sm:$0xff]
        %v3154 = vld [vmem:[%s3136 + $0x88] sm:$0xff]
        %v3155 = vld [vmem:[%s3136 + $0x90] sm:$0xff]
        %v3156 = vld [vmem:[%s3136 + $0x98] sm:$0xff]
        %v3157 = vld [vmem:[%s3136 + $0xa0] sm:$0xff]
        %v3158 = vld [vmem:[%s3136 + $0xa8] sm:$0xff]
        %v3159 = vld [vmem:[%s3136 + $0xb0] sm:$0xff]
        %v3160 = vld [vmem:[%s3136 + $0xb8] sm:$0xff]
        %v3161 = vld [vmem:[%s3136 + $0xc0] sm:$0xff]
        %v3162 = vld [vmem:[%s3136 + $0xc8] sm:$0xff]
        %v3163 = vld [vmem:[%s3136 + $0xd0] sm:$0xff]
        %v3164 = vld [vmem:[%s3136 + $0xd8] sm:$0xff]
        %v3165 = vld [vmem:[%s3136 + $0xe0] sm:$0xff]
        %v3166 = vld [vmem:[%s3136 + $0xe8] sm:$0xff]
        %v3167 = vld [vmem:[%s3136 + $0xf0] sm:$0xff]
        %v3168 = vld [vmem:[%s3136 + $0xf8] sm:$0xff]
        %v3169 = vld [vmem:[%s3136 + $0x100] sm:$0xff]
        %v3170 = vld [vmem:[%s3136 + $0x108] sm:$0xff]
        %v3171 = vld [vmem:[%s3136 + $0x110] sm:$0xff]
        %v3172 = vld [vmem:[%s3136 + $0x118] sm:$0xff]
        %v3173 = vld [vmem:[%s3136 + $0x120] sm:$0xff]
        %v3174 = vld [vmem:[%s3136 + $0x128] sm:$0xff]
        %v3175 = vld [vmem:[%s3136 + $0x130] sm:$0xff]
        %v3176 = vld [vmem:[%s3136 + $0x138] sm:$0xff]
        %v3177 = vld [vmem:[%s3136 + $0x140] sm:$0xff]
        %v3178 = vld [vmem:[%s3136 + $0x148] sm:$0xff]
        %v3179 = vld [vmem:[%s3136 + $0x150] sm:$0xff]
        %v3180 = vld [vmem:[%s3136 + $0x158] sm:$0xff]
        %v3181 = vld [vmem:[%s3136 + $0x160] sm:$0xff]
        %v3182 = vld [vmem:[%s3136 + $0x168] sm:$0xff]
        %v3183 = vld [vmem:[%s3136 + $0x170] sm:$0xff]
        %v3184 = vld [vmem:[%s3136 + $0x178] sm:$0xff]
        %v3185 = vld [vmem:[%s3136 + $0x180] sm:$0xff]
        %v3186 = vld [vmem:[%s3136 + $0x188] sm:$0xff]
        %v3187 = vld [vmem:[%s3136 + $0x190] sm:$0xff]
        %v3188 = vld [vmem:[%s3136 + $0x198] sm:$0xff]
        %3189 = vrot.lane.b32.xlu0 %v2776, 112
        %v3190 = vpop.permute.xlu0 %3189
        %3191 = vrot.lane.b32.xlu0 %v2777, 112
        %v3192 = vpop.permute.xlu0 %3191
        %v3193 = vsel %vm337, %v3190, %v3192
        %v3247 = vunpack.c.l.b16 %v3137
        %v3248 = vunpack.c.h.b16 %v3137
        %v3249 = vunpack.c.l.b16 %v3138
        %v3250 = vunpack.c.h.b16 %v3138
        %v3251 = vunpack.c.l.b16 %v3139
        %v3252 = vunpack.c.h.b16 %v3139
        %v3253 = vunpack.c.l.b16 %v3140
        %v3254 = vunpack.c.h.b16 %v3140
        %v3255 = vunpack.c.l.b16 %v3141
        %v3256 = vunpack.c.h.b16 %v3141
        %v3257 = vunpack.c.l.b16 %v3142
        %v3258 = vunpack.c.h.b16 %v3142
        %v3259 = vunpack.c.l.b16 %v3143
        %v3260 = vunpack.c.h.b16 %v3143
        %v3261 = vunpack.c.l.b16 %v3144
        %v3262 = vunpack.c.h.b16 %v3144
        %v3263 = vunpack.c.l.b16 %v3145
        %v3264 = vunpack.c.h.b16 %v3145
        %v3265 = vunpack.c.l.b16 %v3146
        %v3266 = vunpack.c.h.b16 %v3146
        %v3267 = vunpack.c.l.b16 %v3147
        %v3268 = vunpack.c.h.b16 %v3147
        %v3269 = vunpack.c.l.b16 %v3148
        %v3270 = vunpack.c.h.b16 %v3148
        %v3271 = vunpack.c.l.b16 %v3149
        %v3272 = vunpack.c.h.b16 %v3149
        %v3273 = vunpack.c.l.b16 %v3150
        %v3274 = vunpack.c.h.b16 %v3150
        %v3275 = vunpack.c.l.b16 %v3151
        %v3276 = vunpack.c.h.b16 %v3151
        %v3277 = vunpack.c.l.b16 %v3152
        %v3278 = vunpack.c.h.b16 %v3152
        %v3279 = vunpack.c.l.b16 %v3153
        %v3280 = vunpack.c.h.b16 %v3153
        %v3281 = vunpack.c.l.b16 %v3154
        %v3282 = vunpack.c.h.b16 %v3154
        %v3283 = vunpack.c.l.b16 %v3155
        %v3284 = vunpack.c.h.b16 %v3155
        %v3285 = vunpack.c.l.b16 %v3156
        %v3286 = vunpack.c.h.b16 %v3156
        %v3287 = vunpack.c.l.b16 %v3157
        %v3288 = vunpack.c.h.b16 %v3157
        %v3289 = vunpack.c.l.b16 %v3158
        %v3290 = vunpack.c.h.b16 %v3158
        %v3291 = vunpack.c.l.b16 %v3159
        %v3292 = vunpack.c.h.b16 %v3159
        %v3293 = vunpack.c.l.b16 %v3160
        %v3294 = vunpack.c.h.b16 %v3160
        %v3295 = vunpack.c.l.b16 %v3161
        %v3296 = vunpack.c.h.b16 %v3161
        %v3297 = vunpack.c.l.b16 %v3162
        %v3298 = vunpack.c.h.b16 %v3162
        %v3299 = vunpack.c.l.b16 %v3163
        %v3300 = vunpack.c.h.b16 %v3163
        %v3301 = vunpack.c.l.b16 %v3164
        %v3302 = vunpack.c.h.b16 %v3164
        %v3303 = vunpack.c.l.b16 %v3165
        %v3304 = vunpack.c.h.b16 %v3165
        %v3305 = vunpack.c.l.b16 %v3166
        %v3306 = vunpack.c.h.b16 %v3166
        %v3307 = vunpack.c.l.b16 %v3167
        %v3308 = vunpack.c.h.b16 %v3167
        %v3309 = vunpack.c.l.b16 %v3168
        %v3310 = vunpack.c.h.b16 %v3168
        %v3311 = vunpack.c.l.b16 %v3169
        %v3312 = vunpack.c.h.b16 %v3169
        %v3313 = vunpack.c.l.b16 %v3170
        %v3314 = vunpack.c.h.b16 %v3170
        %v3315 = vunpack.c.l.b16 %v3171
        %v3316 = vunpack.c.h.b16 %v3171
        %v3317 = vunpack.c.l.b16 %v3172
        %v3318 = vunpack.c.h.b16 %v3172
        %v3319 = vunpack.c.l.b16 %v3173
        %v3320 = vunpack.c.h.b16 %v3173
        %v3321 = vunpack.c.l.b16 %v3174
        %v3322 = vunpack.c.h.b16 %v3174
        %v3323 = vunpack.c.l.b16 %v3175
        %v3324 = vunpack.c.h.b16 %v3175
        %v3325 = vunpack.c.l.b16 %v3176
        %v3326 = vunpack.c.h.b16 %v3176
        %v3327 = vunpack.c.l.b16 %v3177
        %v3328 = vunpack.c.h.b16 %v3177
        %v3329 = vunpack.c.l.b16 %v3178
        %v3330 = vunpack.c.h.b16 %v3178
        %v3331 = vunpack.c.l.b16 %v3179
        %v3332 = vunpack.c.h.b16 %v3179
        %v3333 = vunpack.c.l.b16 %v3180
        %v3334 = vunpack.c.h.b16 %v3180
        %v3335 = vunpack.c.l.b16 %v3181
        %v3336 = vunpack.c.h.b16 %v3181
        %v3337 = vunpack.c.l.b16 %v3182
        %v3338 = vunpack.c.h.b16 %v3182
        %v3339 = vunpack.c.l.b16 %v3183
        %v3340 = vunpack.c.h.b16 %v3183
        %v3341 = vunpack.c.l.b16 %v3184
        %v3342 = vunpack.c.h.b16 %v3184
        %v3343 = vunpack.c.l.b16 %v3185
        %v3344 = vunpack.c.h.b16 %v3185
        %v3345 = vunpack.c.l.b16 %v3186
        %v3346 = vunpack.c.h.b16 %v3186
        %v3347 = vunpack.c.l.b16 %v3187
        %v3348 = vunpack.c.h.b16 %v3187
        %v3349 = vunpack.c.l.b16 %v3188
        %v3350 = vunpack.c.h.b16 %v3188
        %v3351 = vpack.c.b16 %v3251, %v3247
        %v3352 = vpack.c.b16 %v3252, %v3248
        %v3353 = vpack.c.b16 %v3253, %v3249
        %v3354 = vpack.c.b16 %v3254, %v3250
        %v3355 = vpack.c.b16 %v3259, %v3255
        %v3356 = vpack.c.b16 %v3260, %v3256
        %v3357 = vpack.c.b16 %v3261, %v3257
        %v3358 = vpack.c.b16 %v3262, %v3258
        %v3359 = vpack.c.b16 %v3267, %v3263
        %v3360 = vpack.c.b16 %v3268, %v3264
        %v3361 = vpack.c.b16 %v3269, %v3265
        %v3362 = vpack.c.b16 %v3270, %v3266
        %v3363 = vpack.c.b16 %v3275, %v3271
        %v3364 = vpack.c.b16 %v3276, %v3272
        %v3365 = vpack.c.b16 %v3277, %v3273
        %v3366 = vpack.c.b16 %v3278, %v3274
        %v3367 = vpack.c.b16 %v3283, %v3279
        %v3368 = vpack.c.b16 %v3284, %v3280
        %v3369 = vpack.c.b16 %v3285, %v3281
        %v3370 = vpack.c.b16 %v3286, %v3282
        %v3371 = vpack.c.b16 %v3291, %v3287
        %v3372 = vpack.c.b16 %v3292, %v3288
        %v3373 = vpack.c.b16 %v3293, %v3289
        %v3374 = vpack.c.b16 %v3294, %v3290
        %v3375 = vpack.c.b16 %v3299, %v3295
        %v3376 = vpack.c.b16 %v3300, %v3296
        %v3377 = vpack.c.b16 %v3301, %v3297
        %v3378 = vpack.c.b16 %v3302, %v3298
        %v3379 = vpack.c.b16 %v3307, %v3303
        %v3380 = vpack.c.b16 %v3308, %v3304
        %v3381 = vpack.c.b16 %v3309, %v3305
        %v3382 = vpack.c.b16 %v3310, %v3306
        %v3383 = vpack.c.b16 %v3315, %v3311
        %v3384 = vpack.c.b16 %v3316, %v3312
        %v3385 = vpack.c.b16 %v3317, %v3313
        %v3386 = vpack.c.b16 %v3318, %v3314
        %v3387 = vpack.c.b16 %v3323, %v3319
        %v3388 = vpack.c.b16 %v3324, %v3320
        %v3389 = vpack.c.b16 %v3325, %v3321
        %v3390 = vpack.c.b16 %v3326, %v3322
        %v3391 = vpack.c.b16 %v3331, %v3327
        %v3392 = vpack.c.b16 %v3332, %v3328
        %v3393 = vpack.c.b16 %v3333, %v3329
        %v3394 = vpack.c.b16 %v3334, %v3330
        %v3395 = vpack.c.b16 %v3339, %v3335
        %v3396 = vpack.c.b16 %v3340, %v3336
        %v3397 = vpack.c.b16 %v3341, %v3337
        %v3398 = vpack.c.b16 %v3342, %v3338
        %v3399 = vpack.c.b16 %v3347, %v3343
        %v3400 = vpack.c.b16 %v3348, %v3344
        %v3401 = vpack.c.b16 %v3349, %v3345
        %v3402 = vpack.c.b16 %v3350, %v3346
        %v3456 = vsel %vm600, %v3192, 0
        %3458 = vmatprep.subr.bf16.mxu0 %v3352
        %3459 = vmatpush1.bf16.msra.mxu0 %v3351
        %3460 = vmatprep.subr.bf16.mxu0 %v3356
        %3461 = vmatpush1.bf16.msra.mxu0 %v3355
        %3462 = vmatprep.subr.bf16.mxu0 %v3360
        %3463 = vmatpush1.bf16.msra.mxu0 %v3359
        %3464 = vmatprep.subr.bf16.mxu0 %v3364
        %3465 = vmatpush1.bf16.msra.mxu0 %v3363
        %3466 = vmatprep.subr.bf16.mxu0 %v3368
        %3467 = vmatpush1.bf16.msra.mxu0 %v3367
        %3468 = vmatprep.subr.bf16.mxu0 %v3372
        %3469 = vmatpush1.bf16.msra.mxu0 %v3371
        %3470 = vmatprep.subr.bf16.mxu0 %v3376
        %3471 = vmatpush1.bf16.msra.mxu0 %v3375
        %3472 = vmatprep.subr.bf16.mxu0 %v3380
        %3473 = vmatpush1.bf16.msra.mxu0 %v3379
        %3474 = vmatprep.subr.bf16.mxu0 %v3384
        %3475 = vmatpush1.bf16.msra.mxu0 %v3383
        %3476 = vmatprep.subr.bf16.mxu0 %v3388
        %3477 = vmatpush1.bf16.msra.mxu0 %v3387
        %3478 = vmatprep.subr.bf16.mxu0 %v3392
        %3479 = vmatpush1.bf16.msra.mxu0 %v3391
        %3480 = vmatprep.subr.bf16.mxu0 %v3396
        %3481 = vmatpush1.bf16.msra.mxu0 %v3395
        %3482 = vmatprep.subr.bf16.mxu0 %v3400
        %3483 = vmatpush1.bf16.msra.mxu0 %v3399
        %3484 = vmatprep.subr.bf16.mxu0 0
        %3485 = vmatpush1.bf16.msra.mxu0 0
        %3486 = vmatprep.subr.bf16.mxu0 0
        %3487 = vmatpush1.bf16.msra.mxu0 0
        %3488 = vmatprep.subr.bf16.mxu0 0
        %3489 = vmatpush1.bf16.msra.mxu0 0
        %3490 = vmatprep.mubr.bf16.mxu0 %v3456
        %3491 = vmatmul.mubr.bf16.gmra.mrb[0].mxu0 %v3193
        %v3492 = vpop.f32.mrb[0].mxu0
        %v3493 = vadd.f32 0.0, %v3492
        %v3494 = vpop.f32.mrb[0].mxu0
        %v3495 = vadd.f32 0.0, %v3494
        %v3496 = vpop.f32.mrb[0].mxu0
        %v3497 = vadd.f32 0.0, %v3496
        %v3498 = vpop.f32.mrb[0].mxu0
        %v3499 = vadd.f32 0.0, %v3498
        %3500 = vdwg.mxu0
        %3501 = vmatprep.subr.bf16.mxu0 %v3354
        %3502 = vmatpush1.bf16.msra.mxu0 %v3353
        %3503 = vmatprep.subr.bf16.mxu0 %v3358
        %3504 = vmatpush1.bf16.msra.mxu0 %v3357
        %3505 = vmatprep.subr.bf16.mxu0 %v3362
        %3506 = vmatpush1.bf16.msra.mxu0 %v3361
        %3507 = vmatprep.subr.bf16.mxu0 %v3366
        %3508 = vmatpush1.bf16.msra.mxu0 %v3365
        %3509 = vmatprep.subr.bf16.mxu0 %v3370
        %3510 = vmatpush1.bf16.msra.mxu0 %v3369
        %3511 = vmatprep.subr.bf16.mxu0 %v3374
        %3512 = vmatpush1.bf16.msra.mxu0 %v3373
        %3513 = vmatprep.subr.bf16.mxu0 %v3378
        %3514 = vmatpush1.bf16.msra.mxu0 %v3377
        %3515 = vmatprep.subr.bf16.mxu0 %v3382
        %3516 = vmatpush1.bf16.msra.mxu0 %v3381
        %3517 = vmatprep.subr.bf16.mxu0 %v3386
        %3518 = vmatpush1.bf16.msra.mxu0 %v3385
        %3519 = vmatprep.subr.bf16.mxu0 %v3390
        %3520 = vmatpush1.bf16.msra.mxu0 %v3389
        %3521 = vmatprep.subr.bf16.mxu0 %v3394
        %3522 = vmatpush1.bf16.msra.mxu0 %v3393
        %3523 = vmatprep.subr.bf16.mxu0 %v3398
        %3524 = vmatpush1.bf16.msra.mxu0 %v3397
        %3525 = vmatprep.subr.bf16.mxu0 %v3402
        %3526 = vmatpush1.bf16.msra.mxu0 %v3401
        %3527 = vmatprep.subr.bf16.mxu0 0
        %3528 = vmatpush1.bf16.msra.mxu0 0
        %3529 = vmatprep.subr.bf16.mxu0 0
        %3530 = vmatpush1.bf16.msra.mxu0 0
        %3531 = vmatprep.subr.bf16.mxu0 0
        %3532 = vmatpush1.bf16.msra.mxu0 0
        %3533 = vmatprep.mubr.bf16.mxu0 %v3456
        %3534 = vmatmul.mubr.bf16.gmra.mrb[0].mxu0 %v3193
        %v3535 = vpop.f32.mrb[0].mxu0
        %v3536 = vadd.f32 0.0, %v3535
        %v3537 = vpop.f32.mrb[0].mxu0
        %v3538 = vadd.f32 0.0, %v3537
        %v3539 = vpop.f32.mrb[0].mxu0
        %v3540 = vadd.f32 0.0, %v3539
        %v3541 = vpop.f32.mrb[0].mxu0
        %v3542 = vadd.f32 0.0, %v3541
        %3543 = vdwg.mxu0
        %v3544 = vadd.f32 %v3128, %v3493
        %v3545 = vadd.f32 %v3129, %v3495
        %v3546 = vadd.f32 %v3130, %v3536
        %v3547 = vadd.f32 %v3131, %v3538
        %v3548 = vadd.f32 %v3132, %v3497
        %v3549 = vadd.f32 %v3133, %v3499
        %v3550 = vadd.f32 %v3134, %v3540
        %v3551 = vadd.f32 %v3135, %v3542
        %s3552 = scalar_lea.vmem [#allocation5], 3328
        %v3553 = vld [vmem:[%s3552] sm:$0xff]
        %v3554 = vld [vmem:[%s3552 + $0x8] sm:$0xff]
        %v3555 = vld [vmem:[%s3552 + $0x10] sm:$0xff]
        %v3556 = vld [vmem:[%s3552 + $0x18] sm:$0xff]
        %v3557 = vld [vmem:[%s3552 + $0x20] sm:$0xff]
        %v3558 = vld [vmem:[%s3552 + $0x28] sm:$0xff]
        %v3559 = vld [vmem:[%s3552 + $0x30] sm:$0xff]
        %v3560 = vld [vmem:[%s3552 + $0x38] sm:$0xff]
        %v3561 = vld [vmem:[%s3552 + $0x40] sm:$0xff]
        %v3562 = vld [vmem:[%s3552 + $0x48] sm:$0xff]
        %v3563 = vld [vmem:[%s3552 + $0x50] sm:$0xff]
        %v3564 = vld [vmem:[%s3552 + $0x58] sm:$0xff]
        %v3565 = vld [vmem:[%s3552 + $0x60] sm:$0xff]
        %v3566 = vld [vmem:[%s3552 + $0x68] sm:$0xff]
        %v3567 = vld [vmem:[%s3552 + $0x70] sm:$0xff]
        %v3568 = vld [vmem:[%s3552 + $0x78] sm:$0xff]
        %v3569 = vld [vmem:[%s3552 + $0x80] sm:$0xff]
        %v3570 = vld [vmem:[%s3552 + $0x88] sm:$0xff]
        %v3571 = vld [vmem:[%s3552 + $0x90] sm:$0xff]
        %v3572 = vld [vmem:[%s3552 + $0x98] sm:$0xff]
        %v3573 = vld [vmem:[%s3552 + $0xa0] sm:$0xff]
        %v3574 = vld [vmem:[%s3552 + $0xa8] sm:$0xff]
        %v3575 = vld [vmem:[%s3552 + $0xb0] sm:$0xff]
        %v3576 = vld [vmem:[%s3552 + $0xb8] sm:$0xff]
        %v3577 = vld [vmem:[%s3552 + $0xc0] sm:$0xff]
        %v3578 = vld [vmem:[%s3552 + $0xc8] sm:$0xff]
        %v3579 = vld [vmem:[%s3552 + $0xd0] sm:$0xff]
        %v3580 = vld [vmem:[%s3552 + $0xd8] sm:$0xff]
        %v3581 = vld [vmem:[%s3552 + $0xe0] sm:$0xff]
        %v3582 = vld [vmem:[%s3552 + $0xe8] sm:$0xff]
        %v3583 = vld [vmem:[%s3552 + $0xf0] sm:$0xff]
        %v3584 = vld [vmem:[%s3552 + $0xf8] sm:$0xff]
        %v3585 = vld [vmem:[%s3552 + $0x100] sm:$0xff]
        %v3586 = vld [vmem:[%s3552 + $0x108] sm:$0xff]
        %v3587 = vld [vmem:[%s3552 + $0x110] sm:$0xff]
        %v3588 = vld [vmem:[%s3552 + $0x118] sm:$0xff]
        %v3589 = vld [vmem:[%s3552 + $0x120] sm:$0xff]
        %v3590 = vld [vmem:[%s3552 + $0x128] sm:$0xff]
        %v3591 = vld [vmem:[%s3552 + $0x130] sm:$0xff]
        %v3592 = vld [vmem:[%s3552 + $0x138] sm:$0xff]
        %v3593 = vld [vmem:[%s3552 + $0x140] sm:$0xff]
        %v3594 = vld [vmem:[%s3552 + $0x148] sm:$0xff]
        %v3595 = vld [vmem:[%s3552 + $0x150] sm:$0xff]
        %v3596 = vld [vmem:[%s3552 + $0x158] sm:$0xff]
        %v3597 = vld [vmem:[%s3552 + $0x160] sm:$0xff]
        %v3598 = vld [vmem:[%s3552 + $0x168] sm:$0xff]
        %v3599 = vld [vmem:[%s3552 + $0x170] sm:$0xff]
        %v3600 = vld [vmem:[%s3552 + $0x178] sm:$0xff]
        %v3601 = vld [vmem:[%s3552 + $0x180] sm:$0xff]
        %v3602 = vld [vmem:[%s3552 + $0x188] sm:$0xff]
        %v3603 = vld [vmem:[%s3552 + $0x190] sm:$0xff]
        %v3604 = vld [vmem:[%s3552 + $0x198] sm:$0xff]
        %3605 = vrot.lane.b32.xlu0 %v2776, 96
        %v3606 = vpop.permute.xlu0 %3605
        %3607 = vrot.lane.b32.xlu0 %v2777, 96
        %v3608 = vpop.permute.xlu0 %3607
        %v3609 = vsel %vm1097, %v3606, %v3608
        %v3663 = vunpack.c.l.b16 %v3553
        %v3664 = vunpack.c.h.b16 %v3553
        %v3665 = vunpack.c.l.b16 %v3554
        %v3666 = vunpack.c.h.b16 %v3554
        %v3667 = vunpack.c.l.b16 %v3555
        %v3668 = vunpack.c.h.b16 %v3555
        %v3669 = vunpack.c.l.b16 %v3556
        %v3670 = vunpack.c.h.b16 %v3556
        %v3671 = vunpack.c.l.b16 %v3557
        %v3672 = vunpack.c.h.b16 %v3557
        %v3673 = vunpack.c.l.b16 %v3558
        %v3674 = vunpack.c.h.b16 %v3558
        %v3675 = vunpack.c.l.b16 %v3559
        %v3676 = vunpack.c.h.b16 %v3559
        %v3677 = vunpack.c.l.b16 %v3560
        %v3678 = vunpack.c.h.b16 %v3560
        %v3679 = vunpack.c.l.b16 %v3561
        %v3680 = vunpack.c.h.b16 %v3561
        %v3681 = vunpack.c.l.b16 %v3562
        %v3682 = vunpack.c.h.b16 %v3562
        %v3683 = vunpack.c.l.b16 %v3563
        %v3684 = vunpack.c.h.b16 %v3563
        %v3685 = vunpack.c.l.b16 %v3564
        %v3686 = vunpack.c.h.b16 %v3564
        %v3687 = vunpack.c.l.b16 %v3565
        %v3688 = vunpack.c.h.b16 %v3565
        %v3689 = vunpack.c.l.b16 %v3566
        %v3690 = vunpack.c.h.b16 %v3566
        %v3691 = vunpack.c.l.b16 %v3567
        %v3692 = vunpack.c.h.b16 %v3567
        %v3693 = vunpack.c.l.b16 %v3568
        %v3694 = vunpack.c.h.b16 %v3568
        %v3695 = vunpack.c.l.b16 %v3569
        %v3696 = vunpack.c.h.b16 %v3569
        %v3697 = vunpack.c.l.b16 %v3570
        %v3698 = vunpack.c.h.b16 %v3570
        %v3699 = vunpack.c.l.b16 %v3571
        %v3700 = vunpack.c.h.b16 %v3571
        %v3701 = vunpack.c.l.b16 %v3572
        %v3702 = vunpack.c.h.b16 %v3572
        %v3703 = vunpack.c.l.b16 %v3573
        %v3704 = vunpack.c.h.b16 %v3573
        %v3705 = vunpack.c.l.b16 %v3574
        %v3706 = vunpack.c.h.b16 %v3574
        %v3707 = vunpack.c.l.b16 %v3575
        %v3708 = vunpack.c.h.b16 %v3575
        %v3709 = vunpack.c.l.b16 %v3576
        %v3710 = vunpack.c.h.b16 %v3576
        %v3711 = vunpack.c.l.b16 %v3577
        %v3712 = vunpack.c.h.b16 %v3577
        %v3713 = vunpack.c.l.b16 %v3578
        %v3714 = vunpack.c.h.b16 %v3578
        %v3715 = vunpack.c.l.b16 %v3579
        %v3716 = vunpack.c.h.b16 %v3579
        %v3717 = vunpack.c.l.b16 %v3580
        %v3718 = vunpack.c.h.b16 %v3580
        %v3719 = vunpack.c.l.b16 %v3581
        %v3720 = vunpack.c.h.b16 %v3581
        %v3721 = vunpack.c.l.b16 %v3582
        %v3722 = vunpack.c.h.b16 %v3582
        %v3723 = vunpack.c.l.b16 %v3583
        %v3724 = vunpack.c.h.b16 %v3583
        %v3725 = vunpack.c.l.b16 %v3584
        %v3726 = vunpack.c.h.b16 %v3584
        %v3727 = vunpack.c.l.b16 %v3585
        %v3728 = vunpack.c.h.b16 %v3585
        %v3729 = vunpack.c.l.b16 %v3586
        %v3730 = vunpack.c.h.b16 %v3586
        %v3731 = vunpack.c.l.b16 %v3587
        %v3732 = vunpack.c.h.b16 %v3587
        %v3733 = vunpack.c.l.b16 %v3588
        %v3734 = vunpack.c.h.b16 %v3588
        %v3735 = vunpack.c.l.b16 %v3589
        %v3736 = vunpack.c.h.b16 %v3589
        %v3737 = vunpack.c.l.b16 %v3590
        %v3738 = vunpack.c.h.b16 %v3590
        %v3739 = vunpack.c.l.b16 %v3591
        %v3740 = vunpack.c.h.b16 %v3591
        %v3741 = vunpack.c.l.b16 %v3592
        %v3742 = vunpack.c.h.b16 %v3592
        %v3743 = vunpack.c.l.b16 %v3593
        %v3744 = vunpack.c.h.b16 %v3593
        %v3745 = vunpack.c.l.b16 %v3594
        %v3746 = vunpack.c.h.b16 %v3594
        %v3747 = vunpack.c.l.b16 %v3595
        %v3748 = vunpack.c.h.b16 %v3595
        %v3749 = vunpack.c.l.b16 %v3596
        %v3750 = vunpack.c.h.b16 %v3596
        %v3751 = vunpack.c.l.b16 %v3597
        %v3752 = vunpack.c.h.b16 %v3597
        %v3753 = vunpack.c.l.b16 %v3598
        %v3754 = vunpack.c.h.b16 %v3598
        %v3755 = vunpack.c.l.b16 %v3599
        %v3756 = vunpack.c.h.b16 %v3599
        %v3757 = vunpack.c.l.b16 %v3600
        %v3758 = vunpack.c.h.b16 %v3600
        %v3759 = vunpack.c.l.b16 %v3601
        %v3760 = vunpack.c.h.b16 %v3601
        %v3761 = vunpack.c.l.b16 %v3602
        %v3762 = vunpack.c.h.b16 %v3602
        %v3763 = vunpack.c.l.b16 %v3603
        %v3764 = vunpack.c.h.b16 %v3603
        %v3765 = vunpack.c.l.b16 %v3604
        %v3766 = vunpack.c.h.b16 %v3604
        %v3767 = vpack.c.b16 %v3667, %v3663
        %v3768 = vpack.c.b16 %v3668, %v3664
        %v3769 = vpack.c.b16 %v3669, %v3665
        %v3770 = vpack.c.b16 %v3670, %v3666
        %v3771 = vpack.c.b16 %v3675, %v3671
        %v3772 = vpack.c.b16 %v3676, %v3672
        %v3773 = vpack.c.b16 %v3677, %v3673
        %v3774 = vpack.c.b16 %v3678, %v3674
        %v3775 = vpack.c.b16 %v3683, %v3679
        %v3776 = vpack.c.b16 %v3684, %v3680
        %v3777 = vpack.c.b16 %v3685, %v3681
        %v3778 = vpack.c.b16 %v3686, %v3682
        %v3779 = vpack.c.b16 %v3691, %v3687
        %v3780 = vpack.c.b16 %v3692, %v3688
        %v3781 = vpack.c.b16 %v3693, %v3689
        %v3782 = vpack.c.b16 %v3694, %v3690
        %v3783 = vpack.c.b16 %v3699, %v3695
        %v3784 = vpack.c.b16 %v3700, %v3696
        %v3785 = vpack.c.b16 %v3701, %v3697
        %v3786 = vpack.c.b16 %v3702, %v3698
        %v3787 = vpack.c.b16 %v3707, %v3703
        %v3788 = vpack.c.b16 %v3708, %v3704
        %v3789 = vpack.c.b16 %v3709, %v3705
        %v3790 = vpack.c.b16 %v3710, %v3706
        %v3791 = vpack.c.b16 %v3715, %v3711
        %v3792 = vpack.c.b16 %v3716, %v3712
        %v3793 = vpack.c.b16 %v3717, %v3713
        %v3794 = vpack.c.b16 %v3718, %v3714
        %v3795 = vpack.c.b16 %v3723, %v3719
        %v3796 = vpack.c.b16 %v3724, %v3720
        %v3797 = vpack.c.b16 %v3725, %v3721
        %v3798 = vpack.c.b16 %v3726, %v3722
        %v3799 = vpack.c.b16 %v3731, %v3727
        %v3800 = vpack.c.b16 %v3732, %v3728
        %v3801 = vpack.c.b16 %v3733, %v3729
        %v3802 = vpack.c.b16 %v3734, %v3730
        %v3803 = vpack.c.b16 %v3739, %v3735
        %v3804 = vpack.c.b16 %v3740, %v3736
        %v3805 = vpack.c.b16 %v3741, %v3737
        %v3806 = vpack.c.b16 %v3742, %v3738
        %v3807 = vpack.c.b16 %v3747, %v3743
        %v3808 = vpack.c.b16 %v3748, %v3744
        %v3809 = vpack.c.b16 %v3749, %v3745
        %v3810 = vpack.c.b16 %v3750, %v3746
        %v3811 = vpack.c.b16 %v3755, %v3751
        %v3812 = vpack.c.b16 %v3756, %v3752
        %v3813 = vpack.c.b16 %v3757, %v3753
        %v3814 = vpack.c.b16 %v3758, %v3754
        %v3815 = vpack.c.b16 %v3763, %v3759
        %v3816 = vpack.c.b16 %v3764, %v3760
        %v3817 = vpack.c.b16 %v3765, %v3761
        %v3818 = vpack.c.b16 %v3766, %v3762
        %v3872 = vsel %vm600, %v3608, 0
        %3874 = vmatprep.subr.bf16.mxu0 %v3768
        %3875 = vmatpush1.bf16.msra.mxu0 %v3767
        %3876 = vmatprep.subr.bf16.mxu0 %v3772
        %3877 = vmatpush1.bf16.msra.mxu0 %v3771
        %3878 = vmatprep.subr.bf16.mxu0 %v3776
        %3879 = vmatpush1.bf16.msra.mxu0 %v3775
        %3880 = vmatprep.subr.bf16.mxu0 %v3780
        %3881 = vmatpush1.bf16.msra.mxu0 %v3779
        %3882 = vmatprep.subr.bf16.mxu0 %v3784
        %3883 = vmatpush1.bf16.msra.mxu0 %v3783
        %3884 = vmatprep.subr.bf16.mxu0 %v3788
        %3885 = vmatpush1.bf16.msra.mxu0 %v3787
        %3886 = vmatprep.subr.bf16.mxu0 %v3792
        %3887 = vmatpush1.bf16.msra.mxu0 %v3791
        %3888 = vmatprep.subr.bf16.mxu0 %v3796
        %3889 = vmatpush1.bf16.msra.mxu0 %v3795
        %3890 = vmatprep.subr.bf16.mxu0 %v3800
        %3891 = vmatpush1.bf16.msra.mxu0 %v3799
        %3892 = vmatprep.subr.bf16.mxu0 %v3804
        %3893 = vmatpush1.bf16.msra.mxu0 %v3803
        %3894 = vmatprep.subr.bf16.mxu0 %v3808
        %3895 = vmatpush1.bf16.msra.mxu0 %v3807
        %3896 = vmatprep.subr.bf16.mxu0 %v3812
        %3897 = vmatpush1.bf16.msra.mxu0 %v3811
        %3898 = vmatprep.subr.bf16.mxu0 %v3816
        %3899 = vmatpush1.bf16.msra.mxu0 %v3815
        %3900 = vmatprep.subr.bf16.mxu0 0
        %3901 = vmatpush1.bf16.msra.mxu0 0
        %3902 = vmatprep.subr.bf16.mxu0 0
        %3903 = vmatpush1.bf16.msra.mxu0 0
        %3904 = vmatprep.subr.bf16.mxu0 0
        %3905 = vmatpush1.bf16.msra.mxu0 0
        %3906 = vmatprep.mubr.bf16.mxu0 %v3872
        %3907 = vmatmul.mubr.bf16.gmra.mrb[0].mxu0 %v3609
        %v3908 = vpop.f32.mrb[0].mxu0
        %v3909 = vadd.f32 0.0, %v3908
        %v3910 = vpop.f32.mrb[0].mxu0
        %v3911 = vadd.f32 0.0, %v3910
        %v3912 = vpop.f32.mrb[0].mxu0
        %v3913 = vadd.f32 0.0, %v3912
        %v3914 = vpop.f32.mrb[0].mxu0
        %v3915 = vadd.f32 0.0, %v3914
        %3916 = vdwg.mxu0
        %3917 = vmatprep.subr.bf16.mxu0 %v3770
        %3918 = vmatpush1.bf16.msra.mxu0 %v3769
        %3919 = vmatprep.subr.bf16.mxu0 %v3774
        %3920 = vmatpush1.bf16.msra.mxu0 %v3773
        %3921 = vmatprep.subr.bf16.mxu0 %v3778
        %3922 = vmatpush1.bf16.msra.mxu0 %v3777
        %3923 = vmatprep.subr.bf16.mxu0 %v3782
        %3924 = vmatpush1.bf16.msra.mxu0 %v3781
        %3925 = vmatprep.subr.bf16.mxu0 %v3786
        %3926 = vmatpush1.bf16.msra.mxu0 %v3785
        %3927 = vmatprep.subr.bf16.mxu0 %v3790
        %3928 = vmatpush1.bf16.msra.mxu0 %v3789
        %3929 = vmatprep.subr.bf16.mxu0 %v3794
        %3930 = vmatpush1.bf16.msra.mxu0 %v3793
        %3931 = vmatprep.subr.bf16.mxu0 %v3798
        %3932 = vmatpush1.bf16.msra.mxu0 %v3797
        %3933 = vmatprep.subr.bf16.mxu0 %v3802
        %3934 = vmatpush1.bf16.msra.mxu0 %v3801
        %3935 = vmatprep.subr.bf16.mxu0 %v3806
        %3936 = vmatpush1.bf16.msra.mxu0 %v3805
        %3937 = vmatprep.subr.bf16.mxu0 %v3810
        %3938 = vmatpush1.bf16.msra.mxu0 %v3809
        %3939 = vmatprep.subr.bf16.mxu0 %v3814
        %3940 = vmatpush1.bf16.msra.mxu0 %v3813
        %3941 = vmatprep.subr.bf16.mxu0 %v3818
        %3942 = vmatpush1.bf16.msra.mxu0 %v3817
        %3943 = vmatprep.subr.bf16.mxu0 0
        %3944 = vmatpush1.bf16.msra.mxu0 0
        %3945 = vmatprep.subr.bf16.mxu0 0
        %3946 = vmatpush1.bf16.msra.mxu0 0
        %3947 = vmatprep.subr.bf16.mxu0 0
        %3948 = vmatpush1.bf16.msra.mxu0 0
        %3949 = vmatprep.mubr.bf16.mxu0 %v3872
        %3950 = vmatmul.mubr.bf16.gmra.mrb[0].mxu0 %v3609
        %v3951 = vpop.f32.mrb[0].mxu0
        %v3952 = vadd.f32 0.0, %v3951
        %v3953 = vpop.f32.mrb[0].mxu0
        %v3954 = vadd.f32 0.0, %v3953
        %v3955 = vpop.f32.mrb[0].mxu0
        %v3956 = vadd.f32 0.0, %v3955
        %v3957 = vpop.f32.mrb[0].mxu0
        %v3958 = vadd.f32 0.0, %v3957
        %3959 = vdwg.mxu0
        %v3960 = vadd.f32 %v3544, %v3909
        %v3961 = vadd.f32 %v3545, %v3911
        %v3962 = vadd.f32 %v3546, %v3952
        %v3963 = vadd.f32 %v3547, %v3954
        %v3964 = vadd.f32 %v3548, %v3913
        %v3965 = vadd.f32 %v3549, %v3915
        %v3966 = vadd.f32 %v3550, %v3956
        %v3967 = vadd.f32 %v3551, %v3958
        %v3969 = vlaneseq
        %v3970 = vshrl.u32 %v3969, 7
        %v3971 = vsub.s32 0, %v3970
        %v3972 = vrot.slane %v217, %v3971
        %v3973 = vlaneseq
        %v3974 = vshrl.u32 %v3973, 7
        %v3975 = vsub.s32 1, %v3974
        %v3976 = vrot.slane %v217, %v3975
        %v3977 = vlaneseq
        %v3978 = vshrl.u32 %v3977, 7
        %v3979 = vsub.s32 2, %v3978
        %v3980 = vrot.slane %v217, %v3979
        %v3981 = vlaneseq
        %v3982 = vshrl.u32 %v3981, 7
        %v3983 = vsub.s32 3, %v3982
        %v3984 = vrot.slane %v217, %v3983
        %v3989 = vadd.f32 %v3960, %v3972
        %v3990 = vadd.f32 %v3961, %v3976
        %v3991 = vadd.f32 %v3962, %v3980
        %v3992 = vadd.f32 %v3963, %v3984
        %v3993 = vadd.f32 %v3964, %v3972
        %v3994 = vadd.f32 %v3965, %v3976
        %v3995 = vadd.f32 %v3966, %v3980
        %v3996 = vadd.f32 %v3967, %v3984
        %v3997 = vmax.f32 %v3989, 0.0
        %v3998 = vmax.f32 %v3990, 0.0
        %v3999 = vmax.f32 %v3991, 0.0
        %v4000 = vmax.f32 %v3992, 0.0
        %v4001 = vmax.f32 %v3993, 0.0
        %v4002 = vmax.f32 %v3994, 0.0
        %v4003 = vmax.f32 %v3995, 0.0
        %v4004 = vmax.f32 %v3996, 0.0
        %v4005 = vpack.c.bf16 %v4001, %v3997
        %v4006 = vpack.c.bf16 %v4002, %v3998
        %v4007 = vpack.c.bf16 %v4003, %v3999
        %v4008 = vpack.c.bf16 %v4004, %v4000
        %v4013 = vunpack.c.l.b16 %v4005
        %v4014 = vunpack.c.l.b16 %v4006
        %v4015 = vunpack.c.l.b16 %v4007
        %v4016 = vunpack.c.l.b16 %v4008
        %v4017 = vunpack.c.h.b16 %v4005
        %v4018 = vunpack.c.h.b16 %v4006
        %v4019 = vunpack.c.h.b16 %v4007
        %v4020 = vunpack.c.h.b16 %v4008
        %v4021 = vpack.c.b16 %v4014, %v4013
        %v4022 = vpack.c.b16 %v4016, %v4015
        %v4023 = vpack.c.b16 %v4018, %v4017
        %v4024 = vpack.c.b16 %v4020, %v4019
        %4029 = vst [vmem:[%s215] sm:$0xff] %v4021
        %vm4030 = vcmask 1043456
        %vm4031 = vcmask 261124
        %vm4032 = vmor %vm4031, %vm4030
        %4033 = vst.msk [vmem:[%s215 + $0x8] sm:$0xff] %vm4032, %v4022
        %vm4034 = vcmask 1042432
        %vm4035 = vsmask.f32 2304
        %vm4036 = vmand %vm4034, %vm4035
        %vm4037 = vcmask 1046532
        %vm4038 = vsmask.f32 6400
        %vm4039 = vmand %vm4037, %vm4038
        %vm4040 = vmor %vm4039, %vm4036
        %v4041 = vld [vmem:[%s215 + $0x10] sm:$0x77]
        %v4042 = vsel %vm4040, %v4023, %v4041
        %4043 = vst [vmem:[%s215 + $0x10] sm:$0x77] %v4042
        %vm4044 = vcmask 260100
        %vm4045 = vmand %vm4044, %vm4038
        %vm4046 = vmor %vm4045, %vm4036
        %v4047 = vld [vmem:[%s215 + $0x18] sm:$0x77]
        %v4048 = vsel %vm4046, %v4024, %v4047
        %4049 = vst [vmem:[%s215 + $0x18] sm:$0x77] %v4048
        %s4050 = sand.u32 %s97, 1
        %s4051 = scalar_lea.sflag [#allocation4], %s4050
        %s4052 = sand.u32 %s97, 1
        %s4053 = smul.addr %s4052, 32
        %s4054 = scalar_lea.vmem [#allocation8], %s4053
        // Predicated region
        $region45: #{convnet_forward.9} parent=31 // pred_check
          %p4055 = pneg %p107
        $region46: #{convnet_forward.9} parent=31 // pred_check_branch
          %4057 = sbr.rel (%p4055) target = $region48
        $region47: #{convnet_forward.9} parent=31 // pred_region
          %s4059 = ssub.s32 512, 512
          %4060 = vsyncadd %s4051, %s4059
          %s4061 = smul.addr %s21, 8
          %s4062 = smul.addr %s4061, 64
          %s4063 = scalar_lea.hbm %s3, %s4062
          %s4064 = sshll.u32 %s4054, 4
          %s4065 = int_to_ptr.vmem [resolvable:$true] %s4064
          %4070 = dma.vmem_to_hbm [thread:$0]  %s4065, 512, %s4063, %s4051, 256, 256, 16
        $region48: #{convnet_forward.9} parent=31 // pred_fallthru
          _
      $region32: #{convnet_forward.9} parent=5 // pred_fallthru
        _
      %p4071 = scmp.le.s32.totalorder 2, %s16
      // Predicated region
      $region49: #{convnet_forward.9} parent=5 // pred_check
        %p4072 = pneg %p4071
      $region50: #{convnet_forward.9} parent=5 // pred_check_branch
        %4074 = sbr.rel (%p4072) target = $region52
      $region51: #{convnet_forward.9} parent=5 // pred_region
        %s4075 = ssub.s32 %s16, 2
        // Predicated region
        $region53: #{convnet_forward.9} parent=51 // pred_check
          %p4076 = pneg %p113
        $region54: #{convnet_forward.9} parent=51 // pred_check_branch
          %4078 = sbr.rel (%p4076) target = $region56
        $region55: #{convnet_forward.9} parent=51 // pred_region
          %s4079 = sand.u32 %s98, 1
          %s4080 = scalar_lea.sflag [#allocation4], %s4079
          %s4081 = sand.u32 %s98, 1
          %s4082 = smul.addr %s4081, 32
          %s4083 = scalar_lea.vmem [#allocation8], %s4082
          %4084 = dma.done %s4080, 512
        $region56: #{convnet_forward.9} parent=51 // pred_fallthru
          _
      $region52: #{convnet_forward.9} parent=5 // pred_fallthru
        _
    $region6: #{convnet_forward.9} parent=1 // loop_footer
      %s20 = sadd.s32 1, %s16
    $region7: #{convnet_forward.9} parent=1 // loop_footer_branch
      %15 = sbr.rel target = $region3
    $region8: #{convnet_forward.9} parent=1 // loop_exit
      _
    %4085 = vsyncpa [#allocation3], 1
    %s4086 = scalar_lea.sflag [#allocation3], 1
    %4087 = vsyncpa %s4086, 1
    %4088 = vsyncpa [#allocation6], 1
    %4089 = vsyncpa [#allocation4], 1
    %s4090 = scalar_lea.sflag [#allocation4], 1
    %4091 = vsyncpa %s4090, 1

</llo_original>
